<compile_context>
chip_gen: v7x
topology: tpu7x:2x2x1
jax: 0.10.0
libtpu: 0.0.40
codegen_flags: <defaults>
</compile_context>

<pallas_src>
import functools

import jax
import jax.numpy as jnp
from jax.experimental import pallas as pl
from jax.experimental.pallas import tpu as pltpu

_HID = 128                               # GRU hidden size (module constant)
_CONV_CFG = ((8, 4), (4, 2), (3, 1))     # (kernel, stride) for conv1..conv3
_VMEM = pl.BlockSpec(memory_space=pltpu.MemorySpace.VMEM)
_CPARAMS = pltpu.CompilerParams(vmem_limit_bytes=32 * 1024 * 1024)


# ---------------------------------------------------------------------------
# Pallas kernels
# ---------------------------------------------------------------------------

def _conv_mm_kernel(cols_ref, w_ref, b_ref, o_ref):
    # cols: (M, Kd) bf16; w: (Kd, Cout) bf16, block-diagonal over groups;
    # b: (1, Cout) f32.  One MXU matmul covers every group; the zero blocks
    # are free FLOPs at these sizes.
    y = jnp.dot(cols_ref[...], w_ref[...], preferred_element_type=jnp.float32)
    o_ref[...] = jnp.maximum(y + b_ref[...], 0.0).astype(o_ref.dtype)


def _gru_head_kernel(x_ref, wih_ref, whh_ref, bih_ref, bhh_ref,
                     wh_ref, bh_ref, y_ref, *, T, B, H, A):
    # x:   (T*B, I)  bf16, time-major rows (t*B + b)
    # wih: (I, 6H)   bf16, gate columns ordered [r1 r2 z1 z2 n1 n2]
    # whh: (2H, 6H)  bf16, block-diagonal (rows 0:H -> GRU1, H:2H -> GRU2)
    # bih/bhh: (1, 6H) f32 ; wh: (2H, A+1) f32 ; bh: (1, A+1) f32
    # y:   (B, A)    f32
    # Hoisted input projection: one matmul for all timesteps and both GRUs.
    gi_all = jnp.dot(x_ref[...], wih_ref[...],
                     preferred_element_type=jnp.float32) + bih_ref[...]
    whh = whh_ref[...]
    bhh = bhh_ref[...]
    h = jnp.zeros((B, 2 * H), jnp.float32)        # [h_adv | h_val]
    for t in range(T):                            # T small & static: unroll
        gi = gi_all[t * B:(t + 1) * B, :]
        gh = jnp.dot(h.astype(whh.dtype), whh,
                     preferred_element_type=jnp.float32) + bhh
        r = jax.nn.sigmoid(gi[:, 0:2 * H] + gh[:, 0:2 * H])
        z = jax.nn.sigmoid(gi[:, 2 * H:4 * H] + gh[:, 2 * H:4 * H])
        n = jnp.tanh(gi[:, 4 * H:6 * H] + r * gh[:, 4 * H:6 * H])
        h = (1.0 - z) * n + z * h
    # Dueling head: fc1/fc2 fused into one block matmul.
    head = jnp.dot(h, wh_ref[...], preferred_element_type=jnp.float32) + bh_ref[...]
    adv = head[:, 0:A]
    val = head[:, A:A + 1]
    y_ref[...] = adv + val - jnp.mean(adv, axis=1, keepdims=True)


# ---------------------------------------------------------------------------
# Wrappers
# ---------------------------------------------------------------------------

def _im2col(x_nhwc, K, stride):
    """im2col via static strided slices (no gather).
    x: (B, H, W, C) -> cols: (B*Ho*Wo, K*K*C) with column order (ki, kj, c)."""
    B, H, W, C = x_nhwc.shape
    Ho = (H - K) // stride + 1
    Wo = (W - K) // stride + 1
    taps = []
    for ki in range(K):
        for kj in range(K):
            taps.append(jax.lax.slice(
                x_nhwc, (0, ki, kj, 0),
                (B, ki + (Ho - 1) * stride + 1, kj + (Wo - 1) * stride + 1, C),
                (1, stride, stride, 1)))           # (B, Ho, Wo, C)
    cols = jnp.concatenate(taps, axis=-1)          # (B, Ho, Wo, K*K*C)
    return cols.reshape(B * Ho * Wo, K * K * C), Ho, Wo


def _conv_matmul_relu(cols, w_bd, b):
    M = cols.shape[0]
    Cout = w_bd.shape[1]
    return pl.pallas_call(
        _conv_mm_kernel,
        out_shape=jax.ShapeDtypeStruct((M, Cout), jnp.bfloat16),
        in_specs=[_VMEM, _VMEM, _VMEM],
        out_specs=_VMEM,
        compiler_params=_CPARAMS,
    )(cols, w_bd, b)


def crd2qn_forward(x, prep, n_actions, n_states):
    """x: (B, n_states, Hin, Win) f32 NCHW (PyTorch layout)."""
    B = x.shape[0]
    h = jnp.transpose(x, (0, 2, 3, 1)).astype(jnp.bfloat16)      # NHWC, bf16
    for li, (K, s) in enumerate(_CONV_CFG, start=1):
        cols, Ho, Wo = _im2col(h, K, s)
        out2d = _conv_matmul_relu(cols, prep[f"conv{li}_wbd"], prep[f"conv{li}_b"])
        h = out2d.reshape(B, Ho, Wo, -1)                         # NHWC, bf16

    # Reproduce x.view(B, -1).view(B, n_states, -1) of the NCHW conv output:
    # sequence element t == flattened output of conv group t, in (c, h, w)
    # order.  Emit it time-major as (T*B, I) for the hoisted GRU projection.
    T = n_states
    Ho, Wo, Cout = h.shape[1], h.shape[2], h.shape[3]
    Cg = Cout // T
    x2d = jnp.transpose(h.reshape(B, Ho * Wo, T, Cg), (2, 0, 3, 1))
    x2d = x2d.reshape(T * B, Cg * Ho * Wo)

    return pl.pallas_call(
        functools.partial(_gru_head_kernel, T=T, B=B, H=_HID, A=n_actions),
        out_shape=jax.ShapeDtypeStruct((B, n_actions), jnp.float32),
        in_specs=[_VMEM] * 7,
        out_specs=_VMEM,
        compiler_params=_CPARAMS,
    )(x2d, prep["gru_wih"], prep["gru_whh"], prep["gru_bih"], prep["gru_bhh"],
      prep["head_w"], prep["head_b"])


# ---------------------------------------------------------------------------
# Parameters (PyTorch layout) and one-time kernel-friendly packing
# ---------------------------------------------------------------------------

def init_params(key, n_actions, n_states):
    H = _HID
    gru_in = int(7 * 7 * 64 / n_actions)
    # The original module is only self-consistent when the n_states-chunk
    # reshape matches the GRU input size 7*7*64/n_actions.
    assert gru_in * n_states == 7 * 7 * 64, (
        "CRD2QN requires 7*7*64/n_actions == 7*7*64/n_states "
        "(e.g. n_actions == n_states)")
    shapes = {
        "conv1_w": (32, 1, 8, 8),               "conv1_b": (32,),
        "conv2_w": (64, 32 // n_states, 4, 4),  "conv2_b": (64,),
        "conv3_w": (64, 64 // n_states, 3, 3),  "conv3_b": (64,),
        "gru1_wih": (3 * H, gru_in), "gru1_whh": (3 * H, H),
        "gru1_bih": (3 * H,),        "gru1_bhh": (3 * H,),
        "gru2_wih": (3 * H, gru_in), "gru2_whh": (3 * H, H),
        "gru2_bih": (3 * H,),        "gru2_bhh": (3 * H,),
        "fc1_w": (n_actions, H), "fc1_b": (n_actions,),
        "fc2_w": (1, H),         "fc2_b": (1,),
    }
    params = {}
    keys = jax.random.split(key, len(shapes))
    for k_rng, (name, shp) in zip(keys, sorted(shapes.items())):
        params[name] = (0.05 * jax.random.normal(k_rng, shp)).astype(jnp.float32)
    return params


def prepare_params(params, n_actions, n_states):
    """One-time packing of PyTorch-layout params into kernel layouts:
    block-diagonal conv / hidden weights, interleaved gate columns, fused
    head, bf16 MXU operands.  Runs once, outside the jitted forward."""
    H = _HID
    prep = {}

    # --- convs: block-diagonal (K*K*Cin, Cout) weights, col order (ki,kj,c) --
    for li in (1, 2, 3):
        w = params[f"conv{li}_w"]                 # (Cout, Cin_g, K, K)
        b = params[f"conv{li}_b"]
        Cout, Cin_g, K, _ = w.shape
        G = n_states
        Cin, Cout_g = G * Cin_g, Cout // G
        w_kkio = jnp.transpose(w, (2, 3, 1, 0))   # (K, K, Cin_g, Cout)
        wbd = jnp.zeros((K, K, Cin, Cout), jnp.float32)
        for g in range(G):
            wbd = wbd.at[:, :, g * Cin_g:(g + 1) * Cin_g,
                         g * Cout_g:(g + 1) * Cout_g].set(
                w_kkio[:, :, :, g * Cout_g:(g + 1) * Cout_g])
        prep[f"conv{li}_wbd"] = wbd.reshape(K * K * Cin, Cout).astype(jnp.bfloat16)
        prep[f"conv{li}_b"] = b.reshape(1, Cout).astype(jnp.float32)

    # --- GRUs: interleave gate columns as [r1 r2 z1 z2 n1 n2] ----------------
    def interleave_cols(m1, m2):                  # (3H, X) x2 -> (X, 6H)
        blocks = []
        for gidx in range(3):
            blocks.append(jnp.transpose(m1[gidx * H:(gidx + 1) * H, :]))
            blocks.append(jnp.transpose(m2[gidx * H:(gidx + 1) * H, :]))
        return jnp.concatenate(blocks, axis=1)

    def interleave_bias(v1, v2):                  # (3H,) x2 -> (1, 6H)
        parts = []
        for gidx in range(3):
            parts.append(v1[gidx * H:(gidx + 1) * H])
            parts.append(v2[gidx * H:(gidx + 1) * H])
        return jnp.concatenate(parts).reshape(1, 6 * H)

    prep["gru_wih"] = interleave_cols(
        params["gru1_wih"], params["gru2_wih"]).astype(jnp.bfloat16)

    whh_bd = jnp.zeros((2 * H, 6 * H), jnp.float32)
    for gidx in range(3):
        whh_bd = whh_bd.at[0:H, 2 * gidx * H:(2 * gidx + 1) * H].set(
            jnp.transpose(params["gru1_whh"][gidx * H:(gidx + 1) * H, :]))
        whh_bd = whh_bd.at[H:2 * H, (2 * gidx + 1) * H:(2 * gidx + 2) * H].set(
            jnp.transpose(params["gru2_whh"][gidx * H:(gidx + 1) * H, :]))
    prep["gru_whh"] = whh_bd.astype(jnp.bfloat16)

    prep["gru_bih"] = interleave_bias(
        params["gru1_bih"], params["gru2_bih"]).astype(jnp.float32)
    prep["gru_bhh"] = interleave_bias(
        params["gru1_bhh"], params["gru2_bhh"]).astype(jnp.float32)

    # --- dueling head: fc1/fc2 fused into one (2H, A+1) block matrix --------
    A = n_actions
    head_w = jnp.zeros((2 * H, A + 1), jnp.float32)
    head_w = head_w.at[0:H, 0:A].set(jnp.transpose(params["fc1_w"]))
    head_w = head_w.at[H:2 * H, A:A + 1].set(jnp.transpose(params["fc2_w"]))
    prep["head_w"] = head_w
    prep["head_b"] = jnp.concatenate(
        [params["fc1_b"], params["fc2_b"]]).reshape(1, A + 1)
    return prep


# ---------------------------------------------------------------------------
# Pure-JAX f32 reference (matches the PyTorch module exactly)
# ---------------------------------------------------------------------------

def reference_forward(x, params, n_actions, n_states):
    def conv(h, w, b, stride, groups):
        y = jax.lax.conv_general_dilated(
            h, w, (stride, stride), "VALID",
            dimension_numbers=("NCHW", "OIHW", "NCHW"),
            feature_group_count=groups)
        return jax.nn.relu(y + b[None, :, None, None])

    h = conv(x, params["conv1_w"], params["conv1_b"], 4, n_states)
    h = conv(h, params["conv2_w"], params["conv2_b"], 2, n_states)
    h = conv(h, params["conv3_w"], params["conv3_b"], 1, n_states)
    B = x.shape[0]
    seq = h.reshape(B, n_states, -1)

    def gru(seq, wih, whh, bih, bhh):
        Hh = whh.shape[1]
        hs = jnp.zeros((B, Hh), jnp.float32)
        for t in range(seq.shape[1]):
            xt = seq[:, t, :]
            gi = xt @ wih.T + bih
            gh = hs @ whh.T + bhh
            r = jax.nn.sigmoid(gi[:, :Hh] + gh[:, :Hh])
            z = jax.nn.sigmoid(gi[:, Hh:2 * Hh] + gh[:, Hh:2 * Hh])
            n = jnp.tanh(gi[:, 2 * Hh:] + r * gh[:, 2 * Hh:])
            hs = (1.0 - z) * n + z * hs
        return hs

    a = gru(seq, params["gru1_wih"], params["gru1_whh"],
            params["gru1_bih"], params["gru1_bhh"])
    v = gru(seq, params["gru2_wih"], params["gru2_whh"],
            params["gru2_bih"], params["gru2_bhh"])
    adv = a @ params["fc1_w"].T + params["fc1_b"]
    val = v @ params["fc2_w"].T + params["fc2_b"]
    return adv + val - adv.mean(axis=1, keepdims=True)


if __name__ == "__main__":
    # n_actions == n_states is required for the original module's view()/GRU
    # shapes to be consistent; 84x84 input yields the 7x7x64 conv trunk output.
    n_actions = 4
    n_states = 4
    B, Hin, Win = 2, 84, 84

    key = jax.random.PRNGKey(0)
    k_x, k_p = jax.random.split(key)
    x = jax.random.normal(k_x, (B, n_states, Hin, Win), dtype=jnp.float32)
    params = init_params(k_p, n_actions, n_states)
    prep = prepare_params(params, n_actions, n_states)   # one-time packing

    fwd = jax.jit(lambda xx, pp: crd2qn_forward(xx, pp, n_actions, n_states))
    y = fwd(x, prep)
    jax.block_until_ready(y)
    assert y.shape == (B, n_actions), y.shape

    # Numerical check vs the pure-JAX f32 reference (Pallas path uses bf16
    # MXU operands with f32 accumulation, hence the loose tolerance).
    y_ref = jax.jit(
        lambda xx, pp: reference_forward(xx, pp, n_actions, n_states))(x, params)
    err = float(jnp.max(jnp.abs(y.astype(jnp.float32) - y_ref)))
    assert err < 2e-2, f"mismatch vs reference: max abs err = {err}"
    print("KERNEL_OK")
</pallas_src>

<mosaic_0001>
module attributes {stable_mosaic.version = 11 : i64} {
  func.func @_conv_mm_kernel(%arg0: memref<800x256xbf16, #tpu.memory_space<vmem>>, %arg1: memref<256x32xbf16, #tpu.memory_space<vmem>>, %arg2: memref<1x32xf32, #tpu.memory_space<vmem>>, %arg3: memref<800x32xbf16, #tpu.memory_space<vmem>>) attributes {dimension_semantics = [], scalar_prefetch = 0 : i64, scratch_operands = 0 : i64, tpu.core_type = #tpu.core_type<tc>} {
    %c0 = arith.constant 0 : index
    %c0_0 = arith.constant 0 : index
    %0 = vector.load %arg0[%c0, %c0_0] : memref<800x256xbf16, #tpu.memory_space<vmem>>, vector<800x256xbf16>
    %c0_1 = arith.constant 0 : index
    %c0_2 = arith.constant 0 : index
    %1 = vector.load %arg1[%c0_1, %c0_2] : memref<256x32xbf16, #tpu.memory_space<vmem>>, vector<256x32xbf16>
    %cst = arith.constant dense<0.000000e+00> : vector<800x32xf32>
    %2 = tpu.matmul %0, %1, %cst {dimension_numbers = #tpu.dot_dimension_numbers<[1], [0], [0], [1], [0, 0, 1, 1], [], []>} : vector<800x256xbf16>, vector<256x32xbf16>, vector<800x32xf32> -> vector<800x32xf32>
    %c0_3 = arith.constant 0 : index
    %c0_4 = arith.constant 0 : index
    %3 = vector.load %arg2[%c0_3, %c0_4] : memref<1x32xf32, #tpu.memory_space<vmem>>, vector<1x32xf32>
    %4 = vector.broadcast %3 : vector<1x32xf32> to vector<800x32xf32>
    %5 = arith.addf %2, %4 : vector<800x32xf32>
    %cst_5 = arith.constant 0.000000e+00 : f32
    %6 = vector.broadcast %cst_5 : f32 to vector<800x32xf32>
    %7 = arith.maximumf %5, %6 : vector<800x32xf32>
    %8 = arith.truncf %7 : vector<800x32xf32> to vector<800x32xbf16>
    %c0_6 = arith.constant 0 : index
    %c0_7 = arith.constant 0 : index
    %9 = vector.load %arg3[%c0_6, %c0_7] : memref<800x32xbf16, #tpu.memory_space<vmem>>, vector<800x32xbf16>
    tpu.vector_store %arg3[%c0_6, %c0_7], %8 {strides = array<i32>} : memref<800x32xbf16, #tpu.memory_space<vmem>>, vector<800x32xbf16>,
    return
  }
}

module attributes {stable_mosaic.version = 11 : i64} {
  func.func @_conv_mm_kernel(%arg0: memref<162x512xbf16, #tpu.memory_space<vmem>>, %arg1: memref<512x64xbf16, #tpu.memory_space<vmem>>, %arg2: memref<1x64xf32, #tpu.memory_space<vmem>>, %arg3: memref<162x64xbf16, #tpu.memory_space<vmem>>) attributes {dimension_semantics = [], scalar_prefetch = 0 : i64, scratch_operands = 0 : i64, tpu.core_type = #tpu.core_type<tc>} {
    %c0 = arith.constant 0 : index
    %c0_0 = arith.constant 0 : index
    %0 = vector.load %arg0[%c0, %c0_0] : memref<162x512xbf16, #tpu.memory_space<vmem>>, vector<162x512xbf16>
    %c0_1 = arith.constant 0 : index
    %c0_2 = arith.constant 0 : index
    %1 = vector.load %arg1[%c0_1, %c0_2] : memref<512x64xbf16, #tpu.memory_space<vmem>>, vector<512x64xbf16>
    %cst = arith.constant dense<0.000000e+00> : vector<162x64xf32>
    %2 = tpu.matmul %0, %1, %cst {dimension_numbers = #tpu.dot_dimension_numbers<[1], [0], [0], [1], [0, 0, 1, 1], [], []>} : vector<162x512xbf16>, vector<512x64xbf16>, vector<162x64xf32> -> vector<162x64xf32>
    %c0_3 = arith.constant 0 : index
    %c0_4 = arith.constant 0 : index
    %3 = vector.load %arg2[%c0_3, %c0_4] : memref<1x64xf32, #tpu.memory_space<vmem>>, vector<1x64xf32>
    %4 = vector.broadcast %3 : vector<1x64xf32> to vector<162x64xf32>
    %5 = arith.addf %2, %4 : vector<162x64xf32>
    %cst_5 = arith.constant 0.000000e+00 : f32
    %6 = vector.broadcast %cst_5 : f32 to vector<162x64xf32>
    %7 = arith.maximumf %5, %6 : vector<162x64xf32>
    %8 = arith.truncf %7 : vector<162x64xf32> to vector<162x64xbf16>
    %c0_6 = arith.constant 0 : index
    %c0_7 = arith.constant 0 : index
    %9 = vector.load %arg3[%c0_6, %c0_7] : memref<162x64xbf16, #tpu.memory_space<vmem>>, vector<162x64xbf16>
    tpu.vector_store %arg3[%c0_6, %c0_7], %8 {strides = array<i32>} : memref<162x64xbf16, #tpu.memory_space<vmem>>, vector<162x64xbf16>,
    return
  }
}

module attributes {stable_mosaic.version = 11 : i64} {
  func.func @_conv_mm_kernel(%arg0: memref<98x576xbf16, #tpu.memory_space<vmem>>, %arg1: memref<576x64xbf16, #tpu.memory_space<vmem>>, %arg2: memref<1x64xf32, #tpu.memory_space<vmem>>, %arg3: memref<98x64xbf16, #tpu.memory_space<vmem>>) attributes {dimension_semantics = [], scalar_prefetch = 0 : i64, scratch_operands = 0 : i64, tpu.core_type = #tpu.core_type<tc>} {
    %c0 = arith.constant 0 : index
    %c0_0 = arith.constant 0 : index
    %0 = vector.load %arg0[%c0, %c0_0] : memref<98x576xbf16, #tpu.memory_space<vmem>>, vector<98x576xbf16>
    %c0_1 = arith.constant 0 : index
    %c0_2 = arith.constant 0 : index
    %1 = vector.load %arg1[%c0_1, %c0_2] : memref<576x64xbf16, #tpu.memory_space<vmem>>, vector<576x64xbf16>
    %cst = arith.constant dense<0.000000e+00> : vector<98x64xf32>
    %2 = tpu.matmul %0, %1, %cst {dimension_numbers = #tpu.dot_dimension_numbers<[1], [0], [0], [1], [0, 0, 1, 1], [], []>} : vector<98x576xbf16>, vector<576x64xbf16>, vector<98x64xf32> -> vector<98x64xf32>
    %c0_3 = arith.constant 0 : index
    %c0_4 = arith.constant 0 : index
    %3 = vector.load %arg2[%c0_3, %c0_4] : memref<1x64xf32, #tpu.memory_space<vmem>>, vector<1x64xf32>
    %4 = vector.broadcast %3 : vector<1x64xf32> to vector<98x64xf32>
    %5 = arith.addf %2, %4 : vector<98x64xf32>
    %cst_5 = arith.constant 0.000000e+00 : f32
    %6 = vector.broadcast %cst_5 : f32 to vector<98x64xf32>
    %7 = arith.maximumf %5, %6 : vector<98x64xf32>
    %8 = arith.truncf %7 : vector<98x64xf32> to vector<98x64xbf16>
    %c0_6 = arith.constant 0 : index
    %c0_7 = arith.constant 0 : index
    %9 = vector.load %arg3[%c0_6, %c0_7] : memref<98x64xbf16, #tpu.memory_space<vmem>>, vector<98x64xbf16>
    tpu.vector_store %arg3[%c0_6, %c0_7], %8 {strides = array<i32>} : memref<98x64xbf16, #tpu.memory_space<vmem>>, vector<98x64xbf16>,
    return
  }
}

module attributes {stable_mosaic.version = 11 : i64} {
  func.func @_gru_head_kernel(%arg0: memref<8x784xbf16, #tpu.memory_space<vmem>>, %arg1: memref<784x768xbf16, #tpu.memory_space<vmem>>, %arg2: memref<256x768xbf16, #tpu.memory_space<vmem>>, %arg3: memref<1x768xf32, #tpu.memory_space<vmem>>, %arg4: memref<1x768xf32, #tpu.memory_space<vmem>>, %arg5: memref<256x5xf32, #tpu.memory_space<vmem>>, %arg6: memref<1x5xf32, #tpu.memory_space<vmem>>, %arg7: memref<2x4xf32, #tpu.memory_space<vmem>>) attributes {dimension_semantics = [], scalar_prefetch = 0 : i64, scratch_operands = 0 : i64, tpu.core_type = #tpu.core_type<tc>} {
    %c0 = arith.constant 0 : index
    %c0_0 = arith.constant 0 : index
    %0 = vector.load %arg0[%c0, %c0_0] : memref<8x784xbf16, #tpu.memory_space<vmem>>, vector<8x784xbf16>
    %c0_1 = arith.constant 0 : index
    %c0_2 = arith.constant 0 : index
    %1 = vector.load %arg1[%c0_1, %c0_2] : memref<784x768xbf16, #tpu.memory_space<vmem>>, vector<784x768xbf16>
    %cst = arith.constant dense<0.000000e+00> : vector<8x768xf32>
    %2 = tpu.matmul %0, %1, %cst {dimension_numbers = #tpu.dot_dimension_numbers<[1], [0], [0], [1], [0, 0, 1, 1], [], []>} : vector<8x784xbf16>, vector<784x768xbf16>, vector<8x768xf32> -> vector<8x768xf32>
    %c0_3 = arith.constant 0 : index
    %c0_4 = arith.constant 0 : index
    %3 = vector.load %arg3[%c0_3, %c0_4] : memref<1x768xf32, #tpu.memory_space<vmem>>, vector<1x768xf32>
    %4 = vector.broadcast %3 : vector<1x768xf32> to vector<8x768xf32>
    %5 = arith.addf %2, %4 : vector<8x768xf32>
    %c0_5 = arith.constant 0 : index
    %c0_6 = arith.constant 0 : index
    %6 = vector.load %arg2[%c0_5, %c0_6] : memref<256x768xbf16, #tpu.memory_space<vmem>>, vector<256x768xbf16>
    %c0_7 = arith.constant 0 : index
    %c0_8 = arith.constant 0 : index
    %7 = vector.load %arg4[%c0_7, %c0_8] : memref<1x768xf32, #tpu.memory_space<vmem>>, vector<1x768xf32>
    %cst_9 = arith.constant 0.000000e+00 : f32
    %8 = vector.broadcast %cst_9 : f32 to vector<2x256xf32>
    %9 = vector.extract_strided_slice %5 {offsets = [0, 0], sizes = [2, 768], strides = [1, 1]} : vector<8x768xf32> to vector<2x768xf32>
    %10 = arith.truncf %8 : vector<2x256xf32> to vector<2x256xbf16>
    %cst_10 = arith.constant dense<0.000000e+00> : vector<2x768xf32>
    %11 = tpu.matmul %10, %6, %cst_10 {dimension_numbers = #tpu.dot_dimension_numbers<[1], [0], [0], [1], [0, 0, 1, 1], [], []>} : vector<2x256xbf16>, vector<256x768xbf16>, vector<2x768xf32> -> vector<2x768xf32>
    %12 = vector.broadcast %7 : vector<1x768xf32> to vector<2x768xf32>
    %13 = arith.addf %11, %12 : vector<2x768xf32>
    %14 = vector.extract_strided_slice %9 {offsets = [0, 0], sizes = [2, 256], strides = [1, 1]} : vector<2x768xf32> to vector<2x256xf32>
    %15 = vector.extract_strided_slice %13 {offsets = [0, 0], sizes = [2, 256], strides = [1, 1]} : vector<2x768xf32> to vector<2x256xf32>
    %16 = arith.addf %14, %15 : vector<2x256xf32>
    %17 = arith.negf %16 : vector<2x256xf32>
    %18 = math.exp %17 : vector<2x256xf32>
    %cst_11 = arith.constant 1.000000e+00 : f32
    %19 = vector.broadcast %cst_11 : f32 to vector<2x256xf32>
    %20 = arith.addf %19, %18 : vector<2x256xf32>
    %21 = arith.divf %19, %20 : vector<2x256xf32>
    %22 = vector.extract_strided_slice %9 {offsets = [0, 256], sizes = [2, 256], strides = [1, 1]} : vector<2x768xf32> to vector<2x256xf32>
    %23 = vector.extract_strided_slice %13 {offsets = [0, 256], sizes = [2, 256], strides = [1, 1]} : vector<2x768xf32> to vector<2x256xf32>
    %24 = arith.addf %22, %23 : vector<2x256xf32>
    %25 = arith.negf %24 : vector<2x256xf32>
    %26 = math.exp %25 : vector<2x256xf32>
    %cst_12 = arith.constant 1.000000e+00 : f32
    %27 = vector.broadcast %cst_12 : f32 to vector<2x256xf32>
    %28 = arith.addf %27, %26 : vector<2x256xf32>
    %29 = arith.divf %27, %28 : vector<2x256xf32>
    %30 = vector.extract_strided_slice %9 {offsets = [0, 512], sizes = [2, 256], strides = [1, 1]} : vector<2x768xf32> to vector<2x256xf32>
    %31 = vector.extract_strided_slice %13 {offsets = [0, 512], sizes = [2, 256], strides = [1, 1]} : vector<2x768xf32> to vector<2x256xf32>
    %32 = arith.mulf %21, %31 : vector<2x256xf32>
    %33 = arith.addf %30, %32 : vector<2x256xf32>
    %34 = math.tanh %33 : vector<2x256xf32>
    %cst_13 = arith.constant 1.000000e+00 : f32
    %35 = vector.broadcast %cst_13 : f32 to vector<2x256xf32>
    %36 = arith.subf %35, %29 : vector<2x256xf32>
    %37 = arith.mulf %36, %34 : vector<2x256xf32>
    %38 = arith.mulf %29, %8 : vector<2x256xf32>
    %39 = arith.addf %37, %38 : vector<2x256xf32>
    %40 = vector.extract_strided_slice %5 {offsets = [2, 0], sizes = [2, 768], strides = [1, 1]} : vector<8x768xf32> to vector<2x768xf32>
    %41 = arith.truncf %39 : vector<2x256xf32> to vector<2x256xbf16>
    %cst_14 = arith.constant dense<0.000000e+00> : vector<2x768xf32>
    %42 = tpu.matmul %41, %6, %cst_14 {dimension_numbers = #tpu.dot_dimension_numbers<[1], [0], [0], [1], [0, 0, 1, 1], [], []>} : vector<2x256xbf16>, vector<256x768xbf16>, vector<2x768xf32> -> vector<2x768xf32>
    %43 = vector.broadcast %7 : vector<1x768xf32> to vector<2x768xf32>
    %44 = arith.addf %42, %43 : vector<2x768xf32>
    %45 = vector.extract_strided_slice %40 {offsets = [0, 0], sizes = [2, 256], strides = [1, 1]} : vector<2x768xf32> to vector<2x256xf32>
    %46 = vector.extract_strided_slice %44 {offsets = [0, 0], sizes = [2, 256], strides = [1, 1]} : vector<2x768xf32> to vector<2x256xf32>
    %47 = arith.addf %45, %46 : vector<2x256xf32>
    %48 = arith.negf %47 : vector<2x256xf32>
    %49 = math.exp %48 : vector<2x256xf32>
    %cst_15 = arith.constant 1.000000e+00 : f32
    %50 = vector.broadcast %cst_15 : f32 to vector<2x256xf32>
    %51 = arith.addf %50, %49 : vector<2x256xf32>
    %52 = arith.divf %50, %51 : vector<2x256xf32>
    %53 = vector.extract_strided_slice %40 {offsets = [0, 256], sizes = [2, 256], strides = [1, 1]} : vector<2x768xf32> to vector<2x256xf32>
    %54 = vector.extract_strided_slice %44 {offsets = [0, 256], sizes = [2, 256], strides = [1, 1]} : vector<2x768xf32> to vector<2x256xf32>
    %55 = arith.addf %53, %54 : vector<2x256xf32>
    %56 = arith.negf %55 : vector<2x256xf32>
    %57 = math.exp %56 : vector<2x256xf32>
    %cst_16 = arith.constant 1.000000e+00 : f32
    %58 = vector.broadcast %cst_16 : f32 to vector<2x256xf32>
    %59 = arith.addf %58, %57 : vector<2x256xf32>
    %60 = arith.divf %58, %59 : vector<2x256xf32>
    %61 = vector.extract_strided_slice %40 {offsets = [0, 512], sizes = [2, 256], strides = [1, 1]} : vector<2x768xf32> to vector<2x256xf32>
    %62 = vector.extract_strided_slice %44 {offsets = [0, 512], sizes = [2, 256], strides = [1, 1]} : vector<2x768xf32> to vector<2x256xf32>
    %63 = arith.mulf %52, %62 : vector<2x256xf32>
    %64 = arith.addf %61, %63 : vector<2x256xf32>
    %65 = math.tanh %64 : vector<2x256xf32>
    %cst_17 = arith.constant 1.000000e+00 : f32
    %66 = vector.broadcast %cst_17 : f32 to vector<2x256xf32>
    %67 = arith.subf %66, %60 : vector<2x256xf32>
    %68 = arith.mulf %67, %65 : vector<2x256xf32>
    %69 = arith.mulf %60, %39 : vector<2x256xf32>
    %70 = arith.addf %68, %69 : vector<2x256xf32>
    %71 = vector.extract_strided_slice %5 {offsets = [4, 0], sizes = [2, 768], strides = [1, 1]} : vector<8x768xf32> to vector<2x768xf32>
    %72 = arith.truncf %70 : vector<2x256xf32> to vector<2x256xbf16>
    %cst_18 = arith.constant dense<0.000000e+00> : vector<2x768xf32>
    %73 = tpu.matmul %72, %6, %cst_18 {dimension_numbers = #tpu.dot_dimension_numbers<[1], [0], [0], [1], [0, 0, 1, 1], [], []>} : vector<2x256xbf16>, vector<256x768xbf16>, vector<2x768xf32> -> vector<2x768xf32>
    %74 = vector.broadcast %7 : vector<1x768xf32> to vector<2x768xf32>
    %75 = arith.addf %73, %74 : vector<2x768xf32>
    %76 = vector.extract_strided_slice %71 {offsets = [0, 0], sizes = [2, 256], strides = [1, 1]} : vector<2x768xf32> to vector<2x256xf32>
    %77 = vector.extract_strided_slice %75 {offsets = [0, 0], sizes = [2, 256], strides = [1, 1]} : vector<2x768xf32> to vector<2x256xf32>
    %78 = arith.addf %76, %77 : vector<2x256xf32>
    %79 = arith.negf %78 : vector<2x256xf32>
    %80 = math.exp %79 : vector<2x256xf32>
    %cst_19 = arith.constant 1.000000e+00 : f32
    %81 = vector.broadcast %cst_19 : f32 to vector<2x256xf32>
    %82 = arith.addf %81, %80 : vector<2x256xf32>
    %83 = arith.divf %81, %82 : vector<2x256xf32>
    %84 = vector.extract_strided_slice %71 {offsets = [0, 256], sizes = [2, 256], strides = [1, 1]} : vector<2x768xf32> to vector<2x256xf32>
    %85 = vector.extract_strided_slice %75 {offsets = [0, 256], sizes = [2, 256], strides = [1, 1]} : vector<2x768xf32> to vector<2x256xf32>
    %86 = arith.addf %84, %85 : vector<2x256xf32>
    %87 = arith.negf %86 : vector<2x256xf32>
    %88 = math.exp %87 : vector<2x256xf32>
    %cst_20 = arith.constant 1.000000e+00 : f32
    %89 = vector.broadcast %cst_20 : f32 to vector<2x256xf32>
    %90 = arith.addf %89, %88 : vector<2x256xf32>
    %91 = arith.divf %89, %90 : vector<2x256xf32>
    %92 = vector.extract_strided_slice %71 {offsets = [0, 512], sizes = [2, 256], strides = [1, 1]} : vector<2x768xf32> to vector<2x256xf32>
    %93 = vector.extract_strided_slice %75 {offsets = [0, 512], sizes = [2, 256], strides = [1, 1]} : vector<2x768xf32> to vector<2x256xf32>
    %94 = arith.mulf %83, %93 : vector<2x256xf32>
    %95 = arith.addf %92, %94 : vector<2x256xf32>
    %96 = math.tanh %95 : vector<2x256xf32>
    %cst_21 = arith.constant 1.000000e+00 : f32
    %97 = vector.broadcast %cst_21 : f32 to vector<2x256xf32>
    %98 = arith.subf %97, %91 : vector<2x256xf32>
    %99 = arith.mulf %98, %96 : vector<2x256xf32>
    %100 = arith.mulf %91, %70 : vector<2x256xf32>
    %101 = arith.addf %99, %100 : vector<2x256xf32>
    %102 = vector.extract_strided_slice %5 {offsets = [6, 0], sizes = [2, 768], strides = [1, 1]} : vector<8x768xf32> to vector<2x768xf32>
    %103 = arith.truncf %101 : vector<2x256xf32> to vector<2x256xbf16>
    %cst_22 = arith.constant dense<0.000000e+00> : vector<2x768xf32>
    %104 = tpu.matmul %103, %6, %cst_22 {dimension_numbers = #tpu.dot_dimension_numbers<[1], [0], [0], [1], [0, 0, 1, 1], [], []>} : vector<2x256xbf16>, vector<256x768xbf16>, vector<2x768xf32> -> vector<2x768xf32>
    %105 = vector.broadcast %7 : vector<1x768xf32> to vector<2x768xf32>
    %106 = arith.addf %104, %105 : vector<2x768xf32>
    %107 = vector.extract_strided_slice %102 {offsets = [0, 0], sizes = [2, 256], strides = [1, 1]} : vector<2x768xf32> to vector<2x256xf32>
    %108 = vector.extract_strided_slice %106 {offsets = [0, 0], sizes = [2, 256], strides = [1, 1]} : vector<2x768xf32> to vector<2x256xf32>
    %109 = arith.addf %107, %108 : vector<2x256xf32>
    %110 = arith.negf %109 : vector<2x256xf32>
    %111 = math.exp %110 : vector<2x256xf32>
    %cst_23 = arith.constant 1.000000e+00 : f32
    %112 = vector.broadcast %cst_23 : f32 to vector<2x256xf32>
    %113 = arith.addf %112, %111 : vector<2x256xf32>
    %114 = arith.divf %112, %113 : vector<2x256xf32>
    %115 = vector.extract_strided_slice %102 {offsets = [0, 256], sizes = [2, 256], strides = [1, 1]} : vector<2x768xf32> to vector<2x256xf32>
    %116 = vector.extract_strided_slice %106 {offsets = [0, 256], sizes = [2, 256], strides = [1, 1]} : vector<2x768xf32> to vector<2x256xf32>
    %117 = arith.addf %115, %116 : vector<2x256xf32>
    %118 = arith.negf %117 : vector<2x256xf32>
    %119 = math.exp %118 : vector<2x256xf32>
    %cst_24 = arith.constant 1.000000e+00 : f32
    %120 = vector.broadcast %cst_24 : f32 to vector<2x256xf32>
    %121 = arith.addf %120, %119 : vector<2x256xf32>
    %122 = arith.divf %120, %121 : vector<2x256xf32>
    %123 = vector.extract_strided_slice %102 {offsets = [0, 512], sizes = [2, 256], strides = [1, 1]} : vector<2x768xf32> to vector<2x256xf32>
    %124 = vector.extract_strided_slice %106 {offsets = [0, 512], sizes = [2, 256], strides = [1, 1]} : vector<2x768xf32> to vector<2x256xf32>
    %125 = arith.mulf %114, %124 : vector<2x256xf32>
    %126 = arith.addf %123, %125 : vector<2x256xf32>
    %127 = math.tanh %126 : vector<2x256xf32>
    %cst_25 = arith.constant 1.000000e+00 : f32
    %128 = vector.broadcast %cst_25 : f32 to vector<2x256xf32>
    %129 = arith.subf %128, %122 : vector<2x256xf32>
    %130 = arith.mulf %129, %127 : vector<2x256xf32>
    %131 = arith.mulf %122, %101 : vector<2x256xf32>
    %132 = arith.addf %130, %131 : vector<2x256xf32>
    %c0_26 = arith.constant 0 : index
    %c0_27 = arith.constant 0 : index
    %133 = vector.load %arg5[%c0_26, %c0_27] : memref<256x5xf32, #tpu.memory_space<vmem>>, vector<256x5xf32>
    %cst_28 = arith.constant dense<0.000000e+00> : vector<2x5xf32>
    %134 = tpu.matmul %132, %133, %cst_28 {dimension_numbers = #tpu.dot_dimension_numbers<[1], [0], [0], [1], [0, 0, 1, 1], [], []>} : vector<2x256xf32>, vector<256x5xf32>, vector<2x5xf32> -> vector<2x5xf32>
    %c0_29 = arith.constant 0 : index
    %c0_30 = arith.constant 0 : index
    %135 = vector.load %arg6[%c0_29, %c0_30] : memref<1x5xf32, #tpu.memory_space<vmem>>, vector<1x5xf32>
    %136 = vector.broadcast %135 : vector<1x5xf32> to vector<2x5xf32>
    %137 = arith.addf %134, %136 : vector<2x5xf32>
    %138 = vector.extract_strided_slice %137 {offsets = [0, 0], sizes = [2, 4], strides = [1, 1]} : vector<2x5xf32> to vector<2x4xf32>
    %139 = vector.extract_strided_slice %137 {offsets = [0, 4], sizes = [2, 1], strides = [1, 1]} : vector<2x5xf32> to vector<2x1xf32>
    %140 = vector.broadcast %139 : vector<2x1xf32> to vector<2x4xf32>
    %141 = arith.addf %138, %140 : vector<2x4xf32>
    %cst_31 = arith.constant dense<0.000000e+00> : vector<2xf32>
    %142 = vector.multi_reduction <add>, %138, %cst_31 [1] : vector<2x4xf32> to vector<2xf32>
    %143 = vector.shape_cast %142 : vector<2xf32> to vector<2x1xf32>
    %cst_32 = arith.constant 4.000000e+00 : f32
    %144 = vector.broadcast %cst_32 : f32 to vector<2x1xf32>
    %145 = arith.divf %143, %144 : vector<2x1xf32>
    %146 = vector.broadcast %145 : vector<2x1xf32> to vector<2x4xf32>
    %147 = arith.subf %141, %146 : vector<2x4xf32>
    %c0_33 = arith.constant 0 : index
    %c0_34 = arith.constant 0 : index
    %148 = vector.load %arg7[%c0_33, %c0_34] : memref<2x4xf32, #tpu.memory_space<vmem>>, vector<2x4xf32>
    tpu.vector_store %arg7[%c0_33, %c0_34], %147 {strides = array<i32>} : memref<2x4xf32, #tpu.memory_space<vmem>>, vector<2x4xf32>,
    return
  }
}

</mosaic_0001>

<llo_original>
// kernel: _lambda_.4
$region0: #{_lambda_.4}
  #allocation0 [shape = 'u32[]', space=smem, size = 0x4, offset = 0x4, fixed_abs, tag = 'smem constant byte address 0x4 - core index']
  #allocation1 [shape = 'u32[144,128]{1,0:T(1,128)}', space=vmem, size = 0x12000, scoped, tag = 'internal scratch']
  %s0 = inlined_call_operand.vmem [shape: bf16[800,256], index: 0, kind: input, shape index: {}]
  %s1 = inlined_call_operand.vmem [shape: bf16[256,32], index: 1, kind: input, shape index: {}]
  %s2 = inlined_call_operand.vmem [shape: f32[1,32], index: 2, kind: input, shape index: {}]
  %s3 = inlined_call_operand.vmem [shape: bf16[800,32], index: 3, kind: output, shape index: {}]
  %s4 = sld [smem:[#allocation0]]
  $region22: #{_lambda_.4} parent=0
    _
  %s6 = ssub.s32 1, %s4
  %s7 = scalar_select 0, %s6, %s4
  // Predicated region
  $region2: #{_lambda_.4} parent=0 // pred_check
    _
  $region3: #{_lambda_.4} parent=0 // pred_check_branch
    %9 = sbr.rel (0) target = $region5
  $region4: #{_lambda_.4} parent=0 // pred_region
    _
  $region5: #{_lambda_.4} parent=0 // pred_fallthru
    _
  // Predicated region
  $region6: #{_lambda_.4} parent=0 // pred_check
    _
  $region7: #{_lambda_.4} parent=0 // pred_check_branch
    %11 = sbr.rel (0) target = $region9
  $region8: #{_lambda_.4} parent=0 // pred_region
    _
  $region9: #{_lambda_.4} parent=0 // pred_fallthru
    _
  // Predicated region
  $region10: #{_lambda_.4} parent=0 // pred_check
    _
  $region11: #{_lambda_.4} parent=0 // pred_check_branch
    %13 = sbr.rel (0) target = $region13
  $region12: #{_lambda_.4} parent=0 // pred_region
    _
  $region13: #{_lambda_.4} parent=0 // pred_fallthru
    _
  %v15 = vld [vmem:[%s0] sm:$0xff]
  %v16 = vld [vmem:[%s0 + $0x8] sm:$0xff]
  %v17 = vld [vmem:[%s0 + $0x10] sm:$0xff]
  %v18 = vld [vmem:[%s0 + $0x18] sm:$0xff]
  %v19 = vld [vmem:[%s0 + $0x20] sm:$0xff]
  %v20 = vld [vmem:[%s0 + $0x28] sm:$0xff]
  %v21 = vld [vmem:[%s0 + $0x30] sm:$0xff]
  %v22 = vld [vmem:[%s0 + $0x38] sm:$0xff]
  %v23 = vld [vmem:[%s0 + $0x40] sm:$0xff]
  %v24 = vld [vmem:[%s0 + $0x48] sm:$0xff]
  %v25 = vld [vmem:[%s0 + $0x50] sm:$0xff]
  %v26 = vld [vmem:[%s0 + $0x58] sm:$0xff]
  %v27 = vld [vmem:[%s0 + $0x60] sm:$0xff]
  %v28 = vld [vmem:[%s0 + $0x68] sm:$0xff]
  %v29 = vld [vmem:[%s0 + $0x70] sm:$0xff]
  %v30 = vld [vmem:[%s0 + $0x78] sm:$0xff]
  %v31 = vld [vmem:[%s0 + $0x80] sm:$0xff]
  %v32 = vld [vmem:[%s0 + $0x88] sm:$0xff]
  %v33 = vld [vmem:[%s0 + $0x90] sm:$0xff]
  %v34 = vld [vmem:[%s0 + $0x98] sm:$0xff]
  %v35 = vld [vmem:[%s0 + $0xa0] sm:$0xff]
  %v36 = vld [vmem:[%s0 + $0xa8] sm:$0xff]
  %v37 = vld [vmem:[%s0 + $0xb0] sm:$0xff]
  %v38 = vld [vmem:[%s0 + $0xb8] sm:$0xff]
  %v39 = vld [vmem:[%s0 + $0xc0] sm:$0xff]
  %v40 = vld [vmem:[%s0 + $0xc8] sm:$0xff]
  %v41 = vld [vmem:[%s0 + $0xd0] sm:$0xff]
  %v42 = vld [vmem:[%s0 + $0xd8] sm:$0xff]
  %v43 = vld [vmem:[%s0 + $0xe0] sm:$0xff]
  %v44 = vld [vmem:[%s0 + $0xe8] sm:$0xff]
  %v45 = vld [vmem:[%s0 + $0xf0] sm:$0xff]
  %v46 = vld [vmem:[%s0 + $0xf8] sm:$0xff]
  %v47 = vld [vmem:[%s0 + $0x100] sm:$0xff]
  %v48 = vld [vmem:[%s0 + $0x108] sm:$0xff]
  %v49 = vld [vmem:[%s0 + $0x110] sm:$0xff]
  %v50 = vld [vmem:[%s0 + $0x118] sm:$0xff]
  %v51 = vld [vmem:[%s0 + $0x120] sm:$0xff]
  %v52 = vld [vmem:[%s0 + $0x128] sm:$0xff]
  %v53 = vld [vmem:[%s0 + $0x130] sm:$0xff]
  %v54 = vld [vmem:[%s0 + $0x138] sm:$0xff]
  %v55 = vld [vmem:[%s0 + $0x140] sm:$0xff]
  %v56 = vld [vmem:[%s0 + $0x148] sm:$0xff]
  %v57 = vld [vmem:[%s0 + $0x150] sm:$0xff]
  %v58 = vld [vmem:[%s0 + $0x158] sm:$0xff]
  %v59 = vld [vmem:[%s0 + $0x160] sm:$0xff]
  %v60 = vld [vmem:[%s0 + $0x168] sm:$0xff]
  %v61 = vld [vmem:[%s0 + $0x170] sm:$0xff]
  %v62 = vld [vmem:[%s0 + $0x178] sm:$0xff]
  %v63 = vld [vmem:[%s0 + $0x180] sm:$0xff]
  %v64 = vld [vmem:[%s0 + $0x188] sm:$0xff]
  %v65 = vld [vmem:[%s0 + $0x190] sm:$0xff]
  %v66 = vld [vmem:[%s0 + $0x198] sm:$0xff]
  %v67 = vld [vmem:[%s0 + $0x1a0] sm:$0xff]
  %v68 = vld [vmem:[%s0 + $0x1a8] sm:$0xff]
  %v69 = vld [vmem:[%s0 + $0x1b0] sm:$0xff]
  %v70 = vld [vmem:[%s0 + $0x1b8] sm:$0xff]
  %v71 = vld [vmem:[%s0 + $0x1c0] sm:$0xff]
  %v72 = vld [vmem:[%s0 + $0x1c8] sm:$0xff]
  %v73 = vld [vmem:[%s0 + $0x1d0] sm:$0xff]
  %v74 = vld [vmem:[%s0 + $0x1d8] sm:$0xff]
  %v75 = vld [vmem:[%s0 + $0x1e0] sm:$0xff]
  %v76 = vld [vmem:[%s0 + $0x1e8] sm:$0xff]
  %v77 = vld [vmem:[%s0 + $0x1f0] sm:$0xff]
  %v78 = vld [vmem:[%s0 + $0x1f8] sm:$0xff]
  %v79 = vld [vmem:[%s0 + $0x200] sm:$0xff]
  %v80 = vld [vmem:[%s0 + $0x208] sm:$0xff]
  %v81 = vld [vmem:[%s0 + $0x210] sm:$0xff]
  %v82 = vld [vmem:[%s0 + $0x218] sm:$0xff]
  %v83 = vld [vmem:[%s0 + $0x220] sm:$0xff]
  %v84 = vld [vmem:[%s0 + $0x228] sm:$0xff]
  %v85 = vld [vmem:[%s0 + $0x230] sm:$0xff]
  %v86 = vld [vmem:[%s0 + $0x238] sm:$0xff]
  %v87 = vld [vmem:[%s0 + $0x240] sm:$0xff]
  %v88 = vld [vmem:[%s0 + $0x248] sm:$0xff]
  %v89 = vld [vmem:[%s0 + $0x250] sm:$0xff]
  %v90 = vld [vmem:[%s0 + $0x258] sm:$0xff]
  %v91 = vld [vmem:[%s0 + $0x260] sm:$0xff]
  %v92 = vld [vmem:[%s0 + $0x268] sm:$0xff]
  %v93 = vld [vmem:[%s0 + $0x270] sm:$0xff]
  %v94 = vld [vmem:[%s0 + $0x278] sm:$0xff]
  %v95 = vld [vmem:[%s0 + $0x280] sm:$0xff]
  %v96 = vld [vmem:[%s0 + $0x288] sm:$0xff]
  %v97 = vld [vmem:[%s0 + $0x290] sm:$0xff]
  %v98 = vld [vmem:[%s0 + $0x298] sm:$0xff]
  %v99 = vld [vmem:[%s0 + $0x2a0] sm:$0xff]
  %v100 = vld [vmem:[%s0 + $0x2a8] sm:$0xff]
  %v101 = vld [vmem:[%s0 + $0x2b0] sm:$0xff]
  %v102 = vld [vmem:[%s0 + $0x2b8] sm:$0xff]
  %v103 = vld [vmem:[%s0 + $0x2c0] sm:$0xff]
  %v104 = vld [vmem:[%s0 + $0x2c8] sm:$0xff]
  %v105 = vld [vmem:[%s0 + $0x2d0] sm:$0xff]
  %v106 = vld [vmem:[%s0 + $0x2d8] sm:$0xff]
  %v107 = vld [vmem:[%s0 + $0x2e0] sm:$0xff]
  %v108 = vld [vmem:[%s0 + $0x2e8] sm:$0xff]
  %v109 = vld [vmem:[%s0 + $0x2f0] sm:$0xff]
  %v110 = vld [vmem:[%s0 + $0x2f8] sm:$0xff]
  %v111 = vld [vmem:[%s0 + $0x300] sm:$0xff]
  %v112 = vld [vmem:[%s0 + $0x308] sm:$0xff]
  %v113 = vld [vmem:[%s0 + $0x310] sm:$0xff]
  %v114 = vld [vmem:[%s0 + $0x318] sm:$0xff]
  %v115 = vld [vmem:[%s1] sm:$0xf]
  %v116 = vld [vmem:[%s1 + $0x4] sm:$0xf]
  %v117 = vld [vmem:[%s1 + $0x8] sm:$0xf]
  %v118 = vld [vmem:[%s1 + $0xc] sm:$0xf]
  %v119 = vld [vmem:[%s1 + $0x10] sm:$0xf]
  %v120 = vld [vmem:[%s1 + $0x14] sm:$0xf]
  %v121 = vld [vmem:[%s1 + $0x18] sm:$0xf]
  %v122 = vld [vmem:[%s1 + $0x1c] sm:$0xf]
  %v123 = vld [vmem:[%s1 + $0x20] sm:$0xf]
  %v124 = vld [vmem:[%s1 + $0x24] sm:$0xf]
  %v125 = vld [vmem:[%s1 + $0x28] sm:$0xf]
  %v126 = vld [vmem:[%s1 + $0x2c] sm:$0xf]
  %v127 = vld [vmem:[%s1 + $0x30] sm:$0xf]
  %v128 = vld [vmem:[%s1 + $0x34] sm:$0xf]
  %v129 = vld [vmem:[%s1 + $0x38] sm:$0xf]
  %v130 = vld [vmem:[%s1 + $0x3c] sm:$0xf]
  %v131 = vld [vmem:[%s1 + $0x40] sm:$0xf]
  %v132 = vld [vmem:[%s1 + $0x44] sm:$0xf]
  %v133 = vld [vmem:[%s1 + $0x48] sm:$0xf]
  %v134 = vld [vmem:[%s1 + $0x4c] sm:$0xf]
  %v135 = vld [vmem:[%s1 + $0x50] sm:$0xf]
  %v136 = vld [vmem:[%s1 + $0x54] sm:$0xf]
  %v137 = vld [vmem:[%s1 + $0x58] sm:$0xf]
  %v138 = vld [vmem:[%s1 + $0x5c] sm:$0xf]
  %v139 = vld [vmem:[%s1 + $0x60] sm:$0xf]
  %v140 = vld [vmem:[%s1 + $0x64] sm:$0xf]
  %v141 = vld [vmem:[%s1 + $0x68] sm:$0xf]
  %v142 = vld [vmem:[%s1 + $0x6c] sm:$0xf]
  %v143 = vld [vmem:[%s1 + $0x70] sm:$0xf]
  %v144 = vld [vmem:[%s1 + $0x74] sm:$0xf]
  %v145 = vld [vmem:[%s1 + $0x78] sm:$0xf]
  %v146 = vld [vmem:[%s1 + $0x7c] sm:$0xf]
  %v147 = vld [vmem:[%s2] sm:$0x1]
  %v149 = vlaneseq
  %v150 = vshrl.u32 %v149, 7
  %v151 = vsub.s32 0, %v150
  %v152 = vrot.slane %v147, %v151
  %v254 = vunpack.c.l.b16 %v15
  %v255 = vunpack.c.h.b16 %v15
  %v256 = vunpack.c.l.b16 %v16
  %v257 = vunpack.c.h.b16 %v16
  %v258 = vunpack.c.l.b16 %v17
  %v259 = vunpack.c.h.b16 %v17
  %v260 = vunpack.c.l.b16 %v18
  %v261 = vunpack.c.h.b16 %v18
  %v262 = vunpack.c.l.b16 %v19
  %v263 = vunpack.c.h.b16 %v19
  %v264 = vunpack.c.l.b16 %v20
  %v265 = vunpack.c.h.b16 %v20
  %v266 = vunpack.c.l.b16 %v21
  %v267 = vunpack.c.h.b16 %v21
  %v268 = vunpack.c.l.b16 %v22
  %v269 = vunpack.c.h.b16 %v22
  %v270 = vunpack.c.l.b16 %v23
  %v271 = vunpack.c.h.b16 %v23
  %v272 = vunpack.c.l.b16 %v24
  %v273 = vunpack.c.h.b16 %v24
  %v274 = vunpack.c.l.b16 %v25
  %v275 = vunpack.c.h.b16 %v25
  %v276 = vunpack.c.l.b16 %v26
  %v277 = vunpack.c.h.b16 %v26
  %v278 = vunpack.c.l.b16 %v27
  %v279 = vunpack.c.h.b16 %v27
  %v280 = vunpack.c.l.b16 %v28
  %v281 = vunpack.c.h.b16 %v28
  %v282 = vunpack.c.l.b16 %v29
  %v283 = vunpack.c.h.b16 %v29
  %v284 = vunpack.c.l.b16 %v30
  %v285 = vunpack.c.h.b16 %v30
  %v286 = vunpack.c.l.b16 %v31
  %v287 = vunpack.c.h.b16 %v31
  %v288 = vunpack.c.l.b16 %v32
  %v289 = vunpack.c.h.b16 %v32
  %v290 = vunpack.c.l.b16 %v33
  %v291 = vunpack.c.h.b16 %v33
  %v292 = vunpack.c.l.b16 %v34
  %v293 = vunpack.c.h.b16 %v34
  %v294 = vunpack.c.l.b16 %v35
  %v295 = vunpack.c.h.b16 %v35
  %v296 = vunpack.c.l.b16 %v36
  %v297 = vunpack.c.h.b16 %v36
  %v298 = vunpack.c.l.b16 %v37
  %v299 = vunpack.c.h.b16 %v37
  %v300 = vunpack.c.l.b16 %v38
  %v301 = vunpack.c.h.b16 %v38
  %v302 = vunpack.c.l.b16 %v39
  %v303 = vunpack.c.h.b16 %v39
  %v304 = vunpack.c.l.b16 %v40
  %v305 = vunpack.c.h.b16 %v40
  %v306 = vunpack.c.l.b16 %v41
  %v307 = vunpack.c.h.b16 %v41
  %v308 = vunpack.c.l.b16 %v42
  %v309 = vunpack.c.h.b16 %v42
  %v310 = vunpack.c.l.b16 %v43
  %v311 = vunpack.c.h.b16 %v43
  %v312 = vunpack.c.l.b16 %v44
  %v313 = vunpack.c.h.b16 %v44
  %v314 = vunpack.c.l.b16 %v45
  %v315 = vunpack.c.h.b16 %v45
  %v316 = vunpack.c.l.b16 %v46
  %v317 = vunpack.c.h.b16 %v46
  %v318 = vunpack.c.l.b16 %v47
  %v319 = vunpack.c.h.b16 %v47
  %v320 = vunpack.c.l.b16 %v48
  %v321 = vunpack.c.h.b16 %v48
  %v322 = vunpack.c.l.b16 %v49
  %v323 = vunpack.c.h.b16 %v49
  %v324 = vunpack.c.l.b16 %v50
  %v325 = vunpack.c.h.b16 %v50
  %v326 = vunpack.c.l.b16 %v51
  %v327 = vunpack.c.h.b16 %v51
  %v328 = vunpack.c.l.b16 %v52
  %v329 = vunpack.c.h.b16 %v52
  %v330 = vunpack.c.l.b16 %v53
  %v331 = vunpack.c.h.b16 %v53
  %v332 = vunpack.c.l.b16 %v54
  %v333 = vunpack.c.h.b16 %v54
  %v334 = vunpack.c.l.b16 %v55
  %v335 = vunpack.c.h.b16 %v55
  %v336 = vunpack.c.l.b16 %v56
  %v337 = vunpack.c.h.b16 %v56
  %v338 = vunpack.c.l.b16 %v57
  %v339 = vunpack.c.h.b16 %v57
  %v340 = vunpack.c.l.b16 %v58
  %v341 = vunpack.c.h.b16 %v58
  %v342 = vunpack.c.l.b16 %v59
  %v343 = vunpack.c.h.b16 %v59
  %v344 = vunpack.c.l.b16 %v60
  %v345 = vunpack.c.h.b16 %v60
  %v346 = vunpack.c.l.b16 %v61
  %v347 = vunpack.c.h.b16 %v61
  %v348 = vunpack.c.l.b16 %v62
  %v349 = vunpack.c.h.b16 %v62
  %v350 = vunpack.c.l.b16 %v63
  %v351 = vunpack.c.h.b16 %v63
  %v352 = vunpack.c.l.b16 %v64
  %v353 = vunpack.c.h.b16 %v64
  %v354 = vunpack.c.l.b16 %v65
  %v355 = vunpack.c.h.b16 %v65
  %v356 = vunpack.c.l.b16 %v66
  %v357 = vunpack.c.h.b16 %v66
  %v358 = vunpack.c.l.b16 %v67
  %v359 = vunpack.c.h.b16 %v67
  %v360 = vunpack.c.l.b16 %v68
  %v361 = vunpack.c.h.b16 %v68
  %v362 = vunpack.c.l.b16 %v69
  %v363 = vunpack.c.h.b16 %v69
  %v364 = vunpack.c.l.b16 %v70
  %v365 = vunpack.c.h.b16 %v70
  %v366 = vunpack.c.l.b16 %v71
  %v367 = vunpack.c.h.b16 %v71
  %v368 = vunpack.c.l.b16 %v72
  %v369 = vunpack.c.h.b16 %v72
  %v370 = vunpack.c.l.b16 %v73
  %v371 = vunpack.c.h.b16 %v73
  %v372 = vunpack.c.l.b16 %v74
  %v373 = vunpack.c.h.b16 %v74
  %v374 = vunpack.c.l.b16 %v75
  %v375 = vunpack.c.h.b16 %v75
  %v376 = vunpack.c.l.b16 %v76
  %v377 = vunpack.c.h.b16 %v76
  %v378 = vunpack.c.l.b16 %v77
  %v379 = vunpack.c.h.b16 %v77
  %v380 = vunpack.c.l.b16 %v78
  %v381 = vunpack.c.h.b16 %v78
  %v382 = vunpack.c.l.b16 %v79
  %v383 = vunpack.c.h.b16 %v79
  %v384 = vunpack.c.l.b16 %v80
  %v385 = vunpack.c.h.b16 %v80
  %v386 = vunpack.c.l.b16 %v81
  %v387 = vunpack.c.h.b16 %v81
  %v388 = vunpack.c.l.b16 %v82
  %v389 = vunpack.c.h.b16 %v82
  %v390 = vunpack.c.l.b16 %v83
  %v391 = vunpack.c.h.b16 %v83
  %v392 = vunpack.c.l.b16 %v84
  %v393 = vunpack.c.h.b16 %v84
  %v394 = vunpack.c.l.b16 %v85
  %v395 = vunpack.c.h.b16 %v85
  %v396 = vunpack.c.l.b16 %v86
  %v397 = vunpack.c.h.b16 %v86
  %v398 = vunpack.c.l.b16 %v87
  %v399 = vunpack.c.h.b16 %v87
  %v400 = vunpack.c.l.b16 %v88
  %v401 = vunpack.c.h.b16 %v88
  %v402 = vunpack.c.l.b16 %v89
  %v403 = vunpack.c.h.b16 %v89
  %v404 = vunpack.c.l.b16 %v90
  %v405 = vunpack.c.h.b16 %v90
  %v406 = vunpack.c.l.b16 %v91
  %v407 = vunpack.c.h.b16 %v91
  %v408 = vunpack.c.l.b16 %v92
  %v409 = vunpack.c.h.b16 %v92
  %v410 = vunpack.c.l.b16 %v93
  %v411 = vunpack.c.h.b16 %v93
  %v412 = vunpack.c.l.b16 %v94
  %v413 = vunpack.c.h.b16 %v94
  %v414 = vunpack.c.l.b16 %v95
  %v415 = vunpack.c.h.b16 %v95
  %v416 = vunpack.c.l.b16 %v96
  %v417 = vunpack.c.h.b16 %v96
  %v418 = vunpack.c.l.b16 %v97
  %v419 = vunpack.c.h.b16 %v97
  %v420 = vunpack.c.l.b16 %v98
  %v421 = vunpack.c.h.b16 %v98
  %v422 = vunpack.c.l.b16 %v99
  %v423 = vunpack.c.h.b16 %v99
  %v424 = vunpack.c.l.b16 %v100
  %v425 = vunpack.c.h.b16 %v100
  %v426 = vunpack.c.l.b16 %v101
  %v427 = vunpack.c.h.b16 %v101
  %v428 = vunpack.c.l.b16 %v102
  %v429 = vunpack.c.h.b16 %v102
  %v430 = vunpack.c.l.b16 %v103
  %v431 = vunpack.c.h.b16 %v103
  %v432 = vunpack.c.l.b16 %v104
  %v433 = vunpack.c.h.b16 %v104
  %v434 = vunpack.c.l.b16 %v105
  %v435 = vunpack.c.h.b16 %v105
  %v436 = vunpack.c.l.b16 %v106
  %v437 = vunpack.c.h.b16 %v106
  %v438 = vunpack.c.l.b16 %v107
  %v439 = vunpack.c.h.b16 %v107
  %v440 = vunpack.c.l.b16 %v108
  %v441 = vunpack.c.h.b16 %v108
  %v442 = vunpack.c.l.b16 %v109
  %v443 = vunpack.c.h.b16 %v109
  %v444 = vunpack.c.l.b16 %v110
  %v445 = vunpack.c.h.b16 %v110
  %v446 = vunpack.c.l.b16 %v111
  %v447 = vunpack.c.h.b16 %v111
  %v448 = vunpack.c.l.b16 %v112
  %v449 = vunpack.c.h.b16 %v112
  %v450 = vunpack.c.l.b16 %v113
  %v451 = vunpack.c.h.b16 %v113
  %v452 = vunpack.c.l.b16 %v114
  %v453 = vunpack.c.h.b16 %v114
  %v454 = vpack.c.b16 %v256, %v254
  %v455 = vpack.c.b16 %v257, %v255
  %v456 = vpack.c.b16 %v260, %v258
  %v457 = vpack.c.b16 %v261, %v259
  %v458 = vpack.c.b16 %v264, %v262
  %v459 = vpack.c.b16 %v265, %v263
  %v460 = vpack.c.b16 %v268, %v266
  %v461 = vpack.c.b16 %v269, %v267
  %v462 = vpack.c.b16 %v272, %v270
  %v463 = vpack.c.b16 %v273, %v271
  %v464 = vpack.c.b16 %v276, %v274
  %v465 = vpack.c.b16 %v277, %v275
  %v466 = vpack.c.b16 %v280, %v278
  %v467 = vpack.c.b16 %v281, %v279
  %v468 = vpack.c.b16 %v284, %v282
  %v469 = vpack.c.b16 %v285, %v283
  %v470 = vpack.c.b16 %v288, %v286
  %v471 = vpack.c.b16 %v289, %v287
  %v472 = vpack.c.b16 %v292, %v290
  %v473 = vpack.c.b16 %v293, %v291
  %v474 = vpack.c.b16 %v296, %v294
  %v475 = vpack.c.b16 %v297, %v295
  %v476 = vpack.c.b16 %v300, %v298
  %v477 = vpack.c.b16 %v301, %v299
  %v478 = vpack.c.b16 %v304, %v302
  %v479 = vpack.c.b16 %v305, %v303
  %v480 = vpack.c.b16 %v308, %v306
  %v481 = vpack.c.b16 %v309, %v307
  %v482 = vpack.c.b16 %v312, %v310
  %v483 = vpack.c.b16 %v313, %v311
  %v484 = vpack.c.b16 %v316, %v314
  %v485 = vpack.c.b16 %v317, %v315
  %v486 = vpack.c.b16 %v320, %v318
  %v487 = vpack.c.b16 %v321, %v319
  %v488 = vpack.c.b16 %v324, %v322
  %v489 = vpack.c.b16 %v325, %v323
  %v490 = vpack.c.b16 %v328, %v326
  %v491 = vpack.c.b16 %v329, %v327
  %v492 = vpack.c.b16 %v332, %v330
  %v493 = vpack.c.b16 %v333, %v331
  %v494 = vpack.c.b16 %v336, %v334
  %v495 = vpack.c.b16 %v337, %v335
  %v496 = vpack.c.b16 %v340, %v338
  %v497 = vpack.c.b16 %v341, %v339
  %v498 = vpack.c.b16 %v344, %v342
  %v499 = vpack.c.b16 %v345, %v343
  %v500 = vpack.c.b16 %v348, %v346
  %v501 = vpack.c.b16 %v349, %v347
  %v502 = vpack.c.b16 %v352, %v350
  %v503 = vpack.c.b16 %v353, %v351
  %v504 = vpack.c.b16 %v356, %v354
  %v505 = vpack.c.b16 %v357, %v355
  %v506 = vpack.c.b16 %v360, %v358
  %v507 = vpack.c.b16 %v361, %v359
  %v508 = vpack.c.b16 %v364, %v362
  %v509 = vpack.c.b16 %v365, %v363
  %v510 = vpack.c.b16 %v368, %v366
  %v511 = vpack.c.b16 %v369, %v367
  %v512 = vpack.c.b16 %v372, %v370
  %v513 = vpack.c.b16 %v373, %v371
  %v514 = vpack.c.b16 %v376, %v374
  %v515 = vpack.c.b16 %v377, %v375
  %v516 = vpack.c.b16 %v380, %v378
  %v517 = vpack.c.b16 %v381, %v379
  %v518 = vpack.c.b16 %v384, %v382
  %v519 = vpack.c.b16 %v385, %v383
  %v520 = vpack.c.b16 %v388, %v386
  %v521 = vpack.c.b16 %v389, %v387
  %v522 = vpack.c.b16 %v392, %v390
  %v523 = vpack.c.b16 %v393, %v391
  %v524 = vpack.c.b16 %v396, %v394
  %v525 = vpack.c.b16 %v397, %v395
  %v526 = vpack.c.b16 %v400, %v398
  %v527 = vpack.c.b16 %v401, %v399
  %v528 = vpack.c.b16 %v404, %v402
  %v529 = vpack.c.b16 %v405, %v403
  %v530 = vpack.c.b16 %v408, %v406
  %v531 = vpack.c.b16 %v409, %v407
  %v532 = vpack.c.b16 %v412, %v410
  %v533 = vpack.c.b16 %v413, %v411
  %v534 = vpack.c.b16 %v416, %v414
  %v535 = vpack.c.b16 %v417, %v415
  %v536 = vpack.c.b16 %v420, %v418
  %v537 = vpack.c.b16 %v421, %v419
  %v538 = vpack.c.b16 %v424, %v422
  %v539 = vpack.c.b16 %v425, %v423
  %v540 = vpack.c.b16 %v428, %v426
  %v541 = vpack.c.b16 %v429, %v427
  %v542 = vpack.c.b16 %v432, %v430
  %v543 = vpack.c.b16 %v433, %v431
  %v544 = vpack.c.b16 %v436, %v434
  %v545 = vpack.c.b16 %v437, %v435
  %v546 = vpack.c.b16 %v440, %v438
  %v547 = vpack.c.b16 %v441, %v439
  %v548 = vpack.c.b16 %v444, %v442
  %v549 = vpack.c.b16 %v445, %v443
  %v550 = vpack.c.b16 %v448, %v446
  %v551 = vpack.c.b16 %v449, %v447
  %v552 = vpack.c.b16 %v452, %v450
  %v553 = vpack.c.b16 %v453, %v451
  %v686 = vunpack.c.l.b16 %v115
  %v687 = vunpack.c.l.b16 %v116
  %v688 = vunpack.c.l.b16 %v117
  %v689 = vunpack.c.l.b16 %v118
  %v690 = vunpack.c.l.b16 %v119
  %v691 = vunpack.c.l.b16 %v120
  %v692 = vunpack.c.l.b16 %v121
  %v693 = vunpack.c.l.b16 %v122
  %v694 = vunpack.c.l.b16 %v123
  %v695 = vunpack.c.l.b16 %v124
  %v696 = vunpack.c.l.b16 %v125
  %v697 = vunpack.c.l.b16 %v126
  %v698 = vunpack.c.l.b16 %v127
  %v699 = vunpack.c.l.b16 %v128
  %v700 = vunpack.c.l.b16 %v129
  %v701 = vunpack.c.l.b16 %v130
  %v702 = vunpack.c.l.b16 %v131
  %v703 = vunpack.c.l.b16 %v132
  %v704 = vunpack.c.l.b16 %v133
  %v705 = vunpack.c.l.b16 %v134
  %v706 = vunpack.c.l.b16 %v135
  %v707 = vunpack.c.l.b16 %v136
  %v708 = vunpack.c.l.b16 %v137
  %v709 = vunpack.c.l.b16 %v138
  %v710 = vunpack.c.l.b16 %v139
  %v711 = vunpack.c.l.b16 %v140
  %v712 = vunpack.c.l.b16 %v141
  %v713 = vunpack.c.l.b16 %v142
  %v714 = vunpack.c.l.b16 %v143
  %v715 = vunpack.c.l.b16 %v144
  %v716 = vunpack.c.l.b16 %v145
  %v717 = vunpack.c.l.b16 %v146
  %v718 = vpack.c.b16 %v687, %v686
  %v719 = vpack.c.b16 %v689, %v688
  %v720 = vpack.c.b16 %v691, %v690
  %v721 = vpack.c.b16 %v693, %v692
  %v722 = vpack.c.b16 %v695, %v694
  %v723 = vpack.c.b16 %v697, %v696
  %v724 = vpack.c.b16 %v699, %v698
  %v725 = vpack.c.b16 %v701, %v700
  %v726 = vpack.c.b16 %v703, %v702
  %v727 = vpack.c.b16 %v705, %v704
  %v728 = vpack.c.b16 %v707, %v706
  %v729 = vpack.c.b16 %v709, %v708
  %v730 = vpack.c.b16 %v711, %v710
  %v731 = vpack.c.b16 %v713, %v712
  %v732 = vpack.c.b16 %v715, %v714
  %v733 = vpack.c.b16 %v717, %v716
  %750 = vmatprep.subr.bf16.mxu0 0
  %751 = vmatpush1.bf16.msra.mxu0 %v718
  %752 = vmatprep.subr.bf16.mxu0 0
  %753 = vmatpush1.bf16.msra.mxu0 %v719
  %754 = vmatprep.subr.bf16.mxu0 0
  %755 = vmatpush1.bf16.msra.mxu0 %v720
  %756 = vmatprep.subr.bf16.mxu0 0
  %757 = vmatpush1.bf16.msra.mxu0 %v721
  %758 = vmatprep.subr.bf16.mxu0 0
  %759 = vmatpush1.bf16.msra.mxu0 %v722
  %760 = vmatprep.subr.bf16.mxu0 0
  %761 = vmatpush1.bf16.msra.mxu0 %v723
  %762 = vmatprep.subr.bf16.mxu0 0
  %763 = vmatpush1.bf16.msra.mxu0 %v724
  %764 = vmatprep.subr.bf16.mxu0 0
  %765 = vmatpush1.bf16.msra.mxu0 %v725
  %766 = vmatprep.subr.bf16.mxu0 0
  %767 = vmatpush1.bf16.msra.mxu0 %v726
  %768 = vmatprep.subr.bf16.mxu0 0
  %769 = vmatpush1.bf16.msra.mxu0 %v727
  %770 = vmatprep.subr.bf16.mxu0 0
  %771 = vmatpush1.bf16.msra.mxu0 %v728
  %772 = vmatprep.subr.bf16.mxu0 0
  %773 = vmatpush1.bf16.msra.mxu0 %v729
  %774 = vmatprep.subr.bf16.mxu0 0
  %775 = vmatpush1.bf16.msra.mxu0 %v730
  %776 = vmatprep.subr.bf16.mxu0 0
  %777 = vmatpush1.bf16.msra.mxu0 %v731
  %778 = vmatprep.subr.bf16.mxu0 0
  %779 = vmatpush1.bf16.msra.mxu0 %v732
  %780 = vmatprep.subr.bf16.mxu0 0
  %781 = vmatpush1.bf16.msra.mxu0 %v733
  %782 = vmatprep.mubr.bf16.mxu0 %v455
  %783 = vmatmul.mubr.bf16.gmra.mrb[0].mxu0 %v454
  %v784 = vpop.f32.mrb[0].mxu0
  %v785 = vadd.f32 %v152, %v784
  %v786 = vpop.f32.mrb[0].mxu0
  %v787 = vpop.f32.mrb[0].mxu0
  %v788 = vadd.f32 %v152, %v787
  %v789 = vpop.f32.mrb[0].mxu0
  %790 = vmatprep.mubr.bf16.mxu0 %v457
  %791 = vmatmul.mubr.bf16.gmra.mrb[0].mxu0 %v456
  %v792 = vpop.f32.mrb[0].mxu0
  %v793 = vadd.f32 %v152, %v792
  %v794 = vpop.f32.mrb[0].mxu0
  %v795 = vpop.f32.mrb[0].mxu0
  %v796 = vadd.f32 %v152, %v795
  %v797 = vpop.f32.mrb[0].mxu0
  %798 = vmatprep.mubr.bf16.mxu0 %v459
  %799 = vmatmul.mubr.bf16.gmra.mrb[0].mxu0 %v458
  %v800 = vpop.f32.mrb[0].mxu0
  %v801 = vadd.f32 %v152, %v800
  %v802 = vpop.f32.mrb[0].mxu0
  %v803 = vpop.f32.mrb[0].mxu0
  %v804 = vadd.f32 %v152, %v803
  %v805 = vpop.f32.mrb[0].mxu0
  %806 = vmatprep.mubr.bf16.mxu0 %v461
  %807 = vmatmul.mubr.bf16.gmra.mrb[0].mxu0 %v460
  %v808 = vpop.f32.mrb[0].mxu0
  %v809 = vadd.f32 %v152, %v808
  %v810 = vpop.f32.mrb[0].mxu0
  %v811 = vpop.f32.mrb[0].mxu0
  %v812 = vadd.f32 %v152, %v811
  %v813 = vpop.f32.mrb[0].mxu0
  %814 = vmatprep.mubr.bf16.mxu0 %v463
  %815 = vmatmul.mubr.bf16.gmra.mrb[0].mxu0 %v462
  %v816 = vpop.f32.mrb[0].mxu0
  %v817 = vadd.f32 %v152, %v816
  %v818 = vpop.f32.mrb[0].mxu0
  %v819 = vpop.f32.mrb[0].mxu0
  %v820 = vadd.f32 %v152, %v819
  %v821 = vpop.f32.mrb[0].mxu0
  %822 = vmatprep.mubr.bf16.mxu0 %v465
  %823 = vmatmul.mubr.bf16.gmra.mrb[0].mxu0 %v464
  %v824 = vpop.f32.mrb[0].mxu0
  %v825 = vadd.f32 %v152, %v824
  %v826 = vpop.f32.mrb[0].mxu0
  %v827 = vpop.f32.mrb[0].mxu0
  %v828 = vadd.f32 %v152, %v827
  %v829 = vpop.f32.mrb[0].mxu0
  %830 = vmatprep.mubr.bf16.mxu0 %v467
  %831 = vmatmul.mubr.bf16.gmra.mrb[0].mxu0 %v466
  %v832 = vpop.f32.mrb[0].mxu0
  %v833 = vadd.f32 %v152, %v832
  %v834 = vpop.f32.mrb[0].mxu0
  %v835 = vpop.f32.mrb[0].mxu0
  %v836 = vadd.f32 %v152, %v835
  %v837 = vpop.f32.mrb[0].mxu0
  %838 = vmatprep.mubr.bf16.mxu0 %v469
  %839 = vmatmul.mubr.bf16.gmra.mrb[0].mxu0 %v468
  %v840 = vpop.f32.mrb[0].mxu0
  %v841 = vadd.f32 %v152, %v840
  %v842 = vpop.f32.mrb[0].mxu0
  %v843 = vpop.f32.mrb[0].mxu0
  %v844 = vadd.f32 %v152, %v843
  %v845 = vpop.f32.mrb[0].mxu0
  %846 = vmatprep.mubr.bf16.mxu0 %v471
  %847 = vmatmul.mubr.bf16.gmra.mrb[0].mxu0 %v470
  %v848 = vpop.f32.mrb[0].mxu0
  %v849 = vadd.f32 %v152, %v848
  %v850 = vpop.f32.mrb[0].mxu0
  %v851 = vpop.f32.mrb[0].mxu0
  %v852 = vadd.f32 %v152, %v851
  %v853 = vpop.f32.mrb[0].mxu0
  %854 = vmatprep.mubr.bf16.mxu0 %v473
  %855 = vmatmul.mubr.bf16.gmra.mrb[0].mxu0 %v472
  %v856 = vpop.f32.mrb[0].mxu0
  %v857 = vadd.f32 %v152, %v856
  %v858 = vpop.f32.mrb[0].mxu0
  %v859 = vpop.f32.mrb[0].mxu0
  %v860 = vadd.f32 %v152, %v859
  %v861 = vpop.f32.mrb[0].mxu0
  %862 = vmatprep.mubr.bf16.mxu0 %v475
  %863 = vmatmul.mubr.bf16.gmra.mrb[0].mxu0 %v474
  %v864 = vpop.f32.mrb[0].mxu0
  %v865 = vadd.f32 %v152, %v864
  %v866 = vpop.f32.mrb[0].mxu0
  %v867 = vpop.f32.mrb[0].mxu0
  %v868 = vadd.f32 %v152, %v867
  %v869 = vpop.f32.mrb[0].mxu0
  %870 = vmatprep.mubr.bf16.mxu0 %v477
  %871 = vmatmul.mubr.bf16.gmra.mrb[0].mxu0 %v476
  %v872 = vpop.f32.mrb[0].mxu0
  %v873 = vadd.f32 %v152, %v872
  %v874 = vpop.f32.mrb[0].mxu0
  %v875 = vpop.f32.mrb[0].mxu0
  %v876 = vadd.f32 %v152, %v875
  %v877 = vpop.f32.mrb[0].mxu0
  %878 = vmatprep.mubr.bf16.mxu0 %v479
  %879 = vmatmul.mubr.bf16.gmra.mrb[0].mxu0 %v478
  %v880 = vpop.f32.mrb[0].mxu0
  %v881 = vadd.f32 %v152, %v880
  %v882 = vpop.f32.mrb[0].mxu0
  %v883 = vpop.f32.mrb[0].mxu0
  %v884 = vadd.f32 %v152, %v883
  %v885 = vpop.f32.mrb[0].mxu0
  %886 = vmatprep.mubr.bf16.mxu0 %v481
  %887 = vmatmul.mubr.bf16.gmra.mrb[0].mxu0 %v480
  %v888 = vpop.f32.mrb[0].mxu0
  %v889 = vadd.f32 %v152, %v888
  %v890 = vpop.f32.mrb[0].mxu0
  %v891 = vpop.f32.mrb[0].mxu0
  %v892 = vadd.f32 %v152, %v891
  %v893 = vpop.f32.mrb[0].mxu0
  %894 = vmatprep.mubr.bf16.mxu0 %v483
  %895 = vmatmul.mubr.bf16.gmra.mrb[0].mxu0 %v482
  %v896 = vpop.f32.mrb[0].mxu0
  %v897 = vadd.f32 %v152, %v896
  %v898 = vpop.f32.mrb[0].mxu0
  %v899 = vpop.f32.mrb[0].mxu0
  %v900 = vadd.f32 %v152, %v899
  %v901 = vpop.f32.mrb[0].mxu0
  %902 = vmatprep.mubr.bf16.mxu0 %v485
  %903 = vmatmul.mubr.bf16.gmra.mrb[0].mxu0 %v484
  %v904 = vpop.f32.mrb[0].mxu0
  %v905 = vadd.f32 %v152, %v904
  %v906 = vpop.f32.mrb[0].mxu0
  %v907 = vpop.f32.mrb[0].mxu0
  %v908 = vadd.f32 %v152, %v907
  %v909 = vpop.f32.mrb[0].mxu0
  %910 = vmatprep.mubr.bf16.mxu0 %v487
  %911 = vmatmul.mubr.bf16.gmra.mrb[0].mxu0 %v486
  %v912 = vpop.f32.mrb[0].mxu0
  %v913 = vadd.f32 %v152, %v912
  %v914 = vpop.f32.mrb[0].mxu0
  %v915 = vpop.f32.mrb[0].mxu0
  %v916 = vadd.f32 %v152, %v915
  %v917 = vpop.f32.mrb[0].mxu0
  %918 = vmatprep.mubr.bf16.mxu0 %v489
  %919 = vmatmul.mubr.bf16.gmra.mrb[0].mxu0 %v488
  %v920 = vpop.f32.mrb[0].mxu0
  %v921 = vadd.f32 %v152, %v920
  %v922 = vpop.f32.mrb[0].mxu0
  %v923 = vpop.f32.mrb[0].mxu0
  %v924 = vadd.f32 %v152, %v923
  %v925 = vpop.f32.mrb[0].mxu0
  %926 = vmatprep.mubr.bf16.mxu0 %v491
  %927 = vmatmul.mubr.bf16.gmra.mrb[0].mxu0 %v490
  %v928 = vpop.f32.mrb[0].mxu0
  %v929 = vadd.f32 %v152, %v928
  %v930 = vpop.f32.mrb[0].mxu0
  %v931 = vpop.f32.mrb[0].mxu0
  %v932 = vadd.f32 %v152, %v931
  %v933 = vpop.f32.mrb[0].mxu0
  %934 = vmatprep.mubr.bf16.mxu0 %v493
  %935 = vmatmul.mubr.bf16.gmra.mrb[0].mxu0 %v492
  %v936 = vpop.f32.mrb[0].mxu0
  %v937 = vadd.f32 %v152, %v936
  %v938 = vpop.f32.mrb[0].mxu0
  %v939 = vpop.f32.mrb[0].mxu0
  %v940 = vadd.f32 %v152, %v939
  %v941 = vpop.f32.mrb[0].mxu0
  %942 = vmatprep.mubr.bf16.mxu0 %v495
  %943 = vmatmul.mubr.bf16.gmra.mrb[0].mxu0 %v494
  %v944 = vpop.f32.mrb[0].mxu0
  %v945 = vadd.f32 %v152, %v944
  %v946 = vpop.f32.mrb[0].mxu0
  %v947 = vpop.f32.mrb[0].mxu0
  %v948 = vadd.f32 %v152, %v947
  %v949 = vpop.f32.mrb[0].mxu0
  %950 = vmatprep.mubr.bf16.mxu0 %v497
  %951 = vmatmul.mubr.bf16.gmra.mrb[0].mxu0 %v496
  %v952 = vpop.f32.mrb[0].mxu0
  %v953 = vadd.f32 %v152, %v952
  %v954 = vpop.f32.mrb[0].mxu0
  %v955 = vpop.f32.mrb[0].mxu0
  %v956 = vadd.f32 %v152, %v955
  %v957 = vpop.f32.mrb[0].mxu0
  %958 = vmatprep.mubr.bf16.mxu0 %v499
  %959 = vmatmul.mubr.bf16.gmra.mrb[0].mxu0 %v498
  %v960 = vpop.f32.mrb[0].mxu0
  %v961 = vadd.f32 %v152, %v960
  %v962 = vpop.f32.mrb[0].mxu0
  %v963 = vpop.f32.mrb[0].mxu0
  %v964 = vadd.f32 %v152, %v963
  %v965 = vpop.f32.mrb[0].mxu0
  %966 = vmatprep.mubr.bf16.mxu0 %v501
  %967 = vmatmul.mubr.bf16.gmra.mrb[0].mxu0 %v500
  %v968 = vpop.f32.mrb[0].mxu0
  %v969 = vadd.f32 %v152, %v968
  %v970 = vpop.f32.mrb[0].mxu0
  %v971 = vpop.f32.mrb[0].mxu0
  %v972 = vadd.f32 %v152, %v971
  %v973 = vpop.f32.mrb[0].mxu0
  %974 = vmatprep.mubr.bf16.mxu0 %v503
  %975 = vmatmul.mubr.bf16.gmra.mrb[0].mxu0 %v502
  %v976 = vpop.f32.mrb[0].mxu0
  %v977 = vadd.f32 %v152, %v976
  %v978 = vpop.f32.mrb[0].mxu0
  %v979 = vpop.f32.mrb[0].mxu0
  %v980 = vadd.f32 %v152, %v979
  %v981 = vpop.f32.mrb[0].mxu0
  %982 = vmatprep.mubr.bf16.mxu0 %v505
  %983 = vmatmul.mubr.bf16.gmra.mrb[0].mxu0 %v504
  %v984 = vpop.f32.mrb[0].mxu0
  %v985 = vadd.f32 %v152, %v984
  %v986 = vpop.f32.mrb[0].mxu0
  %v987 = vpop.f32.mrb[0].mxu0
  %v988 = vadd.f32 %v152, %v987
  %v989 = vpop.f32.mrb[0].mxu0
  %990 = vmatprep.mubr.bf16.mxu0 %v507
  %991 = vmatmul.mubr.bf16.gmra.mrb[0].mxu0 %v506
  %v992 = vpop.f32.mrb[0].mxu0
  %v993 = vadd.f32 %v152, %v992
  %v994 = vpop.f32.mrb[0].mxu0
  %v995 = vpop.f32.mrb[0].mxu0
  %v996 = vadd.f32 %v152, %v995
  %v997 = vpop.f32.mrb[0].mxu0
  %998 = vmatprep.mubr.bf16.mxu0 %v509
  %999 = vmatmul.mubr.bf16.gmra.mrb[0].mxu0 %v508
  %v1000 = vpop.f32.mrb[0].mxu0
  %v1001 = vadd.f32 %v152, %v1000
  %v1002 = vpop.f32.mrb[0].mxu0
  %v1003 = vpop.f32.mrb[0].mxu0
  %v1004 = vadd.f32 %v152, %v1003
  %v1005 = vpop.f32.mrb[0].mxu0
  %1006 = vmatprep.mubr.bf16.mxu0 %v511
  %1007 = vmatmul.mubr.bf16.gmra.mrb[0].mxu0 %v510
  %v1008 = vpop.f32.mrb[0].mxu0
  %v1009 = vadd.f32 %v152, %v1008
  %v1010 = vpop.f32.mrb[0].mxu0
  %v1011 = vpop.f32.mrb[0].mxu0
  %v1012 = vadd.f32 %v152, %v1011
  %v1013 = vpop.f32.mrb[0].mxu0
  %1014 = vmatprep.mubr.bf16.mxu0 %v513
  %1015 = vmatmul.mubr.bf16.gmra.mrb[0].mxu0 %v512
  %v1016 = vpop.f32.mrb[0].mxu0
  %v1017 = vadd.f32 %v152, %v1016
  %v1018 = vpop.f32.mrb[0].mxu0
  %v1019 = vpop.f32.mrb[0].mxu0
  %v1020 = vadd.f32 %v152, %v1019
  %v1021 = vpop.f32.mrb[0].mxu0
  %1022 = vmatprep.mubr.bf16.mxu0 %v515
  %1023 = vmatmul.mubr.bf16.gmra.mrb[0].mxu0 %v514
  %v1024 = vpop.f32.mrb[0].mxu0
  %v1025 = vadd.f32 %v152, %v1024
  %v1026 = vpop.f32.mrb[0].mxu0
  %v1027 = vpop.f32.mrb[0].mxu0
  %v1028 = vadd.f32 %v152, %v1027
  %v1029 = vpop.f32.mrb[0].mxu0
  %1030 = vmatprep.mubr.bf16.mxu0 %v517
  %1031 = vmatmul.mubr.bf16.gmra.mrb[0].mxu0 %v516
  %v1032 = vpop.f32.mrb[0].mxu0
  %v1033 = vadd.f32 %v152, %v1032
  %v1034 = vpop.f32.mrb[0].mxu0
  %v1035 = vpop.f32.mrb[0].mxu0
  %v1036 = vadd.f32 %v152, %v1035
  %v1037 = vpop.f32.mrb[0].mxu0
  %1038 = vmatprep.mubr.bf16.mxu0 %v519
  %1039 = vmatmul.mubr.bf16.gmra.mrb[0].mxu0 %v518
  %v1040 = vpop.f32.mrb[0].mxu0
  %v1041 = vadd.f32 %v152, %v1040
  %v1042 = vpop.f32.mrb[0].mxu0
  %v1043 = vpop.f32.mrb[0].mxu0
  %v1044 = vadd.f32 %v152, %v1043
  %v1045 = vpop.f32.mrb[0].mxu0
  %1046 = vmatprep.mubr.bf16.mxu0 %v521
  %1047 = vmatmul.mubr.bf16.gmra.mrb[0].mxu0 %v520
  %v1048 = vpop.f32.mrb[0].mxu0
  %v1049 = vadd.f32 %v152, %v1048
  %v1050 = vpop.f32.mrb[0].mxu0
  %v1051 = vpop.f32.mrb[0].mxu0
  %v1052 = vadd.f32 %v152, %v1051
  %v1053 = vpop.f32.mrb[0].mxu0
  %1054 = vmatprep.mubr.bf16.mxu0 %v523
  %1055 = vmatmul.mubr.bf16.gmra.mrb[0].mxu0 %v522
  %v1056 = vpop.f32.mrb[0].mxu0
  %v1057 = vadd.f32 %v152, %v1056
  %v1058 = vpop.f32.mrb[0].mxu0
  %v1059 = vpop.f32.mrb[0].mxu0
  %v1060 = vadd.f32 %v152, %v1059
  %v1061 = vpop.f32.mrb[0].mxu0
  %1062 = vmatprep.mubr.bf16.mxu0 %v525
  %1063 = vmatmul.mubr.bf16.gmra.mrb[0].mxu0 %v524
  %v1064 = vpop.f32.mrb[0].mxu0
  %v1065 = vadd.f32 %v152, %v1064
  %v1066 = vpop.f32.mrb[0].mxu0
  %v1067 = vpop.f32.mrb[0].mxu0
  %v1068 = vadd.f32 %v152, %v1067
  %v1069 = vpop.f32.mrb[0].mxu0
  %1070 = vmatprep.mubr.bf16.mxu0 %v527
  %1071 = vmatmul.mubr.bf16.gmra.mrb[0].mxu0 %v526
  %v1072 = vpop.f32.mrb[0].mxu0
  %v1073 = vadd.f32 %v152, %v1072
  %v1074 = vpop.f32.mrb[0].mxu0
  %v1075 = vpop.f32.mrb[0].mxu0
  %v1076 = vadd.f32 %v152, %v1075
  %v1077 = vpop.f32.mrb[0].mxu0
  %1078 = vmatprep.mubr.bf16.mxu0 %v529
  %1079 = vmatmul.mubr.bf16.gmra.mrb[0].mxu0 %v528
  %v1080 = vpop.f32.mrb[0].mxu0
  %v1081 = vadd.f32 %v152, %v1080
  %v1082 = vpop.f32.mrb[0].mxu0
  %v1083 = vpop.f32.mrb[0].mxu0
  %v1084 = vadd.f32 %v152, %v1083
  %v1085 = vpop.f32.mrb[0].mxu0
  %1086 = vmatprep.mubr.bf16.mxu0 %v531
  %1087 = vmatmul.mubr.bf16.gmra.mrb[0].mxu0 %v530
  %v1088 = vpop.f32.mrb[0].mxu0
  %v1089 = vadd.f32 %v152, %v1088
  %v1090 = vpop.f32.mrb[0].mxu0
  %v1091 = vpop.f32.mrb[0].mxu0
  %v1092 = vadd.f32 %v152, %v1091
  %v1093 = vpop.f32.mrb[0].mxu0
  %1094 = vmatprep.mubr.bf16.mxu0 %v533
  %1095 = vmatmul.mubr.bf16.gmra.mrb[0].mxu0 %v532
  %v1096 = vpop.f32.mrb[0].mxu0
  %v1097 = vadd.f32 %v152, %v1096
  %v1098 = vpop.f32.mrb[0].mxu0
  %v1099 = vpop.f32.mrb[0].mxu0
  %v1100 = vadd.f32 %v152, %v1099
  %v1101 = vpop.f32.mrb[0].mxu0
  %1102 = vmatprep.mubr.bf16.mxu0 %v535
  %1103 = vmatmul.mubr.bf16.gmra.mrb[0].mxu0 %v534
  %v1104 = vpop.f32.mrb[0].mxu0
  %v1105 = vadd.f32 %v152, %v1104
  %v1106 = vpop.f32.mrb[0].mxu0
  %v1107 = vpop.f32.mrb[0].mxu0
  %v1108 = vadd.f32 %v152, %v1107
  %v1109 = vpop.f32.mrb[0].mxu0
  %1110 = vmatprep.mubr.bf16.mxu0 %v537
  %1111 = vmatmul.mubr.bf16.gmra.mrb[0].mxu0 %v536
  %v1112 = vpop.f32.mrb[0].mxu0
  %v1113 = vadd.f32 %v152, %v1112
  %v1114 = vpop.f32.mrb[0].mxu0
  %v1115 = vpop.f32.mrb[0].mxu0
  %v1116 = vadd.f32 %v152, %v1115
  %v1117 = vpop.f32.mrb[0].mxu0
  %1118 = vmatprep.mubr.bf16.mxu0 %v539
  %1119 = vmatmul.mubr.bf16.gmra.mrb[0].mxu0 %v538
  %v1120 = vpop.f32.mrb[0].mxu0
  %v1121 = vadd.f32 %v152, %v1120
  %v1122 = vpop.f32.mrb[0].mxu0
  %v1123 = vpop.f32.mrb[0].mxu0
  %v1124 = vadd.f32 %v152, %v1123
  %v1125 = vpop.f32.mrb[0].mxu0
  %1126 = vmatprep.mubr.bf16.mxu0 %v541
  %1127 = vmatmul.mubr.bf16.gmra.mrb[0].mxu0 %v540
  %v1128 = vpop.f32.mrb[0].mxu0
  %v1129 = vadd.f32 %v152, %v1128
  %v1130 = vpop.f32.mrb[0].mxu0
  %v1131 = vpop.f32.mrb[0].mxu0
  %v1132 = vadd.f32 %v152, %v1131
  %v1133 = vpop.f32.mrb[0].mxu0
  %1134 = vmatprep.mubr.bf16.mxu0 %v543
  %1135 = vmatmul.mubr.bf16.gmra.mrb[0].mxu0 %v542
  %v1136 = vpop.f32.mrb[0].mxu0
  %v1137 = vadd.f32 %v152, %v1136
  %v1138 = vpop.f32.mrb[0].mxu0
  %v1139 = vpop.f32.mrb[0].mxu0
  %v1140 = vadd.f32 %v152, %v1139
  %v1141 = vpop.f32.mrb[0].mxu0
  %1142 = vmatprep.mubr.bf16.mxu0 %v545
  %1143 = vmatmul.mubr.bf16.gmra.mrb[0].mxu0 %v544
  %v1144 = vpop.f32.mrb[0].mxu0
  %v1145 = vadd.f32 %v152, %v1144
  %v1146 = vpop.f32.mrb[0].mxu0
  %v1147 = vpop.f32.mrb[0].mxu0
  %v1148 = vadd.f32 %v152, %v1147
  %v1149 = vpop.f32.mrb[0].mxu0
  %1150 = vmatprep.mubr.bf16.mxu0 %v547
  %1151 = vmatmul.mubr.bf16.gmra.mrb[0].mxu0 %v546
  %v1152 = vpop.f32.mrb[0].mxu0
  %v1153 = vadd.f32 %v152, %v1152
  %v1154 = vpop.f32.mrb[0].mxu0
  %v1155 = vpop.f32.mrb[0].mxu0
  %v1156 = vadd.f32 %v152, %v1155
  %v1157 = vpop.f32.mrb[0].mxu0
  %1158 = vmatprep.mubr.bf16.mxu0 %v549
  %1159 = vmatmul.mubr.bf16.gmra.mrb[0].mxu0 %v548
  %v1160 = vpop.f32.mrb[0].mxu0
  %v1161 = vadd.f32 %v152, %v1160
  %v1162 = vpop.f32.mrb[0].mxu0
  %v1163 = vpop.f32.mrb[0].mxu0
  %v1164 = vadd.f32 %v152, %v1163
  %v1165 = vpop.f32.mrb[0].mxu0
  %1166 = vmatprep.mubr.bf16.mxu0 %v551
  %1167 = vmatmul.mubr.bf16.gmra.mrb[0].mxu0 %v550
  %v1168 = vpop.f32.mrb[0].mxu0
  %v1169 = vadd.f32 %v152, %v1168
  %v1170 = vpop.f32.mrb[0].mxu0
  %v1171 = vpop.f32.mrb[0].mxu0
  %v1172 = vadd.f32 %v152, %v1171
  %v1173 = vpop.f32.mrb[0].mxu0
  %1174 = vmatprep.mubr.bf16.mxu0 %v553
  %1175 = vmatmul.mubr.bf16.gmra.mrb[0].mxu0 %v552
  %v1176 = vpop.f32.mrb[0].mxu0
  %v1177 = vadd.f32 %v152, %v1176
  %v1178 = vpop.f32.mrb[0].mxu0
  %v1179 = vpop.f32.mrb[0].mxu0
  %v1180 = vadd.f32 %v152, %v1179
  %v1181 = vpop.f32.mrb[0].mxu0
  %1182 = vdwg.mxu0
  %v1183 = vmax.f32 %v785, 0.0
  %v1184 = vmax.f32 %v788, 0.0
  %v1185 = vmax.f32 %v793, 0.0
  %v1186 = vmax.f32 %v796, 0.0
  %v1187 = vmax.f32 %v801, 0.0
  %v1188 = vmax.f32 %v804, 0.0
  %v1189 = vmax.f32 %v809, 0.0
  %v1190 = vmax.f32 %v812, 0.0
  %v1191 = vmax.f32 %v817, 0.0
  %v1192 = vmax.f32 %v820, 0.0
  %v1193 = vmax.f32 %v825, 0.0
  %v1194 = vmax.f32 %v828, 0.0
  %v1195 = vmax.f32 %v833, 0.0
  %v1196 = vmax.f32 %v836, 0.0
  %v1197 = vmax.f32 %v841, 0.0
  %v1198 = vmax.f32 %v844, 0.0
  %v1199 = vmax.f32 %v849, 0.0
  %v1200 = vmax.f32 %v852, 0.0
  %v1201 = vmax.f32 %v857, 0.0
  %v1202 = vmax.f32 %v860, 0.0
  %v1203 = vmax.f32 %v865, 0.0
  %v1204 = vmax.f32 %v868, 0.0
  %v1205 = vmax.f32 %v873, 0.0
  %v1206 = vmax.f32 %v876, 0.0
  %v1207 = vmax.f32 %v881, 0.0
  %v1208 = vmax.f32 %v884, 0.0
  %v1209 = vmax.f32 %v889, 0.0
  %v1210 = vmax.f32 %v892, 0.0
  %v1211 = vmax.f32 %v897, 0.0
  %v1212 = vmax.f32 %v900, 0.0
  %v1213 = vmax.f32 %v905, 0.0
  %v1214 = vmax.f32 %v908, 0.0
  %v1215 = vmax.f32 %v913, 0.0
  %v1216 = vmax.f32 %v916, 0.0
  %v1217 = vmax.f32 %v921, 0.0
  %v1218 = vmax.f32 %v924, 0.0
  %v1219 = vmax.f32 %v929, 0.0
  %v1220 = vmax.f32 %v932, 0.0
  %v1221 = vmax.f32 %v937, 0.0
  %v1222 = vmax.f32 %v940, 0.0
  %v1223 = vmax.f32 %v945, 0.0
  %v1224 = vmax.f32 %v948, 0.0
  %v1225 = vmax.f32 %v953, 0.0
  %v1226 = vmax.f32 %v956, 0.0
  %v1227 = vmax.f32 %v961, 0.0
  %v1228 = vmax.f32 %v964, 0.0
  %v1229 = vmax.f32 %v969, 0.0
  %v1230 = vmax.f32 %v972, 0.0
  %v1231 = vmax.f32 %v977, 0.0
  %v1232 = vmax.f32 %v980, 0.0
  %v1233 = vmax.f32 %v985, 0.0
  %v1234 = vmax.f32 %v988, 0.0
  %v1235 = vmax.f32 %v993, 0.0
  %v1236 = vmax.f32 %v996, 0.0
  %v1237 = vmax.f32 %v1001, 0.0
  %v1238 = vmax.f32 %v1004, 0.0
  %v1239 = vmax.f32 %v1009, 0.0
  %v1240 = vmax.f32 %v1012, 0.0
  %v1241 = vmax.f32 %v1017, 0.0
  %v1242 = vmax.f32 %v1020, 0.0
  %v1243 = vmax.f32 %v1025, 0.0
  %v1244 = vmax.f32 %v1028, 0.0
  %v1245 = vmax.f32 %v1033, 0.0
  %v1246 = vmax.f32 %v1036, 0.0
  %v1247 = vmax.f32 %v1041, 0.0
  %v1248 = vmax.f32 %v1044, 0.0
  %v1249 = vmax.f32 %v1049, 0.0
  %v1250 = vmax.f32 %v1052, 0.0
  %v1251 = vmax.f32 %v1057, 0.0
  %v1252 = vmax.f32 %v1060, 0.0
  %v1253 = vmax.f32 %v1065, 0.0
  %v1254 = vmax.f32 %v1068, 0.0
  %v1255 = vmax.f32 %v1073, 0.0
  %v1256 = vmax.f32 %v1076, 0.0
  %v1257 = vmax.f32 %v1081, 0.0
  %v1258 = vmax.f32 %v1084, 0.0
  %v1259 = vmax.f32 %v1089, 0.0
  %v1260 = vmax.f32 %v1092, 0.0
  %v1261 = vmax.f32 %v1097, 0.0
  %v1262 = vmax.f32 %v1100, 0.0
  %v1263 = vmax.f32 %v1105, 0.0
  %v1264 = vmax.f32 %v1108, 0.0
  %v1265 = vmax.f32 %v1113, 0.0
  %v1266 = vmax.f32 %v1116, 0.0
  %v1267 = vmax.f32 %v1121, 0.0
  %v1268 = vmax.f32 %v1124, 0.0
  %v1269 = vmax.f32 %v1129, 0.0
  %v1270 = vmax.f32 %v1132, 0.0
  %v1271 = vmax.f32 %v1137, 0.0
  %v1272 = vmax.f32 %v1140, 0.0
  %v1273 = vmax.f32 %v1145, 0.0
  %v1274 = vmax.f32 %v1148, 0.0
  %v1275 = vmax.f32 %v1153, 0.0
  %v1276 = vmax.f32 %v1156, 0.0
  %v1277 = vmax.f32 %v1161, 0.0
  %v1278 = vmax.f32 %v1164, 0.0
  %v1279 = vmax.f32 %v1169, 0.0
  %v1280 = vmax.f32 %v1172, 0.0
  %v1281 = vmax.f32 %v1177, 0.0
  %v1282 = vmax.f32 %v1180, 0.0
  %v1283 = vpack.c.bf16 %v1184, %v1183
  %v1284 = vpack.c.bf16 %v1186, %v1185
  %v1285 = vpack.c.bf16 %v1188, %v1187
  %v1286 = vpack.c.bf16 %v1190, %v1189
  %v1287 = vpack.c.bf16 %v1192, %v1191
  %v1288 = vpack.c.bf16 %v1194, %v1193
  %v1289 = vpack.c.bf16 %v1196, %v1195
  %v1290 = vpack.c.bf16 %v1198, %v1197
  %v1291 = vpack.c.bf16 %v1200, %v1199
  %v1292 = vpack.c.bf16 %v1202, %v1201
  %v1293 = vpack.c.bf16 %v1204, %v1203
  %v1294 = vpack.c.bf16 %v1206, %v1205
  %v1295 = vpack.c.bf16 %v1208, %v1207
  %v1296 = vpack.c.bf16 %v1210, %v1209
  %v1297 = vpack.c.bf16 %v1212, %v1211
  %v1298 = vpack.c.bf16 %v1214, %v1213
  %v1299 = vpack.c.bf16 %v1216, %v1215
  %v1300 = vpack.c.bf16 %v1218, %v1217
  %v1301 = vpack.c.bf16 %v1220, %v1219
  %v1302 = vpack.c.bf16 %v1222, %v1221
  %v1303 = vpack.c.bf16 %v1224, %v1223
  %v1304 = vpack.c.bf16 %v1226, %v1225
  %v1305 = vpack.c.bf16 %v1228, %v1227
  %v1306 = vpack.c.bf16 %v1230, %v1229
  %v1307 = vpack.c.bf16 %v1232, %v1231
  %v1308 = vpack.c.bf16 %v1234, %v1233
  %v1309 = vpack.c.bf16 %v1236, %v1235
  %v1310 = vpack.c.bf16 %v1238, %v1237
  %v1311 = vpack.c.bf16 %v1240, %v1239
  %v1312 = vpack.c.bf16 %v1242, %v1241
  %v1313 = vpack.c.bf16 %v1244, %v1243
  %v1314 = vpack.c.bf16 %v1246, %v1245
  %v1315 = vpack.c.bf16 %v1248, %v1247
  %v1316 = vpack.c.bf16 %v1250, %v1249
  %v1317 = vpack.c.bf16 %v1252, %v1251
  %v1318 = vpack.c.bf16 %v1254, %v1253
  %v1319 = vpack.c.bf16 %v1256, %v1255
  %v1320 = vpack.c.bf16 %v1258, %v1257
  %v1321 = vpack.c.bf16 %v1260, %v1259
  %v1322 = vpack.c.bf16 %v1262, %v1261
  %v1323 = vpack.c.bf16 %v1264, %v1263
  %v1324 = vpack.c.bf16 %v1266, %v1265
  %v1325 = vpack.c.bf16 %v1268, %v1267
  %v1326 = vpack.c.bf16 %v1270, %v1269
  %v1327 = vpack.c.bf16 %v1272, %v1271
  %v1328 = vpack.c.bf16 %v1274, %v1273
  %v1329 = vpack.c.bf16 %v1276, %v1275
  %v1330 = vpack.c.bf16 %v1278, %v1277
  %v1331 = vpack.c.bf16 %v1280, %v1279
  %v1332 = vpack.c.bf16 %v1282, %v1281
  %v1383 = vunpack.c.l.b16 %v1283
  %v1384 = vunpack.c.h.b16 %v1283
  %v1385 = vunpack.c.l.b16 %v1284
  %v1386 = vunpack.c.h.b16 %v1284
  %v1387 = vunpack.c.l.b16 %v1285
  %v1388 = vunpack.c.h.b16 %v1285
  %v1389 = vunpack.c.l.b16 %v1286
  %v1390 = vunpack.c.h.b16 %v1286
  %v1391 = vunpack.c.l.b16 %v1287
  %v1392 = vunpack.c.h.b16 %v1287
  %v1393 = vunpack.c.l.b16 %v1288
  %v1394 = vunpack.c.h.b16 %v1288
  %v1395 = vunpack.c.l.b16 %v1289
  %v1396 = vunpack.c.h.b16 %v1289
  %v1397 = vunpack.c.l.b16 %v1290
  %v1398 = vunpack.c.h.b16 %v1290
  %v1399 = vunpack.c.l.b16 %v1291
  %v1400 = vunpack.c.h.b16 %v1291
  %v1401 = vunpack.c.l.b16 %v1292
  %v1402 = vunpack.c.h.b16 %v1292
  %v1403 = vunpack.c.l.b16 %v1293
  %v1404 = vunpack.c.h.b16 %v1293
  %v1405 = vunpack.c.l.b16 %v1294
  %v1406 = vunpack.c.h.b16 %v1294
  %v1407 = vunpack.c.l.b16 %v1295
  %v1408 = vunpack.c.h.b16 %v1295
  %v1409 = vunpack.c.l.b16 %v1296
  %v1410 = vunpack.c.h.b16 %v1296
  %v1411 = vunpack.c.l.b16 %v1297
  %v1412 = vunpack.c.h.b16 %v1297
  %v1413 = vunpack.c.l.b16 %v1298
  %v1414 = vunpack.c.h.b16 %v1298
  %v1415 = vunpack.c.l.b16 %v1299
  %v1416 = vunpack.c.h.b16 %v1299
  %v1417 = vunpack.c.l.b16 %v1300
  %v1418 = vunpack.c.h.b16 %v1300
  %v1419 = vunpack.c.l.b16 %v1301
  %v1420 = vunpack.c.h.b16 %v1301
  %v1421 = vunpack.c.l.b16 %v1302
  %v1422 = vunpack.c.h.b16 %v1302
  %v1423 = vunpack.c.l.b16 %v1303
  %v1424 = vunpack.c.h.b16 %v1303
  %v1425 = vunpack.c.l.b16 %v1304
  %v1426 = vunpack.c.h.b16 %v1304
  %v1427 = vunpack.c.l.b16 %v1305
  %v1428 = vunpack.c.h.b16 %v1305
  %v1429 = vunpack.c.l.b16 %v1306
  %v1430 = vunpack.c.h.b16 %v1306
  %v1431 = vunpack.c.l.b16 %v1307
  %v1432 = vunpack.c.h.b16 %v1307
  %v1433 = vunpack.c.l.b16 %v1308
  %v1434 = vunpack.c.h.b16 %v1308
  %v1435 = vunpack.c.l.b16 %v1309
  %v1436 = vunpack.c.h.b16 %v1309
  %v1437 = vunpack.c.l.b16 %v1310
  %v1438 = vunpack.c.h.b16 %v1310
  %v1439 = vunpack.c.l.b16 %v1311
  %v1440 = vunpack.c.h.b16 %v1311
  %v1441 = vunpack.c.l.b16 %v1312
  %v1442 = vunpack.c.h.b16 %v1312
  %v1443 = vunpack.c.l.b16 %v1313
  %v1444 = vunpack.c.h.b16 %v1313
  %v1445 = vunpack.c.l.b16 %v1314
  %v1446 = vunpack.c.h.b16 %v1314
  %v1447 = vunpack.c.l.b16 %v1315
  %v1448 = vunpack.c.h.b16 %v1315
  %v1449 = vunpack.c.l.b16 %v1316
  %v1450 = vunpack.c.h.b16 %v1316
  %v1451 = vunpack.c.l.b16 %v1317
  %v1452 = vunpack.c.h.b16 %v1317
  %v1453 = vunpack.c.l.b16 %v1318
  %v1454 = vunpack.c.h.b16 %v1318
  %v1455 = vunpack.c.l.b16 %v1319
  %v1456 = vunpack.c.h.b16 %v1319
  %v1457 = vunpack.c.l.b16 %v1320
  %v1458 = vunpack.c.h.b16 %v1320
  %v1459 = vunpack.c.l.b16 %v1321
  %v1460 = vunpack.c.h.b16 %v1321
  %v1461 = vunpack.c.l.b16 %v1322
  %v1462 = vunpack.c.h.b16 %v1322
  %v1463 = vunpack.c.l.b16 %v1323
  %v1464 = vunpack.c.h.b16 %v1323
  %v1465 = vunpack.c.l.b16 %v1324
  %v1466 = vunpack.c.h.b16 %v1324
  %v1467 = vunpack.c.l.b16 %v1325
  %v1468 = vunpack.c.h.b16 %v1325
  %v1469 = vunpack.c.l.b16 %v1326
  %v1470 = vunpack.c.h.b16 %v1326
  %v1471 = vunpack.c.l.b16 %v1327
  %v1472 = vunpack.c.h.b16 %v1327
  %v1473 = vunpack.c.l.b16 %v1328
  %v1474 = vunpack.c.h.b16 %v1328
  %v1475 = vunpack.c.l.b16 %v1329
  %v1476 = vunpack.c.h.b16 %v1329
  %v1477 = vunpack.c.l.b16 %v1330
  %v1478 = vunpack.c.h.b16 %v1330
  %v1479 = vunpack.c.l.b16 %v1331
  %v1480 = vunpack.c.h.b16 %v1331
  %v1481 = vunpack.c.l.b16 %v1332
  %v1482 = vunpack.c.h.b16 %v1332
  %v1483 = vpack.c.b16 %v1383, %v1383
  %v1484 = vpack.c.b16 %v1384, %v1384
  %v1485 = vpack.c.b16 %v1385, %v1385
  %v1486 = vpack.c.b16 %v1386, %v1386
  %v1487 = vpack.c.b16 %v1387, %v1387
  %v1488 = vpack.c.b16 %v1388, %v1388
  %v1489 = vpack.c.b16 %v1389, %v1389
  %v1490 = vpack.c.b16 %v1390, %v1390
  %v1491 = vpack.c.b16 %v1391, %v1391
  %v1492 = vpack.c.b16 %v1392, %v1392
  %v1493 = vpack.c.b16 %v1393, %v1393
  %v1494 = vpack.c.b16 %v1394, %v1394
  %v1495 = vpack.c.b16 %v1395, %v1395
  %v1496 = vpack.c.b16 %v1396, %v1396
  %v1497 = vpack.c.b16 %v1397, %v1397
  %v1498 = vpack.c.b16 %v1398, %v1398
  %v1499 = vpack.c.b16 %v1399, %v1399
  %v1500 = vpack.c.b16 %v1400, %v1400
  %v1501 = vpack.c.b16 %v1401, %v1401
  %v1502 = vpack.c.b16 %v1402, %v1402
  %v1503 = vpack.c.b16 %v1403, %v1403
  %v1504 = vpack.c.b16 %v1404, %v1404
  %v1505 = vpack.c.b16 %v1405, %v1405
  %v1506 = vpack.c.b16 %v1406, %v1406
  %v1507 = vpack.c.b16 %v1407, %v1407
  %v1508 = vpack.c.b16 %v1408, %v1408
  %v1509 = vpack.c.b16 %v1409, %v1409
  %v1510 = vpack.c.b16 %v1410, %v1410
  %v1511 = vpack.c.b16 %v1411, %v1411
  %v1512 = vpack.c.b16 %v1412, %v1412
  %v1513 = vpack.c.b16 %v1413, %v1413
  %v1514 = vpack.c.b16 %v1414, %v1414
  %v1515 = vpack.c.b16 %v1415, %v1415
  %v1516 = vpack.c.b16 %v1416, %v1416
  %v1517 = vpack.c.b16 %v1417, %v1417
  %v1518 = vpack.c.b16 %v1418, %v1418
  %v1519 = vpack.c.b16 %v1419, %v1419
  %v1520 = vpack.c.b16 %v1420, %v1420
  %v1521 = vpack.c.b16 %v1421, %v1421
  %v1522 = vpack.c.b16 %v1422, %v1422
  %v1523 = vpack.c.b16 %v1423, %v1423
  %v1524 = vpack.c.b16 %v1424, %v1424
  %v1525 = vpack.c.b16 %v1425, %v1425
  %v1526 = vpack.c.b16 %v1426, %v1426
  %v1527 = vpack.c.b16 %v1427, %v1427
  %v1528 = vpack.c.b16 %v1428, %v1428
  %v1529 = vpack.c.b16 %v1429, %v1429
  %v1530 = vpack.c.b16 %v1430, %v1430
  %v1531 = vpack.c.b16 %v1431, %v1431
  %v1532 = vpack.c.b16 %v1432, %v1432
  %v1533 = vpack.c.b16 %v1433, %v1433
  %v1534 = vpack.c.b16 %v1434, %v1434
  %v1535 = vpack.c.b16 %v1435, %v1435
  %v1536 = vpack.c.b16 %v1436, %v1436
  %v1537 = vpack.c.b16 %v1437, %v1437
  %v1538 = vpack.c.b16 %v1438, %v1438
  %v1539 = vpack.c.b16 %v1439, %v1439
  %v1540 = vpack.c.b16 %v1440, %v1440
  %v1541 = vpack.c.b16 %v1441, %v1441
  %v1542 = vpack.c.b16 %v1442, %v1442
  %v1543 = vpack.c.b16 %v1443, %v1443
  %v1544 = vpack.c.b16 %v1444, %v1444
  %v1545 = vpack.c.b16 %v1445, %v1445
  %v1546 = vpack.c.b16 %v1446, %v1446
  %v1547 = vpack.c.b16 %v1447, %v1447
  %v1548 = vpack.c.b16 %v1448, %v1448
  %v1549 = vpack.c.b16 %v1449, %v1449
  %v1550 = vpack.c.b16 %v1450, %v1450
  %v1551 = vpack.c.b16 %v1451, %v1451
  %v1552 = vpack.c.b16 %v1452, %v1452
  %v1553 = vpack.c.b16 %v1453, %v1453
  %v1554 = vpack.c.b16 %v1454, %v1454
  %v1555 = vpack.c.b16 %v1455, %v1455
  %v1556 = vpack.c.b16 %v1456, %v1456
  %v1557 = vpack.c.b16 %v1457, %v1457
  %v1558 = vpack.c.b16 %v1458, %v1458
  %v1559 = vpack.c.b16 %v1459, %v1459
  %v1560 = vpack.c.b16 %v1460, %v1460
  %v1561 = vpack.c.b16 %v1461, %v1461
  %v1562 = vpack.c.b16 %v1462, %v1462
  %v1563 = vpack.c.b16 %v1463, %v1463
  %v1564 = vpack.c.b16 %v1464, %v1464
  %v1565 = vpack.c.b16 %v1465, %v1465
  %v1566 = vpack.c.b16 %v1466, %v1466
  %v1567 = vpack.c.b16 %v1467, %v1467
  %v1568 = vpack.c.b16 %v1468, %v1468
  %v1569 = vpack.c.b16 %v1469, %v1469
  %v1570 = vpack.c.b16 %v1470, %v1470
  %v1571 = vpack.c.b16 %v1471, %v1471
  %v1572 = vpack.c.b16 %v1472, %v1472
  %v1573 = vpack.c.b16 %v1473, %v1473
  %v1574 = vpack.c.b16 %v1474, %v1474
  %v1575 = vpack.c.b16 %v1475, %v1475
  %v1576 = vpack.c.b16 %v1476, %v1476
  %v1577 = vpack.c.b16 %v1477, %v1477
  %v1578 = vpack.c.b16 %v1478, %v1478
  %v1579 = vpack.c.b16 %v1479, %v1479
  %v1580 = vpack.c.b16 %v1480, %v1480
  %v1581 = vpack.c.b16 %v1481, %v1481
  %v1582 = vpack.c.b16 %v1482, %v1482
  %vm1683 = vcmask 257024
  %1684 = vst.msk [vmem:[%s3] sm:$0xf] %vm1683, %v1483
  %1685 = vst.msk [vmem:[%s3 + $0x4] sm:$0xf] %vm1683, %v1484
  %1686 = vst.msk [vmem:[%s3 + $0x8] sm:$0xf] %vm1683, %v1485
  %1687 = vst.msk [vmem:[%s3 + $0xc] sm:$0xf] %vm1683, %v1486
  %1688 = vst.msk [vmem:[%s3 + $0x10] sm:$0xf] %vm1683, %v1487
  %1689 = vst.msk [vmem:[%s3 + $0x14] sm:$0xf] %vm1683, %v1488
  %1690 = vst.msk [vmem:[%s3 + $0x18] sm:$0xf] %vm1683, %v1489
  %1691 = vst.msk [vmem:[%s3 + $0x1c] sm:$0xf] %vm1683, %v1490
  %1692 = vst.msk [vmem:[%s3 + $0x20] sm:$0xf] %vm1683, %v1491
  %1693 = vst.msk [vmem:[%s3 + $0x24] sm:$0xf] %vm1683, %v1492
  %1694 = vst.msk [vmem:[%s3 + $0x28] sm:$0xf] %vm1683, %v1493
  %1695 = vst.msk [vmem:[%s3 + $0x2c] sm:$0xf] %vm1683, %v1494
  %1696 = vst.msk [vmem:[%s3 + $0x30] sm:$0xf] %vm1683, %v1495
  %1697 = vst.msk [vmem:[%s3 + $0x34] sm:$0xf] %vm1683, %v1496
  %1698 = vst.msk [vmem:[%s3 + $0x38] sm:$0xf] %vm1683, %v1497
  %1699 = vst.msk [vmem:[%s3 + $0x3c] sm:$0xf] %vm1683, %v1498
  %1700 = vst.msk [vmem:[%s3 + $0x40] sm:$0xf] %vm1683, %v1499
  %1701 = vst.msk [vmem:[%s3 + $0x44] sm:$0xf] %vm1683, %v1500
  %1702 = vst.msk [vmem:[%s3 + $0x48] sm:$0xf] %vm1683, %v1501
  %1703 = vst.msk [vmem:[%s3 + $0x4c] sm:$0xf] %vm1683, %v1502
  %1704 = vst.msk [vmem:[%s3 + $0x50] sm:$0xf] %vm1683, %v1503
  %1705 = vst.msk [vmem:[%s3 + $0x54] sm:$0xf] %vm1683, %v1504
  %1706 = vst.msk [vmem:[%s3 + $0x58] sm:$0xf] %vm1683, %v1505
  %1707 = vst.msk [vmem:[%s3 + $0x5c] sm:$0xf] %vm1683, %v1506
  %1708 = vst.msk [vmem:[%s3 + $0x60] sm:$0xf] %vm1683, %v1507
  %1709 = vst.msk [vmem:[%s3 + $0x64] sm:$0xf] %vm1683, %v1508
  %1710 = vst.msk [vmem:[%s3 + $0x68] sm:$0xf] %vm1683, %v1509
  %1711 = vst.msk [vmem:[%s3 + $0x6c] sm:$0xf] %vm1683, %v1510
  %1712 = vst.msk [vmem:[%s3 + $0x70] sm:$0xf] %vm1683, %v1511
  %1713 = vst.msk [vmem:[%s3 + $0x74] sm:$0xf] %vm1683, %v1512
  %1714 = vst.msk [vmem:[%s3 + $0x78] sm:$0xf] %vm1683, %v1513
  %1715 = vst.msk [vmem:[%s3 + $0x7c] sm:$0xf] %vm1683, %v1514
  %1716 = vst.msk [vmem:[%s3 + $0x80] sm:$0xf] %vm1683, %v1515
  %1717 = vst.msk [vmem:[%s3 + $0x84] sm:$0xf] %vm1683, %v1516
  %1718 = vst.msk [vmem:[%s3 + $0x88] sm:$0xf] %vm1683, %v1517
  %1719 = vst.msk [vmem:[%s3 + $0x8c] sm:$0xf] %vm1683, %v1518
  %1720 = vst.msk [vmem:[%s3 + $0x90] sm:$0xf] %vm1683, %v1519
  %1721 = vst.msk [vmem:[%s3 + $0x94] sm:$0xf] %vm1683, %v1520
  %1722 = vst.msk [vmem:[%s3 + $0x98] sm:$0xf] %vm1683, %v1521
  %1723 = vst.msk [vmem:[%s3 + $0x9c] sm:$0xf] %vm1683, %v1522
  %1724 = vst.msk [vmem:[%s3 + $0xa0] sm:$0xf] %vm1683, %v1523
  %1725 = vst.msk [vmem:[%s3 + $0xa4] sm:$0xf] %vm1683, %v1524
  %1726 = vst.msk [vmem:[%s3 + $0xa8] sm:$0xf] %vm1683, %v1525
  %1727 = vst.msk [vmem:[%s3 + $0xac] sm:$0xf] %vm1683, %v1526
  %1728 = vst.msk [vmem:[%s3 + $0xb0] sm:$0xf] %vm1683, %v1527
  %1729 = vst.msk [vmem:[%s3 + $0xb4] sm:$0xf] %vm1683, %v1528
  %1730 = vst.msk [vmem:[%s3 + $0xb8] sm:$0xf] %vm1683, %v1529
  %1731 = vst.msk [vmem:[%s3 + $0xbc] sm:$0xf] %vm1683, %v1530
  %1732 = vst.msk [vmem:[%s3 + $0xc0] sm:$0xf] %vm1683, %v1531
  %1733 = vst.msk [vmem:[%s3 + $0xc4] sm:$0xf] %vm1683, %v1532
  %1734 = vst.msk [vmem:[%s3 + $0xc8] sm:$0xf] %vm1683, %v1533
  %1735 = vst.msk [vmem:[%s3 + $0xcc] sm:$0xf] %vm1683, %v1534
  %1736 = vst.msk [vmem:[%s3 + $0xd0] sm:$0xf] %vm1683, %v1535
  %1737 = vst.msk [vmem:[%s3 + $0xd4] sm:$0xf] %vm1683, %v1536
  %1738 = vst.msk [vmem:[%s3 + $0xd8] sm:$0xf] %vm1683, %v1537
  %1739 = vst.msk [vmem:[%s3 + $0xdc] sm:$0xf] %vm1683, %v1538
  %1740 = vst.msk [vmem:[%s3 + $0xe0] sm:$0xf] %vm1683, %v1539
  %1741 = vst.msk [vmem:[%s3 + $0xe4] sm:$0xf] %vm1683, %v1540
  %1742 = vst.msk [vmem:[%s3 + $0xe8] sm:$0xf] %vm1683, %v1541
  %1743 = vst.msk [vmem:[%s3 + $0xec] sm:$0xf] %vm1683, %v1542
  %1744 = vst.msk [vmem:[%s3 + $0xf0] sm:$0xf] %vm1683, %v1543
  %1745 = vst.msk [vmem:[%s3 + $0xf4] sm:$0xf] %vm1683, %v1544
  %1746 = vst.msk [vmem:[%s3 + $0xf8] sm:$0xf] %vm1683, %v1545
  %1747 = vst.msk [vmem:[%s3 + $0xfc] sm:$0xf] %vm1683, %v1546
  %1748 = vst.msk [vmem:[%s3 + $0x100] sm:$0xf] %vm1683, %v1547
  %1749 = vst.msk [vmem:[%s3 + $0x104] sm:$0xf] %vm1683, %v1548
  %1750 = vst.msk [vmem:[%s3 + $0x108] sm:$0xf] %vm1683, %v1549
  %1751 = vst.msk [vmem:[%s3 + $0x10c] sm:$0xf] %vm1683, %v1550
  %1752 = vst.msk [vmem:[%s3 + $0x110] sm:$0xf] %vm1683, %v1551
  %1753 = vst.msk [vmem:[%s3 + $0x114] sm:$0xf] %vm1683, %v1552
  %1754 = vst.msk [vmem:[%s3 + $0x118] sm:$0xf] %vm1683, %v1553
  %1755 = vst.msk [vmem:[%s3 + $0x11c] sm:$0xf] %vm1683, %v1554
  %1756 = vst.msk [vmem:[%s3 + $0x120] sm:$0xf] %vm1683, %v1555
  %1757 = vst.msk [vmem:[%s3 + $0x124] sm:$0xf] %vm1683, %v1556
  %1758 = vst.msk [vmem:[%s3 + $0x128] sm:$0xf] %vm1683, %v1557
  %1759 = vst.msk [vmem:[%s3 + $0x12c] sm:$0xf] %vm1683, %v1558
  %1760 = vst.msk [vmem:[%s3 + $0x130] sm:$0xf] %vm1683, %v1559
  %1761 = vst.msk [vmem:[%s3 + $0x134] sm:$0xf] %vm1683, %v1560
  %1762 = vst.msk [vmem:[%s3 + $0x138] sm:$0xf] %vm1683, %v1561
  %1763 = vst.msk [vmem:[%s3 + $0x13c] sm:$0xf] %vm1683, %v1562
  %1764 = vst.msk [vmem:[%s3 + $0x140] sm:$0xf] %vm1683, %v1563
  %1765 = vst.msk [vmem:[%s3 + $0x144] sm:$0xf] %vm1683, %v1564
  %1766 = vst.msk [vmem:[%s3 + $0x148] sm:$0xf] %vm1683, %v1565
  %1767 = vst.msk [vmem:[%s3 + $0x14c] sm:$0xf] %vm1683, %v1566
  %1768 = vst.msk [vmem:[%s3 + $0x150] sm:$0xf] %vm1683, %v1567
  %1769 = vst.msk [vmem:[%s3 + $0x154] sm:$0xf] %vm1683, %v1568
  %1770 = vst.msk [vmem:[%s3 + $0x158] sm:$0xf] %vm1683, %v1569
  %1771 = vst.msk [vmem:[%s3 + $0x15c] sm:$0xf] %vm1683, %v1570
  %1772 = vst.msk [vmem:[%s3 + $0x160] sm:$0xf] %vm1683, %v1571
  %1773 = vst.msk [vmem:[%s3 + $0x164] sm:$0xf] %vm1683, %v1572
  %1774 = vst.msk [vmem:[%s3 + $0x168] sm:$0xf] %vm1683, %v1573
  %1775 = vst.msk [vmem:[%s3 + $0x16c] sm:$0xf] %vm1683, %v1574
  %1776 = vst.msk [vmem:[%s3 + $0x170] sm:$0xf] %vm1683, %v1575
  %1777 = vst.msk [vmem:[%s3 + $0x174] sm:$0xf] %vm1683, %v1576
  %1778 = vst.msk [vmem:[%s3 + $0x178] sm:$0xf] %vm1683, %v1577
  %1779 = vst.msk [vmem:[%s3 + $0x17c] sm:$0xf] %vm1683, %v1578
  %1780 = vst.msk [vmem:[%s3 + $0x180] sm:$0xf] %vm1683, %v1579
  %1781 = vst.msk [vmem:[%s3 + $0x184] sm:$0xf] %vm1683, %v1580
  %1782 = vst.msk [vmem:[%s3 + $0x188] sm:$0xf] %vm1683, %v1581
  %1783 = vst.msk [vmem:[%s3 + $0x18c] sm:$0xf] %vm1683, %v1582
  // Predicated region
  $region14: #{_lambda_.4} parent=0 // pred_check
    _
  $region15: #{_lambda_.4} parent=0 // pred_check_branch
    %1785 = sbr.rel (0) target = $region17
  $region16: #{_lambda_.4} parent=0 // pred_region
    _
  $region17: #{_lambda_.4} parent=0 // pred_fallthru
    _
  // Predicated region
  $region18: #{_lambda_.4} parent=0 // pred_check
    _
  $region19: #{_lambda_.4} parent=0 // pred_check_branch
    %1787 = sbr.rel (0) target = $region21
  $region20: #{_lambda_.4} parent=0 // pred_region
    _
  $region21: #{_lambda_.4} parent=0 // pred_fallthru
    _

// kernel: _lambda_.5
$region0: #{_lambda_.5}
  #allocation0 [shape = 'u32[]', space=smem, size = 0x4, offset = 0x4, fixed_abs, tag = 'smem constant byte address 0x4 - core index']
  #allocation1 [shape = 'u32[144,128]{1,0:T(1,128)}', space=vmem, size = 0x12000, scoped, tag = 'internal scratch']
  %s0 = inlined_call_operand.vmem [shape: bf16[162,512], index: 0, kind: input, shape index: {}]
  %s1 = inlined_call_operand.vmem [shape: bf16[512,64], index: 1, kind: input, shape index: {}]
  %s2 = inlined_call_operand.vmem [shape: f32[1,64], index: 2, kind: input, shape index: {}]
  %s3 = inlined_call_operand.vmem [shape: bf16[162,64], index: 3, kind: output, shape index: {}]
  %s4 = sld [smem:[#allocation0]]
  $region22: #{_lambda_.5} parent=0
    _
  %s6 = ssub.s32 1, %s4
  %s7 = scalar_select 0, %s6, %s4
  // Predicated region
  $region2: #{_lambda_.5} parent=0 // pred_check
    _
  $region3: #{_lambda_.5} parent=0 // pred_check_branch
    %9 = sbr.rel (0) target = $region5
  $region4: #{_lambda_.5} parent=0 // pred_region
    _
  $region5: #{_lambda_.5} parent=0 // pred_fallthru
    _
  // Predicated region
  $region6: #{_lambda_.5} parent=0 // pred_check
    _
  $region7: #{_lambda_.5} parent=0 // pred_check_branch
    %11 = sbr.rel (0) target = $region9
  $region8: #{_lambda_.5} parent=0 // pred_region
    _
  $region9: #{_lambda_.5} parent=0 // pred_fallthru
    _
  // Predicated region
  $region10: #{_lambda_.5} parent=0 // pred_check
    _
  $region11: #{_lambda_.5} parent=0 // pred_check_branch
    %13 = sbr.rel (0) target = $region13
  $region12: #{_lambda_.5} parent=0 // pred_region
    _
  $region13: #{_lambda_.5} parent=0 // pred_fallthru
    _
  %v15 = vld [vmem:[%s0] sm:$0xff]
  %v16 = vld [vmem:[%s0 + $0x8] sm:$0xff]
  %v17 = vld [vmem:[%s0 + $0x10] sm:$0xff]
  %v18 = vld [vmem:[%s0 + $0x18] sm:$0xff]
  %v19 = vld [vmem:[%s0 + $0x20] sm:$0xff]
  %v20 = vld [vmem:[%s0 + $0x28] sm:$0xff]
  %v21 = vld [vmem:[%s0 + $0x30] sm:$0xff]
  %v22 = vld [vmem:[%s0 + $0x38] sm:$0xff]
  %v23 = vld [vmem:[%s0 + $0x40] sm:$0xff]
  %v24 = vld [vmem:[%s0 + $0x48] sm:$0xff]
  %v25 = vld [vmem:[%s0 + $0x50] sm:$0xff]
  %v26 = vld [vmem:[%s0 + $0x58] sm:$0xff]
  %v27 = vld [vmem:[%s0 + $0x60] sm:$0xff]
  %v28 = vld [vmem:[%s0 + $0x68] sm:$0xff]
  %v29 = vld [vmem:[%s0 + $0x70] sm:$0xff]
  %v30 = vld [vmem:[%s0 + $0x78] sm:$0xff]
  %v31 = vld [vmem:[%s0 + $0x80] sm:$0xff]
  %v32 = vld [vmem:[%s0 + $0x88] sm:$0xff]
  %v33 = vld [vmem:[%s0 + $0x90] sm:$0xff]
  %v34 = vld [vmem:[%s0 + $0x98] sm:$0xff]
  %v35 = vld [vmem:[%s0 + $0xa0] sm:$0xff]
  %v36 = vld [vmem:[%s0 + $0xa8] sm:$0xff]
  %v37 = vld [vmem:[%s0 + $0xb0] sm:$0xff]
  %v38 = vld [vmem:[%s0 + $0xb8] sm:$0xff]
  %v39 = vld [vmem:[%s0 + $0xc0] sm:$0xff]
  %v40 = vld [vmem:[%s0 + $0xc8] sm:$0xff]
  %v41 = vld [vmem:[%s0 + $0xd0] sm:$0xff]
  %v42 = vld [vmem:[%s0 + $0xd8] sm:$0xff]
  %v43 = vld [vmem:[%s0 + $0xe0] sm:$0xff]
  %v44 = vld [vmem:[%s0 + $0xe8] sm:$0xff]
  %v45 = vld [vmem:[%s0 + $0xf0] sm:$0xff]
  %v46 = vld [vmem:[%s0 + $0xf8] sm:$0xff]
  %v47 = vld [vmem:[%s0 + $0x100] sm:$0xff]
  %v48 = vld [vmem:[%s0 + $0x108] sm:$0xff]
  %v49 = vld [vmem:[%s0 + $0x110] sm:$0xff]
  %v50 = vld [vmem:[%s0 + $0x118] sm:$0xff]
  %v51 = vld [vmem:[%s0 + $0x120] sm:$0xff]
  %v52 = vld [vmem:[%s0 + $0x128] sm:$0xff]
  %v53 = vld [vmem:[%s0 + $0x130] sm:$0xff]
  %v54 = vld [vmem:[%s0 + $0x138] sm:$0xff]
  %v55 = vld [vmem:[%s0 + $0x140] sm:$0x11]
  %v56 = vld [vmem:[%s0 + $0x148] sm:$0x11]
  %v57 = vld [vmem:[%s1] sm:$0xf]
  %v58 = vld [vmem:[%s1 + $0x4] sm:$0xf]
  %v59 = vld [vmem:[%s1 + $0x8] sm:$0xf]
  %v60 = vld [vmem:[%s1 + $0xc] sm:$0xf]
  %v61 = vld [vmem:[%s1 + $0x10] sm:$0xf]
  %v62 = vld [vmem:[%s1 + $0x14] sm:$0xf]
  %v63 = vld [vmem:[%s1 + $0x18] sm:$0xf]
  %v64 = vld [vmem:[%s1 + $0x1c] sm:$0xf]
  %v65 = vld [vmem:[%s1 + $0x20] sm:$0xf]
  %v66 = vld [vmem:[%s1 + $0x24] sm:$0xf]
  %v67 = vld [vmem:[%s1 + $0x28] sm:$0xf]
  %v68 = vld [vmem:[%s1 + $0x2c] sm:$0xf]
  %v69 = vld [vmem:[%s1 + $0x30] sm:$0xf]
  %v70 = vld [vmem:[%s1 + $0x34] sm:$0xf]
  %v71 = vld [vmem:[%s1 + $0x38] sm:$0xf]
  %v72 = vld [vmem:[%s1 + $0x3c] sm:$0xf]
  %v73 = vld [vmem:[%s1 + $0x40] sm:$0xf]
  %v74 = vld [vmem:[%s1 + $0x44] sm:$0xf]
  %v75 = vld [vmem:[%s1 + $0x48] sm:$0xf]
  %v76 = vld [vmem:[%s1 + $0x4c] sm:$0xf]
  %v77 = vld [vmem:[%s1 + $0x50] sm:$0xf]
  %v78 = vld [vmem:[%s1 + $0x54] sm:$0xf]
  %v79 = vld [vmem:[%s1 + $0x58] sm:$0xf]
  %v80 = vld [vmem:[%s1 + $0x5c] sm:$0xf]
  %v81 = vld [vmem:[%s1 + $0x60] sm:$0xf]
  %v82 = vld [vmem:[%s1 + $0x64] sm:$0xf]
  %v83 = vld [vmem:[%s1 + $0x68] sm:$0xf]
  %v84 = vld [vmem:[%s1 + $0x6c] sm:$0xf]
  %v85 = vld [vmem:[%s1 + $0x70] sm:$0xf]
  %v86 = vld [vmem:[%s1 + $0x74] sm:$0xf]
  %v87 = vld [vmem:[%s1 + $0x78] sm:$0xf]
  %v88 = vld [vmem:[%s1 + $0x7c] sm:$0xf]
  %v89 = vld [vmem:[%s1 + $0x80] sm:$0xf]
  %v90 = vld [vmem:[%s1 + $0x84] sm:$0xf]
  %v91 = vld [vmem:[%s1 + $0x88] sm:$0xf]
  %v92 = vld [vmem:[%s1 + $0x8c] sm:$0xf]
  %v93 = vld [vmem:[%s1 + $0x90] sm:$0xf]
  %v94 = vld [vmem:[%s1 + $0x94] sm:$0xf]
  %v95 = vld [vmem:[%s1 + $0x98] sm:$0xf]
  %v96 = vld [vmem:[%s1 + $0x9c] sm:$0xf]
  %v97 = vld [vmem:[%s1 + $0xa0] sm:$0xf]
  %v98 = vld [vmem:[%s1 + $0xa4] sm:$0xf]
  %v99 = vld [vmem:[%s1 + $0xa8] sm:$0xf]
  %v100 = vld [vmem:[%s1 + $0xac] sm:$0xf]
  %v101 = vld [vmem:[%s1 + $0xb0] sm:$0xf]
  %v102 = vld [vmem:[%s1 + $0xb4] sm:$0xf]
  %v103 = vld [vmem:[%s1 + $0xb8] sm:$0xf]
  %v104 = vld [vmem:[%s1 + $0xbc] sm:$0xf]
  %v105 = vld [vmem:[%s1 + $0xc0] sm:$0xf]
  %v106 = vld [vmem:[%s1 + $0xc4] sm:$0xf]
  %v107 = vld [vmem:[%s1 + $0xc8] sm:$0xf]
  %v108 = vld [vmem:[%s1 + $0xcc] sm:$0xf]
  %v109 = vld [vmem:[%s1 + $0xd0] sm:$0xf]
  %v110 = vld [vmem:[%s1 + $0xd4] sm:$0xf]
  %v111 = vld [vmem:[%s1 + $0xd8] sm:$0xf]
  %v112 = vld [vmem:[%s1 + $0xdc] sm:$0xf]
  %v113 = vld [vmem:[%s1 + $0xe0] sm:$0xf]
  %v114 = vld [vmem:[%s1 + $0xe4] sm:$0xf]
  %v115 = vld [vmem:[%s1 + $0xe8] sm:$0xf]
  %v116 = vld [vmem:[%s1 + $0xec] sm:$0xf]
  %v117 = vld [vmem:[%s1 + $0xf0] sm:$0xf]
  %v118 = vld [vmem:[%s1 + $0xf4] sm:$0xf]
  %v119 = vld [vmem:[%s1 + $0xf8] sm:$0xf]
  %v120 = vld [vmem:[%s1 + $0xfc] sm:$0xf]
  %v121 = vld [vmem:[%s2] sm:$0x1]
  %v123 = vlaneseq
  %v124 = vshrl.u32 %v123, 7
  %v125 = vsub.s32 0, %v124
  %v126 = vrot.slane %v121, %v125
  %v170 = vunpack.c.l.b16 %v15
  %v171 = vunpack.c.h.b16 %v15
  %v172 = vunpack.c.l.b16 %v16
  %v173 = vunpack.c.h.b16 %v16
  %v174 = vunpack.c.l.b16 %v17
  %v175 = vunpack.c.h.b16 %v17
  %v176 = vunpack.c.l.b16 %v18
  %v177 = vunpack.c.h.b16 %v18
  %v178 = vunpack.c.l.b16 %v19
  %v179 = vunpack.c.h.b16 %v19
  %v180 = vunpack.c.l.b16 %v20
  %v181 = vunpack.c.h.b16 %v20
  %v182 = vunpack.c.l.b16 %v21
  %v183 = vunpack.c.h.b16 %v21
  %v184 = vunpack.c.l.b16 %v22
  %v185 = vunpack.c.h.b16 %v22
  %v186 = vunpack.c.l.b16 %v23
  %v187 = vunpack.c.h.b16 %v23
  %v188 = vunpack.c.l.b16 %v24
  %v189 = vunpack.c.h.b16 %v24
  %v190 = vunpack.c.l.b16 %v25
  %v191 = vunpack.c.h.b16 %v25
  %v192 = vunpack.c.l.b16 %v26
  %v193 = vunpack.c.h.b16 %v26
  %v194 = vunpack.c.l.b16 %v27
  %v195 = vunpack.c.h.b16 %v27
  %v196 = vunpack.c.l.b16 %v28
  %v197 = vunpack.c.h.b16 %v28
  %v198 = vunpack.c.l.b16 %v29
  %v199 = vunpack.c.h.b16 %v29
  %v200 = vunpack.c.l.b16 %v30
  %v201 = vunpack.c.h.b16 %v30
  %v202 = vunpack.c.l.b16 %v31
  %v203 = vunpack.c.h.b16 %v31
  %v204 = vunpack.c.l.b16 %v32
  %v205 = vunpack.c.h.b16 %v32
  %v206 = vunpack.c.l.b16 %v33
  %v207 = vunpack.c.h.b16 %v33
  %v208 = vunpack.c.l.b16 %v34
  %v209 = vunpack.c.h.b16 %v34
  %v210 = vunpack.c.l.b16 %v35
  %v211 = vunpack.c.h.b16 %v35
  %v212 = vunpack.c.l.b16 %v36
  %v213 = vunpack.c.h.b16 %v36
  %v214 = vunpack.c.l.b16 %v37
  %v215 = vunpack.c.h.b16 %v37
  %v216 = vunpack.c.l.b16 %v38
  %v217 = vunpack.c.h.b16 %v38
  %v218 = vunpack.c.l.b16 %v39
  %v219 = vunpack.c.h.b16 %v39
  %v220 = vunpack.c.l.b16 %v40
  %v221 = vunpack.c.h.b16 %v40
  %v222 = vunpack.c.l.b16 %v41
  %v223 = vunpack.c.h.b16 %v41
  %v224 = vunpack.c.l.b16 %v42
  %v225 = vunpack.c.h.b16 %v42
  %v226 = vunpack.c.l.b16 %v43
  %v227 = vunpack.c.h.b16 %v43
  %v228 = vunpack.c.l.b16 %v44
  %v229 = vunpack.c.h.b16 %v44
  %v230 = vunpack.c.l.b16 %v45
  %v231 = vunpack.c.h.b16 %v45
  %v232 = vunpack.c.l.b16 %v46
  %v233 = vunpack.c.h.b16 %v46
  %v234 = vunpack.c.l.b16 %v47
  %v235 = vunpack.c.h.b16 %v47
  %v236 = vunpack.c.l.b16 %v48
  %v237 = vunpack.c.h.b16 %v48
  %v238 = vunpack.c.l.b16 %v49
  %v239 = vunpack.c.h.b16 %v49
  %v240 = vunpack.c.l.b16 %v50
  %v241 = vunpack.c.h.b16 %v50
  %v242 = vunpack.c.l.b16 %v51
  %v243 = vunpack.c.h.b16 %v51
  %v244 = vunpack.c.l.b16 %v52
  %v245 = vunpack.c.h.b16 %v52
  %v246 = vunpack.c.l.b16 %v53
  %v247 = vunpack.c.h.b16 %v53
  %v248 = vunpack.c.l.b16 %v54
  %v249 = vunpack.c.h.b16 %v54
  %v250 = vunpack.c.l.b16 %v55
  %v251 = vunpack.c.h.b16 %v55
  %v252 = vunpack.c.l.b16 %v56
  %v253 = vunpack.c.h.b16 %v56
  %v254 = vpack.c.b16 %v174, %v170
  %v255 = vpack.c.b16 %v175, %v171
  %v256 = vpack.c.b16 %v176, %v172
  %v257 = vpack.c.b16 %v177, %v173
  %v258 = vpack.c.b16 %v182, %v178
  %v259 = vpack.c.b16 %v183, %v179
  %v260 = vpack.c.b16 %v184, %v180
  %v261 = vpack.c.b16 %v185, %v181
  %v262 = vpack.c.b16 %v190, %v186
  %v263 = vpack.c.b16 %v191, %v187
  %v264 = vpack.c.b16 %v192, %v188
  %v265 = vpack.c.b16 %v193, %v189
  %v266 = vpack.c.b16 %v198, %v194
  %v267 = vpack.c.b16 %v199, %v195
  %v268 = vpack.c.b16 %v200, %v196
  %v269 = vpack.c.b16 %v201, %v197
  %v270 = vpack.c.b16 %v206, %v202
  %v271 = vpack.c.b16 %v207, %v203
  %v272 = vpack.c.b16 %v208, %v204
  %v273 = vpack.c.b16 %v209, %v205
  %v274 = vpack.c.b16 %v214, %v210
  %v275 = vpack.c.b16 %v215, %v211
  %v276 = vpack.c.b16 %v216, %v212
  %v277 = vpack.c.b16 %v217, %v213
  %v278 = vpack.c.b16 %v222, %v218
  %v279 = vpack.c.b16 %v223, %v219
  %v280 = vpack.c.b16 %v224, %v220
  %v281 = vpack.c.b16 %v225, %v221
  %v282 = vpack.c.b16 %v230, %v226
  %v283 = vpack.c.b16 %v231, %v227
  %v284 = vpack.c.b16 %v232, %v228
  %v285 = vpack.c.b16 %v233, %v229
  %v286 = vpack.c.b16 %v238, %v234
  %v287 = vpack.c.b16 %v239, %v235
  %v288 = vpack.c.b16 %v240, %v236
  %v289 = vpack.c.b16 %v241, %v237
  %v290 = vpack.c.b16 %v246, %v242
  %v291 = vpack.c.b16 %v247, %v243
  %v292 = vpack.c.b16 %v248, %v244
  %v293 = vpack.c.b16 %v249, %v245
  %v294 = vpack.c.b16 %v250, %v250
  %v295 = vpack.c.b16 %v251, %v251
  %v296 = vpack.c.b16 %v252, %v252
  %v297 = vpack.c.b16 %v253, %v253
  %v406 = vunpack.c.l.b16 %v57
  %v407 = vunpack.c.l.b16 %v58
  %v408 = vunpack.c.l.b16 %v59
  %v409 = vunpack.c.l.b16 %v60
  %v410 = vunpack.c.l.b16 %v61
  %v411 = vunpack.c.l.b16 %v62
  %v412 = vunpack.c.l.b16 %v63
  %v413 = vunpack.c.l.b16 %v64
  %v414 = vunpack.c.l.b16 %v65
  %v415 = vunpack.c.l.b16 %v66
  %v416 = vunpack.c.l.b16 %v67
  %v417 = vunpack.c.l.b16 %v68
  %v418 = vunpack.c.l.b16 %v69
  %v419 = vunpack.c.l.b16 %v70
  %v420 = vunpack.c.l.b16 %v71
  %v421 = vunpack.c.l.b16 %v72
  %v422 = vunpack.c.l.b16 %v73
  %v423 = vunpack.c.l.b16 %v74
  %v424 = vunpack.c.l.b16 %v75
  %v425 = vunpack.c.l.b16 %v76
  %v426 = vunpack.c.l.b16 %v77
  %v427 = vunpack.c.l.b16 %v78
  %v428 = vunpack.c.l.b16 %v79
  %v429 = vunpack.c.l.b16 %v80
  %v430 = vunpack.c.l.b16 %v81
  %v431 = vunpack.c.l.b16 %v82
  %v432 = vunpack.c.l.b16 %v83
  %v433 = vunpack.c.l.b16 %v84
  %v434 = vunpack.c.l.b16 %v85
  %v435 = vunpack.c.l.b16 %v86
  %v436 = vunpack.c.l.b16 %v87
  %v437 = vunpack.c.l.b16 %v88
  %v438 = vunpack.c.l.b16 %v89
  %v439 = vunpack.c.l.b16 %v90
  %v440 = vunpack.c.l.b16 %v91
  %v441 = vunpack.c.l.b16 %v92
  %v442 = vunpack.c.l.b16 %v93
  %v443 = vunpack.c.l.b16 %v94
  %v444 = vunpack.c.l.b16 %v95
  %v445 = vunpack.c.l.b16 %v96
  %v446 = vunpack.c.l.b16 %v97
  %v447 = vunpack.c.l.b16 %v98
  %v448 = vunpack.c.l.b16 %v99
  %v449 = vunpack.c.l.b16 %v100
  %v450 = vunpack.c.l.b16 %v101
  %v451 = vunpack.c.l.b16 %v102
  %v452 = vunpack.c.l.b16 %v103
  %v453 = vunpack.c.l.b16 %v104
  %v454 = vunpack.c.l.b16 %v105
  %v455 = vunpack.c.l.b16 %v106
  %v456 = vunpack.c.l.b16 %v107
  %v457 = vunpack.c.l.b16 %v108
  %v458 = vunpack.c.l.b16 %v109
  %v459 = vunpack.c.l.b16 %v110
  %v460 = vunpack.c.l.b16 %v111
  %v461 = vunpack.c.l.b16 %v112
  %v462 = vunpack.c.l.b16 %v113
  %v463 = vunpack.c.l.b16 %v114
  %v464 = vunpack.c.l.b16 %v115
  %v465 = vunpack.c.l.b16 %v116
  %v466 = vunpack.c.l.b16 %v117
  %v467 = vunpack.c.l.b16 %v118
  %v468 = vunpack.c.l.b16 %v119
  %v469 = vunpack.c.l.b16 %v120
  %v470 = vpack.c.b16 %v407, %v406
  %v471 = vpack.c.b16 %v409, %v408
  %v472 = vpack.c.b16 %v411, %v410
  %v473 = vpack.c.b16 %v413, %v412
  %v474 = vpack.c.b16 %v415, %v414
  %v475 = vpack.c.b16 %v417, %v416
  %v476 = vpack.c.b16 %v419, %v418
  %v477 = vpack.c.b16 %v421, %v420
  %v478 = vpack.c.b16 %v423, %v422
  %v479 = vpack.c.b16 %v425, %v424
  %v480 = vpack.c.b16 %v427, %v426
  %v481 = vpack.c.b16 %v429, %v428
  %v482 = vpack.c.b16 %v431, %v430
  %v483 = vpack.c.b16 %v433, %v432
  %v484 = vpack.c.b16 %v435, %v434
  %v485 = vpack.c.b16 %v437, %v436
  %v486 = vpack.c.b16 %v439, %v438
  %v487 = vpack.c.b16 %v441, %v440
  %v488 = vpack.c.b16 %v443, %v442
  %v489 = vpack.c.b16 %v445, %v444
  %v490 = vpack.c.b16 %v447, %v446
  %v491 = vpack.c.b16 %v449, %v448
  %v492 = vpack.c.b16 %v451, %v450
  %v493 = vpack.c.b16 %v453, %v452
  %v494 = vpack.c.b16 %v455, %v454
  %v495 = vpack.c.b16 %v457, %v456
  %v496 = vpack.c.b16 %v459, %v458
  %v497 = vpack.c.b16 %v461, %v460
  %v498 = vpack.c.b16 %v463, %v462
  %v499 = vpack.c.b16 %v465, %v464
  %v500 = vpack.c.b16 %v467, %v466
  %v501 = vpack.c.b16 %v469, %v468
  %534 = vmatprep.subr.bf16.mxu0 0
  %535 = vmatpush1.bf16.msra.mxu0 %v470
  %536 = vmatprep.subr.bf16.mxu0 0
  %537 = vmatpush1.bf16.msra.mxu0 %v471
  %538 = vmatprep.subr.bf16.mxu0 0
  %539 = vmatpush1.bf16.msra.mxu0 %v472
  %540 = vmatprep.subr.bf16.mxu0 0
  %541 = vmatpush1.bf16.msra.mxu0 %v473
  %542 = vmatprep.subr.bf16.mxu0 0
  %543 = vmatpush1.bf16.msra.mxu0 %v474
  %544 = vmatprep.subr.bf16.mxu0 0
  %545 = vmatpush1.bf16.msra.mxu0 %v475
  %546 = vmatprep.subr.bf16.mxu0 0
  %547 = vmatpush1.bf16.msra.mxu0 %v476
  %548 = vmatprep.subr.bf16.mxu0 0
  %549 = vmatpush1.bf16.msra.mxu0 %v477
  %550 = vmatprep.subr.bf16.mxu0 0
  %551 = vmatpush1.bf16.msra.mxu0 %v478
  %552 = vmatprep.subr.bf16.mxu0 0
  %553 = vmatpush1.bf16.msra.mxu0 %v479
  %554 = vmatprep.subr.bf16.mxu0 0
  %555 = vmatpush1.bf16.msra.mxu0 %v480
  %556 = vmatprep.subr.bf16.mxu0 0
  %557 = vmatpush1.bf16.msra.mxu0 %v481
  %558 = vmatprep.subr.bf16.mxu0 0
  %559 = vmatpush1.bf16.msra.mxu0 %v482
  %560 = vmatprep.subr.bf16.mxu0 0
  %561 = vmatpush1.bf16.msra.mxu0 %v483
  %562 = vmatprep.subr.bf16.mxu0 0
  %563 = vmatpush1.bf16.msra.mxu0 %v484
  %564 = vmatprep.subr.bf16.mxu0 0
  %565 = vmatpush1.bf16.msra.mxu0 %v485
  %566 = vmatprep.mubr.bf16.mxu0 %v255
  %567 = vmatmul.mubr.bf16.gmra.mrb[0].mxu0 %v254
  %v568 = vpop.f32.mrb[0].mxu0
  %v569 = vadd.f32 %v126, %v568
  %v570 = vpop.f32.mrb[0].mxu0
  %v571 = vpop.f32.mrb[0].mxu0
  %v572 = vadd.f32 %v126, %v571
  %v573 = vpop.f32.mrb[0].mxu0
  %574 = vmatprep.mubr.bf16.mxu0 %v259
  %575 = vmatmul.mubr.bf16.gmra.mrb[0].mxu0 %v258
  %v576 = vpop.f32.mrb[0].mxu0
  %v577 = vadd.f32 %v126, %v576
  %v578 = vpop.f32.mrb[0].mxu0
  %v579 = vpop.f32.mrb[0].mxu0
  %v580 = vadd.f32 %v126, %v579
  %v581 = vpop.f32.mrb[0].mxu0
  %582 = vmatprep.mubr.bf16.mxu0 %v263
  %583 = vmatmul.mubr.bf16.gmra.mrb[0].mxu0 %v262
  %v584 = vpop.f32.mrb[0].mxu0
  %v585 = vadd.f32 %v126, %v584
  %v586 = vpop.f32.mrb[0].mxu0
  %v587 = vpop.f32.mrb[0].mxu0
  %v588 = vadd.f32 %v126, %v587
  %v589 = vpop.f32.mrb[0].mxu0
  %590 = vmatprep.mubr.bf16.mxu0 %v267
  %591 = vmatmul.mubr.bf16.gmra.mrb[0].mxu0 %v266
  %v592 = vpop.f32.mrb[0].mxu0
  %v593 = vadd.f32 %v126, %v592
  %v594 = vpop.f32.mrb[0].mxu0
  %v595 = vpop.f32.mrb[0].mxu0
  %v596 = vadd.f32 %v126, %v595
  %v597 = vpop.f32.mrb[0].mxu0
  %598 = vmatprep.mubr.bf16.mxu0 %v271
  %599 = vmatmul.mubr.bf16.gmra.mrb[0].mxu0 %v270
  %v600 = vpop.f32.mrb[0].mxu0
  %v601 = vadd.f32 %v126, %v600
  %v602 = vpop.f32.mrb[0].mxu0
  %v603 = vpop.f32.mrb[0].mxu0
  %v604 = vadd.f32 %v126, %v603
  %v605 = vpop.f32.mrb[0].mxu0
  %606 = vmatprep.mubr.bf16.mxu0 %v275
  %607 = vmatmul.mubr.bf16.gmra.mrb[0].mxu0 %v274
  %v608 = vpop.f32.mrb[0].mxu0
  %v609 = vadd.f32 %v126, %v608
  %v610 = vpop.f32.mrb[0].mxu0
  %v611 = vpop.f32.mrb[0].mxu0
  %v612 = vadd.f32 %v126, %v611
  %v613 = vpop.f32.mrb[0].mxu0
  %614 = vmatprep.mubr.bf16.mxu0 %v279
  %615 = vmatmul.mubr.bf16.gmra.mrb[0].mxu0 %v278
  %v616 = vpop.f32.mrb[0].mxu0
  %v617 = vadd.f32 %v126, %v616
  %v618 = vpop.f32.mrb[0].mxu0
  %v619 = vpop.f32.mrb[0].mxu0
  %v620 = vadd.f32 %v126, %v619
  %v621 = vpop.f32.mrb[0].mxu0
  %622 = vmatprep.mubr.bf16.mxu0 %v283
  %623 = vmatmul.mubr.bf16.gmra.mrb[0].mxu0 %v282
  %v624 = vpop.f32.mrb[0].mxu0
  %v625 = vadd.f32 %v126, %v624
  %v626 = vpop.f32.mrb[0].mxu0
  %v627 = vpop.f32.mrb[0].mxu0
  %v628 = vadd.f32 %v126, %v627
  %v629 = vpop.f32.mrb[0].mxu0
  %630 = vmatprep.mubr.bf16.mxu0 %v287
  %631 = vmatmul.mubr.bf16.gmra.mrb[0].mxu0 %v286
  %v632 = vpop.f32.mrb[0].mxu0
  %v633 = vadd.f32 %v126, %v632
  %v634 = vpop.f32.mrb[0].mxu0
  %v635 = vpop.f32.mrb[0].mxu0
  %v636 = vadd.f32 %v126, %v635
  %v637 = vpop.f32.mrb[0].mxu0
  %638 = vmatprep.mubr.bf16.mxu0 %v291
  %639 = vmatmul.mubr.bf16.gmra.mrb[0].mxu0 %v290
  %v640 = vpop.f32.mrb[0].mxu0
  %v641 = vadd.f32 %v126, %v640
  %v642 = vpop.f32.mrb[0].mxu0
  %v643 = vpop.f32.mrb[0].mxu0
  %v644 = vadd.f32 %v126, %v643
  %v645 = vpop.f32.mrb[0].mxu0
  %646 = vmatprep.mubr.bf16.mxu0 %v295
  %647 = vmatmul.mubr.bf16.gmra.mrb[0].mxu0 %v294
  %v648 = vpop.f32.mrb[0].mxu0
  %v649 = vadd.f32 %v126, %v648
  %v650 = vpop.f32.mrb[0].mxu0
  %v651 = vpop.f32.mrb[0].mxu0
  %v652 = vpop.f32.mrb[0].mxu0
  %653 = vdwg.mxu0
  %654 = vmatprep.subr.bf16.mxu0 0
  %655 = vmatpush1.bf16.msra.mxu0 %v486
  %656 = vmatprep.subr.bf16.mxu0 0
  %657 = vmatpush1.bf16.msra.mxu0 %v487
  %658 = vmatprep.subr.bf16.mxu0 0
  %659 = vmatpush1.bf16.msra.mxu0 %v488
  %660 = vmatprep.subr.bf16.mxu0 0
  %661 = vmatpush1.bf16.msra.mxu0 %v489
  %662 = vmatprep.subr.bf16.mxu0 0
  %663 = vmatpush1.bf16.msra.mxu0 %v490
  %664 = vmatprep.subr.bf16.mxu0 0
  %665 = vmatpush1.bf16.msra.mxu0 %v491
  %666 = vmatprep.subr.bf16.mxu0 0
  %667 = vmatpush1.bf16.msra.mxu0 %v492
  %668 = vmatprep.subr.bf16.mxu0 0
  %669 = vmatpush1.bf16.msra.mxu0 %v493
  %670 = vmatprep.subr.bf16.mxu0 0
  %671 = vmatpush1.bf16.msra.mxu0 %v494
  %672 = vmatprep.subr.bf16.mxu0 0
  %673 = vmatpush1.bf16.msra.mxu0 %v495
  %674 = vmatprep.subr.bf16.mxu0 0
  %675 = vmatpush1.bf16.msra.mxu0 %v496
  %676 = vmatprep.subr.bf16.mxu0 0
  %677 = vmatpush1.bf16.msra.mxu0 %v497
  %678 = vmatprep.subr.bf16.mxu0 0
  %679 = vmatpush1.bf16.msra.mxu0 %v498
  %680 = vmatprep.subr.bf16.mxu0 0
  %681 = vmatpush1.bf16.msra.mxu0 %v499
  %682 = vmatprep.subr.bf16.mxu0 0
  %683 = vmatpush1.bf16.msra.mxu0 %v500
  %684 = vmatprep.subr.bf16.mxu0 0
  %685 = vmatpush1.bf16.msra.mxu0 %v501
  %686 = vmatprep.mubr.bf16.mxu0 %v257
  %687 = vmatmul.mubr.bf16.gmra.mrb[0].mxu0 %v256
  %v688 = vpop.f32.mrb[0].mxu0
  %v689 = vadd.f32 %v569, %v688
  %v690 = vpop.f32.mrb[0].mxu0
  %v691 = vpop.f32.mrb[0].mxu0
  %v692 = vadd.f32 %v572, %v691
  %v693 = vpop.f32.mrb[0].mxu0
  %694 = vmatprep.mubr.bf16.mxu0 %v261
  %695 = vmatmul.mubr.bf16.gmra.mrb[0].mxu0 %v260
  %v696 = vpop.f32.mrb[0].mxu0
  %v697 = vadd.f32 %v577, %v696
  %v698 = vpop.f32.mrb[0].mxu0
  %v699 = vpop.f32.mrb[0].mxu0
  %v700 = vadd.f32 %v580, %v699
  %v701 = vpop.f32.mrb[0].mxu0
  %702 = vmatprep.mubr.bf16.mxu0 %v265
  %703 = vmatmul.mubr.bf16.gmra.mrb[0].mxu0 %v264
  %v704 = vpop.f32.mrb[0].mxu0
  %v705 = vadd.f32 %v585, %v704
  %v706 = vpop.f32.mrb[0].mxu0
  %v707 = vpop.f32.mrb[0].mxu0
  %v708 = vadd.f32 %v588, %v707
  %v709 = vpop.f32.mrb[0].mxu0
  %710 = vmatprep.mubr.bf16.mxu0 %v269
  %711 = vmatmul.mubr.bf16.gmra.mrb[0].mxu0 %v268
  %v712 = vpop.f32.mrb[0].mxu0
  %v713 = vadd.f32 %v593, %v712
  %v714 = vpop.f32.mrb[0].mxu0
  %v715 = vpop.f32.mrb[0].mxu0
  %v716 = vadd.f32 %v596, %v715
  %v717 = vpop.f32.mrb[0].mxu0
  %718 = vmatprep.mubr.bf16.mxu0 %v273
  %719 = vmatmul.mubr.bf16.gmra.mrb[0].mxu0 %v272
  %v720 = vpop.f32.mrb[0].mxu0
  %v721 = vadd.f32 %v601, %v720
  %v722 = vpop.f32.mrb[0].mxu0
  %v723 = vpop.f32.mrb[0].mxu0
  %v724 = vadd.f32 %v604, %v723
  %v725 = vpop.f32.mrb[0].mxu0
  %726 = vmatprep.mubr.bf16.mxu0 %v277
  %727 = vmatmul.mubr.bf16.gmra.mrb[0].mxu0 %v276
  %v728 = vpop.f32.mrb[0].mxu0
  %v729 = vadd.f32 %v609, %v728
  %v730 = vpop.f32.mrb[0].mxu0
  %v731 = vpop.f32.mrb[0].mxu0
  %v732 = vadd.f32 %v612, %v731
  %v733 = vpop.f32.mrb[0].mxu0
  %734 = vmatprep.mubr.bf16.mxu0 %v281
  %735 = vmatmul.mubr.bf16.gmra.mrb[0].mxu0 %v280
  %v736 = vpop.f32.mrb[0].mxu0
  %v737 = vadd.f32 %v617, %v736
  %v738 = vpop.f32.mrb[0].mxu0
  %v739 = vpop.f32.mrb[0].mxu0
  %v740 = vadd.f32 %v620, %v739
  %v741 = vpop.f32.mrb[0].mxu0
  %742 = vmatprep.mubr.bf16.mxu0 %v285
  %743 = vmatmul.mubr.bf16.gmra.mrb[0].mxu0 %v284
  %v744 = vpop.f32.mrb[0].mxu0
  %v745 = vadd.f32 %v625, %v744
  %v746 = vpop.f32.mrb[0].mxu0
  %v747 = vpop.f32.mrb[0].mxu0
  %v748 = vadd.f32 %v628, %v747
  %v749 = vpop.f32.mrb[0].mxu0
  %750 = vmatprep.mubr.bf16.mxu0 %v289
  %751 = vmatmul.mubr.bf16.gmra.mrb[0].mxu0 %v288
  %v752 = vpop.f32.mrb[0].mxu0
  %v753 = vadd.f32 %v633, %v752
  %v754 = vpop.f32.mrb[0].mxu0
  %v755 = vpop.f32.mrb[0].mxu0
  %v756 = vadd.f32 %v636, %v755
  %v757 = vpop.f32.mrb[0].mxu0
  %758 = vmatprep.mubr.bf16.mxu0 %v293
  %759 = vmatmul.mubr.bf16.gmra.mrb[0].mxu0 %v292
  %v760 = vpop.f32.mrb[0].mxu0
  %v761 = vadd.f32 %v641, %v760
  %v762 = vpop.f32.mrb[0].mxu0
  %v763 = vpop.f32.mrb[0].mxu0
  %v764 = vadd.f32 %v644, %v763
  %v765 = vpop.f32.mrb[0].mxu0
  %766 = vmatprep.mubr.bf16.mxu0 %v297
  %767 = vmatmul.mubr.bf16.gmra.mrb[0].mxu0 %v296
  %v768 = vpop.f32.mrb[0].mxu0
  %v769 = vadd.f32 %v649, %v768
  %v770 = vpop.f32.mrb[0].mxu0
  %v771 = vpop.f32.mrb[0].mxu0
  %v772 = vpop.f32.mrb[0].mxu0
  %773 = vdwg.mxu0
  %v774 = vmax.f32 %v689, 0.0
  %v775 = vmax.f32 %v692, 0.0
  %v776 = vmax.f32 %v697, 0.0
  %v777 = vmax.f32 %v700, 0.0
  %v778 = vmax.f32 %v705, 0.0
  %v779 = vmax.f32 %v708, 0.0
  %v780 = vmax.f32 %v713, 0.0
  %v781 = vmax.f32 %v716, 0.0
  %v782 = vmax.f32 %v721, 0.0
  %v783 = vmax.f32 %v724, 0.0
  %v784 = vmax.f32 %v729, 0.0
  %v785 = vmax.f32 %v732, 0.0
  %v786 = vmax.f32 %v737, 0.0
  %v787 = vmax.f32 %v740, 0.0
  %v788 = vmax.f32 %v745, 0.0
  %v789 = vmax.f32 %v748, 0.0
  %v790 = vmax.f32 %v753, 0.0
  %v791 = vmax.f32 %v756, 0.0
  %v792 = vmax.f32 %v761, 0.0
  %v793 = vmax.f32 %v764, 0.0
  %v794 = vmax.f32 %v769, 0.0
  %v795 = vpack.c.bf16 %v775, %v774
  %v796 = vpack.c.bf16 %v777, %v776
  %v797 = vpack.c.bf16 %v779, %v778
  %v798 = vpack.c.bf16 %v781, %v780
  %v799 = vpack.c.bf16 %v783, %v782
  %v800 = vpack.c.bf16 %v785, %v784
  %v801 = vpack.c.bf16 %v787, %v786
  %v802 = vpack.c.bf16 %v789, %v788
  %v803 = vpack.c.bf16 %v791, %v790
  %v804 = vpack.c.bf16 %v793, %v792
  %v805 = vpack.c.bf16 %v794, %v794
  %v817 = vunpack.c.l.b16 %v795
  %v818 = vunpack.c.h.b16 %v795
  %v819 = vunpack.c.l.b16 %v796
  %v820 = vunpack.c.h.b16 %v796
  %v821 = vunpack.c.l.b16 %v797
  %v822 = vunpack.c.h.b16 %v797
  %v823 = vunpack.c.l.b16 %v798
  %v824 = vunpack.c.h.b16 %v798
  %v825 = vunpack.c.l.b16 %v799
  %v826 = vunpack.c.h.b16 %v799
  %v827 = vunpack.c.l.b16 %v800
  %v828 = vunpack.c.h.b16 %v800
  %v829 = vunpack.c.l.b16 %v801
  %v830 = vunpack.c.h.b16 %v801
  %v831 = vunpack.c.l.b16 %v802
  %v832 = vunpack.c.h.b16 %v802
  %v833 = vunpack.c.l.b16 %v803
  %v834 = vunpack.c.h.b16 %v803
  %v835 = vunpack.c.l.b16 %v804
  %v836 = vunpack.c.h.b16 %v804
  %v837 = vunpack.c.l.b16 %v805
  %v838 = vpack.c.b16 %v817, %v817
  %v839 = vpack.c.b16 %v818, %v818
  %v840 = vpack.c.b16 %v819, %v819
  %v841 = vpack.c.b16 %v820, %v820
  %v842 = vpack.c.b16 %v821, %v821
  %v843 = vpack.c.b16 %v822, %v822
  %v844 = vpack.c.b16 %v823, %v823
  %v845 = vpack.c.b16 %v824, %v824
  %v846 = vpack.c.b16 %v825, %v825
  %v847 = vpack.c.b16 %v826, %v826
  %v848 = vpack.c.b16 %v827, %v827
  %v849 = vpack.c.b16 %v828, %v828
  %v850 = vpack.c.b16 %v829, %v829
  %v851 = vpack.c.b16 %v830, %v830
  %v852 = vpack.c.b16 %v831, %v831
  %v853 = vpack.c.b16 %v832, %v832
  %v854 = vpack.c.b16 %v833, %v833
  %v855 = vpack.c.b16 %v834, %v834
  %v856 = vpack.c.b16 %v835, %v835
  %v857 = vpack.c.b16 %v836, %v836
  %v858 = vpack.c.b16 %v837, %v837
  %vm880 = vcmask 519168
  %881 = vst.msk [vmem:[%s3] sm:$0xf] %vm880, %v838
  %882 = vst.msk [vmem:[%s3 + $0x4] sm:$0xf] %vm880, %v839
  %883 = vst.msk [vmem:[%s3 + $0x8] sm:$0xf] %vm880, %v840
  %884 = vst.msk [vmem:[%s3 + $0xc] sm:$0xf] %vm880, %v841
  %885 = vst.msk [vmem:[%s3 + $0x10] sm:$0xf] %vm880, %v842
  %886 = vst.msk [vmem:[%s3 + $0x14] sm:$0xf] %vm880, %v843
  %887 = vst.msk [vmem:[%s3 + $0x18] sm:$0xf] %vm880, %v844
  %888 = vst.msk [vmem:[%s3 + $0x1c] sm:$0xf] %vm880, %v845
  %889 = vst.msk [vmem:[%s3 + $0x20] sm:$0xf] %vm880, %v846
  %890 = vst.msk [vmem:[%s3 + $0x24] sm:$0xf] %vm880, %v847
  %891 = vst.msk [vmem:[%s3 + $0x28] sm:$0xf] %vm880, %v848
  %892 = vst.msk [vmem:[%s3 + $0x2c] sm:$0xf] %vm880, %v849
  %893 = vst.msk [vmem:[%s3 + $0x30] sm:$0xf] %vm880, %v850
  %894 = vst.msk [vmem:[%s3 + $0x34] sm:$0xf] %vm880, %v851
  %895 = vst.msk [vmem:[%s3 + $0x38] sm:$0xf] %vm880, %v852
  %896 = vst.msk [vmem:[%s3 + $0x3c] sm:$0xf] %vm880, %v853
  %897 = vst.msk [vmem:[%s3 + $0x40] sm:$0xf] %vm880, %v854
  %898 = vst.msk [vmem:[%s3 + $0x44] sm:$0xf] %vm880, %v855
  %899 = vst.msk [vmem:[%s3 + $0x48] sm:$0xf] %vm880, %v856
  %900 = vst.msk [vmem:[%s3 + $0x4c] sm:$0xf] %vm880, %v857
  %vm901 = vcmask 516096
  %902 = vst.msk [vmem:[%s3 + $0x50] sm:$0x1] %vm901, %v858
  // Predicated region
  $region14: #{_lambda_.5} parent=0 // pred_check
    _
  $region15: #{_lambda_.5} parent=0 // pred_check_branch
    %904 = sbr.rel (0) target = $region17
  $region16: #{_lambda_.5} parent=0 // pred_region
    _
  $region17: #{_lambda_.5} parent=0 // pred_fallthru
    _
  // Predicated region
  $region18: #{_lambda_.5} parent=0 // pred_check
    _
  $region19: #{_lambda_.5} parent=0 // pred_check_branch
    %906 = sbr.rel (0) target = $region21
  $region20: #{_lambda_.5} parent=0 // pred_region
    _
  $region21: #{_lambda_.5} parent=0 // pred_fallthru
    _

// kernel: _lambda_.6
$region0: #{_lambda_.6}
  #allocation0 [shape = 'u32[]', space=smem, size = 0x4, offset = 0x4, fixed_abs, tag = 'smem constant byte address 0x4 - core index']
  #allocation1 [shape = 'u32[144,128]{1,0:T(1,128)}', space=vmem, size = 0x12000, scoped, tag = 'internal scratch']
  %s0 = inlined_call_operand.vmem [shape: bf16[98,576], index: 0, kind: input, shape index: {}]
  %s1 = inlined_call_operand.vmem [shape: bf16[576,64], index: 1, kind: input, shape index: {}]
  %s2 = inlined_call_operand.vmem [shape: f32[1,64], index: 2, kind: input, shape index: {}]
  %s3 = inlined_call_operand.vmem [shape: bf16[98,64], index: 3, kind: output, shape index: {}]
  %s4 = sld [smem:[#allocation0]]
  $region22: #{_lambda_.6} parent=0
    _
  %s6 = ssub.s32 1, %s4
  %s7 = scalar_select 0, %s6, %s4
  // Predicated region
  $region2: #{_lambda_.6} parent=0 // pred_check
    _
  $region3: #{_lambda_.6} parent=0 // pred_check_branch
    %9 = sbr.rel (0) target = $region5
  $region4: #{_lambda_.6} parent=0 // pred_region
    _
  $region5: #{_lambda_.6} parent=0 // pred_fallthru
    _
  // Predicated region
  $region6: #{_lambda_.6} parent=0 // pred_check
    _
  $region7: #{_lambda_.6} parent=0 // pred_check_branch
    %11 = sbr.rel (0) target = $region9
  $region8: #{_lambda_.6} parent=0 // pred_region
    _
  $region9: #{_lambda_.6} parent=0 // pred_fallthru
    _
  // Predicated region
  $region10: #{_lambda_.6} parent=0 // pred_check
    _
  $region11: #{_lambda_.6} parent=0 // pred_check_branch
    %13 = sbr.rel (0) target = $region13
  $region12: #{_lambda_.6} parent=0 // pred_region
    _
  $region13: #{_lambda_.6} parent=0 // pred_fallthru
    _
  %v15 = vld [vmem:[%s0] sm:$0xff]
  %v16 = vld [vmem:[%s0 + $0x8] sm:$0xff]
  %v17 = vld [vmem:[%s0 + $0x10] sm:$0xf]
  %v18 = vld [vmem:[%s0 + $0x14] sm:$0xff]
  %v19 = vld [vmem:[%s0 + $0x1c] sm:$0xff]
  %v20 = vld [vmem:[%s0 + $0x24] sm:$0xf]
  %v21 = vld [vmem:[%s0 + $0x28] sm:$0xff]
  %v22 = vld [vmem:[%s0 + $0x30] sm:$0xff]
  %v23 = vld [vmem:[%s0 + $0x38] sm:$0xf]
  %v24 = vld [vmem:[%s0 + $0x3c] sm:$0xff]
  %v25 = vld [vmem:[%s0 + $0x44] sm:$0xff]
  %v26 = vld [vmem:[%s0 + $0x4c] sm:$0xf]
  %v27 = vld [vmem:[%s0 + $0x50] sm:$0xff]
  %v28 = vld [vmem:[%s0 + $0x58] sm:$0xff]
  %v29 = vld [vmem:[%s0 + $0x60] sm:$0xf]
  %v30 = vld [vmem:[%s0 + $0x64] sm:$0xff]
  %v31 = vld [vmem:[%s0 + $0x6c] sm:$0xff]
  %v32 = vld [vmem:[%s0 + $0x74] sm:$0xf]
  %v33 = vld [vmem:[%s0 + $0x78] sm:$0xff]
  %v34 = vld [vmem:[%s0 + $0x80] sm:$0xff]
  %v35 = vld [vmem:[%s0 + $0x88] sm:$0xf]
  %v36 = vld [vmem:[%s0 + $0x8c] sm:$0xff]
  %v37 = vld [vmem:[%s0 + $0x94] sm:$0xff]
  %v38 = vld [vmem:[%s0 + $0x9c] sm:$0xf]
  %v39 = vld [vmem:[%s0 + $0xa0] sm:$0xff]
  %v40 = vld [vmem:[%s0 + $0xa8] sm:$0xff]
  %v41 = vld [vmem:[%s0 + $0xb0] sm:$0xf]
  %v42 = vld [vmem:[%s0 + $0xb4] sm:$0xff]
  %v43 = vld [vmem:[%s0 + $0xbc] sm:$0xff]
  %v44 = vld [vmem:[%s0 + $0xc4] sm:$0xf]
  %v45 = vld [vmem:[%s0 + $0xc8] sm:$0xff]
  %v46 = vld [vmem:[%s0 + $0xd0] sm:$0xff]
  %v47 = vld [vmem:[%s0 + $0xd8] sm:$0xf]
  %v48 = vld [vmem:[%s0 + $0xdc] sm:$0xff]
  %v49 = vld [vmem:[%s0 + $0xe4] sm:$0xff]
  %v50 = vld [vmem:[%s0 + $0xec] sm:$0xf]
  %v51 = vld [vmem:[%s0 + $0xf0] sm:$0x11]
  %v52 = vld [vmem:[%s0 + $0xf8] sm:$0x11]
  %v53 = vld [vmem:[%s0 + $0x100] sm:$0x1]
  %v54 = vld [vmem:[%s1] sm:$0xf]
  %v55 = vld [vmem:[%s1 + $0x4] sm:$0xf]
  %v56 = vld [vmem:[%s1 + $0x8] sm:$0xf]
  %v57 = vld [vmem:[%s1 + $0xc] sm:$0xf]
  %v58 = vld [vmem:[%s1 + $0x10] sm:$0xf]
  %v59 = vld [vmem:[%s1 + $0x14] sm:$0xf]
  %v60 = vld [vmem:[%s1 + $0x18] sm:$0xf]
  %v61 = vld [vmem:[%s1 + $0x1c] sm:$0xf]
  %v62 = vld [vmem:[%s1 + $0x20] sm:$0xf]
  %v63 = vld [vmem:[%s1 + $0x24] sm:$0xf]
  %v64 = vld [vmem:[%s1 + $0x28] sm:$0xf]
  %v65 = vld [vmem:[%s1 + $0x2c] sm:$0xf]
  %v66 = vld [vmem:[%s1 + $0x30] sm:$0xf]
  %v67 = vld [vmem:[%s1 + $0x34] sm:$0xf]
  %v68 = vld [vmem:[%s1 + $0x38] sm:$0xf]
  %v69 = vld [vmem:[%s1 + $0x3c] sm:$0xf]
  %v70 = vld [vmem:[%s1 + $0x40] sm:$0xf]
  %v71 = vld [vmem:[%s1 + $0x44] sm:$0xf]
  %v72 = vld [vmem:[%s1 + $0x48] sm:$0xf]
  %v73 = vld [vmem:[%s1 + $0x4c] sm:$0xf]
  %v74 = vld [vmem:[%s1 + $0x50] sm:$0xf]
  %v75 = vld [vmem:[%s1 + $0x54] sm:$0xf]
  %v76 = vld [vmem:[%s1 + $0x58] sm:$0xf]
  %v77 = vld [vmem:[%s1 + $0x5c] sm:$0xf]
  %v78 = vld [vmem:[%s1 + $0x60] sm:$0xf]
  %v79 = vld [vmem:[%s1 + $0x64] sm:$0xf]
  %v80 = vld [vmem:[%s1 + $0x68] sm:$0xf]
  %v81 = vld [vmem:[%s1 + $0x6c] sm:$0xf]
  %v82 = vld [vmem:[%s1 + $0x70] sm:$0xf]
  %v83 = vld [vmem:[%s1 + $0x74] sm:$0xf]
  %v84 = vld [vmem:[%s1 + $0x78] sm:$0xf]
  %v85 = vld [vmem:[%s1 + $0x7c] sm:$0xf]
  %v86 = vld [vmem:[%s1 + $0x80] sm:$0xf]
  %v87 = vld [vmem:[%s1 + $0x84] sm:$0xf]
  %v88 = vld [vmem:[%s1 + $0x88] sm:$0xf]
  %v89 = vld [vmem:[%s1 + $0x8c] sm:$0xf]
  %v90 = vld [vmem:[%s1 + $0x90] sm:$0xf]
  %v91 = vld [vmem:[%s1 + $0x94] sm:$0xf]
  %v92 = vld [vmem:[%s1 + $0x98] sm:$0xf]
  %v93 = vld [vmem:[%s1 + $0x9c] sm:$0xf]
  %v94 = vld [vmem:[%s1 + $0xa0] sm:$0xf]
  %v95 = vld [vmem:[%s1 + $0xa4] sm:$0xf]
  %v96 = vld [vmem:[%s1 + $0xa8] sm:$0xf]
  %v97 = vld [vmem:[%s1 + $0xac] sm:$0xf]
  %v98 = vld [vmem:[%s1 + $0xb0] sm:$0xf]
  %v99 = vld [vmem:[%s1 + $0xb4] sm:$0xf]
  %v100 = vld [vmem:[%s1 + $0xb8] sm:$0xf]
  %v101 = vld [vmem:[%s1 + $0xbc] sm:$0xf]
  %v102 = vld [vmem:[%s1 + $0xc0] sm:$0xf]
  %v103 = vld [vmem:[%s1 + $0xc4] sm:$0xf]
  %v104 = vld [vmem:[%s1 + $0xc8] sm:$0xf]
  %v105 = vld [vmem:[%s1 + $0xcc] sm:$0xf]
  %v106 = vld [vmem:[%s1 + $0xd0] sm:$0xf]
  %v107 = vld [vmem:[%s1 + $0xd4] sm:$0xf]
  %v108 = vld [vmem:[%s1 + $0xd8] sm:$0xf]
  %v109 = vld [vmem:[%s1 + $0xdc] sm:$0xf]
  %v110 = vld [vmem:[%s1 + $0xe0] sm:$0xf]
  %v111 = vld [vmem:[%s1 + $0xe4] sm:$0xf]
  %v112 = vld [vmem:[%s1 + $0xe8] sm:$0xf]
  %v113 = vld [vmem:[%s1 + $0xec] sm:$0xf]
  %v114 = vld [vmem:[%s1 + $0xf0] sm:$0xf]
  %v115 = vld [vmem:[%s1 + $0xf4] sm:$0xf]
  %v116 = vld [vmem:[%s1 + $0xf8] sm:$0xf]
  %v117 = vld [vmem:[%s1 + $0xfc] sm:$0xf]
  %v118 = vld [vmem:[%s1 + $0x100] sm:$0xf]
  %v119 = vld [vmem:[%s1 + $0x104] sm:$0xf]
  %v120 = vld [vmem:[%s1 + $0x108] sm:$0xf]
  %v121 = vld [vmem:[%s1 + $0x10c] sm:$0xf]
  %v122 = vld [vmem:[%s1 + $0x110] sm:$0xf]
  %v123 = vld [vmem:[%s1 + $0x114] sm:$0xf]
  %v124 = vld [vmem:[%s1 + $0x118] sm:$0xf]
  %v125 = vld [vmem:[%s1 + $0x11c] sm:$0xf]
  %v126 = vld [vmem:[%s2] sm:$0x1]
  %v128 = vlaneseq
  %v129 = vshrl.u32 %v128, 7
  %v130 = vsub.s32 0, %v129
  %v131 = vrot.slane %v126, %v130
  %v172 = vunpack.c.l.b16 %v15
  %v173 = vunpack.c.h.b16 %v15
  %v174 = vunpack.c.l.b16 %v16
  %v175 = vunpack.c.h.b16 %v16
  %v176 = vunpack.c.l.b16 %v17
  %v177 = vunpack.c.l.b16 %v18
  %v178 = vunpack.c.h.b16 %v18
  %v179 = vunpack.c.l.b16 %v19
  %v180 = vunpack.c.h.b16 %v19
  %v181 = vunpack.c.l.b16 %v20
  %v182 = vunpack.c.l.b16 %v21
  %v183 = vunpack.c.h.b16 %v21
  %v184 = vunpack.c.l.b16 %v22
  %v185 = vunpack.c.h.b16 %v22
  %v186 = vunpack.c.l.b16 %v23
  %v187 = vunpack.c.l.b16 %v24
  %v188 = vunpack.c.h.b16 %v24
  %v189 = vunpack.c.l.b16 %v25
  %v190 = vunpack.c.h.b16 %v25
  %v191 = vunpack.c.l.b16 %v26
  %v192 = vunpack.c.l.b16 %v27
  %v193 = vunpack.c.h.b16 %v27
  %v194 = vunpack.c.l.b16 %v28
  %v195 = vunpack.c.h.b16 %v28
  %v196 = vunpack.c.l.b16 %v29
  %v197 = vunpack.c.l.b16 %v30
  %v198 = vunpack.c.h.b16 %v30
  %v199 = vunpack.c.l.b16 %v31
  %v200 = vunpack.c.h.b16 %v31
  %v201 = vunpack.c.l.b16 %v32
  %v202 = vunpack.c.l.b16 %v33
  %v203 = vunpack.c.h.b16 %v33
  %v204 = vunpack.c.l.b16 %v34
  %v205 = vunpack.c.h.b16 %v34
  %v206 = vunpack.c.l.b16 %v35
  %v207 = vunpack.c.l.b16 %v36
  %v208 = vunpack.c.h.b16 %v36
  %v209 = vunpack.c.l.b16 %v37
  %v210 = vunpack.c.h.b16 %v37
  %v211 = vunpack.c.l.b16 %v38
  %v212 = vunpack.c.l.b16 %v39
  %v213 = vunpack.c.h.b16 %v39
  %v214 = vunpack.c.l.b16 %v40
  %v215 = vunpack.c.h.b16 %v40
  %v216 = vunpack.c.l.b16 %v41
  %v217 = vunpack.c.l.b16 %v42
  %v218 = vunpack.c.h.b16 %v42
  %v219 = vunpack.c.l.b16 %v43
  %v220 = vunpack.c.h.b16 %v43
  %v221 = vunpack.c.l.b16 %v44
  %v222 = vunpack.c.l.b16 %v45
  %v223 = vunpack.c.h.b16 %v45
  %v224 = vunpack.c.l.b16 %v46
  %v225 = vunpack.c.h.b16 %v46
  %v226 = vunpack.c.l.b16 %v47
  %v227 = vunpack.c.l.b16 %v48
  %v228 = vunpack.c.h.b16 %v48
  %v229 = vunpack.c.l.b16 %v49
  %v230 = vunpack.c.h.b16 %v49
  %v231 = vunpack.c.l.b16 %v50
  %v232 = vunpack.c.l.b16 %v51
  %v233 = vunpack.c.h.b16 %v51
  %v234 = vunpack.c.l.b16 %v52
  %v235 = vunpack.c.h.b16 %v52
  %v236 = vunpack.c.l.b16 %v53
  %v237 = vpack.c.b16 %v177, %v172
  %v238 = vpack.c.b16 %v178, %v173
  %v239 = vpack.c.b16 %v179, %v174
  %v240 = vpack.c.b16 %v180, %v175
  %v241 = vpack.c.b16 %v181, %v176
  %v242 = vpack.c.b16 %v187, %v182
  %v243 = vpack.c.b16 %v188, %v183
  %v244 = vpack.c.b16 %v189, %v184
  %v245 = vpack.c.b16 %v190, %v185
  %v246 = vpack.c.b16 %v191, %v186
  %v247 = vpack.c.b16 %v197, %v192
  %v248 = vpack.c.b16 %v198, %v193
  %v249 = vpack.c.b16 %v199, %v194
  %v250 = vpack.c.b16 %v200, %v195
  %v251 = vpack.c.b16 %v201, %v196
  %v252 = vpack.c.b16 %v207, %v202
  %v253 = vpack.c.b16 %v208, %v203
  %v254 = vpack.c.b16 %v209, %v204
  %v255 = vpack.c.b16 %v210, %v205
  %v256 = vpack.c.b16 %v211, %v206
  %v257 = vpack.c.b16 %v217, %v212
  %v258 = vpack.c.b16 %v218, %v213
  %v259 = vpack.c.b16 %v219, %v214
  %v260 = vpack.c.b16 %v220, %v215
  %v261 = vpack.c.b16 %v221, %v216
  %v262 = vpack.c.b16 %v227, %v222
  %v263 = vpack.c.b16 %v228, %v223
  %v264 = vpack.c.b16 %v229, %v224
  %v265 = vpack.c.b16 %v230, %v225
  %v266 = vpack.c.b16 %v231, %v226
  %v267 = vpack.c.b16 %v232, %v232
  %v268 = vpack.c.b16 %v233, %v233
  %v269 = vpack.c.b16 %v234, %v234
  %v270 = vpack.c.b16 %v235, %v235
  %v271 = vpack.c.b16 %v236, %v236
  %v372 = vunpack.c.l.b16 %v54
  %v373 = vunpack.c.l.b16 %v55
  %v374 = vunpack.c.l.b16 %v56
  %v375 = vunpack.c.l.b16 %v57
  %v376 = vunpack.c.l.b16 %v58
  %v377 = vunpack.c.l.b16 %v59
  %v378 = vunpack.c.l.b16 %v60
  %v379 = vunpack.c.l.b16 %v61
  %v380 = vunpack.c.l.b16 %v62
  %v381 = vunpack.c.l.b16 %v63
  %v382 = vunpack.c.l.b16 %v64
  %v383 = vunpack.c.l.b16 %v65
  %v384 = vunpack.c.l.b16 %v66
  %v385 = vunpack.c.l.b16 %v67
  %v386 = vunpack.c.l.b16 %v68
  %v387 = vunpack.c.l.b16 %v69
  %v388 = vunpack.c.l.b16 %v70
  %v389 = vunpack.c.l.b16 %v71
  %v390 = vunpack.c.l.b16 %v72
  %v391 = vunpack.c.l.b16 %v73
  %v392 = vunpack.c.l.b16 %v74
  %v393 = vunpack.c.l.b16 %v75
  %v394 = vunpack.c.l.b16 %v76
  %v395 = vunpack.c.l.b16 %v77
  %v396 = vunpack.c.l.b16 %v78
  %v397 = vunpack.c.l.b16 %v79
  %v398 = vunpack.c.l.b16 %v80
  %v399 = vunpack.c.l.b16 %v81
  %v400 = vunpack.c.l.b16 %v82
  %v401 = vunpack.c.l.b16 %v83
  %v402 = vunpack.c.l.b16 %v84
  %v403 = vunpack.c.l.b16 %v85
  %v404 = vunpack.c.l.b16 %v86
  %v405 = vunpack.c.l.b16 %v87
  %v406 = vunpack.c.l.b16 %v88
  %v407 = vunpack.c.l.b16 %v89
  %v408 = vunpack.c.l.b16 %v90
  %v409 = vunpack.c.l.b16 %v91
  %v410 = vunpack.c.l.b16 %v92
  %v411 = vunpack.c.l.b16 %v93
  %v412 = vunpack.c.l.b16 %v94
  %v413 = vunpack.c.l.b16 %v95
  %v414 = vunpack.c.l.b16 %v96
  %v415 = vunpack.c.l.b16 %v97
  %v416 = vunpack.c.l.b16 %v98
  %v417 = vunpack.c.l.b16 %v99
  %v418 = vunpack.c.l.b16 %v100
  %v419 = vunpack.c.l.b16 %v101
  %v420 = vunpack.c.l.b16 %v102
  %v421 = vunpack.c.l.b16 %v103
  %v422 = vunpack.c.l.b16 %v104
  %v423 = vunpack.c.l.b16 %v105
  %v424 = vunpack.c.l.b16 %v106
  %v425 = vunpack.c.l.b16 %v107
  %v426 = vunpack.c.l.b16 %v108
  %v427 = vunpack.c.l.b16 %v109
  %v428 = vunpack.c.l.b16 %v110
  %v429 = vunpack.c.l.b16 %v111
  %v430 = vunpack.c.l.b16 %v112
  %v431 = vunpack.c.l.b16 %v113
  %v432 = vunpack.c.l.b16 %v114
  %v433 = vunpack.c.l.b16 %v115
  %v434 = vunpack.c.l.b16 %v116
  %v435 = vunpack.c.l.b16 %v117
  %v436 = vunpack.c.l.b16 %v118
  %v437 = vunpack.c.l.b16 %v119
  %v438 = vunpack.c.l.b16 %v120
  %v439 = vunpack.c.l.b16 %v121
  %v440 = vunpack.c.l.b16 %v122
  %v441 = vunpack.c.l.b16 %v123
  %v442 = vunpack.c.l.b16 %v124
  %v443 = vunpack.c.l.b16 %v125
  %v444 = vpack.c.b16 %v373, %v372
  %v445 = vpack.c.b16 %v375, %v374
  %v446 = vpack.c.b16 %v377, %v376
  %v447 = vpack.c.b16 %v379, %v378
  %v448 = vpack.c.b16 %v381, %v380
  %v449 = vpack.c.b16 %v383, %v382
  %v450 = vpack.c.b16 %v385, %v384
  %v451 = vpack.c.b16 %v387, %v386
  %v452 = vpack.c.b16 %v389, %v388
  %v453 = vpack.c.b16 %v391, %v390
  %v454 = vpack.c.b16 %v393, %v392
  %v455 = vpack.c.b16 %v395, %v394
  %v456 = vpack.c.b16 %v397, %v396
  %v457 = vpack.c.b16 %v399, %v398
  %v458 = vpack.c.b16 %v401, %v400
  %v459 = vpack.c.b16 %v403, %v402
  %v460 = vpack.c.b16 %v405, %v404
  %v461 = vpack.c.b16 %v407, %v406
  %v462 = vpack.c.b16 %v409, %v408
  %v463 = vpack.c.b16 %v411, %v410
  %v464 = vpack.c.b16 %v413, %v412
  %v465 = vpack.c.b16 %v415, %v414
  %v466 = vpack.c.b16 %v417, %v416
  %v467 = vpack.c.b16 %v419, %v418
  %v468 = vpack.c.b16 %v421, %v420
  %v469 = vpack.c.b16 %v423, %v422
  %v470 = vpack.c.b16 %v425, %v424
  %v471 = vpack.c.b16 %v427, %v426
  %v472 = vpack.c.b16 %v429, %v428
  %v473 = vpack.c.b16 %v431, %v430
  %v474 = vpack.c.b16 %v433, %v432
  %v475 = vpack.c.b16 %v435, %v434
  %v476 = vpack.c.b16 %v437, %v436
  %v477 = vpack.c.b16 %v439, %v438
  %v478 = vpack.c.b16 %v441, %v440
  %v479 = vpack.c.b16 %v443, %v442
  %vm516 = vcmask 523264
  %v518 = vsel %vm516, %v241, 0
  %v521 = vsel %vm516, %v246, 0
  %v524 = vsel %vm516, %v251, 0
  %v527 = vsel %vm516, %v256, 0
  %v530 = vsel %vm516, %v261, 0
  %v533 = vsel %vm516, %v266, 0
  %v536 = vsel %vm516, %v271, 0
  %538 = vmatprep.subr.bf16.mxu0 0
  %539 = vmatpush1.bf16.msra.mxu0 %v444
  %540 = vmatprep.subr.bf16.mxu0 0
  %541 = vmatpush1.bf16.msra.mxu0 %v445
  %542 = vmatprep.subr.bf16.mxu0 0
  %543 = vmatpush1.bf16.msra.mxu0 %v446
  %544 = vmatprep.subr.bf16.mxu0 0
  %545 = vmatpush1.bf16.msra.mxu0 %v447
  %546 = vmatprep.subr.bf16.mxu0 0
  %547 = vmatpush1.bf16.msra.mxu0 %v448
  %548 = vmatprep.subr.bf16.mxu0 0
  %549 = vmatpush1.bf16.msra.mxu0 %v449
  %550 = vmatprep.subr.bf16.mxu0 0
  %551 = vmatpush1.bf16.msra.mxu0 %v450
  %552 = vmatprep.subr.bf16.mxu0 0
  %553 = vmatpush1.bf16.msra.mxu0 %v451
  %554 = vmatprep.subr.bf16.mxu0 0
  %555 = vmatpush1.bf16.msra.mxu0 %v452
  %556 = vmatprep.subr.bf16.mxu0 0
  %557 = vmatpush1.bf16.msra.mxu0 %v453
  %558 = vmatprep.subr.bf16.mxu0 0
  %559 = vmatpush1.bf16.msra.mxu0 %v454
  %560 = vmatprep.subr.bf16.mxu0 0
  %561 = vmatpush1.bf16.msra.mxu0 %v455
  %562 = vmatprep.subr.bf16.mxu0 0
  %563 = vmatpush1.bf16.msra.mxu0 %v456
  %564 = vmatprep.subr.bf16.mxu0 0
  %565 = vmatpush1.bf16.msra.mxu0 %v457
  %566 = vmatprep.subr.bf16.mxu0 0
  %567 = vmatpush1.bf16.msra.mxu0 %v458
  %568 = vmatprep.subr.bf16.mxu0 0
  %569 = vmatpush1.bf16.msra.mxu0 %v459
  %570 = vmatprep.mubr.bf16.mxu0 %v238
  %571 = vmatmul.mubr.bf16.gmra.mrb[0].mxu0 %v237
  %v572 = vpop.f32.mrb[0].mxu0
  %v573 = vadd.f32 %v131, %v572
  %v574 = vpop.f32.mrb[0].mxu0
  %v575 = vpop.f32.mrb[0].mxu0
  %v576 = vadd.f32 %v131, %v575
  %v577 = vpop.f32.mrb[0].mxu0
  %578 = vmatprep.mubr.bf16.mxu0 %v243
  %579 = vmatmul.mubr.bf16.gmra.mrb[0].mxu0 %v242
  %v580 = vpop.f32.mrb[0].mxu0
  %v581 = vadd.f32 %v131, %v580
  %v582 = vpop.f32.mrb[0].mxu0
  %v583 = vpop.f32.mrb[0].mxu0
  %v584 = vadd.f32 %v131, %v583
  %v585 = vpop.f32.mrb[0].mxu0
  %586 = vmatprep.mubr.bf16.mxu0 %v248
  %587 = vmatmul.mubr.bf16.gmra.mrb[0].mxu0 %v247
  %v588 = vpop.f32.mrb[0].mxu0
  %v589 = vadd.f32 %v131, %v588
  %v590 = vpop.f32.mrb[0].mxu0
  %v591 = vpop.f32.mrb[0].mxu0
  %v592 = vadd.f32 %v131, %v591
  %v593 = vpop.f32.mrb[0].mxu0
  %594 = vmatprep.mubr.bf16.mxu0 %v253
  %595 = vmatmul.mubr.bf16.gmra.mrb[0].mxu0 %v252
  %v596 = vpop.f32.mrb[0].mxu0
  %v597 = vadd.f32 %v131, %v596
  %v598 = vpop.f32.mrb[0].mxu0
  %v599 = vpop.f32.mrb[0].mxu0
  %v600 = vadd.f32 %v131, %v599
  %v601 = vpop.f32.mrb[0].mxu0
  %602 = vmatprep.mubr.bf16.mxu0 %v258
  %603 = vmatmul.mubr.bf16.gmra.mrb[0].mxu0 %v257
  %v604 = vpop.f32.mrb[0].mxu0
  %v605 = vadd.f32 %v131, %v604
  %v606 = vpop.f32.mrb[0].mxu0
  %v607 = vpop.f32.mrb[0].mxu0
  %v608 = vadd.f32 %v131, %v607
  %v609 = vpop.f32.mrb[0].mxu0
  %610 = vmatprep.mubr.bf16.mxu0 %v263
  %611 = vmatmul.mubr.bf16.gmra.mrb[0].mxu0 %v262
  %v612 = vpop.f32.mrb[0].mxu0
  %v613 = vadd.f32 %v131, %v612
  %v614 = vpop.f32.mrb[0].mxu0
  %v615 = vpop.f32.mrb[0].mxu0
  %v616 = vadd.f32 %v131, %v615
  %v617 = vpop.f32.mrb[0].mxu0
  %618 = vmatprep.mubr.bf16.mxu0 %v268
  %619 = vmatmul.mubr.bf16.gmra.mrb[0].mxu0 %v267
  %v620 = vpop.f32.mrb[0].mxu0
  %v621 = vadd.f32 %v131, %v620
  %v622 = vpop.f32.mrb[0].mxu0
  %v623 = vpop.f32.mrb[0].mxu0
  %v624 = vpop.f32.mrb[0].mxu0
  %625 = vdwg.mxu0
  %626 = vmatprep.subr.bf16.mxu0 0
  %627 = vmatpush1.bf16.msra.mxu0 %v460
  %628 = vmatprep.subr.bf16.mxu0 0
  %629 = vmatpush1.bf16.msra.mxu0 %v461
  %630 = vmatprep.subr.bf16.mxu0 0
  %631 = vmatpush1.bf16.msra.mxu0 %v462
  %632 = vmatprep.subr.bf16.mxu0 0
  %633 = vmatpush1.bf16.msra.mxu0 %v463
  %634 = vmatprep.subr.bf16.mxu0 0
  %635 = vmatpush1.bf16.msra.mxu0 %v464
  %636 = vmatprep.subr.bf16.mxu0 0
  %637 = vmatpush1.bf16.msra.mxu0 %v465
  %638 = vmatprep.subr.bf16.mxu0 0
  %639 = vmatpush1.bf16.msra.mxu0 %v466
  %640 = vmatprep.subr.bf16.mxu0 0
  %641 = vmatpush1.bf16.msra.mxu0 %v467
  %642 = vmatprep.subr.bf16.mxu0 0
  %643 = vmatpush1.bf16.msra.mxu0 %v468
  %644 = vmatprep.subr.bf16.mxu0 0
  %645 = vmatpush1.bf16.msra.mxu0 %v469
  %646 = vmatprep.subr.bf16.mxu0 0
  %647 = vmatpush1.bf16.msra.mxu0 %v470
  %648 = vmatprep.subr.bf16.mxu0 0
  %649 = vmatpush1.bf16.msra.mxu0 %v471
  %650 = vmatprep.subr.bf16.mxu0 0
  %651 = vmatpush1.bf16.msra.mxu0 %v472
  %652 = vmatprep.subr.bf16.mxu0 0
  %653 = vmatpush1.bf16.msra.mxu0 %v473
  %654 = vmatprep.subr.bf16.mxu0 0
  %655 = vmatpush1.bf16.msra.mxu0 %v474
  %656 = vmatprep.subr.bf16.mxu0 0
  %657 = vmatpush1.bf16.msra.mxu0 %v475
  %658 = vmatprep.mubr.bf16.mxu0 %v240
  %659 = vmatmul.mubr.bf16.gmra.mrb[0].mxu0 %v239
  %v660 = vpop.f32.mrb[0].mxu0
  %v661 = vadd.f32 %v573, %v660
  %v662 = vpop.f32.mrb[0].mxu0
  %v663 = vpop.f32.mrb[0].mxu0
  %v664 = vadd.f32 %v576, %v663
  %v665 = vpop.f32.mrb[0].mxu0
  %666 = vmatprep.mubr.bf16.mxu0 %v245
  %667 = vmatmul.mubr.bf16.gmra.mrb[0].mxu0 %v244
  %v668 = vpop.f32.mrb[0].mxu0
  %v669 = vadd.f32 %v581, %v668
  %v670 = vpop.f32.mrb[0].mxu0
  %v671 = vpop.f32.mrb[0].mxu0
  %v672 = vadd.f32 %v584, %v671
  %v673 = vpop.f32.mrb[0].mxu0
  %674 = vmatprep.mubr.bf16.mxu0 %v250
  %675 = vmatmul.mubr.bf16.gmra.mrb[0].mxu0 %v249
  %v676 = vpop.f32.mrb[0].mxu0
  %v677 = vadd.f32 %v589, %v676
  %v678 = vpop.f32.mrb[0].mxu0
  %v679 = vpop.f32.mrb[0].mxu0
  %v680 = vadd.f32 %v592, %v679
  %v681 = vpop.f32.mrb[0].mxu0
  %682 = vmatprep.mubr.bf16.mxu0 %v255
  %683 = vmatmul.mubr.bf16.gmra.mrb[0].mxu0 %v254
  %v684 = vpop.f32.mrb[0].mxu0
  %v685 = vadd.f32 %v597, %v684
  %v686 = vpop.f32.mrb[0].mxu0
  %v687 = vpop.f32.mrb[0].mxu0
  %v688 = vadd.f32 %v600, %v687
  %v689 = vpop.f32.mrb[0].mxu0
  %690 = vmatprep.mubr.bf16.mxu0 %v260
  %691 = vmatmul.mubr.bf16.gmra.mrb[0].mxu0 %v259
  %v692 = vpop.f32.mrb[0].mxu0
  %v693 = vadd.f32 %v605, %v692
  %v694 = vpop.f32.mrb[0].mxu0
  %v695 = vpop.f32.mrb[0].mxu0
  %v696 = vadd.f32 %v608, %v695
  %v697 = vpop.f32.mrb[0].mxu0
  %698 = vmatprep.mubr.bf16.mxu0 %v265
  %699 = vmatmul.mubr.bf16.gmra.mrb[0].mxu0 %v264
  %v700 = vpop.f32.mrb[0].mxu0
  %v701 = vadd.f32 %v613, %v700
  %v702 = vpop.f32.mrb[0].mxu0
  %v703 = vpop.f32.mrb[0].mxu0
  %v704 = vadd.f32 %v616, %v703
  %v705 = vpop.f32.mrb[0].mxu0
  %706 = vmatprep.mubr.bf16.mxu0 %v270
  %707 = vmatmul.mubr.bf16.gmra.mrb[0].mxu0 %v269
  %v708 = vpop.f32.mrb[0].mxu0
  %v709 = vadd.f32 %v621, %v708
  %v710 = vpop.f32.mrb[0].mxu0
  %v711 = vpop.f32.mrb[0].mxu0
  %v712 = vpop.f32.mrb[0].mxu0
  %713 = vdwg.mxu0
  %714 = vmatprep.subr.bf16.mxu0 0
  %715 = vmatpush1.bf16.msra.mxu0 %v476
  %716 = vmatprep.subr.bf16.mxu0 0
  %717 = vmatpush1.bf16.msra.mxu0 %v477
  %718 = vmatprep.subr.bf16.mxu0 0
  %719 = vmatpush1.bf16.msra.mxu0 %v478
  %720 = vmatprep.subr.bf16.mxu0 0
  %721 = vmatpush1.bf16.msra.mxu0 %v479
  %722 = vmatprep.subr.bf16.mxu0 0
  %723 = vmatpush1.bf16.msra.mxu0 0
  %724 = vmatprep.subr.bf16.mxu0 0
  %725 = vmatpush1.bf16.msra.mxu0 0
  %726 = vmatprep.subr.bf16.mxu0 0
  %727 = vmatpush1.bf16.msra.mxu0 0
  %728 = vmatprep.subr.bf16.mxu0 0
  %729 = vmatpush1.bf16.msra.mxu0 0
  %730 = vmatprep.subr.bf16.mxu0 0
  %731 = vmatpush1.bf16.msra.mxu0 0
  %732 = vmatprep.subr.bf16.mxu0 0
  %733 = vmatpush1.bf16.msra.mxu0 0
  %734 = vmatprep.subr.bf16.mxu0 0
  %735 = vmatpush1.bf16.msra.mxu0 0
  %736 = vmatprep.subr.bf16.mxu0 0
  %737 = vmatpush1.bf16.msra.mxu0 0
  %738 = vmatprep.subr.bf16.mxu0 0
  %739 = vmatpush1.bf16.msra.mxu0 0
  %740 = vmatprep.subr.bf16.mxu0 0
  %741 = vmatpush1.bf16.msra.mxu0 0
  %742 = vmatprep.subr.bf16.mxu0 0
  %743 = vmatpush1.bf16.msra.mxu0 0
  %744 = vmatprep.subr.bf16.mxu0 0
  %745 = vmatpush1.bf16.msra.mxu0 0
  %746 = vmatprep.mubr.bf16.mxu0 0
  %747 = vmatmul.mubr.bf16.gmra.mrb[0].mxu0 %v518
  %v748 = vpop.f32.mrb[0].mxu0
  %v749 = vadd.f32 %v661, %v748
  %v750 = vpop.f32.mrb[0].mxu0
  %v751 = vpop.f32.mrb[0].mxu0
  %v752 = vadd.f32 %v664, %v751
  %v753 = vpop.f32.mrb[0].mxu0
  %754 = vmatprep.mubr.bf16.mxu0 0
  %755 = vmatmul.mubr.bf16.gmra.mrb[0].mxu0 %v521
  %v756 = vpop.f32.mrb[0].mxu0
  %v757 = vadd.f32 %v669, %v756
  %v758 = vpop.f32.mrb[0].mxu0
  %v759 = vpop.f32.mrb[0].mxu0
  %v760 = vadd.f32 %v672, %v759
  %v761 = vpop.f32.mrb[0].mxu0
  %762 = vmatprep.mubr.bf16.mxu0 0
  %763 = vmatmul.mubr.bf16.gmra.mrb[0].mxu0 %v524
  %v764 = vpop.f32.mrb[0].mxu0
  %v765 = vadd.f32 %v677, %v764
  %v766 = vpop.f32.mrb[0].mxu0
  %v767 = vpop.f32.mrb[0].mxu0
  %v768 = vadd.f32 %v680, %v767
  %v769 = vpop.f32.mrb[0].mxu0
  %770 = vmatprep.mubr.bf16.mxu0 0
  %771 = vmatmul.mubr.bf16.gmra.mrb[0].mxu0 %v527
  %v772 = vpop.f32.mrb[0].mxu0
  %v773 = vadd.f32 %v685, %v772
  %v774 = vpop.f32.mrb[0].mxu0
  %v775 = vpop.f32.mrb[0].mxu0
  %v776 = vadd.f32 %v688, %v775
  %v777 = vpop.f32.mrb[0].mxu0
  %778 = vmatprep.mubr.bf16.mxu0 0
  %779 = vmatmul.mubr.bf16.gmra.mrb[0].mxu0 %v530
  %v780 = vpop.f32.mrb[0].mxu0
  %v781 = vadd.f32 %v693, %v780
  %v782 = vpop.f32.mrb[0].mxu0
  %v783 = vpop.f32.mrb[0].mxu0
  %v784 = vadd.f32 %v696, %v783
  %v785 = vpop.f32.mrb[0].mxu0
  %786 = vmatprep.mubr.bf16.mxu0 0
  %787 = vmatmul.mubr.bf16.gmra.mrb[0].mxu0 %v533
  %v788 = vpop.f32.mrb[0].mxu0
  %v789 = vadd.f32 %v701, %v788
  %v790 = vpop.f32.mrb[0].mxu0
  %v791 = vpop.f32.mrb[0].mxu0
  %v792 = vadd.f32 %v704, %v791
  %v793 = vpop.f32.mrb[0].mxu0
  %794 = vmatprep.mubr.bf16.mxu0 0
  %795 = vmatmul.mubr.bf16.gmra.mrb[0].mxu0 %v536
  %v796 = vpop.f32.mrb[0].mxu0
  %v797 = vadd.f32 %v709, %v796
  %v798 = vpop.f32.mrb[0].mxu0
  %v799 = vpop.f32.mrb[0].mxu0
  %v800 = vpop.f32.mrb[0].mxu0
  %801 = vdwg.mxu0
  %v802 = vmax.f32 %v749, 0.0
  %v803 = vmax.f32 %v752, 0.0
  %v804 = vmax.f32 %v757, 0.0
  %v805 = vmax.f32 %v760, 0.0
  %v806 = vmax.f32 %v765, 0.0
  %v807 = vmax.f32 %v768, 0.0
  %v808 = vmax.f32 %v773, 0.0
  %v809 = vmax.f32 %v776, 0.0
  %v810 = vmax.f32 %v781, 0.0
  %v811 = vmax.f32 %v784, 0.0
  %v812 = vmax.f32 %v789, 0.0
  %v813 = vmax.f32 %v792, 0.0
  %v814 = vmax.f32 %v797, 0.0
  %v815 = vpack.c.bf16 %v803, %v802
  %v816 = vpack.c.bf16 %v805, %v804
  %v817 = vpack.c.bf16 %v807, %v806
  %v818 = vpack.c.bf16 %v809, %v808
  %v819 = vpack.c.bf16 %v811, %v810
  %v820 = vpack.c.bf16 %v813, %v812
  %v821 = vpack.c.bf16 %v814, %v814
  %v829 = vunpack.c.l.b16 %v815
  %v830 = vunpack.c.h.b16 %v815
  %v831 = vunpack.c.l.b16 %v816
  %v832 = vunpack.c.h.b16 %v816
  %v833 = vunpack.c.l.b16 %v817
  %v834 = vunpack.c.h.b16 %v817
  %v835 = vunpack.c.l.b16 %v818
  %v836 = vunpack.c.h.b16 %v818
  %v837 = vunpack.c.l.b16 %v819
  %v838 = vunpack.c.h.b16 %v819
  %v839 = vunpack.c.l.b16 %v820
  %v840 = vunpack.c.h.b16 %v820
  %v841 = vunpack.c.l.b16 %v821
  %v842 = vpack.c.b16 %v829, %v829
  %v843 = vpack.c.b16 %v830, %v830
  %v844 = vpack.c.b16 %v831, %v831
  %v845 = vpack.c.b16 %v832, %v832
  %v846 = vpack.c.b16 %v833, %v833
  %v847 = vpack.c.b16 %v834, %v834
  %v848 = vpack.c.b16 %v835, %v835
  %v849 = vpack.c.b16 %v836, %v836
  %v850 = vpack.c.b16 %v837, %v837
  %v851 = vpack.c.b16 %v838, %v838
  %v852 = vpack.c.b16 %v839, %v839
  %v853 = vpack.c.b16 %v840, %v840
  %v854 = vpack.c.b16 %v841, %v841
  %vm868 = vcmask 519168
  %869 = vst.msk [vmem:[%s3] sm:$0xf] %vm868, %v842
  %870 = vst.msk [vmem:[%s3 + $0x4] sm:$0xf] %vm868, %v843
  %871 = vst.msk [vmem:[%s3 + $0x8] sm:$0xf] %vm868, %v844
  %872 = vst.msk [vmem:[%s3 + $0xc] sm:$0xf] %vm868, %v845
  %873 = vst.msk [vmem:[%s3 + $0x10] sm:$0xf] %vm868, %v846
  %874 = vst.msk [vmem:[%s3 + $0x14] sm:$0xf] %vm868, %v847
  %875 = vst.msk [vmem:[%s3 + $0x18] sm:$0xf] %vm868, %v848
  %876 = vst.msk [vmem:[%s3 + $0x1c] sm:$0xf] %vm868, %v849
  %877 = vst.msk [vmem:[%s3 + $0x20] sm:$0xf] %vm868, %v850
  %878 = vst.msk [vmem:[%s3 + $0x24] sm:$0xf] %vm868, %v851
  %879 = vst.msk [vmem:[%s3 + $0x28] sm:$0xf] %vm868, %v852
  %880 = vst.msk [vmem:[%s3 + $0x2c] sm:$0xf] %vm868, %v853
  %vm881 = vcmask 516096
  %882 = vst.msk [vmem:[%s3 + $0x30] sm:$0x1] %vm881, %v854
  // Predicated region
  $region14: #{_lambda_.6} parent=0 // pred_check
    _
  $region15: #{_lambda_.6} parent=0 // pred_check_branch
    %884 = sbr.rel (0) target = $region17
  $region16: #{_lambda_.6} parent=0 // pred_region
    _
  $region17: #{_lambda_.6} parent=0 // pred_fallthru
    _
  // Predicated region
  $region18: #{_lambda_.6} parent=0 // pred_check
    _
  $region19: #{_lambda_.6} parent=0 // pred_check_branch
    %886 = sbr.rel (0) target = $region21
  $region20: #{_lambda_.6} parent=0 // pred_region
    _
  $region21: #{_lambda_.6} parent=0 // pred_fallthru
    _

// kernel: _lambda_.7
$region0: #{_lambda_.7}
  #allocation0 [shape = 'u32[]', space=smem, size = 0x4, offset = 0x4, fixed_abs, tag = 'smem constant byte address 0x4 - core index']
  #allocation1 [shape = 'u32[144,128]{1,0:T(1,128)}', space=vmem, size = 0x12000, scoped, tag = 'internal scratch']
  %s0 = inlined_call_operand.vmem [shape: bf16[8,784], index: 0, kind: input, shape index: {}]
  %s1 = inlined_call_operand.vmem [shape: bf16[784,768], index: 1, kind: input, shape index: {}]
  %s2 = inlined_call_operand.vmem [shape: bf16[256,768], index: 2, kind: input, shape index: {}]
  %s3 = inlined_call_operand.vmem [shape: f32[1,768], index: 3, kind: input, shape index: {}]
  %s4 = inlined_call_operand.vmem [shape: f32[1,768], index: 4, kind: input, shape index: {}]
  %s5 = inlined_call_operand.vmem [shape: f32[256,5], index: 5, kind: input, shape index: {}]
  %s6 = inlined_call_operand.vmem [shape: f32[1,5], index: 6, kind: input, shape index: {}]
  %s7 = inlined_call_operand.hbm [shape: f32[2,4], index: 7, kind: output, shape index: {}]
  %s8 = sld [smem:[#allocation0]]
  $region38: #{_lambda_.7} parent=0
    _
  %s10 = ssub.s32 1, %s8
  %s11 = scalar_select 0, %s10, %s8
  $region1: #{_lambda_.7} parent=0
    #allocation2 [shape = 'u8[1024]{0}', space=vmem, size = 0x400, scoped, tag = 'output window, operand 0, single buffered']
    #allocation3 [shape = 's32[1]{0}', space=sflag, size = 0x4, scoped, tag = 'scoped memory for _lambda_.7']
    %12 = vsyncpa [#allocation3], 0
    // Predicated region
    $region2: #{_lambda_.7} parent=1 // pred_check
      _
    $region3: #{_lambda_.7} parent=1 // pred_check_branch
      %14 = sbr.rel (0) target = $region5
    $region4: #{_lambda_.7} parent=1 // pred_region
      _
    $region5: #{_lambda_.7} parent=1 // pred_fallthru
      _
    // Predicated region
    $region6: #{_lambda_.7} parent=1 // pred_check
      _
    $region7: #{_lambda_.7} parent=1 // pred_check_branch
      %16 = sbr.rel (0) target = $region9
    $region8: #{_lambda_.7} parent=1 // pred_region
      _
    $region9: #{_lambda_.7} parent=1 // pred_fallthru
      _
    // Predicated region
    $region10: #{_lambda_.7} parent=1 // pred_check
      _
    $region11: #{_lambda_.7} parent=1 // pred_check_branch
      %18 = sbr.rel (0) target = $region13
    $region12: #{_lambda_.7} parent=1 // pred_region
      _
    $region13: #{_lambda_.7} parent=1 // pred_fallthru
      _
    // Predicated region
    $region14: #{_lambda_.7} parent=1 // pred_check
      _
    $region15: #{_lambda_.7} parent=1 // pred_check_branch
      %20 = sbr.rel (0) target = $region17
    $region16: #{_lambda_.7} parent=1 // pred_region
      _
    $region17: #{_lambda_.7} parent=1 // pred_fallthru
      _
    // Predicated region
    $region18: #{_lambda_.7} parent=1 // pred_check
      _
    $region19: #{_lambda_.7} parent=1 // pred_check_branch
      %22 = sbr.rel (0) target = $region21
    $region20: #{_lambda_.7} parent=1 // pred_region
      _
    $region21: #{_lambda_.7} parent=1 // pred_fallthru
      _
    // Predicated region
    $region22: #{_lambda_.7} parent=1 // pred_check
      _
    $region23: #{_lambda_.7} parent=1 // pred_check_branch
      %24 = sbr.rel (0) target = $region25
    $region24: #{_lambda_.7} parent=1 // pred_region
      _
    $region25: #{_lambda_.7} parent=1 // pred_fallthru
      _
    // Predicated region
    $region26: #{_lambda_.7} parent=1 // pred_check
      _
    $region27: #{_lambda_.7} parent=1 // pred_check_branch
      %26 = sbr.rel (0) target = $region29
    $region28: #{_lambda_.7} parent=1 // pred_region
      _
    $region29: #{_lambda_.7} parent=1 // pred_fallthru
      _
    %v28 = vld [vmem:[%s0] sm:$0xff]
    %v29 = vld [vmem:[%s0 + $0x8] sm:$0xff]
    %v30 = vld [vmem:[%s0 + $0x10] sm:$0xff]
    %v31 = vld [vmem:[%s0 + $0x18] sm:$0xf]
    %v32 = vld [vmem:[%s1] sm:$0xff]
    %v33 = vld [vmem:[%s1 + $0x8] sm:$0xff]
    %v34 = vld [vmem:[%s1 + $0x10] sm:$0xff]
    %v35 = vld [vmem:[%s1 + $0x18] sm:$0xff]
    %v36 = vld [vmem:[%s1 + $0x20] sm:$0xff]
    %v37 = vld [vmem:[%s1 + $0x28] sm:$0xff]
    %v38 = vld [vmem:[%s1 + $0x30] sm:$0xff]
    %v39 = vld [vmem:[%s1 + $0x38] sm:$0xff]
    %v40 = vld [vmem:[%s1 + $0x40] sm:$0xff]
    %v41 = vld [vmem:[%s1 + $0x48] sm:$0xff]
    %v42 = vld [vmem:[%s1 + $0x50] sm:$0xff]
    %v43 = vld [vmem:[%s1 + $0x58] sm:$0xff]
    %v44 = vld [vmem:[%s1 + $0x60] sm:$0xff]
    %v45 = vld [vmem:[%s1 + $0x68] sm:$0xff]
    %v46 = vld [vmem:[%s1 + $0x70] sm:$0xff]
    %v47 = vld [vmem:[%s1 + $0x78] sm:$0xff]
    %v48 = vld [vmem:[%s1 + $0x80] sm:$0xff]
    %v49 = vld [vmem:[%s1 + $0x88] sm:$0xff]
    %v50 = vld [vmem:[%s1 + $0x90] sm:$0xff]
    %v51 = vld [vmem:[%s1 + $0x98] sm:$0xff]
    %v52 = vld [vmem:[%s1 + $0xa0] sm:$0xff]
    %v53 = vld [vmem:[%s1 + $0xa8] sm:$0xff]
    %v54 = vld [vmem:[%s1 + $0xb0] sm:$0xff]
    %v55 = vld [vmem:[%s1 + $0xb8] sm:$0xff]
    %v56 = vld [vmem:[%s1 + $0xc0] sm:$0xff]
    %v57 = vld [vmem:[%s1 + $0xc8] sm:$0xff]
    %v58 = vld [vmem:[%s1 + $0xd0] sm:$0xff]
    %v59 = vld [vmem:[%s1 + $0xd8] sm:$0xff]
    %v60 = vld [vmem:[%s1 + $0xe0] sm:$0xff]
    %v61 = vld [vmem:[%s1 + $0xe8] sm:$0xff]
    %v62 = vld [vmem:[%s1 + $0xf0] sm:$0xff]
    %v63 = vld [vmem:[%s1 + $0xf8] sm:$0xff]
    %v64 = vld [vmem:[%s1 + $0x100] sm:$0xff]
    %v65 = vld [vmem:[%s1 + $0x108] sm:$0xff]
    %v66 = vld [vmem:[%s1 + $0x110] sm:$0xff]
    %v67 = vld [vmem:[%s1 + $0x118] sm:$0xff]
    %v68 = vld [vmem:[%s1 + $0x120] sm:$0xff]
    %v69 = vld [vmem:[%s1 + $0x128] sm:$0xff]
    %v70 = vld [vmem:[%s1 + $0x130] sm:$0xff]
    %v71 = vld [vmem:[%s1 + $0x138] sm:$0xff]
    %v72 = vld [vmem:[%s1 + $0x140] sm:$0xff]
    %v73 = vld [vmem:[%s1 + $0x148] sm:$0xff]
    %v74 = vld [vmem:[%s1 + $0x150] sm:$0xff]
    %v75 = vld [vmem:[%s1 + $0x158] sm:$0xff]
    %v76 = vld [vmem:[%s1 + $0x160] sm:$0xff]
    %v77 = vld [vmem:[%s1 + $0x168] sm:$0xff]
    %v78 = vld [vmem:[%s1 + $0x170] sm:$0xff]
    %v79 = vld [vmem:[%s1 + $0x178] sm:$0xff]
    %v80 = vld [vmem:[%s1 + $0x180] sm:$0xff]
    %v81 = vld [vmem:[%s1 + $0x188] sm:$0xff]
    %v82 = vld [vmem:[%s1 + $0x190] sm:$0xff]
    %v83 = vld [vmem:[%s1 + $0x198] sm:$0xff]
    %v84 = vld [vmem:[%s1 + $0x1a0] sm:$0xff]
    %v85 = vld [vmem:[%s1 + $0x1a8] sm:$0xff]
    %v86 = vld [vmem:[%s1 + $0x1b0] sm:$0xff]
    %v87 = vld [vmem:[%s1 + $0x1b8] sm:$0xff]
    %v88 = vld [vmem:[%s1 + $0x1c0] sm:$0xff]
    %v89 = vld [vmem:[%s1 + $0x1c8] sm:$0xff]
    %v90 = vld [vmem:[%s1 + $0x1d0] sm:$0xff]
    %v91 = vld [vmem:[%s1 + $0x1d8] sm:$0xff]
    %v92 = vld [vmem:[%s1 + $0x1e0] sm:$0xff]
    %v93 = vld [vmem:[%s1 + $0x1e8] sm:$0xff]
    %v94 = vld [vmem:[%s1 + $0x1f0] sm:$0xff]
    %v95 = vld [vmem:[%s1 + $0x1f8] sm:$0xff]
    %v96 = vld [vmem:[%s1 + $0x200] sm:$0xff]
    %v97 = vld [vmem:[%s1 + $0x208] sm:$0xff]
    %v98 = vld [vmem:[%s1 + $0x210] sm:$0xff]
    %v99 = vld [vmem:[%s1 + $0x218] sm:$0xff]
    %v100 = vld [vmem:[%s1 + $0x220] sm:$0xff]
    %v101 = vld [vmem:[%s1 + $0x228] sm:$0xff]
    %v102 = vld [vmem:[%s1 + $0x230] sm:$0xff]
    %v103 = vld [vmem:[%s1 + $0x238] sm:$0xff]
    %v104 = vld [vmem:[%s1 + $0x240] sm:$0xff]
    %v105 = vld [vmem:[%s1 + $0x248] sm:$0xff]
    %v106 = vld [vmem:[%s1 + $0x250] sm:$0xff]
    %v107 = vld [vmem:[%s1 + $0x258] sm:$0xff]
    %v108 = vld [vmem:[%s1 + $0x260] sm:$0xff]
    %v109 = vld [vmem:[%s1 + $0x268] sm:$0xff]
    %v110 = vld [vmem:[%s1 + $0x270] sm:$0xff]
    %v111 = vld [vmem:[%s1 + $0x278] sm:$0xff]
    %v112 = vld [vmem:[%s1 + $0x280] sm:$0xff]
    %v113 = vld [vmem:[%s1 + $0x288] sm:$0xff]
    %v114 = vld [vmem:[%s1 + $0x290] sm:$0xff]
    %v115 = vld [vmem:[%s1 + $0x298] sm:$0xff]
    %v116 = vld [vmem:[%s1 + $0x2a0] sm:$0xff]
    %v117 = vld [vmem:[%s1 + $0x2a8] sm:$0xff]
    %v118 = vld [vmem:[%s1 + $0x2b0] sm:$0xff]
    %v119 = vld [vmem:[%s1 + $0x2b8] sm:$0xff]
    %v120 = vld [vmem:[%s1 + $0x2c0] sm:$0xff]
    %v121 = vld [vmem:[%s1 + $0x2c8] sm:$0xff]
    %v122 = vld [vmem:[%s1 + $0x2d0] sm:$0xff]
    %v123 = vld [vmem:[%s1 + $0x2d8] sm:$0xff]
    %v124 = vld [vmem:[%s1 + $0x2e0] sm:$0xff]
    %v125 = vld [vmem:[%s1 + $0x2e8] sm:$0xff]
    %v126 = vld [vmem:[%s1 + $0x2f0] sm:$0xff]
    %v127 = vld [vmem:[%s1 + $0x2f8] sm:$0xff]
    %v128 = vld [vmem:[%s1 + $0x300] sm:$0xff]
    %v129 = vld [vmem:[%s1 + $0x308] sm:$0xff]
    %v130 = vld [vmem:[%s1 + $0x310] sm:$0xff]
    %v131 = vld [vmem:[%s1 + $0x318] sm:$0xff]
    %v132 = vld [vmem:[%s1 + $0x320] sm:$0xff]
    %v133 = vld [vmem:[%s1 + $0x328] sm:$0xff]
    %v134 = vld [vmem:[%s1 + $0x330] sm:$0xff]
    %v135 = vld [vmem:[%s1 + $0x338] sm:$0xff]
    %v136 = vld [vmem:[%s1 + $0x340] sm:$0xff]
    %v137 = vld [vmem:[%s1 + $0x348] sm:$0xff]
    %v138 = vld [vmem:[%s1 + $0x350] sm:$0xff]
    %v139 = vld [vmem:[%s1 + $0x358] sm:$0xff]
    %v140 = vld [vmem:[%s1 + $0x360] sm:$0xff]
    %v141 = vld [vmem:[%s1 + $0x368] sm:$0xff]
    %v142 = vld [vmem:[%s1 + $0x370] sm:$0xff]
    %v143 = vld [vmem:[%s1 + $0x378] sm:$0xff]
    %v144 = vld [vmem:[%s1 + $0x380] sm:$0xff]
    %v145 = vld [vmem:[%s1 + $0x388] sm:$0xff]
    %v146 = vld [vmem:[%s1 + $0x390] sm:$0xff]
    %v147 = vld [vmem:[%s1 + $0x398] sm:$0xff]
    %v148 = vld [vmem:[%s1 + $0x3a0] sm:$0xff]
    %v149 = vld [vmem:[%s1 + $0x3a8] sm:$0xff]
    %v150 = vld [vmem:[%s1 + $0x3b0] sm:$0xff]
    %v151 = vld [vmem:[%s1 + $0x3b8] sm:$0xff]
    %v152 = vld [vmem:[%s1 + $0x3c0] sm:$0xff]
    %v153 = vld [vmem:[%s1 + $0x3c8] sm:$0xff]
    %v154 = vld [vmem:[%s1 + $0x3d0] sm:$0xff]
    %v155 = vld [vmem:[%s1 + $0x3d8] sm:$0xff]
    %v156 = vld [vmem:[%s1 + $0x3e0] sm:$0xff]
    %v157 = vld [vmem:[%s1 + $0x3e8] sm:$0xff]
    %v158 = vld [vmem:[%s1 + $0x3f0] sm:$0xff]
    %v159 = vld [vmem:[%s1 + $0x3f8] sm:$0xff]
    %v160 = vld [vmem:[%s1 + $0x400] sm:$0xff]
    %v161 = vld [vmem:[%s1 + $0x408] sm:$0xff]
    %v162 = vld [vmem:[%s1 + $0x410] sm:$0xff]
    %v163 = vld [vmem:[%s1 + $0x418] sm:$0xff]
    %v164 = vld [vmem:[%s1 + $0x420] sm:$0xff]
    %v165 = vld [vmem:[%s1 + $0x428] sm:$0xff]
    %v166 = vld [vmem:[%s1 + $0x430] sm:$0xff]
    %v167 = vld [vmem:[%s1 + $0x438] sm:$0xff]
    %v168 = vld [vmem:[%s1 + $0x440] sm:$0xff]
    %v169 = vld [vmem:[%s1 + $0x448] sm:$0xff]
    %v170 = vld [vmem:[%s1 + $0x450] sm:$0xff]
    %v171 = vld [vmem:[%s1 + $0x458] sm:$0xff]
    %v172 = vld [vmem:[%s1 + $0x460] sm:$0xff]
    %v173 = vld [vmem:[%s1 + $0x468] sm:$0xff]
    %v174 = vld [vmem:[%s1 + $0x470] sm:$0xff]
    %v175 = vld [vmem:[%s1 + $0x478] sm:$0xff]
    %v176 = vld [vmem:[%s1 + $0x480] sm:$0xff]
    %v177 = vld [vmem:[%s1 + $0x488] sm:$0xff]
    %v178 = vld [vmem:[%s1 + $0x490] sm:$0xff]
    %v179 = vld [vmem:[%s1 + $0x498] sm:$0xff]
    %v180 = vld [vmem:[%s1 + $0x4a0] sm:$0xff]
    %v181 = vld [vmem:[%s1 + $0x4a8] sm:$0xff]
    %v182 = vld [vmem:[%s1 + $0x4b0] sm:$0xff]
    %v183 = vld [vmem:[%s1 + $0x4b8] sm:$0xff]
    %v184 = vld [vmem:[%s1 + $0x4c0] sm:$0xff]
    %v185 = vld [vmem:[%s1 + $0x4c8] sm:$0xff]
    %v186 = vld [vmem:[%s1 + $0x4d0] sm:$0xff]
    %v187 = vld [vmem:[%s1 + $0x4d8] sm:$0xff]
    %v188 = vld [vmem:[%s1 + $0x4e0] sm:$0xff]
    %v189 = vld [vmem:[%s1 + $0x4e8] sm:$0xff]
    %v190 = vld [vmem:[%s1 + $0x4f0] sm:$0xff]
    %v191 = vld [vmem:[%s1 + $0x4f8] sm:$0xff]
    %v192 = vld [vmem:[%s1 + $0x500] sm:$0xff]
    %v193 = vld [vmem:[%s1 + $0x508] sm:$0xff]
    %v194 = vld [vmem:[%s1 + $0x510] sm:$0xff]
    %v195 = vld [vmem:[%s1 + $0x518] sm:$0xff]
    %v196 = vld [vmem:[%s1 + $0x520] sm:$0xff]
    %v197 = vld [vmem:[%s1 + $0x528] sm:$0xff]
    %v198 = vld [vmem:[%s1 + $0x530] sm:$0xff]
    %v199 = vld [vmem:[%s1 + $0x538] sm:$0xff]
    %v200 = vld [vmem:[%s1 + $0x540] sm:$0xff]
    %v201 = vld [vmem:[%s1 + $0x548] sm:$0xff]
    %v202 = vld [vmem:[%s1 + $0x550] sm:$0xff]
    %v203 = vld [vmem:[%s1 + $0x558] sm:$0xff]
    %v204 = vld [vmem:[%s1 + $0x560] sm:$0xff]
    %v205 = vld [vmem:[%s1 + $0x568] sm:$0xff]
    %v206 = vld [vmem:[%s1 + $0x570] sm:$0xff]
    %v207 = vld [vmem:[%s1 + $0x578] sm:$0xff]
    %v208 = vld [vmem:[%s1 + $0x580] sm:$0xff]
    %v209 = vld [vmem:[%s1 + $0x588] sm:$0xff]
    %v210 = vld [vmem:[%s1 + $0x590] sm:$0xff]
    %v211 = vld [vmem:[%s1 + $0x598] sm:$0xff]
    %v212 = vld [vmem:[%s1 + $0x5a0] sm:$0xff]
    %v213 = vld [vmem:[%s1 + $0x5a8] sm:$0xff]
    %v214 = vld [vmem:[%s1 + $0x5b0] sm:$0xff]
    %v215 = vld [vmem:[%s1 + $0x5b8] sm:$0xff]
    %v216 = vld [vmem:[%s1 + $0x5c0] sm:$0xff]
    %v217 = vld [vmem:[%s1 + $0x5c8] sm:$0xff]
    %v218 = vld [vmem:[%s1 + $0x5d0] sm:$0xff]
    %v219 = vld [vmem:[%s1 + $0x5d8] sm:$0xff]
    %v220 = vld [vmem:[%s1 + $0x5e0] sm:$0xff]
    %v221 = vld [vmem:[%s1 + $0x5e8] sm:$0xff]
    %v222 = vld [vmem:[%s1 + $0x5f0] sm:$0xff]
    %v223 = vld [vmem:[%s1 + $0x5f8] sm:$0xff]
    %v224 = vld [vmem:[%s1 + $0x600] sm:$0xff]
    %v225 = vld [vmem:[%s1 + $0x608] sm:$0xff]
    %v226 = vld [vmem:[%s1 + $0x610] sm:$0xff]
    %v227 = vld [vmem:[%s1 + $0x618] sm:$0xff]
    %v228 = vld [vmem:[%s1 + $0x620] sm:$0xff]
    %v229 = vld [vmem:[%s1 + $0x628] sm:$0xff]
    %v230 = vld [vmem:[%s1 + $0x630] sm:$0xff]
    %v231 = vld [vmem:[%s1 + $0x638] sm:$0xff]
    %v232 = vld [vmem:[%s1 + $0x640] sm:$0xff]
    %v233 = vld [vmem:[%s1 + $0x648] sm:$0xff]
    %v234 = vld [vmem:[%s1 + $0x650] sm:$0xff]
    %v235 = vld [vmem:[%s1 + $0x658] sm:$0xff]
    %v236 = vld [vmem:[%s1 + $0x660] sm:$0xff]
    %v237 = vld [vmem:[%s1 + $0x668] sm:$0xff]
    %v238 = vld [vmem:[%s1 + $0x670] sm:$0xff]
    %v239 = vld [vmem:[%s1 + $0x678] sm:$0xff]
    %v240 = vld [vmem:[%s1 + $0x680] sm:$0xff]
    %v241 = vld [vmem:[%s1 + $0x688] sm:$0xff]
    %v242 = vld [vmem:[%s1 + $0x690] sm:$0xff]
    %v243 = vld [vmem:[%s1 + $0x698] sm:$0xff]
    %v244 = vld [vmem:[%s1 + $0x6a0] sm:$0xff]
    %v245 = vld [vmem:[%s1 + $0x6a8] sm:$0xff]
    %v246 = vld [vmem:[%s1 + $0x6b0] sm:$0xff]
    %v247 = vld [vmem:[%s1 + $0x6b8] sm:$0xff]
    %v248 = vld [vmem:[%s1 + $0x6c0] sm:$0xff]
    %v249 = vld [vmem:[%s1 + $0x6c8] sm:$0xff]
    %v250 = vld [vmem:[%s1 + $0x6d0] sm:$0xff]
    %v251 = vld [vmem:[%s1 + $0x6d8] sm:$0xff]
    %v252 = vld [vmem:[%s1 + $0x6e0] sm:$0xff]
    %v253 = vld [vmem:[%s1 + $0x6e8] sm:$0xff]
    %v254 = vld [vmem:[%s1 + $0x6f0] sm:$0xff]
    %v255 = vld [vmem:[%s1 + $0x6f8] sm:$0xff]
    %v256 = vld [vmem:[%s1 + $0x700] sm:$0xff]
    %v257 = vld [vmem:[%s1 + $0x708] sm:$0xff]
    %v258 = vld [vmem:[%s1 + $0x710] sm:$0xff]
    %v259 = vld [vmem:[%s1 + $0x718] sm:$0xff]
    %v260 = vld [vmem:[%s1 + $0x720] sm:$0xff]
    %v261 = vld [vmem:[%s1 + $0x728] sm:$0xff]
    %v262 = vld [vmem:[%s1 + $0x730] sm:$0xff]
    %v263 = vld [vmem:[%s1 + $0x738] sm:$0xff]
    %v264 = vld [vmem:[%s1 + $0x740] sm:$0xff]
    %v265 = vld [vmem:[%s1 + $0x748] sm:$0xff]
    %v266 = vld [vmem:[%s1 + $0x750] sm:$0xff]
    %v267 = vld [vmem:[%s1 + $0x758] sm:$0xff]
    %v268 = vld [vmem:[%s1 + $0x760] sm:$0xff]
    %v269 = vld [vmem:[%s1 + $0x768] sm:$0xff]
    %v270 = vld [vmem:[%s1 + $0x770] sm:$0xff]
    %v271 = vld [vmem:[%s1 + $0x778] sm:$0xff]
    %v272 = vld [vmem:[%s1 + $0x780] sm:$0xff]
    %v273 = vld [vmem:[%s1 + $0x788] sm:$0xff]
    %v274 = vld [vmem:[%s1 + $0x790] sm:$0xff]
    %v275 = vld [vmem:[%s1 + $0x798] sm:$0xff]
    %v276 = vld [vmem:[%s1 + $0x7a0] sm:$0xff]
    %v277 = vld [vmem:[%s1 + $0x7a8] sm:$0xff]
    %v278 = vld [vmem:[%s1 + $0x7b0] sm:$0xff]
    %v279 = vld [vmem:[%s1 + $0x7b8] sm:$0xff]
    %v280 = vld [vmem:[%s1 + $0x7c0] sm:$0xff]
    %v281 = vld [vmem:[%s1 + $0x7c8] sm:$0xff]
    %v282 = vld [vmem:[%s1 + $0x7d0] sm:$0xff]
    %v283 = vld [vmem:[%s1 + $0x7d8] sm:$0xff]
    %v284 = vld [vmem:[%s1 + $0x7e0] sm:$0xff]
    %v285 = vld [vmem:[%s1 + $0x7e8] sm:$0xff]
    %v286 = vld [vmem:[%s1 + $0x7f0] sm:$0xff]
    %v287 = vld [vmem:[%s1 + $0x7f8] sm:$0xff]
    %v288 = vld [vmem:[%s1 + $0x800] sm:$0xff]
    %v289 = vld [vmem:[%s1 + $0x808] sm:$0xff]
    %v290 = vld [vmem:[%s1 + $0x810] sm:$0xff]
    %v291 = vld [vmem:[%s1 + $0x818] sm:$0xff]
    %v292 = vld [vmem:[%s1 + $0x820] sm:$0xff]
    %v293 = vld [vmem:[%s1 + $0x828] sm:$0xff]
    %v294 = vld [vmem:[%s1 + $0x830] sm:$0xff]
    %v295 = vld [vmem:[%s1 + $0x838] sm:$0xff]
    %v296 = vld [vmem:[%s1 + $0x840] sm:$0xff]
    %v297 = vld [vmem:[%s1 + $0x848] sm:$0xff]
    %v298 = vld [vmem:[%s1 + $0x850] sm:$0xff]
    %v299 = vld [vmem:[%s1 + $0x858] sm:$0xff]
    %v300 = vld [vmem:[%s1 + $0x860] sm:$0xff]
    %v301 = vld [vmem:[%s1 + $0x868] sm:$0xff]
    %v302 = vld [vmem:[%s1 + $0x870] sm:$0xff]
    %v303 = vld [vmem:[%s1 + $0x878] sm:$0xff]
    %v304 = vld [vmem:[%s1 + $0x880] sm:$0xff]
    %v305 = vld [vmem:[%s1 + $0x888] sm:$0xff]
    %v306 = vld [vmem:[%s1 + $0x890] sm:$0xff]
    %v307 = vld [vmem:[%s1 + $0x898] sm:$0xff]
    %v308 = vld [vmem:[%s1 + $0x8a0] sm:$0xff]
    %v309 = vld [vmem:[%s1 + $0x8a8] sm:$0xff]
    %v310 = vld [vmem:[%s1 + $0x8b0] sm:$0xff]
    %v311 = vld [vmem:[%s1 + $0x8b8] sm:$0xff]
    %v312 = vld [vmem:[%s1 + $0x8c0] sm:$0xff]
    %v313 = vld [vmem:[%s1 + $0x8c8] sm:$0xff]
    %v314 = vld [vmem:[%s1 + $0x8d0] sm:$0xff]
    %v315 = vld [vmem:[%s1 + $0x8d8] sm:$0xff]
    %v316 = vld [vmem:[%s1 + $0x8e0] sm:$0xff]
    %v317 = vld [vmem:[%s1 + $0x8e8] sm:$0xff]
    %v318 = vld [vmem:[%s1 + $0x8f0] sm:$0xff]
    %v319 = vld [vmem:[%s1 + $0x8f8] sm:$0xff]
    %v320 = vld [vmem:[%s1 + $0x900] sm:$0xff]
    %v321 = vld [vmem:[%s1 + $0x908] sm:$0xff]
    %v322 = vld [vmem:[%s1 + $0x910] sm:$0xff]
    %v323 = vld [vmem:[%s1 + $0x918] sm:$0xff]
    %v324 = vld [vmem:[%s1 + $0x920] sm:$0xff]
    %v325 = vld [vmem:[%s1 + $0x928] sm:$0xff]
    %v326 = vld [vmem:[%s3] sm:$0x3f]
    %v328 = vlaneseq
    %v329 = vshrl.u32 %v328, 7
    %v330 = vsub.s32 0, %v329
    %v331 = vrot.slane %v326, %v330
    %v332 = vlaneseq
    %v333 = vshrl.u32 %v332, 7
    %v334 = vsub.s32 1, %v333
    %v335 = vrot.slane %v326, %v334
    %v336 = vlaneseq
    %v337 = vshrl.u32 %v336, 7
    %v338 = vsub.s32 2, %v337
    %v339 = vrot.slane %v326, %v338
    %v340 = vlaneseq
    %v341 = vshrl.u32 %v340, 7
    %v342 = vsub.s32 3, %v341
    %v343 = vrot.slane %v326, %v342
    %v344 = vlaneseq
    %v345 = vshrl.u32 %v344, 7
    %v346 = vsub.s32 4, %v345
    %v347 = vrot.slane %v326, %v346
    %v348 = vlaneseq
    %v349 = vshrl.u32 %v348, 7
    %v350 = vsub.s32 5, %v349
    %v351 = vrot.slane %v326, %v350
    %v362 = vunpack.c.l.b16 %v28
    %v363 = vunpack.c.h.b16 %v28
    %v364 = vunpack.c.l.b16 %v29
    %v365 = vunpack.c.h.b16 %v29
    %v366 = vunpack.c.l.b16 %v30
    %v367 = vunpack.c.h.b16 %v30
    %v368 = vunpack.c.l.b16 %v31
    %v369 = vpack.c.b16 %v362, %v362
    %v370 = vpack.c.b16 %v363, %v363
    %v371 = vpack.c.b16 %v364, %v364
    %v372 = vpack.c.b16 %v365, %v365
    %v373 = vpack.c.b16 %v366, %v366
    %v374 = vpack.c.b16 %v367, %v367
    %v375 = vpack.c.b16 %v368, %v368
    %v676 = vunpack.c.l.b16 %v32
    %v677 = vunpack.c.h.b16 %v32
    %v678 = vunpack.c.l.b16 %v33
    %v679 = vunpack.c.h.b16 %v33
    %v680 = vunpack.c.l.b16 %v34
    %v681 = vunpack.c.h.b16 %v34
    %v682 = vunpack.c.l.b16 %v35
    %v683 = vunpack.c.h.b16 %v35
    %v684 = vunpack.c.l.b16 %v36
    %v685 = vunpack.c.h.b16 %v36
    %v686 = vunpack.c.l.b16 %v37
    %v687 = vunpack.c.h.b16 %v37
    %v688 = vunpack.c.l.b16 %v38
    %v689 = vunpack.c.h.b16 %v38
    %v690 = vunpack.c.l.b16 %v39
    %v691 = vunpack.c.h.b16 %v39
    %v692 = vunpack.c.l.b16 %v40
    %v693 = vunpack.c.h.b16 %v40
    %v694 = vunpack.c.l.b16 %v41
    %v695 = vunpack.c.h.b16 %v41
    %v696 = vunpack.c.l.b16 %v42
    %v697 = vunpack.c.h.b16 %v42
    %v698 = vunpack.c.l.b16 %v43
    %v699 = vunpack.c.h.b16 %v43
    %v700 = vunpack.c.l.b16 %v44
    %v701 = vunpack.c.h.b16 %v44
    %v702 = vunpack.c.l.b16 %v45
    %v703 = vunpack.c.h.b16 %v45
    %v704 = vunpack.c.l.b16 %v46
    %v705 = vunpack.c.h.b16 %v46
    %v706 = vunpack.c.l.b16 %v47
    %v707 = vunpack.c.h.b16 %v47
    %v708 = vunpack.c.l.b16 %v48
    %v709 = vunpack.c.h.b16 %v48
    %v710 = vunpack.c.l.b16 %v49
    %v711 = vunpack.c.h.b16 %v49
    %v712 = vunpack.c.l.b16 %v50
    %v713 = vunpack.c.h.b16 %v50
    %v714 = vunpack.c.l.b16 %v51
    %v715 = vunpack.c.h.b16 %v51
    %v716 = vunpack.c.l.b16 %v52
    %v717 = vunpack.c.h.b16 %v52
    %v718 = vunpack.c.l.b16 %v53
    %v719 = vunpack.c.h.b16 %v53
    %v720 = vunpack.c.l.b16 %v54
    %v721 = vunpack.c.h.b16 %v54
    %v722 = vunpack.c.l.b16 %v55
    %v723 = vunpack.c.h.b16 %v55
    %v724 = vunpack.c.l.b16 %v56
    %v725 = vunpack.c.h.b16 %v56
    %v726 = vunpack.c.l.b16 %v57
    %v727 = vunpack.c.h.b16 %v57
    %v728 = vunpack.c.l.b16 %v58
    %v729 = vunpack.c.h.b16 %v58
    %v730 = vunpack.c.l.b16 %v59
    %v731 = vunpack.c.h.b16 %v59
    %v732 = vunpack.c.l.b16 %v60
    %v733 = vunpack.c.h.b16 %v60
    %v734 = vunpack.c.l.b16 %v61
    %v735 = vunpack.c.h.b16 %v61
    %v736 = vunpack.c.l.b16 %v62
    %v737 = vunpack.c.h.b16 %v62
    %v738 = vunpack.c.l.b16 %v63
    %v739 = vunpack.c.h.b16 %v63
    %v740 = vunpack.c.l.b16 %v64
    %v741 = vunpack.c.h.b16 %v64
    %v742 = vunpack.c.l.b16 %v65
    %v743 = vunpack.c.h.b16 %v65
    %v744 = vunpack.c.l.b16 %v66
    %v745 = vunpack.c.h.b16 %v66
    %v746 = vunpack.c.l.b16 %v67
    %v747 = vunpack.c.h.b16 %v67
    %v748 = vunpack.c.l.b16 %v68
    %v749 = vunpack.c.h.b16 %v68
    %v750 = vunpack.c.l.b16 %v69
    %v751 = vunpack.c.h.b16 %v69
    %v752 = vunpack.c.l.b16 %v70
    %v753 = vunpack.c.h.b16 %v70
    %v754 = vunpack.c.l.b16 %v71
    %v755 = vunpack.c.h.b16 %v71
    %v756 = vunpack.c.l.b16 %v72
    %v757 = vunpack.c.h.b16 %v72
    %v758 = vunpack.c.l.b16 %v73
    %v759 = vunpack.c.h.b16 %v73
    %v760 = vunpack.c.l.b16 %v74
    %v761 = vunpack.c.h.b16 %v74
    %v762 = vunpack.c.l.b16 %v75
    %v763 = vunpack.c.h.b16 %v75
    %v764 = vunpack.c.l.b16 %v76
    %v765 = vunpack.c.h.b16 %v76
    %v766 = vunpack.c.l.b16 %v77
    %v767 = vunpack.c.h.b16 %v77
    %v768 = vunpack.c.l.b16 %v78
    %v769 = vunpack.c.h.b16 %v78
    %v770 = vunpack.c.l.b16 %v79
    %v771 = vunpack.c.h.b16 %v79
    %v772 = vunpack.c.l.b16 %v80
    %v773 = vunpack.c.h.b16 %v80
    %v774 = vunpack.c.l.b16 %v81
    %v775 = vunpack.c.h.b16 %v81
    %v776 = vunpack.c.l.b16 %v82
    %v777 = vunpack.c.h.b16 %v82
    %v778 = vunpack.c.l.b16 %v83
    %v779 = vunpack.c.h.b16 %v83
    %v780 = vunpack.c.l.b16 %v84
    %v781 = vunpack.c.h.b16 %v84
    %v782 = vunpack.c.l.b16 %v85
    %v783 = vunpack.c.h.b16 %v85
    %v784 = vunpack.c.l.b16 %v86
    %v785 = vunpack.c.h.b16 %v86
    %v786 = vunpack.c.l.b16 %v87
    %v787 = vunpack.c.h.b16 %v87
    %v788 = vunpack.c.l.b16 %v88
    %v789 = vunpack.c.h.b16 %v88
    %v790 = vunpack.c.l.b16 %v89
    %v791 = vunpack.c.h.b16 %v89
    %v792 = vunpack.c.l.b16 %v90
    %v793 = vunpack.c.h.b16 %v90
    %v794 = vunpack.c.l.b16 %v91
    %v795 = vunpack.c.h.b16 %v91
    %v796 = vunpack.c.l.b16 %v92
    %v797 = vunpack.c.h.b16 %v92
    %v798 = vunpack.c.l.b16 %v93
    %v799 = vunpack.c.h.b16 %v93
    %v800 = vunpack.c.l.b16 %v94
    %v801 = vunpack.c.h.b16 %v94
    %v802 = vunpack.c.l.b16 %v95
    %v803 = vunpack.c.h.b16 %v95
    %v804 = vunpack.c.l.b16 %v96
    %v805 = vunpack.c.h.b16 %v96
    %v806 = vunpack.c.l.b16 %v97
    %v807 = vunpack.c.h.b16 %v97
    %v808 = vunpack.c.l.b16 %v98
    %v809 = vunpack.c.h.b16 %v98
    %v810 = vunpack.c.l.b16 %v99
    %v811 = vunpack.c.h.b16 %v99
    %v812 = vunpack.c.l.b16 %v100
    %v813 = vunpack.c.h.b16 %v100
    %v814 = vunpack.c.l.b16 %v101
    %v815 = vunpack.c.h.b16 %v101
    %v816 = vunpack.c.l.b16 %v102
    %v817 = vunpack.c.h.b16 %v102
    %v818 = vunpack.c.l.b16 %v103
    %v819 = vunpack.c.h.b16 %v103
    %v820 = vunpack.c.l.b16 %v104
    %v821 = vunpack.c.h.b16 %v104
    %v822 = vunpack.c.l.b16 %v105
    %v823 = vunpack.c.h.b16 %v105
    %v824 = vunpack.c.l.b16 %v106
    %v825 = vunpack.c.h.b16 %v106
    %v826 = vunpack.c.l.b16 %v107
    %v827 = vunpack.c.h.b16 %v107
    %v828 = vunpack.c.l.b16 %v108
    %v829 = vunpack.c.h.b16 %v108
    %v830 = vunpack.c.l.b16 %v109
    %v831 = vunpack.c.h.b16 %v109
    %v832 = vunpack.c.l.b16 %v110
    %v833 = vunpack.c.h.b16 %v110
    %v834 = vunpack.c.l.b16 %v111
    %v835 = vunpack.c.h.b16 %v111
    %v836 = vunpack.c.l.b16 %v112
    %v837 = vunpack.c.h.b16 %v112
    %v838 = vunpack.c.l.b16 %v113
    %v839 = vunpack.c.h.b16 %v113
    %v840 = vunpack.c.l.b16 %v114
    %v841 = vunpack.c.h.b16 %v114
    %v842 = vunpack.c.l.b16 %v115
    %v843 = vunpack.c.h.b16 %v115
    %v844 = vunpack.c.l.b16 %v116
    %v845 = vunpack.c.h.b16 %v116
    %v846 = vunpack.c.l.b16 %v117
    %v847 = vunpack.c.h.b16 %v117
    %v848 = vunpack.c.l.b16 %v118
    %v849 = vunpack.c.h.b16 %v118
    %v850 = vunpack.c.l.b16 %v119
    %v851 = vunpack.c.h.b16 %v119
    %v852 = vunpack.c.l.b16 %v120
    %v853 = vunpack.c.h.b16 %v120
    %v854 = vunpack.c.l.b16 %v121
    %v855 = vunpack.c.h.b16 %v121
    %v856 = vunpack.c.l.b16 %v122
    %v857 = vunpack.c.h.b16 %v122
    %v858 = vunpack.c.l.b16 %v123
    %v859 = vunpack.c.h.b16 %v123
    %v860 = vunpack.c.l.b16 %v124
    %v861 = vunpack.c.h.b16 %v124
    %v862 = vunpack.c.l.b16 %v125
    %v863 = vunpack.c.h.b16 %v125
    %v864 = vunpack.c.l.b16 %v126
    %v865 = vunpack.c.h.b16 %v126
    %v866 = vunpack.c.l.b16 %v127
    %v867 = vunpack.c.h.b16 %v127
    %v868 = vunpack.c.l.b16 %v128
    %v869 = vunpack.c.h.b16 %v128
    %v870 = vunpack.c.l.b16 %v129
    %v871 = vunpack.c.h.b16 %v129
    %v872 = vunpack.c.l.b16 %v130
    %v873 = vunpack.c.h.b16 %v130
    %v874 = vunpack.c.l.b16 %v131
    %v875 = vunpack.c.h.b16 %v131
    %v876 = vunpack.c.l.b16 %v132
    %v877 = vunpack.c.h.b16 %v132
    %v878 = vunpack.c.l.b16 %v133
    %v879 = vunpack.c.h.b16 %v133
    %v880 = vunpack.c.l.b16 %v134
    %v881 = vunpack.c.h.b16 %v134
    %v882 = vunpack.c.l.b16 %v135
    %v883 = vunpack.c.h.b16 %v135
    %v884 = vunpack.c.l.b16 %v136
    %v885 = vunpack.c.h.b16 %v136
    %v886 = vunpack.c.l.b16 %v137
    %v887 = vunpack.c.h.b16 %v137
    %v888 = vunpack.c.l.b16 %v138
    %v889 = vunpack.c.h.b16 %v138
    %v890 = vunpack.c.l.b16 %v139
    %v891 = vunpack.c.h.b16 %v139
    %v892 = vunpack.c.l.b16 %v140
    %v893 = vunpack.c.h.b16 %v140
    %v894 = vunpack.c.l.b16 %v141
    %v895 = vunpack.c.h.b16 %v141
    %v896 = vunpack.c.l.b16 %v142
    %v897 = vunpack.c.h.b16 %v142
    %v898 = vunpack.c.l.b16 %v143
    %v899 = vunpack.c.h.b16 %v143
    %v900 = vunpack.c.l.b16 %v144
    %v901 = vunpack.c.h.b16 %v144
    %v902 = vunpack.c.l.b16 %v145
    %v903 = vunpack.c.h.b16 %v145
    %v904 = vunpack.c.l.b16 %v146
    %v905 = vunpack.c.h.b16 %v146
    %v906 = vunpack.c.l.b16 %v147
    %v907 = vunpack.c.h.b16 %v147
    %v908 = vunpack.c.l.b16 %v148
    %v909 = vunpack.c.h.b16 %v148
    %v910 = vunpack.c.l.b16 %v149
    %v911 = vunpack.c.h.b16 %v149
    %v912 = vunpack.c.l.b16 %v150
    %v913 = vunpack.c.h.b16 %v150
    %v914 = vunpack.c.l.b16 %v151
    %v915 = vunpack.c.h.b16 %v151
    %v916 = vunpack.c.l.b16 %v152
    %v917 = vunpack.c.h.b16 %v152
    %v918 = vunpack.c.l.b16 %v153
    %v919 = vunpack.c.h.b16 %v153
    %v920 = vunpack.c.l.b16 %v154
    %v921 = vunpack.c.h.b16 %v154
    %v922 = vunpack.c.l.b16 %v155
    %v923 = vunpack.c.h.b16 %v155
    %v924 = vunpack.c.l.b16 %v156
    %v925 = vunpack.c.h.b16 %v156
    %v926 = vunpack.c.l.b16 %v157
    %v927 = vunpack.c.h.b16 %v157
    %v928 = vunpack.c.l.b16 %v158
    %v929 = vunpack.c.h.b16 %v158
    %v930 = vunpack.c.l.b16 %v159
    %v931 = vunpack.c.h.b16 %v159
    %v932 = vunpack.c.l.b16 %v160
    %v933 = vunpack.c.h.b16 %v160
    %v934 = vunpack.c.l.b16 %v161
    %v935 = vunpack.c.h.b16 %v161
    %v936 = vunpack.c.l.b16 %v162
    %v937 = vunpack.c.h.b16 %v162
    %v938 = vunpack.c.l.b16 %v163
    %v939 = vunpack.c.h.b16 %v163
    %v940 = vunpack.c.l.b16 %v164
    %v941 = vunpack.c.h.b16 %v164
    %v942 = vunpack.c.l.b16 %v165
    %v943 = vunpack.c.h.b16 %v165
    %v944 = vunpack.c.l.b16 %v166
    %v945 = vunpack.c.h.b16 %v166
    %v946 = vunpack.c.l.b16 %v167
    %v947 = vunpack.c.h.b16 %v167
    %v948 = vunpack.c.l.b16 %v168
    %v949 = vunpack.c.h.b16 %v168
    %v950 = vunpack.c.l.b16 %v169
    %v951 = vunpack.c.h.b16 %v169
    %v952 = vunpack.c.l.b16 %v170
    %v953 = vunpack.c.h.b16 %v170
    %v954 = vunpack.c.l.b16 %v171
    %v955 = vunpack.c.h.b16 %v171
    %v956 = vunpack.c.l.b16 %v172
    %v957 = vunpack.c.h.b16 %v172
    %v958 = vunpack.c.l.b16 %v173
    %v959 = vunpack.c.h.b16 %v173
    %v960 = vunpack.c.l.b16 %v174
    %v961 = vunpack.c.h.b16 %v174
    %v962 = vunpack.c.l.b16 %v175
    %v963 = vunpack.c.h.b16 %v175
    %v964 = vunpack.c.l.b16 %v176
    %v965 = vunpack.c.h.b16 %v176
    %v966 = vunpack.c.l.b16 %v177
    %v967 = vunpack.c.h.b16 %v177
    %v968 = vunpack.c.l.b16 %v178
    %v969 = vunpack.c.h.b16 %v178
    %v970 = vunpack.c.l.b16 %v179
    %v971 = vunpack.c.h.b16 %v179
    %v972 = vunpack.c.l.b16 %v180
    %v973 = vunpack.c.h.b16 %v180
    %v974 = vunpack.c.l.b16 %v181
    %v975 = vunpack.c.h.b16 %v181
    %v976 = vunpack.c.l.b16 %v182
    %v977 = vunpack.c.h.b16 %v182
    %v978 = vunpack.c.l.b16 %v183
    %v979 = vunpack.c.h.b16 %v183
    %v980 = vunpack.c.l.b16 %v184
    %v981 = vunpack.c.h.b16 %v184
    %v982 = vunpack.c.l.b16 %v185
    %v983 = vunpack.c.h.b16 %v185
    %v984 = vunpack.c.l.b16 %v186
    %v985 = vunpack.c.h.b16 %v186
    %v986 = vunpack.c.l.b16 %v187
    %v987 = vunpack.c.h.b16 %v187
    %v988 = vunpack.c.l.b16 %v188
    %v989 = vunpack.c.h.b16 %v188
    %v990 = vunpack.c.l.b16 %v189
    %v991 = vunpack.c.h.b16 %v189
    %v992 = vunpack.c.l.b16 %v190
    %v993 = vunpack.c.h.b16 %v190
    %v994 = vunpack.c.l.b16 %v191
    %v995 = vunpack.c.h.b16 %v191
    %v996 = vunpack.c.l.b16 %v192
    %v997 = vunpack.c.h.b16 %v192
    %v998 = vunpack.c.l.b16 %v193
    %v999 = vunpack.c.h.b16 %v193
    %v1000 = vunpack.c.l.b16 %v194
    %v1001 = vunpack.c.h.b16 %v194
    %v1002 = vunpack.c.l.b16 %v195
    %v1003 = vunpack.c.h.b16 %v195
    %v1004 = vunpack.c.l.b16 %v196
    %v1005 = vunpack.c.h.b16 %v196
    %v1006 = vunpack.c.l.b16 %v197
    %v1007 = vunpack.c.h.b16 %v197
    %v1008 = vunpack.c.l.b16 %v198
    %v1009 = vunpack.c.h.b16 %v198
    %v1010 = vunpack.c.l.b16 %v199
    %v1011 = vunpack.c.h.b16 %v199
    %v1012 = vunpack.c.l.b16 %v200
    %v1013 = vunpack.c.h.b16 %v200
    %v1014 = vunpack.c.l.b16 %v201
    %v1015 = vunpack.c.h.b16 %v201
    %v1016 = vunpack.c.l.b16 %v202
    %v1017 = vunpack.c.h.b16 %v202
    %v1018 = vunpack.c.l.b16 %v203
    %v1019 = vunpack.c.h.b16 %v203
    %v1020 = vunpack.c.l.b16 %v204
    %v1021 = vunpack.c.h.b16 %v204
    %v1022 = vunpack.c.l.b16 %v205
    %v1023 = vunpack.c.h.b16 %v205
    %v1024 = vunpack.c.l.b16 %v206
    %v1025 = vunpack.c.h.b16 %v206
    %v1026 = vunpack.c.l.b16 %v207
    %v1027 = vunpack.c.h.b16 %v207
    %v1028 = vunpack.c.l.b16 %v208
    %v1029 = vunpack.c.h.b16 %v208
    %v1030 = vunpack.c.l.b16 %v209
    %v1031 = vunpack.c.h.b16 %v209
    %v1032 = vunpack.c.l.b16 %v210
    %v1033 = vunpack.c.h.b16 %v210
    %v1034 = vunpack.c.l.b16 %v211
    %v1035 = vunpack.c.h.b16 %v211
    %v1036 = vunpack.c.l.b16 %v212
    %v1037 = vunpack.c.h.b16 %v212
    %v1038 = vunpack.c.l.b16 %v213
    %v1039 = vunpack.c.h.b16 %v213
    %v1040 = vunpack.c.l.b16 %v214
    %v1041 = vunpack.c.h.b16 %v214
    %v1042 = vunpack.c.l.b16 %v215
    %v1043 = vunpack.c.h.b16 %v215
    %v1044 = vunpack.c.l.b16 %v216
    %v1045 = vunpack.c.h.b16 %v216
    %v1046 = vunpack.c.l.b16 %v217
    %v1047 = vunpack.c.h.b16 %v217
    %v1048 = vunpack.c.l.b16 %v218
    %v1049 = vunpack.c.h.b16 %v218
    %v1050 = vunpack.c.l.b16 %v219
    %v1051 = vunpack.c.h.b16 %v219
    %v1052 = vunpack.c.l.b16 %v220
    %v1053 = vunpack.c.h.b16 %v220
    %v1054 = vunpack.c.l.b16 %v221
    %v1055 = vunpack.c.h.b16 %v221
    %v1056 = vunpack.c.l.b16 %v222
    %v1057 = vunpack.c.h.b16 %v222
    %v1058 = vunpack.c.l.b16 %v223
    %v1059 = vunpack.c.h.b16 %v223
    %v1060 = vunpack.c.l.b16 %v224
    %v1061 = vunpack.c.h.b16 %v224
    %v1062 = vunpack.c.l.b16 %v225
    %v1063 = vunpack.c.h.b16 %v225
    %v1064 = vunpack.c.l.b16 %v226
    %v1065 = vunpack.c.h.b16 %v226
    %v1066 = vunpack.c.l.b16 %v227
    %v1067 = vunpack.c.h.b16 %v227
    %v1068 = vunpack.c.l.b16 %v228
    %v1069 = vunpack.c.h.b16 %v228
    %v1070 = vunpack.c.l.b16 %v229
    %v1071 = vunpack.c.h.b16 %v229
    %v1072 = vunpack.c.l.b16 %v230
    %v1073 = vunpack.c.h.b16 %v230
    %v1074 = vunpack.c.l.b16 %v231
    %v1075 = vunpack.c.h.b16 %v231
    %v1076 = vunpack.c.l.b16 %v232
    %v1077 = vunpack.c.h.b16 %v232
    %v1078 = vunpack.c.l.b16 %v233
    %v1079 = vunpack.c.h.b16 %v233
    %v1080 = vunpack.c.l.b16 %v234
    %v1081 = vunpack.c.h.b16 %v234
    %v1082 = vunpack.c.l.b16 %v235
    %v1083 = vunpack.c.h.b16 %v235
    %v1084 = vunpack.c.l.b16 %v236
    %v1085 = vunpack.c.h.b16 %v236
    %v1086 = vunpack.c.l.b16 %v237
    %v1087 = vunpack.c.h.b16 %v237
    %v1088 = vunpack.c.l.b16 %v238
    %v1089 = vunpack.c.h.b16 %v238
    %v1090 = vunpack.c.l.b16 %v239
    %v1091 = vunpack.c.h.b16 %v239
    %v1092 = vunpack.c.l.b16 %v240
    %v1093 = vunpack.c.h.b16 %v240
    %v1094 = vunpack.c.l.b16 %v241
    %v1095 = vunpack.c.h.b16 %v241
    %v1096 = vunpack.c.l.b16 %v242
    %v1097 = vunpack.c.h.b16 %v242
    %v1098 = vunpack.c.l.b16 %v243
    %v1099 = vunpack.c.h.b16 %v243
    %v1100 = vunpack.c.l.b16 %v244
    %v1101 = vunpack.c.h.b16 %v244
    %v1102 = vunpack.c.l.b16 %v245
    %v1103 = vunpack.c.h.b16 %v245
    %v1104 = vunpack.c.l.b16 %v246
    %v1105 = vunpack.c.h.b16 %v246
    %v1106 = vunpack.c.l.b16 %v247
    %v1107 = vunpack.c.h.b16 %v247
    %v1108 = vunpack.c.l.b16 %v248
    %v1109 = vunpack.c.h.b16 %v248
    %v1110 = vunpack.c.l.b16 %v249
    %v1111 = vunpack.c.h.b16 %v249
    %v1112 = vunpack.c.l.b16 %v250
    %v1113 = vunpack.c.h.b16 %v250
    %v1114 = vunpack.c.l.b16 %v251
    %v1115 = vunpack.c.h.b16 %v251
    %v1116 = vunpack.c.l.b16 %v252
    %v1117 = vunpack.c.h.b16 %v252
    %v1118 = vunpack.c.l.b16 %v253
    %v1119 = vunpack.c.h.b16 %v253
    %v1120 = vunpack.c.l.b16 %v254
    %v1121 = vunpack.c.h.b16 %v254
    %v1122 = vunpack.c.l.b16 %v255
    %v1123 = vunpack.c.h.b16 %v255
    %v1124 = vunpack.c.l.b16 %v256
    %v1125 = vunpack.c.h.b16 %v256
    %v1126 = vunpack.c.l.b16 %v257
    %v1127 = vunpack.c.h.b16 %v257
    %v1128 = vunpack.c.l.b16 %v258
    %v1129 = vunpack.c.h.b16 %v258
    %v1130 = vunpack.c.l.b16 %v259
    %v1131 = vunpack.c.h.b16 %v259
    %v1132 = vunpack.c.l.b16 %v260
    %v1133 = vunpack.c.h.b16 %v260
    %v1134 = vunpack.c.l.b16 %v261
    %v1135 = vunpack.c.h.b16 %v261
    %v1136 = vunpack.c.l.b16 %v262
    %v1137 = vunpack.c.h.b16 %v262
    %v1138 = vunpack.c.l.b16 %v263
    %v1139 = vunpack.c.h.b16 %v263
    %v1140 = vunpack.c.l.b16 %v264
    %v1141 = vunpack.c.h.b16 %v264
    %v1142 = vunpack.c.l.b16 %v265
    %v1143 = vunpack.c.h.b16 %v265
    %v1144 = vunpack.c.l.b16 %v266
    %v1145 = vunpack.c.h.b16 %v266
    %v1146 = vunpack.c.l.b16 %v267
    %v1147 = vunpack.c.h.b16 %v267
    %v1148 = vunpack.c.l.b16 %v268
    %v1149 = vunpack.c.h.b16 %v268
    %v1150 = vunpack.c.l.b16 %v269
    %v1151 = vunpack.c.h.b16 %v269
    %v1152 = vunpack.c.l.b16 %v270
    %v1153 = vunpack.c.h.b16 %v270
    %v1154 = vunpack.c.l.b16 %v271
    %v1155 = vunpack.c.h.b16 %v271
    %v1156 = vunpack.c.l.b16 %v272
    %v1157 = vunpack.c.h.b16 %v272
    %v1158 = vunpack.c.l.b16 %v273
    %v1159 = vunpack.c.h.b16 %v273
    %v1160 = vunpack.c.l.b16 %v274
    %v1161 = vunpack.c.h.b16 %v274
    %v1162 = vunpack.c.l.b16 %v275
    %v1163 = vunpack.c.h.b16 %v275
    %v1164 = vunpack.c.l.b16 %v276
    %v1165 = vunpack.c.h.b16 %v276
    %v1166 = vunpack.c.l.b16 %v277
    %v1167 = vunpack.c.h.b16 %v277
    %v1168 = vunpack.c.l.b16 %v278
    %v1169 = vunpack.c.h.b16 %v278
    %v1170 = vunpack.c.l.b16 %v279
    %v1171 = vunpack.c.h.b16 %v279
    %v1172 = vunpack.c.l.b16 %v280
    %v1173 = vunpack.c.h.b16 %v280
    %v1174 = vunpack.c.l.b16 %v281
    %v1175 = vunpack.c.h.b16 %v281
    %v1176 = vunpack.c.l.b16 %v282
    %v1177 = vunpack.c.h.b16 %v282
    %v1178 = vunpack.c.l.b16 %v283
    %v1179 = vunpack.c.h.b16 %v283
    %v1180 = vunpack.c.l.b16 %v284
    %v1181 = vunpack.c.h.b16 %v284
    %v1182 = vunpack.c.l.b16 %v285
    %v1183 = vunpack.c.h.b16 %v285
    %v1184 = vunpack.c.l.b16 %v286
    %v1185 = vunpack.c.h.b16 %v286
    %v1186 = vunpack.c.l.b16 %v287
    %v1187 = vunpack.c.h.b16 %v287
    %v1188 = vunpack.c.l.b16 %v288
    %v1189 = vunpack.c.h.b16 %v288
    %v1190 = vunpack.c.l.b16 %v289
    %v1191 = vunpack.c.h.b16 %v289
    %v1192 = vunpack.c.l.b16 %v290
    %v1193 = vunpack.c.h.b16 %v290
    %v1194 = vunpack.c.l.b16 %v291
    %v1195 = vunpack.c.h.b16 %v291
    %v1196 = vunpack.c.l.b16 %v292
    %v1197 = vunpack.c.h.b16 %v292
    %v1198 = vunpack.c.l.b16 %v293
    %v1199 = vunpack.c.h.b16 %v293
    %v1200 = vunpack.c.l.b16 %v294
    %v1201 = vunpack.c.h.b16 %v294
    %v1202 = vunpack.c.l.b16 %v295
    %v1203 = vunpack.c.h.b16 %v295
    %v1204 = vunpack.c.l.b16 %v296
    %v1205 = vunpack.c.h.b16 %v296
    %v1206 = vunpack.c.l.b16 %v297
    %v1207 = vunpack.c.h.b16 %v297
    %v1208 = vunpack.c.l.b16 %v298
    %v1209 = vunpack.c.h.b16 %v298
    %v1210 = vunpack.c.l.b16 %v299
    %v1211 = vunpack.c.h.b16 %v299
    %v1212 = vunpack.c.l.b16 %v300
    %v1213 = vunpack.c.h.b16 %v300
    %v1214 = vunpack.c.l.b16 %v301
    %v1215 = vunpack.c.h.b16 %v301
    %v1216 = vunpack.c.l.b16 %v302
    %v1217 = vunpack.c.h.b16 %v302
    %v1218 = vunpack.c.l.b16 %v303
    %v1219 = vunpack.c.h.b16 %v303
    %v1220 = vunpack.c.l.b16 %v304
    %v1221 = vunpack.c.h.b16 %v304
    %v1222 = vunpack.c.l.b16 %v305
    %v1223 = vunpack.c.h.b16 %v305
    %v1224 = vunpack.c.l.b16 %v306
    %v1225 = vunpack.c.h.b16 %v306
    %v1226 = vunpack.c.l.b16 %v307
    %v1227 = vunpack.c.h.b16 %v307
    %v1228 = vunpack.c.l.b16 %v308
    %v1229 = vunpack.c.h.b16 %v308
    %v1230 = vunpack.c.l.b16 %v309
    %v1231 = vunpack.c.h.b16 %v309
    %v1232 = vunpack.c.l.b16 %v310
    %v1233 = vunpack.c.h.b16 %v310
    %v1234 = vunpack.c.l.b16 %v311
    %v1235 = vunpack.c.h.b16 %v311
    %v1236 = vunpack.c.l.b16 %v312
    %v1237 = vunpack.c.h.b16 %v312
    %v1238 = vunpack.c.l.b16 %v313
    %v1239 = vunpack.c.h.b16 %v313
    %v1240 = vunpack.c.l.b16 %v314
    %v1241 = vunpack.c.h.b16 %v314
    %v1242 = vunpack.c.l.b16 %v315
    %v1243 = vunpack.c.h.b16 %v315
    %v1244 = vunpack.c.l.b16 %v316
    %v1245 = vunpack.c.h.b16 %v316
    %v1246 = vunpack.c.l.b16 %v317
    %v1247 = vunpack.c.h.b16 %v317
    %v1248 = vunpack.c.l.b16 %v318
    %v1249 = vunpack.c.h.b16 %v318
    %v1250 = vunpack.c.l.b16 %v319
    %v1251 = vunpack.c.h.b16 %v319
    %v1252 = vunpack.c.l.b16 %v320
    %v1253 = vunpack.c.h.b16 %v320
    %v1254 = vunpack.c.l.b16 %v321
    %v1255 = vunpack.c.h.b16 %v321
    %v1256 = vunpack.c.l.b16 %v322
    %v1257 = vunpack.c.h.b16 %v322
    %v1258 = vunpack.c.l.b16 %v323
    %v1259 = vunpack.c.h.b16 %v323
    %v1260 = vunpack.c.l.b16 %v324
    %v1261 = vunpack.c.h.b16 %v324
    %v1262 = vunpack.c.l.b16 %v325
    %v1263 = vunpack.c.h.b16 %v325
    %v1264 = vpack.c.b16 %v682, %v676
    %v1265 = vpack.c.b16 %v683, %v677
    %v1266 = vpack.c.b16 %v684, %v678
    %v1267 = vpack.c.b16 %v685, %v679
    %v1268 = vpack.c.b16 %v686, %v680
    %v1269 = vpack.c.b16 %v687, %v681
    %v1270 = vpack.c.b16 %v694, %v688
    %v1271 = vpack.c.b16 %v695, %v689
    %v1272 = vpack.c.b16 %v696, %v690
    %v1273 = vpack.c.b16 %v697, %v691
    %v1274 = vpack.c.b16 %v698, %v692
    %v1275 = vpack.c.b16 %v699, %v693
    %v1276 = vpack.c.b16 %v706, %v700
    %v1277 = vpack.c.b16 %v707, %v701
    %v1278 = vpack.c.b16 %v708, %v702
    %v1279 = vpack.c.b16 %v709, %v703
    %v1280 = vpack.c.b16 %v710, %v704
    %v1281 = vpack.c.b16 %v711, %v705
    %v1282 = vpack.c.b16 %v718, %v712
    %v1283 = vpack.c.b16 %v719, %v713
    %v1284 = vpack.c.b16 %v720, %v714
    %v1285 = vpack.c.b16 %v721, %v715
    %v1286 = vpack.c.b16 %v722, %v716
    %v1287 = vpack.c.b16 %v723, %v717
    %v1288 = vpack.c.b16 %v730, %v724
    %v1289 = vpack.c.b16 %v731, %v725
    %v1290 = vpack.c.b16 %v732, %v726
    %v1291 = vpack.c.b16 %v733, %v727
    %v1292 = vpack.c.b16 %v734, %v728
    %v1293 = vpack.c.b16 %v735, %v729
    %v1294 = vpack.c.b16 %v742, %v736
    %v1295 = vpack.c.b16 %v743, %v737
    %v1296 = vpack.c.b16 %v744, %v738
    %v1297 = vpack.c.b16 %v745, %v739
    %v1298 = vpack.c.b16 %v746, %v740
    %v1299 = vpack.c.b16 %v747, %v741
    %v1300 = vpack.c.b16 %v754, %v748
    %v1301 = vpack.c.b16 %v755, %v749
    %v1302 = vpack.c.b16 %v756, %v750
    %v1303 = vpack.c.b16 %v757, %v751
    %v1304 = vpack.c.b16 %v758, %v752
    %v1305 = vpack.c.b16 %v759, %v753
    %v1306 = vpack.c.b16 %v766, %v760
    %v1307 = vpack.c.b16 %v767, %v761
    %v1308 = vpack.c.b16 %v768, %v762
    %v1309 = vpack.c.b16 %v769, %v763
    %v1310 = vpack.c.b16 %v770, %v764
    %v1311 = vpack.c.b16 %v771, %v765
    %v1312 = vpack.c.b16 %v778, %v772
    %v1313 = vpack.c.b16 %v779, %v773
    %v1314 = vpack.c.b16 %v780, %v774
    %v1315 = vpack.c.b16 %v781, %v775
    %v1316 = vpack.c.b16 %v782, %v776
    %v1317 = vpack.c.b16 %v783, %v777
    %v1318 = vpack.c.b16 %v790, %v784
    %v1319 = vpack.c.b16 %v791, %v785
    %v1320 = vpack.c.b16 %v792, %v786
    %v1321 = vpack.c.b16 %v793, %v787
    %v1322 = vpack.c.b16 %v794, %v788
    %v1323 = vpack.c.b16 %v795, %v789
    %v1324 = vpack.c.b16 %v802, %v796
    %v1325 = vpack.c.b16 %v803, %v797
    %v1326 = vpack.c.b16 %v804, %v798
    %v1327 = vpack.c.b16 %v805, %v799
    %v1328 = vpack.c.b16 %v806, %v800
    %v1329 = vpack.c.b16 %v807, %v801
    %v1330 = vpack.c.b16 %v814, %v808
    %v1331 = vpack.c.b16 %v815, %v809
    %v1332 = vpack.c.b16 %v816, %v810
    %v1333 = vpack.c.b16 %v817, %v811
    %v1334 = vpack.c.b16 %v818, %v812
    %v1335 = vpack.c.b16 %v819, %v813
    %v1336 = vpack.c.b16 %v826, %v820
    %v1337 = vpack.c.b16 %v827, %v821
    %v1338 = vpack.c.b16 %v828, %v822
    %v1339 = vpack.c.b16 %v829, %v823
    %v1340 = vpack.c.b16 %v830, %v824
    %v1341 = vpack.c.b16 %v831, %v825
    %v1342 = vpack.c.b16 %v838, %v832
    %v1343 = vpack.c.b16 %v839, %v833
    %v1344 = vpack.c.b16 %v840, %v834
    %v1345 = vpack.c.b16 %v841, %v835
    %v1346 = vpack.c.b16 %v842, %v836
    %v1347 = vpack.c.b16 %v843, %v837
    %v1348 = vpack.c.b16 %v850, %v844
    %v1349 = vpack.c.b16 %v851, %v845
    %v1350 = vpack.c.b16 %v852, %v846
    %v1351 = vpack.c.b16 %v853, %v847
    %v1352 = vpack.c.b16 %v854, %v848
    %v1353 = vpack.c.b16 %v855, %v849
    %v1354 = vpack.c.b16 %v862, %v856
    %v1355 = vpack.c.b16 %v863, %v857
    %v1356 = vpack.c.b16 %v864, %v858
    %v1357 = vpack.c.b16 %v865, %v859
    %v1358 = vpack.c.b16 %v866, %v860
    %v1359 = vpack.c.b16 %v867, %v861
    %v1360 = vpack.c.b16 %v874, %v868
    %v1361 = vpack.c.b16 %v875, %v869
    %v1362 = vpack.c.b16 %v876, %v870
    %v1363 = vpack.c.b16 %v877, %v871
    %v1364 = vpack.c.b16 %v878, %v872
    %v1365 = vpack.c.b16 %v879, %v873
    %v1366 = vpack.c.b16 %v886, %v880
    %v1367 = vpack.c.b16 %v887, %v881
    %v1368 = vpack.c.b16 %v888, %v882
    %v1369 = vpack.c.b16 %v889, %v883
    %v1370 = vpack.c.b16 %v890, %v884
    %v1371 = vpack.c.b16 %v891, %v885
    %v1372 = vpack.c.b16 %v898, %v892
    %v1373 = vpack.c.b16 %v899, %v893
    %v1374 = vpack.c.b16 %v900, %v894
    %v1375 = vpack.c.b16 %v901, %v895
    %v1376 = vpack.c.b16 %v902, %v896
    %v1377 = vpack.c.b16 %v903, %v897
    %v1378 = vpack.c.b16 %v910, %v904
    %v1379 = vpack.c.b16 %v911, %v905
    %v1380 = vpack.c.b16 %v912, %v906
    %v1381 = vpack.c.b16 %v913, %v907
    %v1382 = vpack.c.b16 %v914, %v908
    %v1383 = vpack.c.b16 %v915, %v909
    %v1384 = vpack.c.b16 %v922, %v916
    %v1385 = vpack.c.b16 %v923, %v917
    %v1386 = vpack.c.b16 %v924, %v918
    %v1387 = vpack.c.b16 %v925, %v919
    %v1388 = vpack.c.b16 %v926, %v920
    %v1389 = vpack.c.b16 %v927, %v921
    %v1390 = vpack.c.b16 %v934, %v928
    %v1391 = vpack.c.b16 %v935, %v929
    %v1392 = vpack.c.b16 %v936, %v930
    %v1393 = vpack.c.b16 %v937, %v931
    %v1394 = vpack.c.b16 %v938, %v932
    %v1395 = vpack.c.b16 %v939, %v933
    %v1396 = vpack.c.b16 %v946, %v940
    %v1397 = vpack.c.b16 %v947, %v941
    %v1398 = vpack.c.b16 %v948, %v942
    %v1399 = vpack.c.b16 %v949, %v943
    %v1400 = vpack.c.b16 %v950, %v944
    %v1401 = vpack.c.b16 %v951, %v945
    %v1402 = vpack.c.b16 %v958, %v952
    %v1403 = vpack.c.b16 %v959, %v953
    %v1404 = vpack.c.b16 %v960, %v954
    %v1405 = vpack.c.b16 %v961, %v955
    %v1406 = vpack.c.b16 %v962, %v956
    %v1407 = vpack.c.b16 %v963, %v957
    %v1408 = vpack.c.b16 %v970, %v964
    %v1409 = vpack.c.b16 %v971, %v965
    %v1410 = vpack.c.b16 %v972, %v966
    %v1411 = vpack.c.b16 %v973, %v967
    %v1412 = vpack.c.b16 %v974, %v968
    %v1413 = vpack.c.b16 %v975, %v969
    %v1414 = vpack.c.b16 %v982, %v976
    %v1415 = vpack.c.b16 %v983, %v977
    %v1416 = vpack.c.b16 %v984, %v978
    %v1417 = vpack.c.b16 %v985, %v979
    %v1418 = vpack.c.b16 %v986, %v980
    %v1419 = vpack.c.b16 %v987, %v981
    %v1420 = vpack.c.b16 %v994, %v988
    %v1421 = vpack.c.b16 %v995, %v989
    %v1422 = vpack.c.b16 %v996, %v990
    %v1423 = vpack.c.b16 %v997, %v991
    %v1424 = vpack.c.b16 %v998, %v992
    %v1425 = vpack.c.b16 %v999, %v993
    %v1426 = vpack.c.b16 %v1006, %v1000
    %v1427 = vpack.c.b16 %v1007, %v1001
    %v1428 = vpack.c.b16 %v1008, %v1002
    %v1429 = vpack.c.b16 %v1009, %v1003
    %v1430 = vpack.c.b16 %v1010, %v1004
    %v1431 = vpack.c.b16 %v1011, %v1005
    %v1432 = vpack.c.b16 %v1018, %v1012
    %v1433 = vpack.c.b16 %v1019, %v1013
    %v1434 = vpack.c.b16 %v1020, %v1014
    %v1435 = vpack.c.b16 %v1021, %v1015
    %v1436 = vpack.c.b16 %v1022, %v1016
    %v1437 = vpack.c.b16 %v1023, %v1017
    %v1438 = vpack.c.b16 %v1030, %v1024
    %v1439 = vpack.c.b16 %v1031, %v1025
    %v1440 = vpack.c.b16 %v1032, %v1026
    %v1441 = vpack.c.b16 %v1033, %v1027
    %v1442 = vpack.c.b16 %v1034, %v1028
    %v1443 = vpack.c.b16 %v1035, %v1029
    %v1444 = vpack.c.b16 %v1042, %v1036
    %v1445 = vpack.c.b16 %v1043, %v1037
    %v1446 = vpack.c.b16 %v1044, %v1038
    %v1447 = vpack.c.b16 %v1045, %v1039
    %v1448 = vpack.c.b16 %v1046, %v1040
    %v1449 = vpack.c.b16 %v1047, %v1041
    %v1450 = vpack.c.b16 %v1054, %v1048
    %v1451 = vpack.c.b16 %v1055, %v1049
    %v1452 = vpack.c.b16 %v1056, %v1050
    %v1453 = vpack.c.b16 %v1057, %v1051
    %v1454 = vpack.c.b16 %v1058, %v1052
    %v1455 = vpack.c.b16 %v1059, %v1053
    %v1456 = vpack.c.b16 %v1066, %v1060
    %v1457 = vpack.c.b16 %v1067, %v1061
    %v1458 = vpack.c.b16 %v1068, %v1062
    %v1459 = vpack.c.b16 %v1069, %v1063
    %v1460 = vpack.c.b16 %v1070, %v1064
    %v1461 = vpack.c.b16 %v1071, %v1065
    %v1462 = vpack.c.b16 %v1078, %v1072
    %v1463 = vpack.c.b16 %v1079, %v1073
    %v1464 = vpack.c.b16 %v1080, %v1074
    %v1465 = vpack.c.b16 %v1081, %v1075
    %v1466 = vpack.c.b16 %v1082, %v1076
    %v1467 = vpack.c.b16 %v1083, %v1077
    %v1468 = vpack.c.b16 %v1090, %v1084
    %v1469 = vpack.c.b16 %v1091, %v1085
    %v1470 = vpack.c.b16 %v1092, %v1086
    %v1471 = vpack.c.b16 %v1093, %v1087
    %v1472 = vpack.c.b16 %v1094, %v1088
    %v1473 = vpack.c.b16 %v1095, %v1089
    %v1474 = vpack.c.b16 %v1102, %v1096
    %v1475 = vpack.c.b16 %v1103, %v1097
    %v1476 = vpack.c.b16 %v1104, %v1098
    %v1477 = vpack.c.b16 %v1105, %v1099
    %v1478 = vpack.c.b16 %v1106, %v1100
    %v1479 = vpack.c.b16 %v1107, %v1101
    %v1480 = vpack.c.b16 %v1114, %v1108
    %v1481 = vpack.c.b16 %v1115, %v1109
    %v1482 = vpack.c.b16 %v1116, %v1110
    %v1483 = vpack.c.b16 %v1117, %v1111
    %v1484 = vpack.c.b16 %v1118, %v1112
    %v1485 = vpack.c.b16 %v1119, %v1113
    %v1486 = vpack.c.b16 %v1126, %v1120
    %v1487 = vpack.c.b16 %v1127, %v1121
    %v1488 = vpack.c.b16 %v1128, %v1122
    %v1489 = vpack.c.b16 %v1129, %v1123
    %v1490 = vpack.c.b16 %v1130, %v1124
    %v1491 = vpack.c.b16 %v1131, %v1125
    %v1492 = vpack.c.b16 %v1138, %v1132
    %v1493 = vpack.c.b16 %v1139, %v1133
    %v1494 = vpack.c.b16 %v1140, %v1134
    %v1495 = vpack.c.b16 %v1141, %v1135
    %v1496 = vpack.c.b16 %v1142, %v1136
    %v1497 = vpack.c.b16 %v1143, %v1137
    %v1498 = vpack.c.b16 %v1150, %v1144
    %v1499 = vpack.c.b16 %v1151, %v1145
    %v1500 = vpack.c.b16 %v1152, %v1146
    %v1501 = vpack.c.b16 %v1153, %v1147
    %v1502 = vpack.c.b16 %v1154, %v1148
    %v1503 = vpack.c.b16 %v1155, %v1149
    %v1504 = vpack.c.b16 %v1162, %v1156
    %v1505 = vpack.c.b16 %v1163, %v1157
    %v1506 = vpack.c.b16 %v1164, %v1158
    %v1507 = vpack.c.b16 %v1165, %v1159
    %v1508 = vpack.c.b16 %v1166, %v1160
    %v1509 = vpack.c.b16 %v1167, %v1161
    %v1510 = vpack.c.b16 %v1174, %v1168
    %v1511 = vpack.c.b16 %v1175, %v1169
    %v1512 = vpack.c.b16 %v1176, %v1170
    %v1513 = vpack.c.b16 %v1177, %v1171
    %v1514 = vpack.c.b16 %v1178, %v1172
    %v1515 = vpack.c.b16 %v1179, %v1173
    %v1516 = vpack.c.b16 %v1186, %v1180
    %v1517 = vpack.c.b16 %v1187, %v1181
    %v1518 = vpack.c.b16 %v1188, %v1182
    %v1519 = vpack.c.b16 %v1189, %v1183
    %v1520 = vpack.c.b16 %v1190, %v1184
    %v1521 = vpack.c.b16 %v1191, %v1185
    %v1522 = vpack.c.b16 %v1198, %v1192
    %v1523 = vpack.c.b16 %v1199, %v1193
    %v1524 = vpack.c.b16 %v1200, %v1194
    %v1525 = vpack.c.b16 %v1201, %v1195
    %v1526 = vpack.c.b16 %v1202, %v1196
    %v1527 = vpack.c.b16 %v1203, %v1197
    %v1528 = vpack.c.b16 %v1210, %v1204
    %v1529 = vpack.c.b16 %v1211, %v1205
    %v1530 = vpack.c.b16 %v1212, %v1206
    %v1531 = vpack.c.b16 %v1213, %v1207
    %v1532 = vpack.c.b16 %v1214, %v1208
    %v1533 = vpack.c.b16 %v1215, %v1209
    %v1534 = vpack.c.b16 %v1222, %v1216
    %v1535 = vpack.c.b16 %v1223, %v1217
    %v1536 = vpack.c.b16 %v1224, %v1218
    %v1537 = vpack.c.b16 %v1225, %v1219
    %v1538 = vpack.c.b16 %v1226, %v1220
    %v1539 = vpack.c.b16 %v1227, %v1221
    %v1540 = vpack.c.b16 %v1234, %v1228
    %v1541 = vpack.c.b16 %v1235, %v1229
    %v1542 = vpack.c.b16 %v1236, %v1230
    %v1543 = vpack.c.b16 %v1237, %v1231
    %v1544 = vpack.c.b16 %v1238, %v1232
    %v1545 = vpack.c.b16 %v1239, %v1233
    %v1546 = vpack.c.b16 %v1246, %v1240
    %v1547 = vpack.c.b16 %v1247, %v1241
    %v1548 = vpack.c.b16 %v1248, %v1242
    %v1549 = vpack.c.b16 %v1249, %v1243
    %v1550 = vpack.c.b16 %v1250, %v1244
    %v1551 = vpack.c.b16 %v1251, %v1245
    %v1552 = vpack.c.b16 %v1258, %v1252
    %v1553 = vpack.c.b16 %v1259, %v1253
    %v1554 = vpack.c.b16 %v1260, %v1254
    %v1555 = vpack.c.b16 %v1261, %v1255
    %v1556 = vpack.c.b16 %v1262, %v1256
    %v1557 = vpack.c.b16 %v1263, %v1257
    %vm1852 = vcmask 130048
    %v1854 = vsel %vm1852, %v375, 0
    %1856 = vmatprep.subr.bf16.mxu0 %v1265
    %1857 = vmatpush1.bf16.msra.mxu0 %v1264
    %1858 = vmatprep.subr.bf16.mxu0 %v1271
    %1859 = vmatpush1.bf16.msra.mxu0 %v1270
    %1860 = vmatprep.subr.bf16.mxu0 %v1277
    %1861 = vmatpush1.bf16.msra.mxu0 %v1276
    %1862 = vmatprep.subr.bf16.mxu0 %v1283
    %1863 = vmatpush1.bf16.msra.mxu0 %v1282
    %1864 = vmatprep.subr.bf16.mxu0 %v1289
    %1865 = vmatpush1.bf16.msra.mxu0 %v1288
    %1866 = vmatprep.subr.bf16.mxu0 %v1295
    %1867 = vmatpush1.bf16.msra.mxu0 %v1294
    %1868 = vmatprep.subr.bf16.mxu0 %v1301
    %1869 = vmatpush1.bf16.msra.mxu0 %v1300
    %1870 = vmatprep.subr.bf16.mxu0 %v1307
    %1871 = vmatpush1.bf16.msra.mxu0 %v1306
    %1872 = vmatprep.subr.bf16.mxu0 %v1313
    %1873 = vmatpush1.bf16.msra.mxu0 %v1312
    %1874 = vmatprep.subr.bf16.mxu0 %v1319
    %1875 = vmatpush1.bf16.msra.mxu0 %v1318
    %1876 = vmatprep.subr.bf16.mxu0 %v1325
    %1877 = vmatpush1.bf16.msra.mxu0 %v1324
    %1878 = vmatprep.subr.bf16.mxu0 %v1331
    %1879 = vmatpush1.bf16.msra.mxu0 %v1330
    %1880 = vmatprep.subr.bf16.mxu0 %v1337
    %1881 = vmatpush1.bf16.msra.mxu0 %v1336
    %1882 = vmatprep.subr.bf16.mxu0 %v1343
    %1883 = vmatpush1.bf16.msra.mxu0 %v1342
    %1884 = vmatprep.subr.bf16.mxu0 %v1349
    %1885 = vmatpush1.bf16.msra.mxu0 %v1348
    %1886 = vmatprep.subr.bf16.mxu0 %v1355
    %1887 = vmatpush1.bf16.msra.mxu0 %v1354
    %1888 = vmatprep.mubr.bf16.mxu0 %v370
    %1889 = vmatmul.mubr.bf16.gmra.mrb[0].mxu0 %v369
    %v1890 = vpop.f32.mrb[0].mxu0
    %v1891 = vadd.f32 %v331, %v1890
    %v1892 = vpop.f32.mrb[0].mxu0
    %v1893 = vadd.f32 %v335, %v1892
    %v1894 = vpop.f32.mrb[0].mxu0
    %v1895 = vpop.f32.mrb[0].mxu0
    %1896 = vdwg.mxu0
    %1897 = vmatprep.subr.bf16.mxu0 %v1361
    %1898 = vmatpush1.bf16.msra.mxu0 %v1360
    %1899 = vmatprep.subr.bf16.mxu0 %v1367
    %1900 = vmatpush1.bf16.msra.mxu0 %v1366
    %1901 = vmatprep.subr.bf16.mxu0 %v1373
    %1902 = vmatpush1.bf16.msra.mxu0 %v1372
    %1903 = vmatprep.subr.bf16.mxu0 %v1379
    %1904 = vmatpush1.bf16.msra.mxu0 %v1378
    %1905 = vmatprep.subr.bf16.mxu0 %v1385
    %1906 = vmatpush1.bf16.msra.mxu0 %v1384
    %1907 = vmatprep.subr.bf16.mxu0 %v1391
    %1908 = vmatpush1.bf16.msra.mxu0 %v1390
    %1909 = vmatprep.subr.bf16.mxu0 %v1397
    %1910 = vmatpush1.bf16.msra.mxu0 %v1396
    %1911 = vmatprep.subr.bf16.mxu0 %v1403
    %1912 = vmatpush1.bf16.msra.mxu0 %v1402
    %1913 = vmatprep.subr.bf16.mxu0 %v1409
    %1914 = vmatpush1.bf16.msra.mxu0 %v1408
    %1915 = vmatprep.subr.bf16.mxu0 %v1415
    %1916 = vmatpush1.bf16.msra.mxu0 %v1414
    %1917 = vmatprep.subr.bf16.mxu0 %v1421
    %1918 = vmatpush1.bf16.msra.mxu0 %v1420
    %1919 = vmatprep.subr.bf16.mxu0 %v1427
    %1920 = vmatpush1.bf16.msra.mxu0 %v1426
    %1921 = vmatprep.subr.bf16.mxu0 %v1433
    %1922 = vmatpush1.bf16.msra.mxu0 %v1432
    %1923 = vmatprep.subr.bf16.mxu0 %v1439
    %1924 = vmatpush1.bf16.msra.mxu0 %v1438
    %1925 = vmatprep.subr.bf16.mxu0 %v1445
    %1926 = vmatpush1.bf16.msra.mxu0 %v1444
    %1927 = vmatprep.subr.bf16.mxu0 %v1451
    %1928 = vmatpush1.bf16.msra.mxu0 %v1450
    %1929 = vmatprep.mubr.bf16.mxu0 %v372
    %1930 = vmatmul.mubr.bf16.gmra.mrb[0].mxu0 %v371
    %v1931 = vpop.f32.mrb[0].mxu0
    %v1932 = vadd.f32 %v1891, %v1931
    %v1933 = vpop.f32.mrb[0].mxu0
    %v1934 = vadd.f32 %v1893, %v1933
    %v1935 = vpop.f32.mrb[0].mxu0
    %v1936 = vpop.f32.mrb[0].mxu0
    %1937 = vdwg.mxu0
    %1938 = vmatprep.subr.bf16.mxu0 %v1457
    %1939 = vmatpush1.bf16.msra.mxu0 %v1456
    %1940 = vmatprep.subr.bf16.mxu0 %v1463
    %1941 = vmatpush1.bf16.msra.mxu0 %v1462
    %1942 = vmatprep.subr.bf16.mxu0 %v1469
    %1943 = vmatpush1.bf16.msra.mxu0 %v1468
    %1944 = vmatprep.subr.bf16.mxu0 %v1475
    %1945 = vmatpush1.bf16.msra.mxu0 %v1474
    %1946 = vmatprep.subr.bf16.mxu0 %v1481
    %1947 = vmatpush1.bf16.msra.mxu0 %v1480
    %1948 = vmatprep.subr.bf16.mxu0 %v1487
    %1949 = vmatpush1.bf16.msra.mxu0 %v1486
    %1950 = vmatprep.subr.bf16.mxu0 %v1493
    %1951 = vmatpush1.bf16.msra.mxu0 %v1492
    %1952 = vmatprep.subr.bf16.mxu0 %v1499
    %1953 = vmatpush1.bf16.msra.mxu0 %v1498
    %1954 = vmatprep.subr.bf16.mxu0 %v1505
    %1955 = vmatpush1.bf16.msra.mxu0 %v1504
    %1956 = vmatprep.subr.bf16.mxu0 %v1511
    %1957 = vmatpush1.bf16.msra.mxu0 %v1510
    %1958 = vmatprep.subr.bf16.mxu0 %v1517
    %1959 = vmatpush1.bf16.msra.mxu0 %v1516
    %1960 = vmatprep.subr.bf16.mxu0 %v1523
    %1961 = vmatpush1.bf16.msra.mxu0 %v1522
    %1962 = vmatprep.subr.bf16.mxu0 %v1529
    %1963 = vmatpush1.bf16.msra.mxu0 %v1528
    %1964 = vmatprep.subr.bf16.mxu0 %v1535
    %1965 = vmatpush1.bf16.msra.mxu0 %v1534
    %1966 = vmatprep.subr.bf16.mxu0 %v1541
    %1967 = vmatpush1.bf16.msra.mxu0 %v1540
    %1968 = vmatprep.subr.bf16.mxu0 %v1547
    %1969 = vmatpush1.bf16.msra.mxu0 %v1546
    %1970 = vmatprep.mubr.bf16.mxu0 %v374
    %1971 = vmatmul.mubr.bf16.gmra.mrb[0].mxu0 %v373
    %v1972 = vpop.f32.mrb[0].mxu0
    %v1973 = vadd.f32 %v1932, %v1972
    %v1974 = vpop.f32.mrb[0].mxu0
    %v1975 = vadd.f32 %v1934, %v1974
    %v1976 = vpop.f32.mrb[0].mxu0
    %v1977 = vpop.f32.mrb[0].mxu0
    %1978 = vdwg.mxu0
    %1979 = vmatprep.subr.bf16.mxu0 %v1553
    %1980 = vmatpush1.bf16.msra.mxu0 %v1552
    %1981 = vmatprep.subr.bf16.mxu0 0
    %1982 = vmatpush1.bf16.msra.mxu0 0
    %1983 = vmatprep.subr.bf16.mxu0 0
    %1984 = vmatpush1.bf16.msra.mxu0 0
    %1985 = vmatprep.subr.bf16.mxu0 0
    %1986 = vmatpush1.bf16.msra.mxu0 0
    %1987 = vmatprep.subr.bf16.mxu0 0
    %1988 = vmatpush1.bf16.msra.mxu0 0
    %1989 = vmatprep.subr.bf16.mxu0 0
    %1990 = vmatpush1.bf16.msra.mxu0 0
    %1991 = vmatprep.subr.bf16.mxu0 0
    %1992 = vmatpush1.bf16.msra.mxu0 0
    %1993 = vmatprep.subr.bf16.mxu0 0
    %1994 = vmatpush1.bf16.msra.mxu0 0
    %1995 = vmatprep.subr.bf16.mxu0 0
    %1996 = vmatpush1.bf16.msra.mxu0 0
    %1997 = vmatprep.subr.bf16.mxu0 0
    %1998 = vmatpush1.bf16.msra.mxu0 0
    %1999 = vmatprep.subr.bf16.mxu0 0
    %2000 = vmatpush1.bf16.msra.mxu0 0
    %2001 = vmatprep.subr.bf16.mxu0 0
    %2002 = vmatpush1.bf16.msra.mxu0 0
    %2003 = vmatprep.subr.bf16.mxu0 0
    %2004 = vmatpush1.bf16.msra.mxu0 0
    %2005 = vmatprep.subr.bf16.mxu0 0
    %2006 = vmatpush1.bf16.msra.mxu0 0
    %2007 = vmatprep.subr.bf16.mxu0 0
    %2008 = vmatpush1.bf16.msra.mxu0 0
    %2009 = vmatprep.subr.bf16.mxu0 0
    %2010 = vmatpush1.bf16.msra.mxu0 0
    %2011 = vmatprep.mubr.bf16.mxu0 0
    %2012 = vmatmul.mubr.bf16.gmra.mrb[0].mxu0 %v1854
    %v2013 = vpop.f32.mrb[0].mxu0
    %v2014 = vadd.f32 %v1973, %v2013
    %v2015 = vpop.f32.mrb[0].mxu0
    %v2016 = vadd.f32 %v1975, %v2015
    %v2017 = vpop.f32.mrb[0].mxu0
    %v2018 = vpop.f32.mrb[0].mxu0
    %2019 = vdwg.mxu0
    %2020 = vmatprep.subr.bf16.mxu0 %v1267
    %2021 = vmatpush1.bf16.msra.mxu0 %v1266
    %2022 = vmatprep.subr.bf16.mxu0 %v1273
    %2023 = vmatpush1.bf16.msra.mxu0 %v1272
    %2024 = vmatprep.subr.bf16.mxu0 %v1279
    %2025 = vmatpush1.bf16.msra.mxu0 %v1278
    %2026 = vmatprep.subr.bf16.mxu0 %v1285
    %2027 = vmatpush1.bf16.msra.mxu0 %v1284
    %2028 = vmatprep.subr.bf16.mxu0 %v1291
    %2029 = vmatpush1.bf16.msra.mxu0 %v1290
    %2030 = vmatprep.subr.bf16.mxu0 %v1297
    %2031 = vmatpush1.bf16.msra.mxu0 %v1296
    %2032 = vmatprep.subr.bf16.mxu0 %v1303
    %2033 = vmatpush1.bf16.msra.mxu0 %v1302
    %2034 = vmatprep.subr.bf16.mxu0 %v1309
    %2035 = vmatpush1.bf16.msra.mxu0 %v1308
    %2036 = vmatprep.subr.bf16.mxu0 %v1315
    %2037 = vmatpush1.bf16.msra.mxu0 %v1314
    %2038 = vmatprep.subr.bf16.mxu0 %v1321
    %2039 = vmatpush1.bf16.msra.mxu0 %v1320
    %2040 = vmatprep.subr.bf16.mxu0 %v1327
    %2041 = vmatpush1.bf16.msra.mxu0 %v1326
    %2042 = vmatprep.subr.bf16.mxu0 %v1333
    %2043 = vmatpush1.bf16.msra.mxu0 %v1332
    %2044 = vmatprep.subr.bf16.mxu0 %v1339
    %2045 = vmatpush1.bf16.msra.mxu0 %v1338
    %2046 = vmatprep.subr.bf16.mxu0 %v1345
    %2047 = vmatpush1.bf16.msra.mxu0 %v1344
    %2048 = vmatprep.subr.bf16.mxu0 %v1351
    %2049 = vmatpush1.bf16.msra.mxu0 %v1350
    %2050 = vmatprep.subr.bf16.mxu0 %v1357
    %2051 = vmatpush1.bf16.msra.mxu0 %v1356
    %2052 = vmatprep.mubr.bf16.mxu0 %v370
    %2053 = vmatmul.mubr.bf16.gmra.mrb[0].mxu0 %v369
    %v2054 = vpop.f32.mrb[0].mxu0
    %v2055 = vadd.f32 %v339, %v2054
    %v2056 = vpop.f32.mrb[0].mxu0
    %v2057 = vadd.f32 %v343, %v2056
    %v2058 = vpop.f32.mrb[0].mxu0
    %v2059 = vpop.f32.mrb[0].mxu0
    %2060 = vdwg.mxu0
    %2061 = vmatprep.subr.bf16.mxu0 %v1363
    %2062 = vmatpush1.bf16.msra.mxu0 %v1362
    %2063 = vmatprep.subr.bf16.mxu0 %v1369
    %2064 = vmatpush1.bf16.msra.mxu0 %v1368
    %2065 = vmatprep.subr.bf16.mxu0 %v1375
    %2066 = vmatpush1.bf16.msra.mxu0 %v1374
    %2067 = vmatprep.subr.bf16.mxu0 %v1381
    %2068 = vmatpush1.bf16.msra.mxu0 %v1380
    %2069 = vmatprep.subr.bf16.mxu0 %v1387
    %2070 = vmatpush1.bf16.msra.mxu0 %v1386
    %2071 = vmatprep.subr.bf16.mxu0 %v1393
    %2072 = vmatpush1.bf16.msra.mxu0 %v1392
    %2073 = vmatprep.subr.bf16.mxu0 %v1399
    %2074 = vmatpush1.bf16.msra.mxu0 %v1398
    %2075 = vmatprep.subr.bf16.mxu0 %v1405
    %2076 = vmatpush1.bf16.msra.mxu0 %v1404
    %2077 = vmatprep.subr.bf16.mxu0 %v1411
    %2078 = vmatpush1.bf16.msra.mxu0 %v1410
    %2079 = vmatprep.subr.bf16.mxu0 %v1417
    %2080 = vmatpush1.bf16.msra.mxu0 %v1416
    %2081 = vmatprep.subr.bf16.mxu0 %v1423
    %2082 = vmatpush1.bf16.msra.mxu0 %v1422
    %2083 = vmatprep.subr.bf16.mxu0 %v1429
    %2084 = vmatpush1.bf16.msra.mxu0 %v1428
    %2085 = vmatprep.subr.bf16.mxu0 %v1435
    %2086 = vmatpush1.bf16.msra.mxu0 %v1434
    %2087 = vmatprep.subr.bf16.mxu0 %v1441
    %2088 = vmatpush1.bf16.msra.mxu0 %v1440
    %2089 = vmatprep.subr.bf16.mxu0 %v1447
    %2090 = vmatpush1.bf16.msra.mxu0 %v1446
    %2091 = vmatprep.subr.bf16.mxu0 %v1453
    %2092 = vmatpush1.bf16.msra.mxu0 %v1452
    %2093 = vmatprep.mubr.bf16.mxu0 %v372
    %2094 = vmatmul.mubr.bf16.gmra.mrb[0].mxu0 %v371
    %v2095 = vpop.f32.mrb[0].mxu0
    %v2096 = vadd.f32 %v2055, %v2095
    %v2097 = vpop.f32.mrb[0].mxu0
    %v2098 = vadd.f32 %v2057, %v2097
    %v2099 = vpop.f32.mrb[0].mxu0
    %v2100 = vpop.f32.mrb[0].mxu0
    %2101 = vdwg.mxu0
    %2102 = vmatprep.subr.bf16.mxu0 %v1459
    %2103 = vmatpush1.bf16.msra.mxu0 %v1458
    %2104 = vmatprep.subr.bf16.mxu0 %v1465
    %2105 = vmatpush1.bf16.msra.mxu0 %v1464
    %2106 = vmatprep.subr.bf16.mxu0 %v1471
    %2107 = vmatpush1.bf16.msra.mxu0 %v1470
    %2108 = vmatprep.subr.bf16.mxu0 %v1477
    %2109 = vmatpush1.bf16.msra.mxu0 %v1476
    %2110 = vmatprep.subr.bf16.mxu0 %v1483
    %2111 = vmatpush1.bf16.msra.mxu0 %v1482
    %2112 = vmatprep.subr.bf16.mxu0 %v1489
    %2113 = vmatpush1.bf16.msra.mxu0 %v1488
    %2114 = vmatprep.subr.bf16.mxu0 %v1495
    %2115 = vmatpush1.bf16.msra.mxu0 %v1494
    %2116 = vmatprep.subr.bf16.mxu0 %v1501
    %2117 = vmatpush1.bf16.msra.mxu0 %v1500
    %2118 = vmatprep.subr.bf16.mxu0 %v1507
    %2119 = vmatpush1.bf16.msra.mxu0 %v1506
    %2120 = vmatprep.subr.bf16.mxu0 %v1513
    %2121 = vmatpush1.bf16.msra.mxu0 %v1512
    %2122 = vmatprep.subr.bf16.mxu0 %v1519
    %2123 = vmatpush1.bf16.msra.mxu0 %v1518
    %2124 = vmatprep.subr.bf16.mxu0 %v1525
    %2125 = vmatpush1.bf16.msra.mxu0 %v1524
    %2126 = vmatprep.subr.bf16.mxu0 %v1531
    %2127 = vmatpush1.bf16.msra.mxu0 %v1530
    %2128 = vmatprep.subr.bf16.mxu0 %v1537
    %2129 = vmatpush1.bf16.msra.mxu0 %v1536
    %2130 = vmatprep.subr.bf16.mxu0 %v1543
    %2131 = vmatpush1.bf16.msra.mxu0 %v1542
    %2132 = vmatprep.subr.bf16.mxu0 %v1549
    %2133 = vmatpush1.bf16.msra.mxu0 %v1548
    %2134 = vmatprep.mubr.bf16.mxu0 %v374
    %2135 = vmatmul.mubr.bf16.gmra.mrb[0].mxu0 %v373
    %v2136 = vpop.f32.mrb[0].mxu0
    %v2137 = vadd.f32 %v2096, %v2136
    %v2138 = vpop.f32.mrb[0].mxu0
    %v2139 = vadd.f32 %v2098, %v2138
    %v2140 = vpop.f32.mrb[0].mxu0
    %v2141 = vpop.f32.mrb[0].mxu0
    %2142 = vdwg.mxu0
    %2143 = vmatprep.subr.bf16.mxu0 %v1555
    %2144 = vmatpush1.bf16.msra.mxu0 %v1554
    %2145 = vmatprep.subr.bf16.mxu0 0
    %2146 = vmatpush1.bf16.msra.mxu0 0
    %2147 = vmatprep.subr.bf16.mxu0 0
    %2148 = vmatpush1.bf16.msra.mxu0 0
    %2149 = vmatprep.subr.bf16.mxu0 0
    %2150 = vmatpush1.bf16.msra.mxu0 0
    %2151 = vmatprep.subr.bf16.mxu0 0
    %2152 = vmatpush1.bf16.msra.mxu0 0
    %2153 = vmatprep.subr.bf16.mxu0 0
    %2154 = vmatpush1.bf16.msra.mxu0 0
    %2155 = vmatprep.subr.bf16.mxu0 0
    %2156 = vmatpush1.bf16.msra.mxu0 0
    %2157 = vmatprep.subr.bf16.mxu0 0
    %2158 = vmatpush1.bf16.msra.mxu0 0
    %2159 = vmatprep.subr.bf16.mxu0 0
    %2160 = vmatpush1.bf16.msra.mxu0 0
    %2161 = vmatprep.subr.bf16.mxu0 0
    %2162 = vmatpush1.bf16.msra.mxu0 0
    %2163 = vmatprep.subr.bf16.mxu0 0
    %2164 = vmatpush1.bf16.msra.mxu0 0
    %2165 = vmatprep.subr.bf16.mxu0 0
    %2166 = vmatpush1.bf16.msra.mxu0 0
    %2167 = vmatprep.subr.bf16.mxu0 0
    %2168 = vmatpush1.bf16.msra.mxu0 0
    %2169 = vmatprep.subr.bf16.mxu0 0
    %2170 = vmatpush1.bf16.msra.mxu0 0
    %2171 = vmatprep.subr.bf16.mxu0 0
    %2172 = vmatpush1.bf16.msra.mxu0 0
    %2173 = vmatprep.subr.bf16.mxu0 0
    %2174 = vmatpush1.bf16.msra.mxu0 0
    %2175 = vmatprep.mubr.bf16.mxu0 0
    %2176 = vmatmul.mubr.bf16.gmra.mrb[0].mxu0 %v1854
    %v2177 = vpop.f32.mrb[0].mxu0
    %v2178 = vadd.f32 %v2137, %v2177
    %v2179 = vpop.f32.mrb[0].mxu0
    %v2180 = vadd.f32 %v2139, %v2179
    %v2181 = vpop.f32.mrb[0].mxu0
    %v2182 = vpop.f32.mrb[0].mxu0
    %2183 = vdwg.mxu0
    %2184 = vmatprep.subr.bf16.mxu0 %v1269
    %2185 = vmatpush1.bf16.msra.mxu0 %v1268
    %2186 = vmatprep.subr.bf16.mxu0 %v1275
    %2187 = vmatpush1.bf16.msra.mxu0 %v1274
    %2188 = vmatprep.subr.bf16.mxu0 %v1281
    %2189 = vmatpush1.bf16.msra.mxu0 %v1280
    %2190 = vmatprep.subr.bf16.mxu0 %v1287
    %2191 = vmatpush1.bf16.msra.mxu0 %v1286
    %2192 = vmatprep.subr.bf16.mxu0 %v1293
    %2193 = vmatpush1.bf16.msra.mxu0 %v1292
    %2194 = vmatprep.subr.bf16.mxu0 %v1299
    %2195 = vmatpush1.bf16.msra.mxu0 %v1298
    %2196 = vmatprep.subr.bf16.mxu0 %v1305
    %2197 = vmatpush1.bf16.msra.mxu0 %v1304
    %2198 = vmatprep.subr.bf16.mxu0 %v1311
    %2199 = vmatpush1.bf16.msra.mxu0 %v1310
    %2200 = vmatprep.subr.bf16.mxu0 %v1317
    %2201 = vmatpush1.bf16.msra.mxu0 %v1316
    %2202 = vmatprep.subr.bf16.mxu0 %v1323
    %2203 = vmatpush1.bf16.msra.mxu0 %v1322
    %2204 = vmatprep.subr.bf16.mxu0 %v1329
    %2205 = vmatpush1.bf16.msra.mxu0 %v1328
    %2206 = vmatprep.subr.bf16.mxu0 %v1335
    %2207 = vmatpush1.bf16.msra.mxu0 %v1334
    %2208 = vmatprep.subr.bf16.mxu0 %v1341
    %2209 = vmatpush1.bf16.msra.mxu0 %v1340
    %2210 = vmatprep.subr.bf16.mxu0 %v1347
    %2211 = vmatpush1.bf16.msra.mxu0 %v1346
    %2212 = vmatprep.subr.bf16.mxu0 %v1353
    %2213 = vmatpush1.bf16.msra.mxu0 %v1352
    %2214 = vmatprep.subr.bf16.mxu0 %v1359
    %2215 = vmatpush1.bf16.msra.mxu0 %v1358
    %2216 = vmatprep.mubr.bf16.mxu0 %v370
    %2217 = vmatmul.mubr.bf16.gmra.mrb[0].mxu0 %v369
    %v2218 = vpop.f32.mrb[0].mxu0
    %v2219 = vadd.f32 %v347, %v2218
    %v2220 = vpop.f32.mrb[0].mxu0
    %v2221 = vadd.f32 %v351, %v2220
    %v2222 = vpop.f32.mrb[0].mxu0
    %v2223 = vpop.f32.mrb[0].mxu0
    %2224 = vdwg.mxu0
    %2225 = vmatprep.subr.bf16.mxu0 %v1365
    %2226 = vmatpush1.bf16.msra.mxu0 %v1364
    %2227 = vmatprep.subr.bf16.mxu0 %v1371
    %2228 = vmatpush1.bf16.msra.mxu0 %v1370
    %2229 = vmatprep.subr.bf16.mxu0 %v1377
    %2230 = vmatpush1.bf16.msra.mxu0 %v1376
    %2231 = vmatprep.subr.bf16.mxu0 %v1383
    %2232 = vmatpush1.bf16.msra.mxu0 %v1382
    %2233 = vmatprep.subr.bf16.mxu0 %v1389
    %2234 = vmatpush1.bf16.msra.mxu0 %v1388
    %2235 = vmatprep.subr.bf16.mxu0 %v1395
    %2236 = vmatpush1.bf16.msra.mxu0 %v1394
    %2237 = vmatprep.subr.bf16.mxu0 %v1401
    %2238 = vmatpush1.bf16.msra.mxu0 %v1400
    %2239 = vmatprep.subr.bf16.mxu0 %v1407
    %2240 = vmatpush1.bf16.msra.mxu0 %v1406
    %2241 = vmatprep.subr.bf16.mxu0 %v1413
    %2242 = vmatpush1.bf16.msra.mxu0 %v1412
    %2243 = vmatprep.subr.bf16.mxu0 %v1419
    %2244 = vmatpush1.bf16.msra.mxu0 %v1418
    %2245 = vmatprep.subr.bf16.mxu0 %v1425
    %2246 = vmatpush1.bf16.msra.mxu0 %v1424
    %2247 = vmatprep.subr.bf16.mxu0 %v1431
    %2248 = vmatpush1.bf16.msra.mxu0 %v1430
    %2249 = vmatprep.subr.bf16.mxu0 %v1437
    %2250 = vmatpush1.bf16.msra.mxu0 %v1436
    %2251 = vmatprep.subr.bf16.mxu0 %v1443
    %2252 = vmatpush1.bf16.msra.mxu0 %v1442
    %2253 = vmatprep.subr.bf16.mxu0 %v1449
    %2254 = vmatpush1.bf16.msra.mxu0 %v1448
    %2255 = vmatprep.subr.bf16.mxu0 %v1455
    %2256 = vmatpush1.bf16.msra.mxu0 %v1454
    %2257 = vmatprep.mubr.bf16.mxu0 %v372
    %2258 = vmatmul.mubr.bf16.gmra.mrb[0].mxu0 %v371
    %v2259 = vpop.f32.mrb[0].mxu0
    %v2260 = vadd.f32 %v2219, %v2259
    %v2261 = vpop.f32.mrb[0].mxu0
    %v2262 = vadd.f32 %v2221, %v2261
    %v2263 = vpop.f32.mrb[0].mxu0
    %v2264 = vpop.f32.mrb[0].mxu0
    %2265 = vdwg.mxu0
    %2266 = vmatprep.subr.bf16.mxu0 %v1461
    %2267 = vmatpush1.bf16.msra.mxu0 %v1460
    %2268 = vmatprep.subr.bf16.mxu0 %v1467
    %2269 = vmatpush1.bf16.msra.mxu0 %v1466
    %2270 = vmatprep.subr.bf16.mxu0 %v1473
    %2271 = vmatpush1.bf16.msra.mxu0 %v1472
    %2272 = vmatprep.subr.bf16.mxu0 %v1479
    %2273 = vmatpush1.bf16.msra.mxu0 %v1478
    %2274 = vmatprep.subr.bf16.mxu0 %v1485
    %2275 = vmatpush1.bf16.msra.mxu0 %v1484
    %2276 = vmatprep.subr.bf16.mxu0 %v1491
    %2277 = vmatpush1.bf16.msra.mxu0 %v1490
    %2278 = vmatprep.subr.bf16.mxu0 %v1497
    %2279 = vmatpush1.bf16.msra.mxu0 %v1496
    %2280 = vmatprep.subr.bf16.mxu0 %v1503
    %2281 = vmatpush1.bf16.msra.mxu0 %v1502
    %2282 = vmatprep.subr.bf16.mxu0 %v1509
    %2283 = vmatpush1.bf16.msra.mxu0 %v1508
    %2284 = vmatprep.subr.bf16.mxu0 %v1515
    %2285 = vmatpush1.bf16.msra.mxu0 %v1514
    %2286 = vmatprep.subr.bf16.mxu0 %v1521
    %2287 = vmatpush1.bf16.msra.mxu0 %v1520
    %2288 = vmatprep.subr.bf16.mxu0 %v1527
    %2289 = vmatpush1.bf16.msra.mxu0 %v1526
    %2290 = vmatprep.subr.bf16.mxu0 %v1533
    %2291 = vmatpush1.bf16.msra.mxu0 %v1532
    %2292 = vmatprep.subr.bf16.mxu0 %v1539
    %2293 = vmatpush1.bf16.msra.mxu0 %v1538
    %2294 = vmatprep.subr.bf16.mxu0 %v1545
    %2295 = vmatpush1.bf16.msra.mxu0 %v1544
    %2296 = vmatprep.subr.bf16.mxu0 %v1551
    %2297 = vmatpush1.bf16.msra.mxu0 %v1550
    %2298 = vmatprep.mubr.bf16.mxu0 %v374
    %2299 = vmatmul.mubr.bf16.gmra.mrb[0].mxu0 %v373
    %v2300 = vpop.f32.mrb[0].mxu0
    %v2301 = vadd.f32 %v2260, %v2300
    %v2302 = vpop.f32.mrb[0].mxu0
    %v2303 = vadd.f32 %v2262, %v2302
    %v2304 = vpop.f32.mrb[0].mxu0
    %v2305 = vpop.f32.mrb[0].mxu0
    %2306 = vdwg.mxu0
    %2307 = vmatprep.subr.bf16.mxu0 %v1557
    %2308 = vmatpush1.bf16.msra.mxu0 %v1556
    %2309 = vmatprep.subr.bf16.mxu0 0
    %2310 = vmatpush1.bf16.msra.mxu0 0
    %2311 = vmatprep.subr.bf16.mxu0 0
    %2312 = vmatpush1.bf16.msra.mxu0 0
    %2313 = vmatprep.subr.bf16.mxu0 0
    %2314 = vmatpush1.bf16.msra.mxu0 0
    %2315 = vmatprep.subr.bf16.mxu0 0
    %2316 = vmatpush1.bf16.msra.mxu0 0
    %2317 = vmatprep.subr.bf16.mxu0 0
    %2318 = vmatpush1.bf16.msra.mxu0 0
    %2319 = vmatprep.subr.bf16.mxu0 0
    %2320 = vmatpush1.bf16.msra.mxu0 0
    %2321 = vmatprep.subr.bf16.mxu0 0
    %2322 = vmatpush1.bf16.msra.mxu0 0
    %2323 = vmatprep.subr.bf16.mxu0 0
    %2324 = vmatpush1.bf16.msra.mxu0 0
    %2325 = vmatprep.subr.bf16.mxu0 0
    %2326 = vmatpush1.bf16.msra.mxu0 0
    %2327 = vmatprep.subr.bf16.mxu0 0
    %2328 = vmatpush1.bf16.msra.mxu0 0
    %2329 = vmatprep.subr.bf16.mxu0 0
    %2330 = vmatpush1.bf16.msra.mxu0 0
    %2331 = vmatprep.subr.bf16.mxu0 0
    %2332 = vmatpush1.bf16.msra.mxu0 0
    %2333 = vmatprep.subr.bf16.mxu0 0
    %2334 = vmatpush1.bf16.msra.mxu0 0
    %2335 = vmatprep.subr.bf16.mxu0 0
    %2336 = vmatpush1.bf16.msra.mxu0 0
    %2337 = vmatprep.subr.bf16.mxu0 0
    %2338 = vmatpush1.bf16.msra.mxu0 0
    %2339 = vmatprep.mubr.bf16.mxu0 0
    %2340 = vmatmul.mubr.bf16.gmra.mrb[0].mxu0 %v1854
    %v2341 = vpop.f32.mrb[0].mxu0
    %v2342 = vadd.f32 %v2301, %v2341
    %v2343 = vpop.f32.mrb[0].mxu0
    %v2344 = vadd.f32 %v2303, %v2343
    %v2345 = vpop.f32.mrb[0].mxu0
    %v2346 = vpop.f32.mrb[0].mxu0
    %2347 = vdwg.mxu0
    %v2348 = vld [vmem:[%s2] sm:$0xff]
    %v2349 = vld [vmem:[%s2 + $0x8] sm:$0xff]
    %v2350 = vld [vmem:[%s2 + $0x10] sm:$0xff]
    %v2351 = vld [vmem:[%s2 + $0x18] sm:$0xff]
    %v2352 = vld [vmem:[%s2 + $0x20] sm:$0xff]
    %v2353 = vld [vmem:[%s2 + $0x28] sm:$0xff]
    %v2354 = vld [vmem:[%s2 + $0x30] sm:$0xff]
    %v2355 = vld [vmem:[%s2 + $0x38] sm:$0xff]
    %v2356 = vld [vmem:[%s2 + $0x40] sm:$0xff]
    %v2357 = vld [vmem:[%s2 + $0x48] sm:$0xff]
    %v2358 = vld [vmem:[%s2 + $0x50] sm:$0xff]
    %v2359 = vld [vmem:[%s2 + $0x58] sm:$0xff]
    %v2360 = vld [vmem:[%s2 + $0x60] sm:$0xff]
    %v2361 = vld [vmem:[%s2 + $0x68] sm:$0xff]
    %v2362 = vld [vmem:[%s2 + $0x70] sm:$0xff]
    %v2363 = vld [vmem:[%s2 + $0x78] sm:$0xff]
    %v2364 = vld [vmem:[%s2 + $0x80] sm:$0xff]
    %v2365 = vld [vmem:[%s2 + $0x88] sm:$0xff]
    %v2366 = vld [vmem:[%s2 + $0x90] sm:$0xff]
    %v2367 = vld [vmem:[%s2 + $0x98] sm:$0xff]
    %v2368 = vld [vmem:[%s2 + $0xa0] sm:$0xff]
    %v2369 = vld [vmem:[%s2 + $0xa8] sm:$0xff]
    %v2370 = vld [vmem:[%s2 + $0xb0] sm:$0xff]
    %v2371 = vld [vmem:[%s2 + $0xb8] sm:$0xff]
    %v2372 = vld [vmem:[%s2 + $0xc0] sm:$0xff]
    %v2373 = vld [vmem:[%s2 + $0xc8] sm:$0xff]
    %v2374 = vld [vmem:[%s2 + $0xd0] sm:$0xff]
    %v2375 = vld [vmem:[%s2 + $0xd8] sm:$0xff]
    %v2376 = vld [vmem:[%s2 + $0xe0] sm:$0xff]
    %v2377 = vld [vmem:[%s2 + $0xe8] sm:$0xff]
    %v2378 = vld [vmem:[%s2 + $0xf0] sm:$0xff]
    %v2379 = vld [vmem:[%s2 + $0xf8] sm:$0xff]
    %v2380 = vld [vmem:[%s2 + $0x100] sm:$0xff]
    %v2381 = vld [vmem:[%s2 + $0x108] sm:$0xff]
    %v2382 = vld [vmem:[%s2 + $0x110] sm:$0xff]
    %v2383 = vld [vmem:[%s2 + $0x118] sm:$0xff]
    %v2384 = vld [vmem:[%s2 + $0x120] sm:$0xff]
    %v2385 = vld [vmem:[%s2 + $0x128] sm:$0xff]
    %v2386 = vld [vmem:[%s2 + $0x130] sm:$0xff]
    %v2387 = vld [vmem:[%s2 + $0x138] sm:$0xff]
    %v2388 = vld [vmem:[%s2 + $0x140] sm:$0xff]
    %v2389 = vld [vmem:[%s2 + $0x148] sm:$0xff]
    %v2390 = vld [vmem:[%s2 + $0x150] sm:$0xff]
    %v2391 = vld [vmem:[%s2 + $0x158] sm:$0xff]
    %v2392 = vld [vmem:[%s2 + $0x160] sm:$0xff]
    %v2393 = vld [vmem:[%s2 + $0x168] sm:$0xff]
    %v2394 = vld [vmem:[%s2 + $0x170] sm:$0xff]
    %v2395 = vld [vmem:[%s2 + $0x178] sm:$0xff]
    %v2396 = vld [vmem:[%s2 + $0x180] sm:$0xff]
    %v2397 = vld [vmem:[%s2 + $0x188] sm:$0xff]
    %v2398 = vld [vmem:[%s2 + $0x190] sm:$0xff]
    %v2399 = vld [vmem:[%s2 + $0x198] sm:$0xff]
    %v2400 = vld [vmem:[%s2 + $0x1a0] sm:$0xff]
    %v2401 = vld [vmem:[%s2 + $0x1a8] sm:$0xff]
    %v2402 = vld [vmem:[%s2 + $0x1b0] sm:$0xff]
    %v2403 = vld [vmem:[%s2 + $0x1b8] sm:$0xff]
    %v2404 = vld [vmem:[%s2 + $0x1c0] sm:$0xff]
    %v2405 = vld [vmem:[%s2 + $0x1c8] sm:$0xff]
    %v2406 = vld [vmem:[%s2 + $0x1d0] sm:$0xff]
    %v2407 = vld [vmem:[%s2 + $0x1d8] sm:$0xff]
    %v2408 = vld [vmem:[%s2 + $0x1e0] sm:$0xff]
    %v2409 = vld [vmem:[%s2 + $0x1e8] sm:$0xff]
    %v2410 = vld [vmem:[%s2 + $0x1f0] sm:$0xff]
    %v2411 = vld [vmem:[%s2 + $0x1f8] sm:$0xff]
    %v2412 = vld [vmem:[%s2 + $0x200] sm:$0xff]
    %v2413 = vld [vmem:[%s2 + $0x208] sm:$0xff]
    %v2414 = vld [vmem:[%s2 + $0x210] sm:$0xff]
    %v2415 = vld [vmem:[%s2 + $0x218] sm:$0xff]
    %v2416 = vld [vmem:[%s2 + $0x220] sm:$0xff]
    %v2417 = vld [vmem:[%s2 + $0x228] sm:$0xff]
    %v2418 = vld [vmem:[%s2 + $0x230] sm:$0xff]
    %v2419 = vld [vmem:[%s2 + $0x238] sm:$0xff]
    %v2420 = vld [vmem:[%s2 + $0x240] sm:$0xff]
    %v2421 = vld [vmem:[%s2 + $0x248] sm:$0xff]
    %v2422 = vld [vmem:[%s2 + $0x250] sm:$0xff]
    %v2423 = vld [vmem:[%s2 + $0x258] sm:$0xff]
    %v2424 = vld [vmem:[%s2 + $0x260] sm:$0xff]
    %v2425 = vld [vmem:[%s2 + $0x268] sm:$0xff]
    %v2426 = vld [vmem:[%s2 + $0x270] sm:$0xff]
    %v2427 = vld [vmem:[%s2 + $0x278] sm:$0xff]
    %v2428 = vld [vmem:[%s2 + $0x280] sm:$0xff]
    %v2429 = vld [vmem:[%s2 + $0x288] sm:$0xff]
    %v2430 = vld [vmem:[%s2 + $0x290] sm:$0xff]
    %v2431 = vld [vmem:[%s2 + $0x298] sm:$0xff]
    %v2432 = vld [vmem:[%s2 + $0x2a0] sm:$0xff]
    %v2433 = vld [vmem:[%s2 + $0x2a8] sm:$0xff]
    %v2434 = vld [vmem:[%s2 + $0x2b0] sm:$0xff]
    %v2435 = vld [vmem:[%s2 + $0x2b8] sm:$0xff]
    %v2436 = vld [vmem:[%s2 + $0x2c0] sm:$0xff]
    %v2437 = vld [vmem:[%s2 + $0x2c8] sm:$0xff]
    %v2438 = vld [vmem:[%s2 + $0x2d0] sm:$0xff]
    %v2439 = vld [vmem:[%s2 + $0x2d8] sm:$0xff]
    %v2440 = vld [vmem:[%s2 + $0x2e0] sm:$0xff]
    %v2441 = vld [vmem:[%s2 + $0x2e8] sm:$0xff]
    %v2442 = vld [vmem:[%s2 + $0x2f0] sm:$0xff]
    %v2443 = vld [vmem:[%s2 + $0x2f8] sm:$0xff]
    %v2444 = vld [vmem:[%s4] sm:$0x3f]
    %v2446 = vlaneseq
    %v2447 = vshrl.u32 %v2446, 7
    %v2448 = vsub.s32 0, %v2447
    %v2449 = vrot.slane %v2444, %v2448
    %v2450 = vlaneseq
    %v2451 = vshrl.u32 %v2450, 7
    %v2452 = vsub.s32 1, %v2451
    %v2453 = vrot.slane %v2444, %v2452
    %v2454 = vlaneseq
    %v2455 = vshrl.u32 %v2454, 7
    %v2456 = vsub.s32 2, %v2455
    %v2457 = vrot.slane %v2444, %v2456
    %v2458 = vlaneseq
    %v2459 = vshrl.u32 %v2458, 7
    %v2460 = vsub.s32 3, %v2459
    %v2461 = vrot.slane %v2444, %v2460
    %v2462 = vlaneseq
    %v2463 = vshrl.u32 %v2462, 7
    %v2464 = vsub.s32 4, %v2463
    %v2465 = vrot.slane %v2444, %v2464
    %v2466 = vlaneseq
    %v2467 = vshrl.u32 %v2466, 7
    %v2468 = vsub.s32 5, %v2467
    %v2469 = vrot.slane %v2444, %v2468
    %v2572 = vunpack.c.l.b16 %v2348
    %v2573 = vunpack.c.h.b16 %v2348
    %v2574 = vunpack.c.l.b16 %v2349
    %v2575 = vunpack.c.h.b16 %v2349
    %v2576 = vunpack.c.l.b16 %v2350
    %v2577 = vunpack.c.h.b16 %v2350
    %v2578 = vunpack.c.l.b16 %v2351
    %v2579 = vunpack.c.h.b16 %v2351
    %v2580 = vunpack.c.l.b16 %v2352
    %v2581 = vunpack.c.h.b16 %v2352
    %v2582 = vunpack.c.l.b16 %v2353
    %v2583 = vunpack.c.h.b16 %v2353
    %v2584 = vunpack.c.l.b16 %v2354
    %v2585 = vunpack.c.h.b16 %v2354
    %v2586 = vunpack.c.l.b16 %v2355
    %v2587 = vunpack.c.h.b16 %v2355
    %v2588 = vunpack.c.l.b16 %v2356
    %v2589 = vunpack.c.h.b16 %v2356
    %v2590 = vunpack.c.l.b16 %v2357
    %v2591 = vunpack.c.h.b16 %v2357
    %v2592 = vunpack.c.l.b16 %v2358
    %v2593 = vunpack.c.h.b16 %v2358
    %v2594 = vunpack.c.l.b16 %v2359
    %v2595 = vunpack.c.h.b16 %v2359
    %v2596 = vunpack.c.l.b16 %v2360
    %v2597 = vunpack.c.h.b16 %v2360
    %v2598 = vunpack.c.l.b16 %v2361
    %v2599 = vunpack.c.h.b16 %v2361
    %v2600 = vunpack.c.l.b16 %v2362
    %v2601 = vunpack.c.h.b16 %v2362
    %v2602 = vunpack.c.l.b16 %v2363
    %v2603 = vunpack.c.h.b16 %v2363
    %v2604 = vunpack.c.l.b16 %v2364
    %v2605 = vunpack.c.h.b16 %v2364
    %v2606 = vunpack.c.l.b16 %v2365
    %v2607 = vunpack.c.h.b16 %v2365
    %v2608 = vunpack.c.l.b16 %v2366
    %v2609 = vunpack.c.h.b16 %v2366
    %v2610 = vunpack.c.l.b16 %v2367
    %v2611 = vunpack.c.h.b16 %v2367
    %v2612 = vunpack.c.l.b16 %v2368
    %v2613 = vunpack.c.h.b16 %v2368
    %v2614 = vunpack.c.l.b16 %v2369
    %v2615 = vunpack.c.h.b16 %v2369
    %v2616 = vunpack.c.l.b16 %v2370
    %v2617 = vunpack.c.h.b16 %v2370
    %v2618 = vunpack.c.l.b16 %v2371
    %v2619 = vunpack.c.h.b16 %v2371
    %v2620 = vunpack.c.l.b16 %v2372
    %v2621 = vunpack.c.h.b16 %v2372
    %v2622 = vunpack.c.l.b16 %v2373
    %v2623 = vunpack.c.h.b16 %v2373
    %v2624 = vunpack.c.l.b16 %v2374
    %v2625 = vunpack.c.h.b16 %v2374
    %v2626 = vunpack.c.l.b16 %v2375
    %v2627 = vunpack.c.h.b16 %v2375
    %v2628 = vunpack.c.l.b16 %v2376
    %v2629 = vunpack.c.h.b16 %v2376
    %v2630 = vunpack.c.l.b16 %v2377
    %v2631 = vunpack.c.h.b16 %v2377
    %v2632 = vunpack.c.l.b16 %v2378
    %v2633 = vunpack.c.h.b16 %v2378
    %v2634 = vunpack.c.l.b16 %v2379
    %v2635 = vunpack.c.h.b16 %v2379
    %v2636 = vunpack.c.l.b16 %v2380
    %v2637 = vunpack.c.h.b16 %v2380
    %v2638 = vunpack.c.l.b16 %v2381
    %v2639 = vunpack.c.h.b16 %v2381
    %v2640 = vunpack.c.l.b16 %v2382
    %v2641 = vunpack.c.h.b16 %v2382
    %v2642 = vunpack.c.l.b16 %v2383
    %v2643 = vunpack.c.h.b16 %v2383
    %v2644 = vunpack.c.l.b16 %v2384
    %v2645 = vunpack.c.h.b16 %v2384
    %v2646 = vunpack.c.l.b16 %v2385
    %v2647 = vunpack.c.h.b16 %v2385
    %v2648 = vunpack.c.l.b16 %v2386
    %v2649 = vunpack.c.h.b16 %v2386
    %v2650 = vunpack.c.l.b16 %v2387
    %v2651 = vunpack.c.h.b16 %v2387
    %v2652 = vunpack.c.l.b16 %v2388
    %v2653 = vunpack.c.h.b16 %v2388
    %v2654 = vunpack.c.l.b16 %v2389
    %v2655 = vunpack.c.h.b16 %v2389
    %v2656 = vunpack.c.l.b16 %v2390
    %v2657 = vunpack.c.h.b16 %v2390
    %v2658 = vunpack.c.l.b16 %v2391
    %v2659 = vunpack.c.h.b16 %v2391
    %v2660 = vunpack.c.l.b16 %v2392
    %v2661 = vunpack.c.h.b16 %v2392
    %v2662 = vunpack.c.l.b16 %v2393
    %v2663 = vunpack.c.h.b16 %v2393
    %v2664 = vunpack.c.l.b16 %v2394
    %v2665 = vunpack.c.h.b16 %v2394
    %v2666 = vunpack.c.l.b16 %v2395
    %v2667 = vunpack.c.h.b16 %v2395
    %v2668 = vunpack.c.l.b16 %v2396
    %v2669 = vunpack.c.h.b16 %v2396
    %v2670 = vunpack.c.l.b16 %v2397
    %v2671 = vunpack.c.h.b16 %v2397
    %v2672 = vunpack.c.l.b16 %v2398
    %v2673 = vunpack.c.h.b16 %v2398
    %v2674 = vunpack.c.l.b16 %v2399
    %v2675 = vunpack.c.h.b16 %v2399
    %v2676 = vunpack.c.l.b16 %v2400
    %v2677 = vunpack.c.h.b16 %v2400
    %v2678 = vunpack.c.l.b16 %v2401
    %v2679 = vunpack.c.h.b16 %v2401
    %v2680 = vunpack.c.l.b16 %v2402
    %v2681 = vunpack.c.h.b16 %v2402
    %v2682 = vunpack.c.l.b16 %v2403
    %v2683 = vunpack.c.h.b16 %v2403
    %v2684 = vunpack.c.l.b16 %v2404
    %v2685 = vunpack.c.h.b16 %v2404
    %v2686 = vunpack.c.l.b16 %v2405
    %v2687 = vunpack.c.h.b16 %v2405
    %v2688 = vunpack.c.l.b16 %v2406
    %v2689 = vunpack.c.h.b16 %v2406
    %v2690 = vunpack.c.l.b16 %v2407
    %v2691 = vunpack.c.h.b16 %v2407
    %v2692 = vunpack.c.l.b16 %v2408
    %v2693 = vunpack.c.h.b16 %v2408
    %v2694 = vunpack.c.l.b16 %v2409
    %v2695 = vunpack.c.h.b16 %v2409
    %v2696 = vunpack.c.l.b16 %v2410
    %v2697 = vunpack.c.h.b16 %v2410
    %v2698 = vunpack.c.l.b16 %v2411
    %v2699 = vunpack.c.h.b16 %v2411
    %v2700 = vunpack.c.l.b16 %v2412
    %v2701 = vunpack.c.h.b16 %v2412
    %v2702 = vunpack.c.l.b16 %v2413
    %v2703 = vunpack.c.h.b16 %v2413
    %v2704 = vunpack.c.l.b16 %v2414
    %v2705 = vunpack.c.h.b16 %v2414
    %v2706 = vunpack.c.l.b16 %v2415
    %v2707 = vunpack.c.h.b16 %v2415
    %v2708 = vunpack.c.l.b16 %v2416
    %v2709 = vunpack.c.h.b16 %v2416
    %v2710 = vunpack.c.l.b16 %v2417
    %v2711 = vunpack.c.h.b16 %v2417
    %v2712 = vunpack.c.l.b16 %v2418
    %v2713 = vunpack.c.h.b16 %v2418
    %v2714 = vunpack.c.l.b16 %v2419
    %v2715 = vunpack.c.h.b16 %v2419
    %v2716 = vunpack.c.l.b16 %v2420
    %v2717 = vunpack.c.h.b16 %v2420
    %v2718 = vunpack.c.l.b16 %v2421
    %v2719 = vunpack.c.h.b16 %v2421
    %v2720 = vunpack.c.l.b16 %v2422
    %v2721 = vunpack.c.h.b16 %v2422
    %v2722 = vunpack.c.l.b16 %v2423
    %v2723 = vunpack.c.h.b16 %v2423
    %v2724 = vunpack.c.l.b16 %v2424
    %v2725 = vunpack.c.h.b16 %v2424
    %v2726 = vunpack.c.l.b16 %v2425
    %v2727 = vunpack.c.h.b16 %v2425
    %v2728 = vunpack.c.l.b16 %v2426
    %v2729 = vunpack.c.h.b16 %v2426
    %v2730 = vunpack.c.l.b16 %v2427
    %v2731 = vunpack.c.h.b16 %v2427
    %v2732 = vunpack.c.l.b16 %v2428
    %v2733 = vunpack.c.h.b16 %v2428
    %v2734 = vunpack.c.l.b16 %v2429
    %v2735 = vunpack.c.h.b16 %v2429
    %v2736 = vunpack.c.l.b16 %v2430
    %v2737 = vunpack.c.h.b16 %v2430
    %v2738 = vunpack.c.l.b16 %v2431
    %v2739 = vunpack.c.h.b16 %v2431
    %v2740 = vunpack.c.l.b16 %v2432
    %v2741 = vunpack.c.h.b16 %v2432
    %v2742 = vunpack.c.l.b16 %v2433
    %v2743 = vunpack.c.h.b16 %v2433
    %v2744 = vunpack.c.l.b16 %v2434
    %v2745 = vunpack.c.h.b16 %v2434
    %v2746 = vunpack.c.l.b16 %v2435
    %v2747 = vunpack.c.h.b16 %v2435
    %v2748 = vunpack.c.l.b16 %v2436
    %v2749 = vunpack.c.h.b16 %v2436
    %v2750 = vunpack.c.l.b16 %v2437
    %v2751 = vunpack.c.h.b16 %v2437
    %v2752 = vunpack.c.l.b16 %v2438
    %v2753 = vunpack.c.h.b16 %v2438
    %v2754 = vunpack.c.l.b16 %v2439
    %v2755 = vunpack.c.h.b16 %v2439
    %v2756 = vunpack.c.l.b16 %v2440
    %v2757 = vunpack.c.h.b16 %v2440
    %v2758 = vunpack.c.l.b16 %v2441
    %v2759 = vunpack.c.h.b16 %v2441
    %v2760 = vunpack.c.l.b16 %v2442
    %v2761 = vunpack.c.h.b16 %v2442
    %v2762 = vunpack.c.l.b16 %v2443
    %v2763 = vunpack.c.h.b16 %v2443
    %v2764 = vpack.c.b16 %v2578, %v2572
    %v2765 = vpack.c.b16 %v2579, %v2573
    %v2766 = vpack.c.b16 %v2580, %v2574
    %v2767 = vpack.c.b16 %v2581, %v2575
    %v2768 = vpack.c.b16 %v2582, %v2576
    %v2769 = vpack.c.b16 %v2583, %v2577
    %v2770 = vpack.c.b16 %v2590, %v2584
    %v2771 = vpack.c.b16 %v2591, %v2585
    %v2772 = vpack.c.b16 %v2592, %v2586
    %v2773 = vpack.c.b16 %v2593, %v2587
    %v2774 = vpack.c.b16 %v2594, %v2588
    %v2775 = vpack.c.b16 %v2595, %v2589
    %v2776 = vpack.c.b16 %v2602, %v2596
    %v2777 = vpack.c.b16 %v2603, %v2597
    %v2778 = vpack.c.b16 %v2604, %v2598
    %v2779 = vpack.c.b16 %v2605, %v2599
    %v2780 = vpack.c.b16 %v2606, %v2600
    %v2781 = vpack.c.b16 %v2607, %v2601
    %v2782 = vpack.c.b16 %v2614, %v2608
    %v2783 = vpack.c.b16 %v2615, %v2609
    %v2784 = vpack.c.b16 %v2616, %v2610
    %v2785 = vpack.c.b16 %v2617, %v2611
    %v2786 = vpack.c.b16 %v2618, %v2612
    %v2787 = vpack.c.b16 %v2619, %v2613
    %v2788 = vpack.c.b16 %v2626, %v2620
    %v2789 = vpack.c.b16 %v2627, %v2621
    %v2790 = vpack.c.b16 %v2628, %v2622
    %v2791 = vpack.c.b16 %v2629, %v2623
    %v2792 = vpack.c.b16 %v2630, %v2624
    %v2793 = vpack.c.b16 %v2631, %v2625
    %v2794 = vpack.c.b16 %v2638, %v2632
    %v2795 = vpack.c.b16 %v2639, %v2633
    %v2796 = vpack.c.b16 %v2640, %v2634
    %v2797 = vpack.c.b16 %v2641, %v2635
    %v2798 = vpack.c.b16 %v2642, %v2636
    %v2799 = vpack.c.b16 %v2643, %v2637
    %v2800 = vpack.c.b16 %v2650, %v2644
    %v2801 = vpack.c.b16 %v2651, %v2645
    %v2802 = vpack.c.b16 %v2652, %v2646
    %v2803 = vpack.c.b16 %v2653, %v2647
    %v2804 = vpack.c.b16 %v2654, %v2648
    %v2805 = vpack.c.b16 %v2655, %v2649
    %v2806 = vpack.c.b16 %v2662, %v2656
    %v2807 = vpack.c.b16 %v2663, %v2657
    %v2808 = vpack.c.b16 %v2664, %v2658
    %v2809 = vpack.c.b16 %v2665, %v2659
    %v2810 = vpack.c.b16 %v2666, %v2660
    %v2811 = vpack.c.b16 %v2667, %v2661
    %v2812 = vpack.c.b16 %v2674, %v2668
    %v2813 = vpack.c.b16 %v2675, %v2669
    %v2814 = vpack.c.b16 %v2676, %v2670
    %v2815 = vpack.c.b16 %v2677, %v2671
    %v2816 = vpack.c.b16 %v2678, %v2672
    %v2817 = vpack.c.b16 %v2679, %v2673
    %v2818 = vpack.c.b16 %v2686, %v2680
    %v2819 = vpack.c.b16 %v2687, %v2681
    %v2820 = vpack.c.b16 %v2688, %v2682
    %v2821 = vpack.c.b16 %v2689, %v2683
    %v2822 = vpack.c.b16 %v2690, %v2684
    %v2823 = vpack.c.b16 %v2691, %v2685
    %v2824 = vpack.c.b16 %v2698, %v2692
    %v2825 = vpack.c.b16 %v2699, %v2693
    %v2826 = vpack.c.b16 %v2700, %v2694
    %v2827 = vpack.c.b16 %v2701, %v2695
    %v2828 = vpack.c.b16 %v2702, %v2696
    %v2829 = vpack.c.b16 %v2703, %v2697
    %v2830 = vpack.c.b16 %v2710, %v2704
    %v2831 = vpack.c.b16 %v2711, %v2705
    %v2832 = vpack.c.b16 %v2712, %v2706
    %v2833 = vpack.c.b16 %v2713, %v2707
    %v2834 = vpack.c.b16 %v2714, %v2708
    %v2835 = vpack.c.b16 %v2715, %v2709
    %v2836 = vpack.c.b16 %v2722, %v2716
    %v2837 = vpack.c.b16 %v2723, %v2717
    %v2838 = vpack.c.b16 %v2724, %v2718
    %v2839 = vpack.c.b16 %v2725, %v2719
    %v2840 = vpack.c.b16 %v2726, %v2720
    %v2841 = vpack.c.b16 %v2727, %v2721
    %v2842 = vpack.c.b16 %v2734, %v2728
    %v2843 = vpack.c.b16 %v2735, %v2729
    %v2844 = vpack.c.b16 %v2736, %v2730
    %v2845 = vpack.c.b16 %v2737, %v2731
    %v2846 = vpack.c.b16 %v2738, %v2732
    %v2847 = vpack.c.b16 %v2739, %v2733
    %v2848 = vpack.c.b16 %v2746, %v2740
    %v2849 = vpack.c.b16 %v2747, %v2741
    %v2850 = vpack.c.b16 %v2748, %v2742
    %v2851 = vpack.c.b16 %v2749, %v2743
    %v2852 = vpack.c.b16 %v2750, %v2744
    %v2853 = vpack.c.b16 %v2751, %v2745
    %v2854 = vpack.c.b16 %v2758, %v2752
    %v2855 = vpack.c.b16 %v2759, %v2753
    %v2856 = vpack.c.b16 %v2760, %v2754
    %v2857 = vpack.c.b16 %v2761, %v2755
    %v2858 = vpack.c.b16 %v2762, %v2756
    %v2859 = vpack.c.b16 %v2763, %v2757
    %2956 = vmatprep.subr.bf16.mxu0 %v2765
    %2957 = vmatpush1.bf16.msra.mxu0 %v2764
    %2958 = vmatprep.subr.bf16.mxu0 %v2771
    %2959 = vmatpush1.bf16.msra.mxu0 %v2770
    %2960 = vmatprep.subr.bf16.mxu0 %v2777
    %2961 = vmatpush1.bf16.msra.mxu0 %v2776
    %2962 = vmatprep.subr.bf16.mxu0 %v2783
    %2963 = vmatpush1.bf16.msra.mxu0 %v2782
    %2964 = vmatprep.subr.bf16.mxu0 %v2789
    %2965 = vmatpush1.bf16.msra.mxu0 %v2788
    %2966 = vmatprep.subr.bf16.mxu0 %v2795
    %2967 = vmatpush1.bf16.msra.mxu0 %v2794
    %2968 = vmatprep.subr.bf16.mxu0 %v2801
    %2969 = vmatpush1.bf16.msra.mxu0 %v2800
    %2970 = vmatprep.subr.bf16.mxu0 %v2807
    %2971 = vmatpush1.bf16.msra.mxu0 %v2806
    %2972 = vmatprep.subr.bf16.mxu0 %v2813
    %2973 = vmatpush1.bf16.msra.mxu0 %v2812
    %2974 = vmatprep.subr.bf16.mxu0 %v2819
    %2975 = vmatpush1.bf16.msra.mxu0 %v2818
    %2976 = vmatprep.subr.bf16.mxu0 %v2825
    %2977 = vmatpush1.bf16.msra.mxu0 %v2824
    %2978 = vmatprep.subr.bf16.mxu0 %v2831
    %2979 = vmatpush1.bf16.msra.mxu0 %v2830
    %2980 = vmatprep.subr.bf16.mxu0 %v2837
    %2981 = vmatpush1.bf16.msra.mxu0 %v2836
    %2982 = vmatprep.subr.bf16.mxu0 %v2843
    %2983 = vmatpush1.bf16.msra.mxu0 %v2842
    %2984 = vmatprep.subr.bf16.mxu0 %v2849
    %2985 = vmatpush1.bf16.msra.mxu0 %v2848
    %2986 = vmatprep.subr.bf16.mxu0 %v2855
    %2987 = vmatpush1.bf16.msra.mxu0 %v2854
    %2988 = vmatprep.mubr.bf16.mxu0 0
    %2989 = vmatmul.mubr.bf16.gmra.mrb[0].mxu0 0
    %v2990 = vpop.f32.mrb[0].mxu0
    %v2991 = vadd.f32 %v2449, %v2990
    %v2992 = vpop.f32.mrb[0].mxu0
    %v2993 = vadd.f32 %v2453, %v2992
    %v2994 = vpop.f32.mrb[0].mxu0
    %v2995 = vpop.f32.mrb[0].mxu0
    %2996 = vdwg.mxu0
    %2997 = vmatprep.subr.bf16.mxu0 %v2767
    %2998 = vmatpush1.bf16.msra.mxu0 %v2766
    %2999 = vmatprep.subr.bf16.mxu0 %v2773
    %3000 = vmatpush1.bf16.msra.mxu0 %v2772
    %3001 = vmatprep.subr.bf16.mxu0 %v2779
    %3002 = vmatpush1.bf16.msra.mxu0 %v2778
    %3003 = vmatprep.subr.bf16.mxu0 %v2785
    %3004 = vmatpush1.bf16.msra.mxu0 %v2784
    %3005 = vmatprep.subr.bf16.mxu0 %v2791
    %3006 = vmatpush1.bf16.msra.mxu0 %v2790
    %3007 = vmatprep.subr.bf16.mxu0 %v2797
    %3008 = vmatpush1.bf16.msra.mxu0 %v2796
    %3009 = vmatprep.subr.bf16.mxu0 %v2803
    %3010 = vmatpush1.bf16.msra.mxu0 %v2802
    %3011 = vmatprep.subr.bf16.mxu0 %v2809
    %3012 = vmatpush1.bf16.msra.mxu0 %v2808
    %3013 = vmatprep.subr.bf16.mxu0 %v2815
    %3014 = vmatpush1.bf16.msra.mxu0 %v2814
    %3015 = vmatprep.subr.bf16.mxu0 %v2821
    %3016 = vmatpush1.bf16.msra.mxu0 %v2820
    %3017 = vmatprep.subr.bf16.mxu0 %v2827
    %3018 = vmatpush1.bf16.msra.mxu0 %v2826
    %3019 = vmatprep.subr.bf16.mxu0 %v2833
    %3020 = vmatpush1.bf16.msra.mxu0 %v2832
    %3021 = vmatprep.subr.bf16.mxu0 %v2839
    %3022 = vmatpush1.bf16.msra.mxu0 %v2838
    %3023 = vmatprep.subr.bf16.mxu0 %v2845
    %3024 = vmatpush1.bf16.msra.mxu0 %v2844
    %3025 = vmatprep.subr.bf16.mxu0 %v2851
    %3026 = vmatpush1.bf16.msra.mxu0 %v2850
    %3027 = vmatprep.subr.bf16.mxu0 %v2857
    %3028 = vmatpush1.bf16.msra.mxu0 %v2856
    %3029 = vmatprep.mubr.bf16.mxu0 0
    %3030 = vmatmul.mubr.bf16.gmra.mrb[0].mxu0 0
    %v3031 = vpop.f32.mrb[0].mxu0
    %v3032 = vadd.f32 %v2457, %v3031
    %v3033 = vpop.f32.mrb[0].mxu0
    %v3034 = vadd.f32 %v2461, %v3033
    %v3035 = vpop.f32.mrb[0].mxu0
    %v3036 = vpop.f32.mrb[0].mxu0
    %3037 = vdwg.mxu0
    %3038 = vmatprep.subr.bf16.mxu0 %v2769
    %3039 = vmatpush1.bf16.msra.mxu0 %v2768
    %3040 = vmatprep.subr.bf16.mxu0 %v2775
    %3041 = vmatpush1.bf16.msra.mxu0 %v2774
    %3042 = vmatprep.subr.bf16.mxu0 %v2781
    %3043 = vmatpush1.bf16.msra.mxu0 %v2780
    %3044 = vmatprep.subr.bf16.mxu0 %v2787
    %3045 = vmatpush1.bf16.msra.mxu0 %v2786
    %3046 = vmatprep.subr.bf16.mxu0 %v2793
    %3047 = vmatpush1.bf16.msra.mxu0 %v2792
    %3048 = vmatprep.subr.bf16.mxu0 %v2799
    %3049 = vmatpush1.bf16.msra.mxu0 %v2798
    %3050 = vmatprep.subr.bf16.mxu0 %v2805
    %3051 = vmatpush1.bf16.msra.mxu0 %v2804
    %3052 = vmatprep.subr.bf16.mxu0 %v2811
    %3053 = vmatpush1.bf16.msra.mxu0 %v2810
    %3054 = vmatprep.subr.bf16.mxu0 %v2817
    %3055 = vmatpush1.bf16.msra.mxu0 %v2816
    %3056 = vmatprep.subr.bf16.mxu0 %v2823
    %3057 = vmatpush1.bf16.msra.mxu0 %v2822
    %3058 = vmatprep.subr.bf16.mxu0 %v2829
    %3059 = vmatpush1.bf16.msra.mxu0 %v2828
    %3060 = vmatprep.subr.bf16.mxu0 %v2835
    %3061 = vmatpush1.bf16.msra.mxu0 %v2834
    %3062 = vmatprep.subr.bf16.mxu0 %v2841
    %3063 = vmatpush1.bf16.msra.mxu0 %v2840
    %3064 = vmatprep.subr.bf16.mxu0 %v2847
    %3065 = vmatpush1.bf16.msra.mxu0 %v2846
    %3066 = vmatprep.subr.bf16.mxu0 %v2853
    %3067 = vmatpush1.bf16.msra.mxu0 %v2852
    %3068 = vmatprep.subr.bf16.mxu0 %v2859
    %3069 = vmatpush1.bf16.msra.mxu0 %v2858
    %3070 = vmatprep.mubr.bf16.mxu0 0
    %3071 = vmatmul.mubr.bf16.gmra.mrb[0].mxu0 0
    %v3072 = vpop.f32.mrb[0].mxu0
    %v3073 = vadd.f32 %v2465, %v3072
    %v3074 = vpop.f32.mrb[0].mxu0
    %v3075 = vadd.f32 %v2469, %v3074
    %v3076 = vpop.f32.mrb[0].mxu0
    %v3077 = vpop.f32.mrb[0].mxu0
    %3078 = vdwg.mxu0
    %v3079 = vadd.f32 %v2014, %v2991
    %v3080 = vadd.f32 %v2016, %v2993
    %v3081 = vxor.u32 %v3079, 2147483648
    %v3082 = vxor.u32 %v3080, 2147483648
    %v3083 = vmul.f32 %v3081, 1.442695
    %v3084 = vpow.pop %v3083
    %v3085 = vmul.f32 %v3082, 1.442695
    %v3086 = vpow.pop %v3085
    %v3087 = vadd.f32 %v3084, 1.0
    %v3088 = vadd.f32 %v3086, 1.0
    %v3089 = vrcp.pop %v3087
    %v3090 = vmul.f32 1.0, %v3089
    %v3091 = vrcp.pop %v3088
    %v3092 = vmul.f32 1.0, %v3091
    %v3093 = vadd.f32 %v2178, %v3032
    %v3094 = vadd.f32 %v2180, %v3034
    %v3095 = vxor.u32 %v3093, 2147483648
    %v3096 = vxor.u32 %v3094, 2147483648
    %v3097 = vmul.f32 %v3095, 1.442695
    %v3098 = vpow.pop %v3097
    %v3099 = vmul.f32 %v3096, 1.442695
    %v3100 = vpow.pop %v3099
    %v3101 = vadd.f32 %v3098, 1.0
    %v3102 = vadd.f32 %v3100, 1.0
    %v3103 = vrcp.pop %v3101
    %v3104 = vmul.f32 1.0, %v3103
    %v3105 = vrcp.pop %v3102
    %v3106 = vmul.f32 1.0, %v3105
    %v3107 = vmul.f32 %v3090, %v3073
    %v3108 = vmul.f32 %v3092, %v3075
    %v3109 = vadd.f32 %v2342, %v3107
    %v3110 = vadd.f32 %v2344, %v3108
    %v3111 = vtanh.pop %v3109
    %v3112 = vtanh.pop %v3110
    %v3113 = vsub.f32 1.0, %v3104
    %v3114 = vsub.f32 1.0, %v3106
    %v3115 = vmul.f32 %v3113, %v3111
    %v3116 = vmul.f32 %v3114, %v3112
    %v3117 = vmul.f32 %v3104, 0.0
    %v3118 = vmul.f32 %v3106, 0.0
    %v3119 = vadd.f32 %v3115, %v3117
    %v3120 = vadd.f32 %v3116, %v3118
    %v3121 = vpack.c.bf16 %v3119, %v3119
    %v3122 = vpack.c.bf16 %v3120, %v3120
    %3123 = vmatprep.subr.bf16.mxu0 %v2765
    %3124 = vmatpush1.bf16.msra.mxu0 %v2764
    %3125 = vmatprep.subr.bf16.mxu0 %v2771
    %3126 = vmatpush1.bf16.msra.mxu0 %v2770
    %3127 = vmatprep.subr.bf16.mxu0 %v2777
    %3128 = vmatpush1.bf16.msra.mxu0 %v2776
    %3129 = vmatprep.subr.bf16.mxu0 %v2783
    %3130 = vmatpush1.bf16.msra.mxu0 %v2782
    %3131 = vmatprep.subr.bf16.mxu0 %v2789
    %3132 = vmatpush1.bf16.msra.mxu0 %v2788
    %3133 = vmatprep.subr.bf16.mxu0 %v2795
    %3134 = vmatpush1.bf16.msra.mxu0 %v2794
    %3135 = vmatprep.subr.bf16.mxu0 %v2801
    %3136 = vmatpush1.bf16.msra.mxu0 %v2800
    %3137 = vmatprep.subr.bf16.mxu0 %v2807
    %3138 = vmatpush1.bf16.msra.mxu0 %v2806
    %3139 = vmatprep.subr.bf16.mxu0 %v2813
    %3140 = vmatpush1.bf16.msra.mxu0 %v2812
    %3141 = vmatprep.subr.bf16.mxu0 %v2819
    %3142 = vmatpush1.bf16.msra.mxu0 %v2818
    %3143 = vmatprep.subr.bf16.mxu0 %v2825
    %3144 = vmatpush1.bf16.msra.mxu0 %v2824
    %3145 = vmatprep.subr.bf16.mxu0 %v2831
    %3146 = vmatpush1.bf16.msra.mxu0 %v2830
    %3147 = vmatprep.subr.bf16.mxu0 %v2837
    %3148 = vmatpush1.bf16.msra.mxu0 %v2836
    %3149 = vmatprep.subr.bf16.mxu0 %v2843
    %3150 = vmatpush1.bf16.msra.mxu0 %v2842
    %3151 = vmatprep.subr.bf16.mxu0 %v2849
    %3152 = vmatpush1.bf16.msra.mxu0 %v2848
    %3153 = vmatprep.subr.bf16.mxu0 %v2855
    %3154 = vmatpush1.bf16.msra.mxu0 %v2854
    %3155 = vmatprep.mubr.bf16.mxu0 %v3122
    %3156 = vmatmul.mubr.bf16.gmra.mrb[0].mxu0 %v3121
    %v3157 = vpop.f32.mrb[0].mxu0
    %v3158 = vadd.f32 %v2449, %v3157
    %v3159 = vpop.f32.mrb[0].mxu0
    %v3160 = vadd.f32 %v2453, %v3159
    %v3161 = vpop.f32.mrb[0].mxu0
    %v3162 = vpop.f32.mrb[0].mxu0
    %3163 = vdwg.mxu0
    %3164 = vmatprep.subr.bf16.mxu0 %v2767
    %3165 = vmatpush1.bf16.msra.mxu0 %v2766
    %3166 = vmatprep.subr.bf16.mxu0 %v2773
    %3167 = vmatpush1.bf16.msra.mxu0 %v2772
    %3168 = vmatprep.subr.bf16.mxu0 %v2779
    %3169 = vmatpush1.bf16.msra.mxu0 %v2778
    %3170 = vmatprep.subr.bf16.mxu0 %v2785
    %3171 = vmatpush1.bf16.msra.mxu0 %v2784
    %3172 = vmatprep.subr.bf16.mxu0 %v2791
    %3173 = vmatpush1.bf16.msra.mxu0 %v2790
    %3174 = vmatprep.subr.bf16.mxu0 %v2797
    %3175 = vmatpush1.bf16.msra.mxu0 %v2796
    %3176 = vmatprep.subr.bf16.mxu0 %v2803
    %3177 = vmatpush1.bf16.msra.mxu0 %v2802
    %3178 = vmatprep.subr.bf16.mxu0 %v2809
    %3179 = vmatpush1.bf16.msra.mxu0 %v2808
    %3180 = vmatprep.subr.bf16.mxu0 %v2815
    %3181 = vmatpush1.bf16.msra.mxu0 %v2814
    %3182 = vmatprep.subr.bf16.mxu0 %v2821
    %3183 = vmatpush1.bf16.msra.mxu0 %v2820
    %3184 = vmatprep.subr.bf16.mxu0 %v2827
    %3185 = vmatpush1.bf16.msra.mxu0 %v2826
    %3186 = vmatprep.subr.bf16.mxu0 %v2833
    %3187 = vmatpush1.bf16.msra.mxu0 %v2832
    %3188 = vmatprep.subr.bf16.mxu0 %v2839
    %3189 = vmatpush1.bf16.msra.mxu0 %v2838
    %3190 = vmatprep.subr.bf16.mxu0 %v2845
    %3191 = vmatpush1.bf16.msra.mxu0 %v2844
    %3192 = vmatprep.subr.bf16.mxu0 %v2851
    %3193 = vmatpush1.bf16.msra.mxu0 %v2850
    %3194 = vmatprep.subr.bf16.mxu0 %v2857
    %3195 = vmatpush1.bf16.msra.mxu0 %v2856
    %3196 = vmatprep.mubr.bf16.mxu0 %v3122
    %3197 = vmatmul.mubr.bf16.gmra.mrb[0].mxu0 %v3121
    %v3198 = vpop.f32.mrb[0].mxu0
    %v3199 = vadd.f32 %v2457, %v3198
    %v3200 = vpop.f32.mrb[0].mxu0
    %v3201 = vadd.f32 %v2461, %v3200
    %v3202 = vpop.f32.mrb[0].mxu0
    %v3203 = vpop.f32.mrb[0].mxu0
    %3204 = vdwg.mxu0
    %3205 = vmatprep.subr.bf16.mxu0 %v2769
    %3206 = vmatpush1.bf16.msra.mxu0 %v2768
    %3207 = vmatprep.subr.bf16.mxu0 %v2775
    %3208 = vmatpush1.bf16.msra.mxu0 %v2774
    %3209 = vmatprep.subr.bf16.mxu0 %v2781
    %3210 = vmatpush1.bf16.msra.mxu0 %v2780
    %3211 = vmatprep.subr.bf16.mxu0 %v2787
    %3212 = vmatpush1.bf16.msra.mxu0 %v2786
    %3213 = vmatprep.subr.bf16.mxu0 %v2793
    %3214 = vmatpush1.bf16.msra.mxu0 %v2792
    %3215 = vmatprep.subr.bf16.mxu0 %v2799
    %3216 = vmatpush1.bf16.msra.mxu0 %v2798
    %3217 = vmatprep.subr.bf16.mxu0 %v2805
    %3218 = vmatpush1.bf16.msra.mxu0 %v2804
    %3219 = vmatprep.subr.bf16.mxu0 %v2811
    %3220 = vmatpush1.bf16.msra.mxu0 %v2810
    %3221 = vmatprep.subr.bf16.mxu0 %v2817
    %3222 = vmatpush1.bf16.msra.mxu0 %v2816
    %3223 = vmatprep.subr.bf16.mxu0 %v2823
    %3224 = vmatpush1.bf16.msra.mxu0 %v2822
    %3225 = vmatprep.subr.bf16.mxu0 %v2829
    %3226 = vmatpush1.bf16.msra.mxu0 %v2828
    %3227 = vmatprep.subr.bf16.mxu0 %v2835
    %3228 = vmatpush1.bf16.msra.mxu0 %v2834
    %3229 = vmatprep.subr.bf16.mxu0 %v2841
    %3230 = vmatpush1.bf16.msra.mxu0 %v2840
    %3231 = vmatprep.subr.bf16.mxu0 %v2847
    %3232 = vmatpush1.bf16.msra.mxu0 %v2846
    %3233 = vmatprep.subr.bf16.mxu0 %v2853
    %3234 = vmatpush1.bf16.msra.mxu0 %v2852
    %3235 = vmatprep.subr.bf16.mxu0 %v2859
    %3236 = vmatpush1.bf16.msra.mxu0 %v2858
    %3237 = vmatprep.mubr.bf16.mxu0 %v3122
    %3238 = vmatmul.mubr.bf16.gmra.mrb[0].mxu0 %v3121
    %v3239 = vpop.f32.mrb[0].mxu0
    %v3240 = vadd.f32 %v2465, %v3239
    %v3241 = vpop.f32.mrb[0].mxu0
    %v3242 = vadd.f32 %v2469, %v3241
    %v3243 = vpop.f32.mrb[0].mxu0
    %v3244 = vpop.f32.mrb[0].mxu0
    %3245 = vdwg.mxu0
    %v3248 = vrot.slane %v3158, 6
    %v3249 = vrot.slane %v3160, 6
    %v3252 = vadd.f32 %v2014, %v3248
    %v3253 = vadd.f32 %v2016, %v3249
    %v3254 = vxor.u32 %v3252, 2147483648
    %v3255 = vxor.u32 %v3253, 2147483648
    %v3256 = vmul.f32 %v3254, 1.442695
    %v3257 = vpow.pop %v3256
    %v3258 = vmul.f32 %v3255, 1.442695
    %v3259 = vpow.pop %v3258
    %v3260 = vadd.f32 %v3257, 1.0
    %v3261 = vadd.f32 %v3259, 1.0
    %v3262 = vrcp.pop %v3260
    %v3263 = vmul.f32 1.0, %v3262
    %v3264 = vrcp.pop %v3261
    %v3265 = vmul.f32 1.0, %v3264
    %v3268 = vrot.slane %v3199, 6
    %v3269 = vrot.slane %v3201, 6
    %v3272 = vadd.f32 %v2178, %v3268
    %v3273 = vadd.f32 %v2180, %v3269
    %v3274 = vxor.u32 %v3272, 2147483648
    %v3275 = vxor.u32 %v3273, 2147483648
    %v3276 = vmul.f32 %v3274, 1.442695
    %v3277 = vpow.pop %v3276
    %v3278 = vmul.f32 %v3275, 1.442695
    %v3279 = vpow.pop %v3278
    %v3280 = vadd.f32 %v3277, 1.0
    %v3281 = vadd.f32 %v3279, 1.0
    %v3282 = vrcp.pop %v3280
    %v3283 = vmul.f32 1.0, %v3282
    %v3284 = vrcp.pop %v3281
    %v3285 = vmul.f32 1.0, %v3284
    %v3288 = vrot.slane %v3240, 6
    %v3289 = vrot.slane %v3242, 6
    %v3292 = vmul.f32 %v3263, %v3288
    %v3293 = vmul.f32 %v3265, %v3289
    %v3294 = vadd.f32 %v2342, %v3292
    %v3295 = vadd.f32 %v2344, %v3293
    %v3296 = vtanh.pop %v3294
    %v3297 = vtanh.pop %v3295
    %v3298 = vsub.f32 1.0, %v3283
    %v3299 = vsub.f32 1.0, %v3285
    %v3300 = vmul.f32 %v3298, %v3296
    %v3301 = vmul.f32 %v3299, %v3297
    %v3304 = vrot.slane %v3119, 6
    %v3305 = vrot.slane %v3120, 6
    %v3308 = vmul.f32 %v3283, %v3304
    %v3309 = vmul.f32 %v3285, %v3305
    %v3310 = vadd.f32 %v3300, %v3308
    %v3311 = vadd.f32 %v3301, %v3309
    %v3312 = vpack.c.bf16 %v3310, %v3310
    %v3313 = vpack.c.bf16 %v3311, %v3311
    %v3316 = vrot.slane %v3312, 1
    %v3317 = vrot.slane %v3313, 1
    %3320 = vmatprep.subr.bf16.mxu0 %v2765
    %3321 = vmatpush1.bf16.msra.mxu0 %v2764
    %3322 = vmatprep.subr.bf16.mxu0 %v2771
    %3323 = vmatpush1.bf16.msra.mxu0 %v2770
    %3324 = vmatprep.subr.bf16.mxu0 %v2777
    %3325 = vmatpush1.bf16.msra.mxu0 %v2776
    %3326 = vmatprep.subr.bf16.mxu0 %v2783
    %3327 = vmatpush1.bf16.msra.mxu0 %v2782
    %3328 = vmatprep.subr.bf16.mxu0 %v2789
    %3329 = vmatpush1.bf16.msra.mxu0 %v2788
    %3330 = vmatprep.subr.bf16.mxu0 %v2795
    %3331 = vmatpush1.bf16.msra.mxu0 %v2794
    %3332 = vmatprep.subr.bf16.mxu0 %v2801
    %3333 = vmatpush1.bf16.msra.mxu0 %v2800
    %3334 = vmatprep.subr.bf16.mxu0 %v2807
    %3335 = vmatpush1.bf16.msra.mxu0 %v2806
    %3336 = vmatprep.subr.bf16.mxu0 %v2813
    %3337 = vmatpush1.bf16.msra.mxu0 %v2812
    %3338 = vmatprep.subr.bf16.mxu0 %v2819
    %3339 = vmatpush1.bf16.msra.mxu0 %v2818
    %3340 = vmatprep.subr.bf16.mxu0 %v2825
    %3341 = vmatpush1.bf16.msra.mxu0 %v2824
    %3342 = vmatprep.subr.bf16.mxu0 %v2831
    %3343 = vmatpush1.bf16.msra.mxu0 %v2830
    %3344 = vmatprep.subr.bf16.mxu0 %v2837
    %3345 = vmatpush1.bf16.msra.mxu0 %v2836
    %3346 = vmatprep.subr.bf16.mxu0 %v2843
    %3347 = vmatpush1.bf16.msra.mxu0 %v2842
    %3348 = vmatprep.subr.bf16.mxu0 %v2849
    %3349 = vmatpush1.bf16.msra.mxu0 %v2848
    %3350 = vmatprep.subr.bf16.mxu0 %v2855
    %3351 = vmatpush1.bf16.msra.mxu0 %v2854
    %3352 = vmatprep.mubr.bf16.mxu0 %v3317
    %3353 = vmatmul.mubr.bf16.gmra.mrb[0].mxu0 %v3316
    %v3354 = vpop.f32.mrb[0].mxu0
    %v3355 = vadd.f32 %v2449, %v3354
    %v3356 = vpop.f32.mrb[0].mxu0
    %v3357 = vadd.f32 %v2453, %v3356
    %v3358 = vpop.f32.mrb[0].mxu0
    %v3359 = vpop.f32.mrb[0].mxu0
    %3360 = vdwg.mxu0
    %3361 = vmatprep.subr.bf16.mxu0 %v2767
    %3362 = vmatpush1.bf16.msra.mxu0 %v2766
    %3363 = vmatprep.subr.bf16.mxu0 %v2773
    %3364 = vmatpush1.bf16.msra.mxu0 %v2772
    %3365 = vmatprep.subr.bf16.mxu0 %v2779
    %3366 = vmatpush1.bf16.msra.mxu0 %v2778
    %3367 = vmatprep.subr.bf16.mxu0 %v2785
    %3368 = vmatpush1.bf16.msra.mxu0 %v2784
    %3369 = vmatprep.subr.bf16.mxu0 %v2791
    %3370 = vmatpush1.bf16.msra.mxu0 %v2790
    %3371 = vmatprep.subr.bf16.mxu0 %v2797
    %3372 = vmatpush1.bf16.msra.mxu0 %v2796
    %3373 = vmatprep.subr.bf16.mxu0 %v2803
    %3374 = vmatpush1.bf16.msra.mxu0 %v2802
    %3375 = vmatprep.subr.bf16.mxu0 %v2809
    %3376 = vmatpush1.bf16.msra.mxu0 %v2808
    %3377 = vmatprep.subr.bf16.mxu0 %v2815
    %3378 = vmatpush1.bf16.msra.mxu0 %v2814
    %3379 = vmatprep.subr.bf16.mxu0 %v2821
    %3380 = vmatpush1.bf16.msra.mxu0 %v2820
    %3381 = vmatprep.subr.bf16.mxu0 %v2827
    %3382 = vmatpush1.bf16.msra.mxu0 %v2826
    %3383 = vmatprep.subr.bf16.mxu0 %v2833
    %3384 = vmatpush1.bf16.msra.mxu0 %v2832
    %3385 = vmatprep.subr.bf16.mxu0 %v2839
    %3386 = vmatpush1.bf16.msra.mxu0 %v2838
    %3387 = vmatprep.subr.bf16.mxu0 %v2845
    %3388 = vmatpush1.bf16.msra.mxu0 %v2844
    %3389 = vmatprep.subr.bf16.mxu0 %v2851
    %3390 = vmatpush1.bf16.msra.mxu0 %v2850
    %3391 = vmatprep.subr.bf16.mxu0 %v2857
    %3392 = vmatpush1.bf16.msra.mxu0 %v2856
    %3393 = vmatprep.mubr.bf16.mxu0 %v3317
    %3394 = vmatmul.mubr.bf16.gmra.mrb[0].mxu0 %v3316
    %v3395 = vpop.f32.mrb[0].mxu0
    %v3396 = vadd.f32 %v2457, %v3395
    %v3397 = vpop.f32.mrb[0].mxu0
    %v3398 = vadd.f32 %v2461, %v3397
    %v3399 = vpop.f32.mrb[0].mxu0
    %v3400 = vpop.f32.mrb[0].mxu0
    %3401 = vdwg.mxu0
    %3402 = vmatprep.subr.bf16.mxu0 %v2769
    %3403 = vmatpush1.bf16.msra.mxu0 %v2768
    %3404 = vmatprep.subr.bf16.mxu0 %v2775
    %3405 = vmatpush1.bf16.msra.mxu0 %v2774
    %3406 = vmatprep.subr.bf16.mxu0 %v2781
    %3407 = vmatpush1.bf16.msra.mxu0 %v2780
    %3408 = vmatprep.subr.bf16.mxu0 %v2787
    %3409 = vmatpush1.bf16.msra.mxu0 %v2786
    %3410 = vmatprep.subr.bf16.mxu0 %v2793
    %3411 = vmatpush1.bf16.msra.mxu0 %v2792
    %3412 = vmatprep.subr.bf16.mxu0 %v2799
    %3413 = vmatpush1.bf16.msra.mxu0 %v2798
    %3414 = vmatprep.subr.bf16.mxu0 %v2805
    %3415 = vmatpush1.bf16.msra.mxu0 %v2804
    %3416 = vmatprep.subr.bf16.mxu0 %v2811
    %3417 = vmatpush1.bf16.msra.mxu0 %v2810
    %3418 = vmatprep.subr.bf16.mxu0 %v2817
    %3419 = vmatpush1.bf16.msra.mxu0 %v2816
    %3420 = vmatprep.subr.bf16.mxu0 %v2823
    %3421 = vmatpush1.bf16.msra.mxu0 %v2822
    %3422 = vmatprep.subr.bf16.mxu0 %v2829
    %3423 = vmatpush1.bf16.msra.mxu0 %v2828
    %3424 = vmatprep.subr.bf16.mxu0 %v2835
    %3425 = vmatpush1.bf16.msra.mxu0 %v2834
    %3426 = vmatprep.subr.bf16.mxu0 %v2841
    %3427 = vmatpush1.bf16.msra.mxu0 %v2840
    %3428 = vmatprep.subr.bf16.mxu0 %v2847
    %3429 = vmatpush1.bf16.msra.mxu0 %v2846
    %3430 = vmatprep.subr.bf16.mxu0 %v2853
    %3431 = vmatpush1.bf16.msra.mxu0 %v2852
    %3432 = vmatprep.subr.bf16.mxu0 %v2859
    %3433 = vmatpush1.bf16.msra.mxu0 %v2858
    %3434 = vmatprep.mubr.bf16.mxu0 %v3317
    %3435 = vmatmul.mubr.bf16.gmra.mrb[0].mxu0 %v3316
    %v3436 = vpop.f32.mrb[0].mxu0
    %v3437 = vadd.f32 %v2465, %v3436
    %v3438 = vpop.f32.mrb[0].mxu0
    %v3439 = vadd.f32 %v2469, %v3438
    %v3440 = vpop.f32.mrb[0].mxu0
    %v3441 = vpop.f32.mrb[0].mxu0
    %3442 = vdwg.mxu0
    %v3445 = vrot.slane %v3355, 4
    %v3446 = vrot.slane %v3357, 4
    %v3449 = vadd.f32 %v2014, %v3445
    %v3450 = vadd.f32 %v2016, %v3446
    %v3451 = vxor.u32 %v3449, 2147483648
    %v3452 = vxor.u32 %v3450, 2147483648
    %v3453 = vmul.f32 %v3451, 1.442695
    %v3454 = vpow.pop %v3453
    %v3455 = vmul.f32 %v3452, 1.442695
    %v3456 = vpow.pop %v3455
    %v3457 = vadd.f32 %v3454, 1.0
    %v3458 = vadd.f32 %v3456, 1.0
    %v3459 = vrcp.pop %v3457
    %v3460 = vmul.f32 1.0, %v3459
    %v3461 = vrcp.pop %v3458
    %v3462 = vmul.f32 1.0, %v3461
    %v3465 = vrot.slane %v3396, 4
    %v3466 = vrot.slane %v3398, 4
    %v3469 = vadd.f32 %v2178, %v3465
    %v3470 = vadd.f32 %v2180, %v3466
    %v3471 = vxor.u32 %v3469, 2147483648
    %v3472 = vxor.u32 %v3470, 2147483648
    %v3473 = vmul.f32 %v3471, 1.442695
    %v3474 = vpow.pop %v3473
    %v3475 = vmul.f32 %v3472, 1.442695
    %v3476 = vpow.pop %v3475
    %v3477 = vadd.f32 %v3474, 1.0
    %v3478 = vadd.f32 %v3476, 1.0
    %v3479 = vrcp.pop %v3477
    %v3480 = vmul.f32 1.0, %v3479
    %v3481 = vrcp.pop %v3478
    %v3482 = vmul.f32 1.0, %v3481
    %v3485 = vrot.slane %v3437, 4
    %v3486 = vrot.slane %v3439, 4
    %v3489 = vmul.f32 %v3460, %v3485
    %v3490 = vmul.f32 %v3462, %v3486
    %v3491 = vadd.f32 %v2342, %v3489
    %v3492 = vadd.f32 %v2344, %v3490
    %v3493 = vtanh.pop %v3491
    %v3494 = vtanh.pop %v3492
    %v3495 = vsub.f32 1.0, %v3480
    %v3496 = vsub.f32 1.0, %v3482
    %v3497 = vmul.f32 %v3495, %v3493
    %v3498 = vmul.f32 %v3496, %v3494
    %v3501 = vrot.slane %v3310, 6
    %v3502 = vrot.slane %v3311, 6
    %v3505 = vmul.f32 %v3480, %v3501
    %v3506 = vmul.f32 %v3482, %v3502
    %v3507 = vadd.f32 %v3497, %v3505
    %v3508 = vadd.f32 %v3498, %v3506
    %v3509 = vpack.c.bf16 %v3507, %v3507
    %v3510 = vpack.c.bf16 %v3508, %v3508
    %v3513 = vrot.slane %v3509, 2
    %v3514 = vrot.slane %v3510, 2
    %3517 = vmatprep.subr.bf16.mxu0 %v2765
    %3518 = vmatpush1.bf16.msra.mxu0 %v2764
    %3519 = vmatprep.subr.bf16.mxu0 %v2771
    %3520 = vmatpush1.bf16.msra.mxu0 %v2770
    %3521 = vmatprep.subr.bf16.mxu0 %v2777
    %3522 = vmatpush1.bf16.msra.mxu0 %v2776
    %3523 = vmatprep.subr.bf16.mxu0 %v2783
    %3524 = vmatpush1.bf16.msra.mxu0 %v2782
    %3525 = vmatprep.subr.bf16.mxu0 %v2789
    %3526 = vmatpush1.bf16.msra.mxu0 %v2788
    %3527 = vmatprep.subr.bf16.mxu0 %v2795
    %3528 = vmatpush1.bf16.msra.mxu0 %v2794
    %3529 = vmatprep.subr.bf16.mxu0 %v2801
    %3530 = vmatpush1.bf16.msra.mxu0 %v2800
    %3531 = vmatprep.subr.bf16.mxu0 %v2807
    %3532 = vmatpush1.bf16.msra.mxu0 %v2806
    %3533 = vmatprep.subr.bf16.mxu0 %v2813
    %3534 = vmatpush1.bf16.msra.mxu0 %v2812
    %3535 = vmatprep.subr.bf16.mxu0 %v2819
    %3536 = vmatpush1.bf16.msra.mxu0 %v2818
    %3537 = vmatprep.subr.bf16.mxu0 %v2825
    %3538 = vmatpush1.bf16.msra.mxu0 %v2824
    %3539 = vmatprep.subr.bf16.mxu0 %v2831
    %3540 = vmatpush1.bf16.msra.mxu0 %v2830
    %3541 = vmatprep.subr.bf16.mxu0 %v2837
    %3542 = vmatpush1.bf16.msra.mxu0 %v2836
    %3543 = vmatprep.subr.bf16.mxu0 %v2843
    %3544 = vmatpush1.bf16.msra.mxu0 %v2842
    %3545 = vmatprep.subr.bf16.mxu0 %v2849
    %3546 = vmatpush1.bf16.msra.mxu0 %v2848
    %3547 = vmatprep.subr.bf16.mxu0 %v2855
    %3548 = vmatpush1.bf16.msra.mxu0 %v2854
    %3549 = vmatprep.mubr.bf16.mxu0 %v3514
    %3550 = vmatmul.mubr.bf16.gmra.mrb[0].mxu0 %v3513
    %v3551 = vpop.f32.mrb[0].mxu0
    %v3552 = vadd.f32 %v2449, %v3551
    %v3553 = vpop.f32.mrb[0].mxu0
    %v3554 = vadd.f32 %v2453, %v3553
    %v3555 = vpop.f32.mrb[0].mxu0
    %v3556 = vpop.f32.mrb[0].mxu0
    %3557 = vdwg.mxu0
    %3558 = vmatprep.subr.bf16.mxu0 %v2767
    %3559 = vmatpush1.bf16.msra.mxu0 %v2766
    %3560 = vmatprep.subr.bf16.mxu0 %v2773
    %3561 = vmatpush1.bf16.msra.mxu0 %v2772
    %3562 = vmatprep.subr.bf16.mxu0 %v2779
    %3563 = vmatpush1.bf16.msra.mxu0 %v2778
    %3564 = vmatprep.subr.bf16.mxu0 %v2785
    %3565 = vmatpush1.bf16.msra.mxu0 %v2784
    %3566 = vmatprep.subr.bf16.mxu0 %v2791
    %3567 = vmatpush1.bf16.msra.mxu0 %v2790
    %3568 = vmatprep.subr.bf16.mxu0 %v2797
    %3569 = vmatpush1.bf16.msra.mxu0 %v2796
    %3570 = vmatprep.subr.bf16.mxu0 %v2803
    %3571 = vmatpush1.bf16.msra.mxu0 %v2802
    %3572 = vmatprep.subr.bf16.mxu0 %v2809
    %3573 = vmatpush1.bf16.msra.mxu0 %v2808
    %3574 = vmatprep.subr.bf16.mxu0 %v2815
    %3575 = vmatpush1.bf16.msra.mxu0 %v2814
    %3576 = vmatprep.subr.bf16.mxu0 %v2821
    %3577 = vmatpush1.bf16.msra.mxu0 %v2820
    %3578 = vmatprep.subr.bf16.mxu0 %v2827
    %3579 = vmatpush1.bf16.msra.mxu0 %v2826
    %3580 = vmatprep.subr.bf16.mxu0 %v2833
    %3581 = vmatpush1.bf16.msra.mxu0 %v2832
    %3582 = vmatprep.subr.bf16.mxu0 %v2839
    %3583 = vmatpush1.bf16.msra.mxu0 %v2838
    %3584 = vmatprep.subr.bf16.mxu0 %v2845
    %3585 = vmatpush1.bf16.msra.mxu0 %v2844
    %3586 = vmatprep.subr.bf16.mxu0 %v2851
    %3587 = vmatpush1.bf16.msra.mxu0 %v2850
    %3588 = vmatprep.subr.bf16.mxu0 %v2857
    %3589 = vmatpush1.bf16.msra.mxu0 %v2856
    %3590 = vmatprep.mubr.bf16.mxu0 %v3514
    %3591 = vmatmul.mubr.bf16.gmra.mrb[0].mxu0 %v3513
    %v3592 = vpop.f32.mrb[0].mxu0
    %v3593 = vadd.f32 %v2457, %v3592
    %v3594 = vpop.f32.mrb[0].mxu0
    %v3595 = vadd.f32 %v2461, %v3594
    %v3596 = vpop.f32.mrb[0].mxu0
    %v3597 = vpop.f32.mrb[0].mxu0
    %3598 = vdwg.mxu0
    %3599 = vmatprep.subr.bf16.mxu0 %v2769
    %3600 = vmatpush1.bf16.msra.mxu0 %v2768
    %3601 = vmatprep.subr.bf16.mxu0 %v2775
    %3602 = vmatpush1.bf16.msra.mxu0 %v2774
    %3603 = vmatprep.subr.bf16.mxu0 %v2781
    %3604 = vmatpush1.bf16.msra.mxu0 %v2780
    %3605 = vmatprep.subr.bf16.mxu0 %v2787
    %3606 = vmatpush1.bf16.msra.mxu0 %v2786
    %3607 = vmatprep.subr.bf16.mxu0 %v2793
    %3608 = vmatpush1.bf16.msra.mxu0 %v2792
    %3609 = vmatprep.subr.bf16.mxu0 %v2799
    %3610 = vmatpush1.bf16.msra.mxu0 %v2798
    %3611 = vmatprep.subr.bf16.mxu0 %v2805
    %3612 = vmatpush1.bf16.msra.mxu0 %v2804
    %3613 = vmatprep.subr.bf16.mxu0 %v2811
    %3614 = vmatpush1.bf16.msra.mxu0 %v2810
    %3615 = vmatprep.subr.bf16.mxu0 %v2817
    %3616 = vmatpush1.bf16.msra.mxu0 %v2816
    %3617 = vmatprep.subr.bf16.mxu0 %v2823
    %3618 = vmatpush1.bf16.msra.mxu0 %v2822
    %3619 = vmatprep.subr.bf16.mxu0 %v2829
    %3620 = vmatpush1.bf16.msra.mxu0 %v2828
    %3621 = vmatprep.subr.bf16.mxu0 %v2835
    %3622 = vmatpush1.bf16.msra.mxu0 %v2834
    %3623 = vmatprep.subr.bf16.mxu0 %v2841
    %3624 = vmatpush1.bf16.msra.mxu0 %v2840
    %3625 = vmatprep.subr.bf16.mxu0 %v2847
    %3626 = vmatpush1.bf16.msra.mxu0 %v2846
    %3627 = vmatprep.subr.bf16.mxu0 %v2853
    %3628 = vmatpush1.bf16.msra.mxu0 %v2852
    %3629 = vmatprep.subr.bf16.mxu0 %v2859
    %3630 = vmatpush1.bf16.msra.mxu0 %v2858
    %3631 = vmatprep.mubr.bf16.mxu0 %v3514
    %3632 = vmatmul.mubr.bf16.gmra.mrb[0].mxu0 %v3513
    %v3633 = vpop.f32.mrb[0].mxu0
    %v3634 = vadd.f32 %v2465, %v3633
    %v3635 = vpop.f32.mrb[0].mxu0
    %v3636 = vadd.f32 %v2469, %v3635
    %v3637 = vpop.f32.mrb[0].mxu0
    %v3638 = vpop.f32.mrb[0].mxu0
    %3639 = vdwg.mxu0
    %v3642 = vrot.slane %v3552, 2
    %v3643 = vrot.slane %v3554, 2
    %v3646 = vadd.f32 %v2014, %v3642
    %v3647 = vadd.f32 %v2016, %v3643
    %v3648 = vxor.u32 %v3646, 2147483648
    %v3649 = vxor.u32 %v3647, 2147483648
    %v3650 = vmul.f32 %v3648, 1.442695
    %v3651 = vpow.pop %v3650
    %v3652 = vmul.f32 %v3649, 1.442695
    %v3653 = vpow.pop %v3652
    %v3654 = vadd.f32 %v3651, 1.0
    %v3655 = vadd.f32 %v3653, 1.0
    %v3656 = vrcp.pop %v3654
    %v3657 = vmul.f32 1.0, %v3656
    %v3658 = vrcp.pop %v3655
    %v3659 = vmul.f32 1.0, %v3658
    %v3662 = vrot.slane %v3593, 2
    %v3663 = vrot.slane %v3595, 2
    %v3666 = vadd.f32 %v2178, %v3662
    %v3667 = vadd.f32 %v2180, %v3663
    %v3668 = vxor.u32 %v3666, 2147483648
    %v3669 = vxor.u32 %v3667, 2147483648
    %v3670 = vmul.f32 %v3668, 1.442695
    %v3671 = vpow.pop %v3670
    %v3672 = vmul.f32 %v3669, 1.442695
    %v3673 = vpow.pop %v3672
    %v3674 = vadd.f32 %v3671, 1.0
    %v3675 = vadd.f32 %v3673, 1.0
    %v3676 = vrcp.pop %v3674
    %v3677 = vmul.f32 1.0, %v3676
    %v3678 = vrcp.pop %v3675
    %v3679 = vmul.f32 1.0, %v3678
    %v3682 = vrot.slane %v3634, 2
    %v3683 = vrot.slane %v3636, 2
    %v3686 = vmul.f32 %v3657, %v3682
    %v3687 = vmul.f32 %v3659, %v3683
    %v3688 = vadd.f32 %v2342, %v3686
    %v3689 = vadd.f32 %v2344, %v3687
    %v3690 = vtanh.pop %v3688
    %v3691 = vtanh.pop %v3689
    %v3692 = vsub.f32 1.0, %v3677
    %v3693 = vsub.f32 1.0, %v3679
    %v3694 = vmul.f32 %v3692, %v3690
    %v3695 = vmul.f32 %v3693, %v3691
    %v3698 = vrot.slane %v3507, 6
    %v3699 = vrot.slane %v3508, 6
    %v3702 = vmul.f32 %v3677, %v3698
    %v3703 = vmul.f32 %v3679, %v3699
    %v3704 = vadd.f32 %v3694, %v3702
    %v3705 = vadd.f32 %v3695, %v3703
    %v3706 = vld [vmem:[%s5] sm:$0xff]
    %v3707 = vld [vmem:[%s5 + $0x8] sm:$0xff]
    %v3708 = vld [vmem:[%s5 + $0x10] sm:$0xff]
    %v3709 = vld [vmem:[%s5 + $0x18] sm:$0xff]
    %v3710 = vld [vmem:[%s5 + $0x20] sm:$0xff]
    %v3711 = vld [vmem:[%s5 + $0x28] sm:$0xff]
    %v3712 = vld [vmem:[%s5 + $0x30] sm:$0xff]
    %v3713 = vld [vmem:[%s5 + $0x38] sm:$0xff]
    %v3714 = vld [vmem:[%s5 + $0x40] sm:$0xff]
    %v3715 = vld [vmem:[%s5 + $0x48] sm:$0xff]
    %v3716 = vld [vmem:[%s5 + $0x50] sm:$0xff]
    %v3717 = vld [vmem:[%s5 + $0x58] sm:$0xff]
    %v3718 = vld [vmem:[%s5 + $0x60] sm:$0xff]
    %v3719 = vld [vmem:[%s5 + $0x68] sm:$0xff]
    %v3720 = vld [vmem:[%s5 + $0x70] sm:$0xff]
    %v3721 = vld [vmem:[%s5 + $0x78] sm:$0xff]
    %v3722 = vld [vmem:[%s5 + $0x80] sm:$0xff]
    %v3723 = vld [vmem:[%s5 + $0x88] sm:$0xff]
    %v3724 = vld [vmem:[%s5 + $0x90] sm:$0xff]
    %v3725 = vld [vmem:[%s5 + $0x98] sm:$0xff]
    %v3726 = vld [vmem:[%s5 + $0xa0] sm:$0xff]
    %v3727 = vld [vmem:[%s5 + $0xa8] sm:$0xff]
    %v3728 = vld [vmem:[%s5 + $0xb0] sm:$0xff]
    %v3729 = vld [vmem:[%s5 + $0xb8] sm:$0xff]
    %v3730 = vld [vmem:[%s5 + $0xc0] sm:$0xff]
    %v3731 = vld [vmem:[%s5 + $0xc8] sm:$0xff]
    %v3732 = vld [vmem:[%s5 + $0xd0] sm:$0xff]
    %v3733 = vld [vmem:[%s5 + $0xd8] sm:$0xff]
    %v3734 = vld [vmem:[%s5 + $0xe0] sm:$0xff]
    %v3735 = vld [vmem:[%s5 + $0xe8] sm:$0xff]
    %v3736 = vld [vmem:[%s5 + $0xf0] sm:$0xff]
    %v3737 = vld [vmem:[%s5 + $0xf8] sm:$0xff]
    %v3738 = vld [vmem:[%s6] sm:$0x1]
    %v3740 = vlaneseq
    %v3741 = vshrl.u32 %v3740, 7
    %v3742 = vsub.s32 0, %v3741
    %v3743 = vrot.slane %v3738, %v3742
    %v3747 = vrot.slane %v3704, 6
    %v3748 = vrot.slane %v3705, 6
    %3751 = vmatprep.subr.mxu0 0.0
    %3752 = vmatpush1.msra.mxu0 %v3706
    %3753 = vmatprep.subr.mxu0 0.0
    %3754 = vmatpush1.msra.mxu0 %v3707
    %3755 = vmatprep.subr.mxu0 0.0
    %3756 = vmatpush1.msra.mxu0 %v3708
    %3757 = vmatprep.subr.mxu0 0.0
    %3758 = vmatpush1.msra.mxu0 %v3709
    %3759 = vmatprep.subr.mxu0 0.0
    %3760 = vmatpush1.msra.mxu0 %v3710
    %3761 = vmatprep.subr.mxu0 0.0
    %3762 = vmatpush1.msra.mxu0 %v3711
    %3763 = vmatprep.subr.mxu0 0.0
    %3764 = vmatpush1.msra.mxu0 %v3712
    %3765 = vmatprep.subr.mxu0 0.0
    %3766 = vmatpush1.msra.mxu0 %v3713
    %3767 = vmatprep.subr.mxu0 0.0
    %3768 = vmatpush1.msra.mxu0 %v3714
    %3769 = vmatprep.subr.mxu0 0.0
    %3770 = vmatpush1.msra.mxu0 %v3715
    %3771 = vmatprep.subr.mxu0 0.0
    %3772 = vmatpush1.msra.mxu0 %v3716
    %3773 = vmatprep.subr.mxu0 0.0
    %3774 = vmatpush1.msra.mxu0 %v3717
    %3775 = vmatprep.subr.mxu0 0.0
    %3776 = vmatpush1.msra.mxu0 %v3718
    %3777 = vmatprep.subr.mxu0 0.0
    %3778 = vmatpush1.msra.mxu0 %v3719
    %3779 = vmatprep.subr.mxu0 0.0
    %3780 = vmatpush1.msra.mxu0 %v3720
    %3781 = vmatprep.subr.mxu0 0.0
    %3782 = vmatpush1.msra.mxu0 %v3721
    %3783 = vmatprep.subr.mxu0 0.0
    %3784 = vmatpush1.msra.mxu0 %v3722
    %3785 = vmatprep.subr.mxu0 0.0
    %3786 = vmatpush1.msra.mxu0 %v3723
    %3787 = vmatprep.subr.mxu0 0.0
    %3788 = vmatpush1.msra.mxu0 %v3724
    %3789 = vmatprep.subr.mxu0 0.0
    %3790 = vmatpush1.msra.mxu0 %v3725
    %3791 = vmatprep.subr.mxu0 0.0
    %3792 = vmatpush1.msra.mxu0 %v3726
    %3793 = vmatprep.subr.mxu0 0.0
    %3794 = vmatpush1.msra.mxu0 %v3727
    %3795 = vmatprep.subr.mxu0 0.0
    %3796 = vmatpush1.msra.mxu0 %v3728
    %3797 = vmatprep.subr.mxu0 0.0
    %3798 = vmatpush1.msra.mxu0 %v3729
    %3799 = vmatprep.subr.mxu0 0.0
    %3800 = vmatpush1.msra.mxu0 %v3730
    %3801 = vmatprep.subr.mxu0 0.0
    %3802 = vmatpush1.msra.mxu0 %v3731
    %3803 = vmatprep.subr.mxu0 0.0
    %3804 = vmatpush1.msra.mxu0 %v3732
    %3805 = vmatprep.subr.mxu0 0.0
    %3806 = vmatpush1.msra.mxu0 %v3733
    %3807 = vmatprep.subr.mxu0 0.0
    %3808 = vmatpush1.msra.mxu0 %v3734
    %3809 = vmatprep.subr.mxu0 0.0
    %3810 = vmatpush1.msra.mxu0 %v3735
    %3811 = vmatprep.subr.mxu0 0.0
    %3812 = vmatpush1.msra.mxu0 %v3736
    %3813 = vmatprep.subr.mxu0 0.0
    %3814 = vmatpush1.msra.mxu0 %v3737
    %3815 = vmatprep.mubr.f32.mxu0 %v3748
    %3816 = vmatmul.mubr.f32.gmra.mrb[0].mxu0 %v3747
    %v3817 = vpop.f32.mrb[0].mxu0
    %v3818 = vadd.f32 %v3743, %v3817
    %v3819 = vpop.f32.mrb[0].mxu0
    %3820 = vdwg.mxu0
    %3822 = vset.pattern.permute.xlu0 4
    %3823 = vperm.xlu0 %3822, %v3818
    %v3824 = vpop.permute.xlu0 %3823
    %v3826 = vadd.f32 %v3818, %v3824
    %vm3827 = vcmask 25600
    %v3828 = vsel %vm3827, %v3818, 0.0
    %3829 = vadd.xlane.f32.xlu0 %v3828
    %v3830 = vpop.xlane.xlu0 %3829
    %v3831 = vrcp.pop 4.0
    %v3832 = vmul.f32 %v3830, %v3831
    %v3833 = vsub.f32 %v3826, %v3832
    %3834 = vst.msk [vmem:[#allocation2] sm:$0x3] %vm3827, %v3833
    // Predicated region
    $region30: #{_lambda_.7} parent=1 // pred_check
      _
    $region31: #{_lambda_.7} parent=1 // pred_check_branch
      %3836 = sbr.rel (0) target = $region33
    $region32: #{_lambda_.7} parent=1 // pred_region
      %s3838 = ssub.s32 32, 32
      %3839 = vsyncadd [#allocation3], %s3838
      %s3841 = sshll.u32 [#allocation2], 4
      %s3842 = int_to_ptr.vmem [resolvable:$true] %s3841
      %3844 = dma.vmem_to_hbm [thread:$0]  %s3842, 32, %s7, [#allocation3]
    $region33: #{_lambda_.7} parent=1 // pred_fallthru
      _
    // Predicated region
    $region34: #{_lambda_.7} parent=1 // pred_check
      _
    $region35: #{_lambda_.7} parent=1 // pred_check_branch
      %3846 = sbr.rel (0) target = $region37
    $region36: #{_lambda_.7} parent=1 // pred_region
      %3847 = dma.done [#allocation3], 32
    $region37: #{_lambda_.7} parent=1 // pred_fallthru
      _
    %3848 = vsyncpa [#allocation3], 1

</llo_original>
